<compile_context>
chip_gen: v6e
topology: v6e:2x2x1
jax: 0.10.0
libtpu: 0.0.40
codegen_flags: <defaults>
</compile_context>

<pallas_src>
import functools

import jax
import jax.numpy as jnp
from jax.experimental import pallas as pl
from jax.experimental.pallas import tpu as pltpu


# ----------------------------- Pallas kernels ------------------------------ #

def _conv_relu_pool_kernel(x_ref, w_ref, b_ref, o_ref, s_ref, *, H, W):
    """Fused 3x3 'same' conv + bias + ReLU + 2x2/2 max-pool for ONE image.

    x_ref: (1, C_in_p, (H+3)*(W+2)) bf16   spatially padded image, flat h-major
    w_ref: (9, C_out, C_in_p)       bf16   tap index k = kh*3 + kw
    b_ref: (C_out, 1)               f32
    o_ref: (1, C_out, (H//2)*W)     f32    even lanes of each W-wide slab hold
                                           the pooled outputs (odd = discard)
    s_ref: (C_out, H*(W+2))         f32    scratch: pre-pool ReLU activation
    """
    Wp2 = W + 2
    Mp = H * Wp2                      # flat conv-output length (incl. 2 junk cols/row)
    C_out = w_ref.shape[1]

    # --- conv as 9 accumulating MXU matmuls over contiguous lane windows ----
    acc = jnp.zeros((C_out, Mp), jnp.float32)
    for kh in range(3):
        for kw in range(3):
            wk = w_ref[kh * 3 + kw]                          # (C_out, C_in_p) bf16
            slab = x_ref[0, :, pl.ds(kh * Wp2 + kw, Mp)]     # (C_in_p, Mp)   bf16
            acc = acc + jnp.dot(wk, slab, preferred_element_type=jnp.float32)

    # --- bias + ReLU (f32) --------------------------------------------------
    s_ref[...] = jnp.maximum(acc + b_ref[...], 0.0)

    # --- 2x2/2 max-pool epilogue: contiguous-window maxes only --------------
    # For output row ho, even lanes 2*wo of the W-wide result hold
    # max over the 2x2 block (2ho..2ho+1, 2wo..2wo+1).
    for ho in range(H // 2):
        top = (2 * ho) * Wp2
        bot = top + Wp2
        pooled = jnp.maximum(
            jnp.maximum(s_ref[:, pl.ds(top, W)], s_ref[:, pl.ds(top + 1, W)]),
            jnp.maximum(s_ref[:, pl.ds(bot, W)], s_ref[:, pl.ds(bot + 1, W)]),
        )
        o_ref[0, :, pl.ds(ho * W, W)] = pooled


def _mlp_head_kernel(x_ref, w1_ref, b1_ref, w2_ref, b2_ref, o_ref):
    """Fused fc1 + ReLU + fc2; the (bm, 512) intermediate stays in registers/VMEM."""
    h = jnp.dot(x_ref[...], w1_ref[...], preferred_element_type=jnp.float32)
    h = jnp.maximum(h + b1_ref[...], 0.0)                      # f32 epilogue
    y = jnp.dot(h.astype(jnp.bfloat16), w2_ref[...],
                preferred_element_type=jnp.float32)
    o_ref[...] = y + b2_ref[...]


# ------------------------------- Wrappers ---------------------------------- #

def conv3x3_relu_pool(x, w9, b):
    """x: (B, C_in, H, W) f32, w9: (9, C_out, C_in_p) bf16, b: (C_out, 1) f32
    -> (B, C_out, H//2, W//2) f32."""
    B, C_in, H, W = x.shape
    _, C_out, C_in_p = w9.shape
    Wp2 = W + 2
    Ho, Wo = H // 2, W // 2
    flat_len = (H + 3) * Wp2          # extra zero row so every tap window is in-bounds

    # pad channels to the 8-sublane granule, pad spatially, flatten, cast once
    xp = jnp.pad(x, ((0, 0), (0, C_in_p - C_in), (1, 2), (1, 1)))
    xflat = xp.reshape(B, C_in_p, flat_len).astype(jnp.bfloat16)

    kernel = functools.partial(_conv_relu_pool_kernel, H=H, W=W)
    out = pl.pallas_call(
        kernel,
        out_shape=jax.ShapeDtypeStruct((B, C_out, Ho * W), jnp.float32),
        grid=(B,),
        in_specs=[
            pl.BlockSpec((1, C_in_p, flat_len), lambda i: (i, 0, 0)),
            pl.BlockSpec((9, C_out, C_in_p), lambda i: (0, 0, 0)),
            pl.BlockSpec((C_out, 1), lambda i: (0, 0)),
        ],
        out_specs=pl.BlockSpec((1, C_out, Ho * W), lambda i: (i, 0, 0)),
        scratch_shapes=[pltpu.VMEM((C_out, H * Wp2), jnp.float32)],
        compiler_params=pltpu.CompilerParams(dimension_semantics=("parallel",)),
    )(xflat, w9, b)

    # drop the interleaved (discard) odd lanes -> compact NCHW pooled map
    return out.reshape(B, C_out, Ho, Wo, 2)[..., 0]


def mlp_head(x, w1t, b1, w2t, b2):
    """x: (B, 2048) f32 -> logits (B, 10) f32.  fc1+ReLU+fc2 fused."""
    B, K = x.shape
    N1, N2 = w1t.shape[1], w2t.shape[1]
    xb = x.astype(jnp.bfloat16)
    bm = 128 if (B % 128 == 0) else B          # M-tiling for large batches
    return pl.pallas_call(
        _mlp_head_kernel,
        out_shape=jax.ShapeDtypeStruct((B, N2), jnp.float32),
        grid=(B // bm,),
        in_specs=[
            pl.BlockSpec((bm, K), lambda i: (i, 0)),
            pl.BlockSpec((K, N1), lambda i: (0, 0)),
            pl.BlockSpec((1, N1), lambda i: (0, 0)),
            pl.BlockSpec((N1, N2), lambda i: (0, 0)),
            pl.BlockSpec((1, N2), lambda i: (0, 0)),
        ],
        out_specs=pl.BlockSpec((bm, N2), lambda i: (i, 0)),
        compiler_params=pltpu.CompilerParams(dimension_semantics=("parallel",)),
    )(xb, w1t, b1, w2t, b2)


# ------------------------------ Model glue --------------------------------- #

def init_raw_params(key):
    """PyTorch-layout f32 parameters (for the pure-JAX reference)."""
    k = jax.random.split(key, 8)
    s = 0.05
    return {
        "conv1_w": s * jax.random.normal(k[0], (16, 3, 3, 3), jnp.float32),
        "conv1_b": s * jax.random.normal(k[1], (16,), jnp.float32),
        "conv2_w": s * jax.random.normal(k[2], (32, 16, 3, 3), jnp.float32),
        "conv2_b": s * jax.random.normal(k[3], (32,), jnp.float32),
        "fc1_w":   s * jax.random.normal(k[4], (512, 32 * 8 * 8), jnp.float32),
        "fc1_b":   s * jax.random.normal(k[5], (512,), jnp.float32),
        "fc2_w":   s * jax.random.normal(k[6], (10, 512), jnp.float32),
        "fc2_b":   s * jax.random.normal(k[7], (10,), jnp.float32),
    }


def prepare_params(raw):
    """One-time weight re-layout + bf16 cast (no transposes in the forward)."""
    def conv_taps(w):
        c_out, c_in = w.shape[0], w.shape[1]
        c_in_p = ((c_in + 7) // 8) * 8
        w9 = jnp.transpose(w, (2, 3, 0, 1)).reshape(9, c_out, c_in)   # k = kh*3+kw
        w9 = jnp.pad(w9, ((0, 0), (0, 0), (0, c_in_p - c_in)))
        return w9.astype(jnp.bfloat16)

    return {
        "conv1_w9": conv_taps(raw["conv1_w"]),
        "conv1_b":  raw["conv1_b"].reshape(-1, 1).astype(jnp.float32),
        "conv2_w9": conv_taps(raw["conv2_w"]),
        "conv2_b":  raw["conv2_b"].reshape(-1, 1).astype(jnp.float32),
        "fc1_wt":   raw["fc1_w"].T.astype(jnp.bfloat16),   # (2048, 512)
        "fc1_b":    raw["fc1_b"].reshape(1, -1).astype(jnp.float32),
        "fc2_wt":   raw["fc2_w"].T.astype(jnp.bfloat16),   # (512, 10)
        "fc2_b":    raw["fc2_b"].reshape(1, -1).astype(jnp.float32),
    }


@jax.jit
def simple_cnn_forward(params, x):
    # x: (B, 3, 32, 32) NCHW f32
    x = conv3x3_relu_pool(x, params["conv1_w9"], params["conv1_b"])   # (B, 16, 16, 16)
    x = conv3x3_relu_pool(x, params["conv2_w9"], params["conv2_b"])   # (B, 32, 8, 8)
    B = x.shape[0]
    x = x.reshape(B, 32 * 8 * 8)                                      # matches torch .view
    return mlp_head(x, params["fc1_wt"], params["fc1_b"],
                    params["fc2_wt"], params["fc2_b"])                # (B, 10)


@jax.jit
def reference_forward(raw, x):
    """Pure-JAX (XLA) reference with PyTorch semantics, for validation."""
    def conv(x, w, b):
        y = jax.lax.conv_general_dilated(
            x, w, window_strides=(1, 1), padding="SAME",
            dimension_numbers=("NCHW", "OIHW", "NCHW"))
        return jax.nn.relu(y + b[None, :, None, None])

    def pool(x):
        B, C, H, W = x.shape
        return x.reshape(B, C, H // 2, 2, W // 2, 2).max(axis=(3, 5))

    x = pool(conv(x, raw["conv1_w"], raw["conv1_b"]))
    x = pool(conv(x, raw["conv2_w"], raw["conv2_b"]))
    x = x.reshape(x.shape[0], -1)
    x = jax.nn.relu(x @ raw["fc1_w"].T + raw["fc1_b"])
    return x @ raw["fc2_w"].T + raw["fc2_b"]


if __name__ == "__main__":
    key = jax.random.PRNGKey(0)
    pkey, xkey = jax.random.split(key)
    raw = init_raw_params(pkey)
    params = prepare_params(raw)
    x = jax.random.normal(xkey, (2, 3, 32, 32), jnp.float32)  # 32x32 required by fc1

    out = jax.block_until_ready(simple_cnn_forward(params, x))
    assert out.shape == (2, 10) and out.dtype == jnp.float32
    assert bool(jnp.all(jnp.isfinite(out)))

    ref = jax.block_until_ready(reference_forward(raw, x))
    max_err = float(jnp.max(jnp.abs(out - ref)))
    assert max_err < 5e-2, f"mismatch vs reference: max abs err = {max_err}"

    print("KERNEL_OK")
</pallas_src>

<mosaic_0001>
module attributes {stable_mosaic.version = 11 : i64} {
  func.func @_conv_relu_pool_kernel(%arg0: i32, %arg1: memref<1x8x1190xbf16, #tpu.memory_space<vmem>>, %arg2: memref<9x16x8xbf16, #tpu.memory_space<vmem>>, %arg3: memref<16x1xf32, #tpu.memory_space<vmem>>, %arg4: memref<1x16x512xf32, #tpu.memory_space<vmem>>, %arg5: memref<16x1088xf32, #tpu.memory_space<vmem>>) attributes {dimension_semantics = [#tpu.dimension_semantics<parallel>], iteration_bounds = array<i64: 2>, scalar_prefetch = 0 : i64, scratch_operands = 1 : i64, tpu.core_type = #tpu.core_type<tc>, window_params = [{transform_indices = @transform_0, window_bounds = array<i64: 1, 8, 1190>}, {pipeline_mode = #tpu.pipeline_mode<synchronous>, transform_indices = @transform_1, window_bounds = array<i64: 9, 16, 8>}, {pipeline_mode = #tpu.pipeline_mode<synchronous>, transform_indices = @transform_2, window_bounds = array<i64: 16, 1>}, {transform_indices = @transform_3, window_bounds = array<i64: 1, 16, 512>}]} {
    %cst = arith.constant 0.000000e+00 : f32
    %0 = vector.broadcast %cst : f32 to vector<16x1088xf32>
    %c0 = arith.constant 0 : index
    %c0_0 = arith.constant 0 : index
    %c0_1 = arith.constant 0 : index
    %1 = vector.load %arg2[%c0, %c0_0, %c0_1] : memref<9x16x8xbf16, #tpu.memory_space<vmem>>, vector<1x16x8xbf16>
    %2 = vector.shape_cast %1 : vector<1x16x8xbf16> to vector<16x8xbf16>
    %c0_2 = arith.constant 0 : index
    %c0_3 = arith.constant 0 : index
    %c0_4 = arith.constant 0 : index
    %3 = vector.load %arg1[%c0_2, %c0_3, %c0_4] : memref<1x8x1190xbf16, #tpu.memory_space<vmem>>, vector<1x8x1088xbf16>
    %4 = vector.shape_cast %3 : vector<1x8x1088xbf16> to vector<8x1088xbf16>
    %cst_5 = arith.constant dense<0.000000e+00> : vector<16x1088xf32>
    %5 = tpu.matmul %2, %4, %cst_5 {dimension_numbers = #tpu.dot_dimension_numbers<[1], [0], [0], [1], [0, 0, 1, 1], [], []>} : vector<16x8xbf16>, vector<8x1088xbf16>, vector<16x1088xf32> -> vector<16x1088xf32>
    %6 = arith.addf %0, %5 : vector<16x1088xf32>
    %c1 = arith.constant 1 : index
    %c0_6 = arith.constant 0 : index
    %c0_7 = arith.constant 0 : index
    %7 = vector.load %arg2[%c1, %c0_6, %c0_7] : memref<9x16x8xbf16, #tpu.memory_space<vmem>>, vector<1x16x8xbf16>
    %8 = vector.shape_cast %7 : vector<1x16x8xbf16> to vector<16x8xbf16>
    %c0_8 = arith.constant 0 : index
    %c0_9 = arith.constant 0 : index
    %c1_10 = arith.constant 1 : index
    %9 = vector.load %arg1[%c0_8, %c0_9, %c1_10] : memref<1x8x1190xbf16, #tpu.memory_space<vmem>>, vector<1x8x1088xbf16>
    %10 = vector.shape_cast %9 : vector<1x8x1088xbf16> to vector<8x1088xbf16>
    %cst_11 = arith.constant dense<0.000000e+00> : vector<16x1088xf32>
    %11 = tpu.matmul %8, %10, %cst_11 {dimension_numbers = #tpu.dot_dimension_numbers<[1], [0], [0], [1], [0, 0, 1, 1], [], []>} : vector<16x8xbf16>, vector<8x1088xbf16>, vector<16x1088xf32> -> vector<16x1088xf32>
    %12 = arith.addf %6, %11 : vector<16x1088xf32>
    %c2 = arith.constant 2 : index
    %c0_12 = arith.constant 0 : index
    %c0_13 = arith.constant 0 : index
    %13 = vector.load %arg2[%c2, %c0_12, %c0_13] : memref<9x16x8xbf16, #tpu.memory_space<vmem>>, vector<1x16x8xbf16>
    %14 = vector.shape_cast %13 : vector<1x16x8xbf16> to vector<16x8xbf16>
    %c0_14 = arith.constant 0 : index
    %c0_15 = arith.constant 0 : index
    %c2_16 = arith.constant 2 : index
    %15 = vector.load %arg1[%c0_14, %c0_15, %c2_16] : memref<1x8x1190xbf16, #tpu.memory_space<vmem>>, vector<1x8x1088xbf16>
    %16 = vector.shape_cast %15 : vector<1x8x1088xbf16> to vector<8x1088xbf16>
    %cst_17 = arith.constant dense<0.000000e+00> : vector<16x1088xf32>
    %17 = tpu.matmul %14, %16, %cst_17 {dimension_numbers = #tpu.dot_dimension_numbers<[1], [0], [0], [1], [0, 0, 1, 1], [], []>} : vector<16x8xbf16>, vector<8x1088xbf16>, vector<16x1088xf32> -> vector<16x1088xf32>
    %18 = arith.addf %12, %17 : vector<16x1088xf32>
    %c3 = arith.constant 3 : index
    %c0_18 = arith.constant 0 : index
    %c0_19 = arith.constant 0 : index
    %19 = vector.load %arg2[%c3, %c0_18, %c0_19] : memref<9x16x8xbf16, #tpu.memory_space<vmem>>, vector<1x16x8xbf16>
    %20 = vector.shape_cast %19 : vector<1x16x8xbf16> to vector<16x8xbf16>
    %c0_20 = arith.constant 0 : index
    %c0_21 = arith.constant 0 : index
    %c34 = arith.constant 34 : index
    %21 = vector.load %arg1[%c0_20, %c0_21, %c34] : memref<1x8x1190xbf16, #tpu.memory_space<vmem>>, vector<1x8x1088xbf16>
    %22 = vector.shape_cast %21 : vector<1x8x1088xbf16> to vector<8x1088xbf16>
    %cst_22 = arith.constant dense<0.000000e+00> : vector<16x1088xf32>
    %23 = tpu.matmul %20, %22, %cst_22 {dimension_numbers = #tpu.dot_dimension_numbers<[1], [0], [0], [1], [0, 0, 1, 1], [], []>} : vector<16x8xbf16>, vector<8x1088xbf16>, vector<16x1088xf32> -> vector<16x1088xf32>
    %24 = arith.addf %18, %23 : vector<16x1088xf32>
    %c4 = arith.constant 4 : index
    %c0_23 = arith.constant 0 : index
    %c0_24 = arith.constant 0 : index
    %25 = vector.load %arg2[%c4, %c0_23, %c0_24] : memref<9x16x8xbf16, #tpu.memory_space<vmem>>, vector<1x16x8xbf16>
    %26 = vector.shape_cast %25 : vector<1x16x8xbf16> to vector<16x8xbf16>
    %c0_25 = arith.constant 0 : index
    %c0_26 = arith.constant 0 : index
    %c35 = arith.constant 35 : index
    %27 = vector.load %arg1[%c0_25, %c0_26, %c35] : memref<1x8x1190xbf16, #tpu.memory_space<vmem>>, vector<1x8x1088xbf16>
    %28 = vector.shape_cast %27 : vector<1x8x1088xbf16> to vector<8x1088xbf16>
    %cst_27 = arith.constant dense<0.000000e+00> : vector<16x1088xf32>
    %29 = tpu.matmul %26, %28, %cst_27 {dimension_numbers = #tpu.dot_dimension_numbers<[1], [0], [0], [1], [0, 0, 1, 1], [], []>} : vector<16x8xbf16>, vector<8x1088xbf16>, vector<16x1088xf32> -> vector<16x1088xf32>
    %30 = arith.addf %24, %29 : vector<16x1088xf32>
    %c5 = arith.constant 5 : index
    %c0_28 = arith.constant 0 : index
    %c0_29 = arith.constant 0 : index
    %31 = vector.load %arg2[%c5, %c0_28, %c0_29] : memref<9x16x8xbf16, #tpu.memory_space<vmem>>, vector<1x16x8xbf16>
    %32 = vector.shape_cast %31 : vector<1x16x8xbf16> to vector<16x8xbf16>
    %c0_30 = arith.constant 0 : index
    %c0_31 = arith.constant 0 : index
    %c36 = arith.constant 36 : index
    %33 = vector.load %arg1[%c0_30, %c0_31, %c36] : memref<1x8x1190xbf16, #tpu.memory_space<vmem>>, vector<1x8x1088xbf16>
    %34 = vector.shape_cast %33 : vector<1x8x1088xbf16> to vector<8x1088xbf16>
    %cst_32 = arith.constant dense<0.000000e+00> : vector<16x1088xf32>
    %35 = tpu.matmul %32, %34, %cst_32 {dimension_numbers = #tpu.dot_dimension_numbers<[1], [0], [0], [1], [0, 0, 1, 1], [], []>} : vector<16x8xbf16>, vector<8x1088xbf16>, vector<16x1088xf32> -> vector<16x1088xf32>
    %36 = arith.addf %30, %35 : vector<16x1088xf32>
    %c6 = arith.constant 6 : index
    %c0_33 = arith.constant 0 : index
    %c0_34 = arith.constant 0 : index
    %37 = vector.load %arg2[%c6, %c0_33, %c0_34] : memref<9x16x8xbf16, #tpu.memory_space<vmem>>, vector<1x16x8xbf16>
    %38 = vector.shape_cast %37 : vector<1x16x8xbf16> to vector<16x8xbf16>
    %c0_35 = arith.constant 0 : index
    %c0_36 = arith.constant 0 : index
    %c68 = arith.constant 68 : index
    %39 = vector.load %arg1[%c0_35, %c0_36, %c68] : memref<1x8x1190xbf16, #tpu.memory_space<vmem>>, vector<1x8x1088xbf16>
    %40 = vector.shape_cast %39 : vector<1x8x1088xbf16> to vector<8x1088xbf16>
    %cst_37 = arith.constant dense<0.000000e+00> : vector<16x1088xf32>
    %41 = tpu.matmul %38, %40, %cst_37 {dimension_numbers = #tpu.dot_dimension_numbers<[1], [0], [0], [1], [0, 0, 1, 1], [], []>} : vector<16x8xbf16>, vector<8x1088xbf16>, vector<16x1088xf32> -> vector<16x1088xf32>
    %42 = arith.addf %36, %41 : vector<16x1088xf32>
    %c7 = arith.constant 7 : index
    %c0_38 = arith.constant 0 : index
    %c0_39 = arith.constant 0 : index
    %43 = vector.load %arg2[%c7, %c0_38, %c0_39] : memref<9x16x8xbf16, #tpu.memory_space<vmem>>, vector<1x16x8xbf16>
    %44 = vector.shape_cast %43 : vector<1x16x8xbf16> to vector<16x8xbf16>
    %c0_40 = arith.constant 0 : index
    %c0_41 = arith.constant 0 : index
    %c69 = arith.constant 69 : index
    %45 = vector.load %arg1[%c0_40, %c0_41, %c69] : memref<1x8x1190xbf16, #tpu.memory_space<vmem>>, vector<1x8x1088xbf16>
    %46 = vector.shape_cast %45 : vector<1x8x1088xbf16> to vector<8x1088xbf16>
    %cst_42 = arith.constant dense<0.000000e+00> : vector<16x1088xf32>
    %47 = tpu.matmul %44, %46, %cst_42 {dimension_numbers = #tpu.dot_dimension_numbers<[1], [0], [0], [1], [0, 0, 1, 1], [], []>} : vector<16x8xbf16>, vector<8x1088xbf16>, vector<16x1088xf32> -> vector<16x1088xf32>
    %48 = arith.addf %42, %47 : vector<16x1088xf32>
    %c8 = arith.constant 8 : index
    %c0_43 = arith.constant 0 : index
    %c0_44 = arith.constant 0 : index
    %49 = vector.load %arg2[%c8, %c0_43, %c0_44] : memref<9x16x8xbf16, #tpu.memory_space<vmem>>, vector<1x16x8xbf16>
    %50 = vector.shape_cast %49 : vector<1x16x8xbf16> to vector<16x8xbf16>
    %c0_45 = arith.constant 0 : index
    %c0_46 = arith.constant 0 : index
    %c70 = arith.constant 70 : index
    %51 = vector.load %arg1[%c0_45, %c0_46, %c70] : memref<1x8x1190xbf16, #tpu.memory_space<vmem>>, vector<1x8x1088xbf16>
    %52 = vector.shape_cast %51 : vector<1x8x1088xbf16> to vector<8x1088xbf16>
    %cst_47 = arith.constant dense<0.000000e+00> : vector<16x1088xf32>
    %53 = tpu.matmul %50, %52, %cst_47 {dimension_numbers = #tpu.dot_dimension_numbers<[1], [0], [0], [1], [0, 0, 1, 1], [], []>} : vector<16x8xbf16>, vector<8x1088xbf16>, vector<16x1088xf32> -> vector<16x1088xf32>
    %54 = arith.addf %48, %53 : vector<16x1088xf32>
    %c0_48 = arith.constant 0 : index
    %c0_49 = arith.constant 0 : index
    %55 = vector.load %arg3[%c0_48, %c0_49] : memref<16x1xf32, #tpu.memory_space<vmem>>, vector<16x1xf32>
    %56 = vector.broadcast %55 : vector<16x1xf32> to vector<16x1088xf32>
    %57 = arith.addf %54, %56 : vector<16x1088xf32>
    %cst_50 = arith.constant 0.000000e+00 : f32
    %58 = vector.broadcast %cst_50 : f32 to vector<16x1088xf32>
    %59 = arith.maximumf %57, %58 : vector<16x1088xf32>
    %c0_51 = arith.constant 0 : index
    %c0_52 = arith.constant 0 : index
    %60 = vector.load %arg5[%c0_51, %c0_52] : memref<16x1088xf32, #tpu.memory_space<vmem>>, vector<16x1088xf32>
    tpu.vector_store %arg5[%c0_51, %c0_52], %59 {strides = array<i32>} : memref<16x1088xf32, #tpu.memory_space<vmem>>, vector<16x1088xf32>,
    %c0_53 = arith.constant 0 : index
    %c0_54 = arith.constant 0 : index
    %61 = vector.load %arg5[%c0_53, %c0_54] : memref<16x1088xf32, #tpu.memory_space<vmem>>, vector<16x32xf32>
    %c0_55 = arith.constant 0 : index
    %c1_56 = arith.constant 1 : index
    %62 = vector.load %arg5[%c0_55, %c1_56] : memref<16x1088xf32, #tpu.memory_space<vmem>>, vector<16x32xf32>
    %63 = arith.maximumf %61, %62 : vector<16x32xf32>
    %c0_57 = arith.constant 0 : index
    %c34_58 = arith.constant 34 : index
    %64 = vector.load %arg5[%c0_57, %c34_58] : memref<16x1088xf32, #tpu.memory_space<vmem>>, vector<16x32xf32>
    %c0_59 = arith.constant 0 : index
    %c35_60 = arith.constant 35 : index
    %65 = vector.load %arg5[%c0_59, %c35_60] : memref<16x1088xf32, #tpu.memory_space<vmem>>, vector<16x32xf32>
    %66 = arith.maximumf %64, %65 : vector<16x32xf32>
    %67 = arith.maximumf %63, %66 : vector<16x32xf32>
    %c0_61 = arith.constant 0 : index
    %c0_62 = arith.constant 0 : index
    %c0_63 = arith.constant 0 : index
    %68 = vector.load %arg4[%c0_61, %c0_62, %c0_63] : memref<1x16x512xf32, #tpu.memory_space<vmem>>, vector<1x16x32xf32>
    %69 = vector.shape_cast %68 : vector<1x16x32xf32> to vector<16x32xf32>
    %70 = vector.shape_cast %67 : vector<16x32xf32> to vector<1x16x32xf32>
    tpu.vector_store %arg4[%c0_61, %c0_62, %c0_63], %70 {strides = array<i32>} : memref<1x16x512xf32, #tpu.memory_space<vmem>>, vector<1x16x32xf32>,
    %c0_64 = arith.constant 0 : index
    %c68_65 = arith.constant 68 : index
    %71 = vector.load %arg5[%c0_64, %c68_65] : memref<16x1088xf32, #tpu.memory_space<vmem>>, vector<16x32xf32>
    %c0_66 = arith.constant 0 : index
    %c69_67 = arith.constant 69 : index
    %72 = vector.load %arg5[%c0_66, %c69_67] : memref<16x1088xf32, #tpu.memory_space<vmem>>, vector<16x32xf32>
    %73 = arith.maximumf %71, %72 : vector<16x32xf32>
    %c0_68 = arith.constant 0 : index
    %c102 = arith.constant 102 : index
    %74 = vector.load %arg5[%c0_68, %c102] : memref<16x1088xf32, #tpu.memory_space<vmem>>, vector<16x32xf32>
    %c0_69 = arith.constant 0 : index
    %c103 = arith.constant 103 : index
    %75 = vector.load %arg5[%c0_69, %c103] : memref<16x1088xf32, #tpu.memory_space<vmem>>, vector<16x32xf32>
    %76 = arith.maximumf %74, %75 : vector<16x32xf32>
    %77 = arith.maximumf %73, %76 : vector<16x32xf32>
    %c0_70 = arith.constant 0 : index
    %c0_71 = arith.constant 0 : index
    %c32 = arith.constant 32 : index
    %78 = vector.load %arg4[%c0_70, %c0_71, %c32] : memref<1x16x512xf32, #tpu.memory_space<vmem>>, vector<1x16x32xf32>
    %79 = vector.shape_cast %78 : vector<1x16x32xf32> to vector<16x32xf32>
    %80 = vector.shape_cast %77 : vector<16x32xf32> to vector<1x16x32xf32>
    tpu.vector_store %arg4[%c0_70, %c0_71, %c32], %80 {strides = array<i32>} : memref<1x16x512xf32, #tpu.memory_space<vmem>>, vector<1x16x32xf32>,
    %c0_72 = arith.constant 0 : index
    %c136 = arith.constant 136 : index
    %81 = vector.load %arg5[%c0_72, %c136] : memref<16x1088xf32, #tpu.memory_space<vmem>>, vector<16x32xf32>
    %c0_73 = arith.constant 0 : index
    %c137 = arith.constant 137 : index
    %82 = vector.load %arg5[%c0_73, %c137] : memref<16x1088xf32, #tpu.memory_space<vmem>>, vector<16x32xf32>
    %83 = arith.maximumf %81, %82 : vector<16x32xf32>
    %c0_74 = arith.constant 0 : index
    %c170 = arith.constant 170 : index
    %84 = vector.load %arg5[%c0_74, %c170] : memref<16x1088xf32, #tpu.memory_space<vmem>>, vector<16x32xf32>
    %c0_75 = arith.constant 0 : index
    %c171 = arith.constant 171 : index
    %85 = vector.load %arg5[%c0_75, %c171] : memref<16x1088xf32, #tpu.memory_space<vmem>>, vector<16x32xf32>
    %86 = arith.maximumf %84, %85 : vector<16x32xf32>
    %87 = arith.maximumf %83, %86 : vector<16x32xf32>
    %c0_76 = arith.constant 0 : index
    %c0_77 = arith.constant 0 : index
    %c64 = arith.constant 64 : index
    %88 = vector.load %arg4[%c0_76, %c0_77, %c64] : memref<1x16x512xf32, #tpu.memory_space<vmem>>, vector<1x16x32xf32>
    %89 = vector.shape_cast %88 : vector<1x16x32xf32> to vector<16x32xf32>
    %90 = vector.shape_cast %87 : vector<16x32xf32> to vector<1x16x32xf32>
    tpu.vector_store %arg4[%c0_76, %c0_77, %c64], %90 {strides = array<i32>} : memref<1x16x512xf32, #tpu.memory_space<vmem>>, vector<1x16x32xf32>,
    %c0_78 = arith.constant 0 : index
    %c204 = arith.constant 204 : index
    %91 = vector.load %arg5[%c0_78, %c204] : memref<16x1088xf32, #tpu.memory_space<vmem>>, vector<16x32xf32>
    %c0_79 = arith.constant 0 : index
    %c205 = arith.constant 205 : index
    %92 = vector.load %arg5[%c0_79, %c205] : memref<16x1088xf32, #tpu.memory_space<vmem>>, vector<16x32xf32>
    %93 = arith.maximumf %91, %92 : vector<16x32xf32>
    %c0_80 = arith.constant 0 : index
    %c238 = arith.constant 238 : index
    %94 = vector.load %arg5[%c0_80, %c238] : memref<16x1088xf32, #tpu.memory_space<vmem>>, vector<16x32xf32>
    %c0_81 = arith.constant 0 : index
    %c239 = arith.constant 239 : index
    %95 = vector.load %arg5[%c0_81, %c239] : memref<16x1088xf32, #tpu.memory_space<vmem>>, vector<16x32xf32>
    %96 = arith.maximumf %94, %95 : vector<16x32xf32>
    %97 = arith.maximumf %93, %96 : vector<16x32xf32>
    %c0_82 = arith.constant 0 : index
    %c0_83 = arith.constant 0 : index
    %c96 = arith.constant 96 : index
    %98 = vector.load %arg4[%c0_82, %c0_83, %c96] : memref<1x16x512xf32, #tpu.memory_space<vmem>>, vector<1x16x32xf32>
    %99 = vector.shape_cast %98 : vector<1x16x32xf32> to vector<16x32xf32>
    %100 = vector.shape_cast %97 : vector<16x32xf32> to vector<1x16x32xf32>
    tpu.vector_store %arg4[%c0_82, %c0_83, %c96], %100 {strides = array<i32>} : memref<1x16x512xf32, #tpu.memory_space<vmem>>, vector<1x16x32xf32>,
    %c0_84 = arith.constant 0 : index
    %c272 = arith.constant 272 : index
    %101 = vector.load %arg5[%c0_84, %c272] : memref<16x1088xf32, #tpu.memory_space<vmem>>, vector<16x32xf32>
    %c0_85 = arith.constant 0 : index
    %c273 = arith.constant 273 : index
    %102 = vector.load %arg5[%c0_85, %c273] : memref<16x1088xf32, #tpu.memory_space<vmem>>, vector<16x32xf32>
    %103 = arith.maximumf %101, %102 : vector<16x32xf32>
    %c0_86 = arith.constant 0 : index
    %c306 = arith.constant 306 : index
    %104 = vector.load %arg5[%c0_86, %c306] : memref<16x1088xf32, #tpu.memory_space<vmem>>, vector<16x32xf32>
    %c0_87 = arith.constant 0 : index
    %c307 = arith.constant 307 : index
    %105 = vector.load %arg5[%c0_87, %c307] : memref<16x1088xf32, #tpu.memory_space<vmem>>, vector<16x32xf32>
    %106 = arith.maximumf %104, %105 : vector<16x32xf32>
    %107 = arith.maximumf %103, %106 : vector<16x32xf32>
    %c0_88 = arith.constant 0 : index
    %c0_89 = arith.constant 0 : index
    %c128 = arith.constant 128 : index
    %108 = vector.load %arg4[%c0_88, %c0_89, %c128] : memref<1x16x512xf32, #tpu.memory_space<vmem>>, vector<1x16x32xf32>
    %109 = vector.shape_cast %108 : vector<1x16x32xf32> to vector<16x32xf32>
    %110 = vector.shape_cast %107 : vector<16x32xf32> to vector<1x16x32xf32>
    tpu.vector_store %arg4[%c0_88, %c0_89, %c128], %110 {strides = array<i32>} : memref<1x16x512xf32, #tpu.memory_space<vmem>>, vector<1x16x32xf32>,
    %c0_90 = arith.constant 0 : index
    %c340 = arith.constant 340 : index
    %111 = vector.load %arg5[%c0_90, %c340] : memref<16x1088xf32, #tpu.memory_space<vmem>>, vector<16x32xf32>
    %c0_91 = arith.constant 0 : index
    %c341 = arith.constant 341 : index
    %112 = vector.load %arg5[%c0_91, %c341] : memref<16x1088xf32, #tpu.memory_space<vmem>>, vector<16x32xf32>
    %113 = arith.maximumf %111, %112 : vector<16x32xf32>
    %c0_92 = arith.constant 0 : index
    %c374 = arith.constant 374 : index
    %114 = vector.load %arg5[%c0_92, %c374] : memref<16x1088xf32, #tpu.memory_space<vmem>>, vector<16x32xf32>
    %c0_93 = arith.constant 0 : index
    %c375 = arith.constant 375 : index
    %115 = vector.load %arg5[%c0_93, %c375] : memref<16x1088xf32, #tpu.memory_space<vmem>>, vector<16x32xf32>
    %116 = arith.maximumf %114, %115 : vector<16x32xf32>
    %117 = arith.maximumf %113, %116 : vector<16x32xf32>
    %c0_94 = arith.constant 0 : index
    %c0_95 = arith.constant 0 : index
    %c160 = arith.constant 160 : index
    %118 = vector.load %arg4[%c0_94, %c0_95, %c160] : memref<1x16x512xf32, #tpu.memory_space<vmem>>, vector<1x16x32xf32>
    %119 = vector.shape_cast %118 : vector<1x16x32xf32> to vector<16x32xf32>
    %120 = vector.shape_cast %117 : vector<16x32xf32> to vector<1x16x32xf32>
    tpu.vector_store %arg4[%c0_94, %c0_95, %c160], %120 {strides = array<i32>} : memref<1x16x512xf32, #tpu.memory_space<vmem>>, vector<1x16x32xf32>,
    %c0_96 = arith.constant 0 : index
    %c408 = arith.constant 408 : index
    %121 = vector.load %arg5[%c0_96, %c408] : memref<16x1088xf32, #tpu.memory_space<vmem>>, vector<16x32xf32>
    %c0_97 = arith.constant 0 : index
    %c409 = arith.constant 409 : index
    %122 = vector.load %arg5[%c0_97, %c409] : memref<16x1088xf32, #tpu.memory_space<vmem>>, vector<16x32xf32>
    %123 = arith.maximumf %121, %122 : vector<16x32xf32>
    %c0_98 = arith.constant 0 : index
    %c442 = arith.constant 442 : index
    %124 = vector.load %arg5[%c0_98, %c442] : memref<16x1088xf32, #tpu.memory_space<vmem>>, vector<16x32xf32>
    %c0_99 = arith.constant 0 : index
    %c443 = arith.constant 443 : index
    %125 = vector.load %arg5[%c0_99, %c443] : memref<16x1088xf32, #tpu.memory_space<vmem>>, vector<16x32xf32>
    %126 = arith.maximumf %124, %125 : vector<16x32xf32>
    %127 = arith.maximumf %123, %126 : vector<16x32xf32>
    %c0_100 = arith.constant 0 : index
    %c0_101 = arith.constant 0 : index
    %c192 = arith.constant 192 : index
    %128 = vector.load %arg4[%c0_100, %c0_101, %c192] : memref<1x16x512xf32, #tpu.memory_space<vmem>>, vector<1x16x32xf32>
    %129 = vector.shape_cast %128 : vector<1x16x32xf32> to vector<16x32xf32>
    %130 = vector.shape_cast %127 : vector<16x32xf32> to vector<1x16x32xf32>
    tpu.vector_store %arg4[%c0_100, %c0_101, %c192], %130 {strides = array<i32>} : memref<1x16x512xf32, #tpu.memory_space<vmem>>, vector<1x16x32xf32>,
    %c0_102 = arith.constant 0 : index
    %c476 = arith.constant 476 : index
    %131 = vector.load %arg5[%c0_102, %c476] : memref<16x1088xf32, #tpu.memory_space<vmem>>, vector<16x32xf32>
    %c0_103 = arith.constant 0 : index
    %c477 = arith.constant 477 : index
    %132 = vector.load %arg5[%c0_103, %c477] : memref<16x1088xf32, #tpu.memory_space<vmem>>, vector<16x32xf32>
    %133 = arith.maximumf %131, %132 : vector<16x32xf32>
    %c0_104 = arith.constant 0 : index
    %c510 = arith.constant 510 : index
    %134 = vector.load %arg5[%c0_104, %c510] : memref<16x1088xf32, #tpu.memory_space<vmem>>, vector<16x32xf32>
    %c0_105 = arith.constant 0 : index
    %c511 = arith.constant 511 : index
    %135 = vector.load %arg5[%c0_105, %c511] : memref<16x1088xf32, #tpu.memory_space<vmem>>, vector<16x32xf32>
    %136 = arith.maximumf %134, %135 : vector<16x32xf32>
    %137 = arith.maximumf %133, %136 : vector<16x32xf32>
    %c0_106 = arith.constant 0 : index
    %c0_107 = arith.constant 0 : index
    %c224 = arith.constant 224 : index
    %138 = vector.load %arg4[%c0_106, %c0_107, %c224] : memref<1x16x512xf32, #tpu.memory_space<vmem>>, vector<1x16x32xf32>
    %139 = vector.shape_cast %138 : vector<1x16x32xf32> to vector<16x32xf32>
    %140 = vector.shape_cast %137 : vector<16x32xf32> to vector<1x16x32xf32>
    tpu.vector_store %arg4[%c0_106, %c0_107, %c224], %140 {strides = array<i32>} : memref<1x16x512xf32, #tpu.memory_space<vmem>>, vector<1x16x32xf32>,
    %c0_108 = arith.constant 0 : index
    %c544 = arith.constant 544 : index
    %141 = vector.load %arg5[%c0_108, %c544] : memref<16x1088xf32, #tpu.memory_space<vmem>>, vector<16x32xf32>
    %c0_109 = arith.constant 0 : index
    %c545 = arith.constant 545 : index
    %142 = vector.load %arg5[%c0_109, %c545] : memref<16x1088xf32, #tpu.memory_space<vmem>>, vector<16x32xf32>
    %143 = arith.maximumf %141, %142 : vector<16x32xf32>
    %c0_110 = arith.constant 0 : index
    %c578 = arith.constant 578 : index
    %144 = vector.load %arg5[%c0_110, %c578] : memref<16x1088xf32, #tpu.memory_space<vmem>>, vector<16x32xf32>
    %c0_111 = arith.constant 0 : index
    %c579 = arith.constant 579 : index
    %145 = vector.load %arg5[%c0_111, %c579] : memref<16x1088xf32, #tpu.memory_space<vmem>>, vector<16x32xf32>
    %146 = arith.maximumf %144, %145 : vector<16x32xf32>
    %147 = arith.maximumf %143, %146 : vector<16x32xf32>
    %c0_112 = arith.constant 0 : index
    %c0_113 = arith.constant 0 : index
    %c256 = arith.constant 256 : index
    %148 = vector.load %arg4[%c0_112, %c0_113, %c256] : memref<1x16x512xf32, #tpu.memory_space<vmem>>, vector<1x16x32xf32>
    %149 = vector.shape_cast %148 : vector<1x16x32xf32> to vector<16x32xf32>
    %150 = vector.shape_cast %147 : vector<16x32xf32> to vector<1x16x32xf32>
    tpu.vector_store %arg4[%c0_112, %c0_113, %c256], %150 {strides = array<i32>} : memref<1x16x512xf32, #tpu.memory_space<vmem>>, vector<1x16x32xf32>,
    %c0_114 = arith.constant 0 : index
    %c612 = arith.constant 612 : index
    %151 = vector.load %arg5[%c0_114, %c612] : memref<16x1088xf32, #tpu.memory_space<vmem>>, vector<16x32xf32>
    %c0_115 = arith.constant 0 : index
    %c613 = arith.constant 613 : index
    %152 = vector.load %arg5[%c0_115, %c613] : memref<16x1088xf32, #tpu.memory_space<vmem>>, vector<16x32xf32>
    %153 = arith.maximumf %151, %152 : vector<16x32xf32>
    %c0_116 = arith.constant 0 : index
    %c646 = arith.constant 646 : index
    %154 = vector.load %arg5[%c0_116, %c646] : memref<16x1088xf32, #tpu.memory_space<vmem>>, vector<16x32xf32>
    %c0_117 = arith.constant 0 : index
    %c647 = arith.constant 647 : index
    %155 = vector.load %arg5[%c0_117, %c647] : memref<16x1088xf32, #tpu.memory_space<vmem>>, vector<16x32xf32>
    %156 = arith.maximumf %154, %155 : vector<16x32xf32>
    %157 = arith.maximumf %153, %156 : vector<16x32xf32>
    %c0_118 = arith.constant 0 : index
    %c0_119 = arith.constant 0 : index
    %c288 = arith.constant 288 : index
    %158 = vector.load %arg4[%c0_118, %c0_119, %c288] : memref<1x16x512xf32, #tpu.memory_space<vmem>>, vector<1x16x32xf32>
    %159 = vector.shape_cast %158 : vector<1x16x32xf32> to vector<16x32xf32>
    %160 = vector.shape_cast %157 : vector<16x32xf32> to vector<1x16x32xf32>
    tpu.vector_store %arg4[%c0_118, %c0_119, %c288], %160 {strides = array<i32>} : memref<1x16x512xf32, #tpu.memory_space<vmem>>, vector<1x16x32xf32>,
    %c0_120 = arith.constant 0 : index
    %c680 = arith.constant 680 : index
    %161 = vector.load %arg5[%c0_120, %c680] : memref<16x1088xf32, #tpu.memory_space<vmem>>, vector<16x32xf32>
    %c0_121 = arith.constant 0 : index
    %c681 = arith.constant 681 : index
    %162 = vector.load %arg5[%c0_121, %c681] : memref<16x1088xf32, #tpu.memory_space<vmem>>, vector<16x32xf32>
    %163 = arith.maximumf %161, %162 : vector<16x32xf32>
    %c0_122 = arith.constant 0 : index
    %c714 = arith.constant 714 : index
    %164 = vector.load %arg5[%c0_122, %c714] : memref<16x1088xf32, #tpu.memory_space<vmem>>, vector<16x32xf32>
    %c0_123 = arith.constant 0 : index
    %c715 = arith.constant 715 : index
    %165 = vector.load %arg5[%c0_123, %c715] : memref<16x1088xf32, #tpu.memory_space<vmem>>, vector<16x32xf32>
    %166 = arith.maximumf %164, %165 : vector<16x32xf32>
    %167 = arith.maximumf %163, %166 : vector<16x32xf32>
    %c0_124 = arith.constant 0 : index
    %c0_125 = arith.constant 0 : index
    %c320 = arith.constant 320 : index
    %168 = vector.load %arg4[%c0_124, %c0_125, %c320] : memref<1x16x512xf32, #tpu.memory_space<vmem>>, vector<1x16x32xf32>
    %169 = vector.shape_cast %168 : vector<1x16x32xf32> to vector<16x32xf32>
    %170 = vector.shape_cast %167 : vector<16x32xf32> to vector<1x16x32xf32>
    tpu.vector_store %arg4[%c0_124, %c0_125, %c320], %170 {strides = array<i32>} : memref<1x16x512xf32, #tpu.memory_space<vmem>>, vector<1x16x32xf32>,
    %c0_126 = arith.constant 0 : index
    %c748 = arith.constant 748 : index
    %171 = vector.load %arg5[%c0_126, %c748] : memref<16x1088xf32, #tpu.memory_space<vmem>>, vector<16x32xf32>
    %c0_127 = arith.constant 0 : index
    %c749 = arith.constant 749 : index
    %172 = vector.load %arg5[%c0_127, %c749] : memref<16x1088xf32, #tpu.memory_space<vmem>>, vector<16x32xf32>
    %173 = arith.maximumf %171, %172 : vector<16x32xf32>
    %c0_128 = arith.constant 0 : index
    %c782 = arith.constant 782 : index
    %174 = vector.load %arg5[%c0_128, %c782] : memref<16x1088xf32, #tpu.memory_space<vmem>>, vector<16x32xf32>
    %c0_129 = arith.constant 0 : index
    %c783 = arith.constant 783 : index
    %175 = vector.load %arg5[%c0_129, %c783] : memref<16x1088xf32, #tpu.memory_space<vmem>>, vector<16x32xf32>
    %176 = arith.maximumf %174, %175 : vector<16x32xf32>
    %177 = arith.maximumf %173, %176 : vector<16x32xf32>
    %c0_130 = arith.constant 0 : index
    %c0_131 = arith.constant 0 : index
    %c352 = arith.constant 352 : index
    %178 = vector.load %arg4[%c0_130, %c0_131, %c352] : memref<1x16x512xf32, #tpu.memory_space<vmem>>, vector<1x16x32xf32>
    %179 = vector.shape_cast %178 : vector<1x16x32xf32> to vector<16x32xf32>
    %180 = vector.shape_cast %177 : vector<16x32xf32> to vector<1x16x32xf32>
    tpu.vector_store %arg4[%c0_130, %c0_131, %c352], %180 {strides = array<i32>} : memref<1x16x512xf32, #tpu.memory_space<vmem>>, vector<1x16x32xf32>,
    %c0_132 = arith.constant 0 : index
    %c816 = arith.constant 816 : index
    %181 = vector.load %arg5[%c0_132, %c816] : memref<16x1088xf32, #tpu.memory_space<vmem>>, vector<16x32xf32>
    %c0_133 = arith.constant 0 : index
    %c817 = arith.constant 817 : index
    %182 = vector.load %arg5[%c0_133, %c817] : memref<16x1088xf32, #tpu.memory_space<vmem>>, vector<16x32xf32>
    %183 = arith.maximumf %181, %182 : vector<16x32xf32>
    %c0_134 = arith.constant 0 : index
    %c850 = arith.constant 850 : index
    %184 = vector.load %arg5[%c0_134, %c850] : memref<16x1088xf32, #tpu.memory_space<vmem>>, vector<16x32xf32>
    %c0_135 = arith.constant 0 : index
    %c851 = arith.constant 851 : index
    %185 = vector.load %arg5[%c0_135, %c851] : memref<16x1088xf32, #tpu.memory_space<vmem>>, vector<16x32xf32>
    %186 = arith.maximumf %184, %185 : vector<16x32xf32>
    %187 = arith.maximumf %183, %186 : vector<16x32xf32>
    %c0_136 = arith.constant 0 : index
    %c0_137 = arith.constant 0 : index
    %c384 = arith.constant 384 : index
    %188 = vector.load %arg4[%c0_136, %c0_137, %c384] : memref<1x16x512xf32, #tpu.memory_space<vmem>>, vector<1x16x32xf32>
    %189 = vector.shape_cast %188 : vector<1x16x32xf32> to vector<16x32xf32>
    %190 = vector.shape_cast %187 : vector<16x32xf32> to vector<1x16x32xf32>
    tpu.vector_store %arg4[%c0_136, %c0_137, %c384], %190 {strides = array<i32>} : memref<1x16x512xf32, #tpu.memory_space<vmem>>, vector<1x16x32xf32>,
    %c0_138 = arith.constant 0 : index
    %c884 = arith.constant 884 : index
    %191 = vector.load %arg5[%c0_138, %c884] : memref<16x1088xf32, #tpu.memory_space<vmem>>, vector<16x32xf32>
    %c0_139 = arith.constant 0 : index
    %c885 = arith.constant 885 : index
    %192 = vector.load %arg5[%c0_139, %c885] : memref<16x1088xf32, #tpu.memory_space<vmem>>, vector<16x32xf32>
    %193 = arith.maximumf %191, %192 : vector<16x32xf32>
    %c0_140 = arith.constant 0 : index
    %c918 = arith.constant 918 : index
    %194 = vector.load %arg5[%c0_140, %c918] : memref<16x1088xf32, #tpu.memory_space<vmem>>, vector<16x32xf32>
    %c0_141 = arith.constant 0 : index
    %c919 = arith.constant 919 : index
    %195 = vector.load %arg5[%c0_141, %c919] : memref<16x1088xf32, #tpu.memory_space<vmem>>, vector<16x32xf32>
    %196 = arith.maximumf %194, %195 : vector<16x32xf32>
    %197 = arith.maximumf %193, %196 : vector<16x32xf32>
    %c0_142 = arith.constant 0 : index
    %c0_143 = arith.constant 0 : index
    %c416 = arith.constant 416 : index
    %198 = vector.load %arg4[%c0_142, %c0_143, %c416] : memref<1x16x512xf32, #tpu.memory_space<vmem>>, vector<1x16x32xf32>
    %199 = vector.shape_cast %198 : vector<1x16x32xf32> to vector<16x32xf32>
    %200 = vector.shape_cast %197 : vector<16x32xf32> to vector<1x16x32xf32>
    tpu.vector_store %arg4[%c0_142, %c0_143, %c416], %200 {strides = array<i32>} : memref<1x16x512xf32, #tpu.memory_space<vmem>>, vector<1x16x32xf32>,
    %c0_144 = arith.constant 0 : index
    %c952 = arith.constant 952 : index
    %201 = vector.load %arg5[%c0_144, %c952] : memref<16x1088xf32, #tpu.memory_space<vmem>>, vector<16x32xf32>
    %c0_145 = arith.constant 0 : index
    %c953 = arith.constant 953 : index
    %202 = vector.load %arg5[%c0_145, %c953] : memref<16x1088xf32, #tpu.memory_space<vmem>>, vector<16x32xf32>
    %203 = arith.maximumf %201, %202 : vector<16x32xf32>
    %c0_146 = arith.constant 0 : index
    %c986 = arith.constant 986 : index
    %204 = vector.load %arg5[%c0_146, %c986] : memref<16x1088xf32, #tpu.memory_space<vmem>>, vector<16x32xf32>
    %c0_147 = arith.constant 0 : index
    %c987 = arith.constant 987 : index
    %205 = vector.load %arg5[%c0_147, %c987] : memref<16x1088xf32, #tpu.memory_space<vmem>>, vector<16x32xf32>
    %206 = arith.maximumf %204, %205 : vector<16x32xf32>
    %207 = arith.maximumf %203, %206 : vector<16x32xf32>
    %c0_148 = arith.constant 0 : index
    %c0_149 = arith.constant 0 : index
    %c448 = arith.constant 448 : index
    %208 = vector.load %arg4[%c0_148, %c0_149, %c448] : memref<1x16x512xf32, #tpu.memory_space<vmem>>, vector<1x16x32xf32>
    %209 = vector.shape_cast %208 : vector<1x16x32xf32> to vector<16x32xf32>
    %210 = vector.shape_cast %207 : vector<16x32xf32> to vector<1x16x32xf32>
    tpu.vector_store %arg4[%c0_148, %c0_149, %c448], %210 {strides = array<i32>} : memref<1x16x512xf32, #tpu.memory_space<vmem>>, vector<1x16x32xf32>,
    %c0_150 = arith.constant 0 : index
    %c1020 = arith.constant 1020 : index
    %211 = vector.load %arg5[%c0_150, %c1020] : memref<16x1088xf32, #tpu.memory_space<vmem>>, vector<16x32xf32>
    %c0_151 = arith.constant 0 : index
    %c1021 = arith.constant 1021 : index
    %212 = vector.load %arg5[%c0_151, %c1021] : memref<16x1088xf32, #tpu.memory_space<vmem>>, vector<16x32xf32>
    %213 = arith.maximumf %211, %212 : vector<16x32xf32>
    %c0_152 = arith.constant 0 : index
    %c1054 = arith.constant 1054 : index
    %214 = vector.load %arg5[%c0_152, %c1054] : memref<16x1088xf32, #tpu.memory_space<vmem>>, vector<16x32xf32>
    %c0_153 = arith.constant 0 : index
    %c1055 = arith.constant 1055 : index
    %215 = vector.load %arg5[%c0_153, %c1055] : memref<16x1088xf32, #tpu.memory_space<vmem>>, vector<16x32xf32>
    %216 = arith.maximumf %214, %215 : vector<16x32xf32>
    %217 = arith.maximumf %213, %216 : vector<16x32xf32>
    %c0_154 = arith.constant 0 : index
    %c0_155 = arith.constant 0 : index
    %c480 = arith.constant 480 : index
    %218 = vector.load %arg4[%c0_154, %c0_155, %c480] : memref<1x16x512xf32, #tpu.memory_space<vmem>>, vector<1x16x32xf32>
    %219 = vector.shape_cast %218 : vector<1x16x32xf32> to vector<16x32xf32>
    %220 = vector.shape_cast %217 : vector<16x32xf32> to vector<1x16x32xf32>
    tpu.vector_store %arg4[%c0_154, %c0_155, %c480], %220 {strides = array<i32>} : memref<1x16x512xf32, #tpu.memory_space<vmem>>, vector<1x16x32xf32>,
    return
  }
  func.func @transform_0(%arg0: i32) -> (i32, i32, i32) {
    %c0_i32 = arith.constant 0 : i32
    %c0_i32_0 = arith.constant 0 : i32
    %c0_i32_1 = arith.constant 0 : i32
    return %arg0, %c0_i32, %c0_i32_0 : i32, i32, i32
  }
  func.func @transform_1(%arg0: i32) -> (i32, i32, i32) {
    %c0_i32 = arith.constant 0 : i32
    %c0_i32_0 = arith.constant 0 : i32
    %c0_i32_1 = arith.constant 0 : i32
    %c0_i32_2 = arith.constant 0 : i32
    return %c0_i32, %c0_i32_0, %c0_i32_1 : i32, i32, i32
  }
  func.func @transform_2(%arg0: i32) -> (i32, i32) {
    %c0_i32 = arith.constant 0 : i32
    %c0_i32_0 = arith.constant 0 : i32
    %c0_i32_1 = arith.constant 0 : i32
    return %c0_i32, %c0_i32_0 : i32, i32
  }
  func.func @transform_3(%arg0: i32) -> (i32, i32, i32) {
    %c0_i32 = arith.constant 0 : i32
    %c0_i32_0 = arith.constant 0 : i32
    %c0_i32_1 = arith.constant 0 : i32
    return %arg0, %c0_i32, %c0_i32_0 : i32, i32, i32
  }
}

module attributes {stable_mosaic.version = 11 : i64} {
  func.func @_conv_relu_pool_kernel(%arg0: i32, %arg1: memref<1x16x342xbf16, #tpu.memory_space<vmem>>, %arg2: memref<9x32x16xbf16, #tpu.memory_space<vmem>>, %arg3: memref<32x1xf32, #tpu.memory_space<vmem>>, %arg4: memref<1x32x128xf32, #tpu.memory_space<vmem>>, %arg5: memref<32x288xf32, #tpu.memory_space<vmem>>) attributes {dimension_semantics = [#tpu.dimension_semantics<parallel>], iteration_bounds = array<i64: 2>, scalar_prefetch = 0 : i64, scratch_operands = 1 : i64, tpu.core_type = #tpu.core_type<tc>, window_params = [{transform_indices = @transform_0, window_bounds = array<i64: 1, 16, 342>}, {pipeline_mode = #tpu.pipeline_mode<synchronous>, transform_indices = @transform_1, window_bounds = array<i64: 9, 32, 16>}, {pipeline_mode = #tpu.pipeline_mode<synchronous>, transform_indices = @transform_2, window_bounds = array<i64: 32, 1>}, {transform_indices = @transform_3, window_bounds = array<i64: 1, 32, 128>}]} {
    %cst = arith.constant 0.000000e+00 : f32
    %0 = vector.broadcast %cst : f32 to vector<32x288xf32>
    %c0 = arith.constant 0 : index
    %c0_0 = arith.constant 0 : index
    %c0_1 = arith.constant 0 : index
    %1 = vector.load %arg2[%c0, %c0_0, %c0_1] : memref<9x32x16xbf16, #tpu.memory_space<vmem>>, vector<1x32x16xbf16>
    %2 = vector.shape_cast %1 : vector<1x32x16xbf16> to vector<32x16xbf16>
    %c0_2 = arith.constant 0 : index
    %c0_3 = arith.constant 0 : index
    %c0_4 = arith.constant 0 : index
    %3 = vector.load %arg1[%c0_2, %c0_3, %c0_4] : memref<1x16x342xbf16, #tpu.memory_space<vmem>>, vector<1x16x288xbf16>
    %4 = vector.shape_cast %3 : vector<1x16x288xbf16> to vector<16x288xbf16>
    %cst_5 = arith.constant dense<0.000000e+00> : vector<32x288xf32>
    %5 = tpu.matmul %2, %4, %cst_5 {dimension_numbers = #tpu.dot_dimension_numbers<[1], [0], [0], [1], [0, 0, 1, 1], [], []>} : vector<32x16xbf16>, vector<16x288xbf16>, vector<32x288xf32> -> vector<32x288xf32>
    %6 = arith.addf %0, %5 : vector<32x288xf32>
    %c1 = arith.constant 1 : index
    %c0_6 = arith.constant 0 : index
    %c0_7 = arith.constant 0 : index
    %7 = vector.load %arg2[%c1, %c0_6, %c0_7] : memref<9x32x16xbf16, #tpu.memory_space<vmem>>, vector<1x32x16xbf16>
    %8 = vector.shape_cast %7 : vector<1x32x16xbf16> to vector<32x16xbf16>
    %c0_8 = arith.constant 0 : index
    %c0_9 = arith.constant 0 : index
    %c1_10 = arith.constant 1 : index
    %9 = vector.load %arg1[%c0_8, %c0_9, %c1_10] : memref<1x16x342xbf16, #tpu.memory_space<vmem>>, vector<1x16x288xbf16>
    %10 = vector.shape_cast %9 : vector<1x16x288xbf16> to vector<16x288xbf16>
    %cst_11 = arith.constant dense<0.000000e+00> : vector<32x288xf32>
    %11 = tpu.matmul %8, %10, %cst_11 {dimension_numbers = #tpu.dot_dimension_numbers<[1], [0], [0], [1], [0, 0, 1, 1], [], []>} : vector<32x16xbf16>, vector<16x288xbf16>, vector<32x288xf32> -> vector<32x288xf32>
    %12 = arith.addf %6, %11 : vector<32x288xf32>
    %c2 = arith.constant 2 : index
    %c0_12 = arith.constant 0 : index
    %c0_13 = arith.constant 0 : index
    %13 = vector.load %arg2[%c2, %c0_12, %c0_13] : memref<9x32x16xbf16, #tpu.memory_space<vmem>>, vector<1x32x16xbf16>
    %14 = vector.shape_cast %13 : vector<1x32x16xbf16> to vector<32x16xbf16>
    %c0_14 = arith.constant 0 : index
    %c0_15 = arith.constant 0 : index
    %c2_16 = arith.constant 2 : index
    %15 = vector.load %arg1[%c0_14, %c0_15, %c2_16] : memref<1x16x342xbf16, #tpu.memory_space<vmem>>, vector<1x16x288xbf16>
    %16 = vector.shape_cast %15 : vector<1x16x288xbf16> to vector<16x288xbf16>
    %cst_17 = arith.constant dense<0.000000e+00> : vector<32x288xf32>
    %17 = tpu.matmul %14, %16, %cst_17 {dimension_numbers = #tpu.dot_dimension_numbers<[1], [0], [0], [1], [0, 0, 1, 1], [], []>} : vector<32x16xbf16>, vector<16x288xbf16>, vector<32x288xf32> -> vector<32x288xf32>
    %18 = arith.addf %12, %17 : vector<32x288xf32>
    %c3 = arith.constant 3 : index
    %c0_18 = arith.constant 0 : index
    %c0_19 = arith.constant 0 : index
    %19 = vector.load %arg2[%c3, %c0_18, %c0_19] : memref<9x32x16xbf16, #tpu.memory_space<vmem>>, vector<1x32x16xbf16>
    %20 = vector.shape_cast %19 : vector<1x32x16xbf16> to vector<32x16xbf16>
    %c0_20 = arith.constant 0 : index
    %c0_21 = arith.constant 0 : index
    %c18 = arith.constant 18 : index
    %21 = vector.load %arg1[%c0_20, %c0_21, %c18] : memref<1x16x342xbf16, #tpu.memory_space<vmem>>, vector<1x16x288xbf16>
    %22 = vector.shape_cast %21 : vector<1x16x288xbf16> to vector<16x288xbf16>
    %cst_22 = arith.constant dense<0.000000e+00> : vector<32x288xf32>
    %23 = tpu.matmul %20, %22, %cst_22 {dimension_numbers = #tpu.dot_dimension_numbers<[1], [0], [0], [1], [0, 0, 1, 1], [], []>} : vector<32x16xbf16>, vector<16x288xbf16>, vector<32x288xf32> -> vector<32x288xf32>
    %24 = arith.addf %18, %23 : vector<32x288xf32>
    %c4 = arith.constant 4 : index
    %c0_23 = arith.constant 0 : index
    %c0_24 = arith.constant 0 : index
    %25 = vector.load %arg2[%c4, %c0_23, %c0_24] : memref<9x32x16xbf16, #tpu.memory_space<vmem>>, vector<1x32x16xbf16>
    %26 = vector.shape_cast %25 : vector<1x32x16xbf16> to vector<32x16xbf16>
    %c0_25 = arith.constant 0 : index
    %c0_26 = arith.constant 0 : index
    %c19 = arith.constant 19 : index
    %27 = vector.load %arg1[%c0_25, %c0_26, %c19] : memref<1x16x342xbf16, #tpu.memory_space<vmem>>, vector<1x16x288xbf16>
    %28 = vector.shape_cast %27 : vector<1x16x288xbf16> to vector<16x288xbf16>
    %cst_27 = arith.constant dense<0.000000e+00> : vector<32x288xf32>
    %29 = tpu.matmul %26, %28, %cst_27 {dimension_numbers = #tpu.dot_dimension_numbers<[1], [0], [0], [1], [0, 0, 1, 1], [], []>} : vector<32x16xbf16>, vector<16x288xbf16>, vector<32x288xf32> -> vector<32x288xf32>
    %30 = arith.addf %24, %29 : vector<32x288xf32>
    %c5 = arith.constant 5 : index
    %c0_28 = arith.constant 0 : index
    %c0_29 = arith.constant 0 : index
    %31 = vector.load %arg2[%c5, %c0_28, %c0_29] : memref<9x32x16xbf16, #tpu.memory_space<vmem>>, vector<1x32x16xbf16>
    %32 = vector.shape_cast %31 : vector<1x32x16xbf16> to vector<32x16xbf16>
    %c0_30 = arith.constant 0 : index
    %c0_31 = arith.constant 0 : index
    %c20 = arith.constant 20 : index
    %33 = vector.load %arg1[%c0_30, %c0_31, %c20] : memref<1x16x342xbf16, #tpu.memory_space<vmem>>, vector<1x16x288xbf16>
    %34 = vector.shape_cast %33 : vector<1x16x288xbf16> to vector<16x288xbf16>
    %cst_32 = arith.constant dense<0.000000e+00> : vector<32x288xf32>
    %35 = tpu.matmul %32, %34, %cst_32 {dimension_numbers = #tpu.dot_dimension_numbers<[1], [0], [0], [1], [0, 0, 1, 1], [], []>} : vector<32x16xbf16>, vector<16x288xbf16>, vector<32x288xf32> -> vector<32x288xf32>
    %36 = arith.addf %30, %35 : vector<32x288xf32>
    %c6 = arith.constant 6 : index
    %c0_33 = arith.constant 0 : index
    %c0_34 = arith.constant 0 : index
    %37 = vector.load %arg2[%c6, %c0_33, %c0_34] : memref<9x32x16xbf16, #tpu.memory_space<vmem>>, vector<1x32x16xbf16>
    %38 = vector.shape_cast %37 : vector<1x32x16xbf16> to vector<32x16xbf16>
    %c0_35 = arith.constant 0 : index
    %c0_36 = arith.constant 0 : index
    %c36 = arith.constant 36 : index
    %39 = vector.load %arg1[%c0_35, %c0_36, %c36] : memref<1x16x342xbf16, #tpu.memory_space<vmem>>, vector<1x16x288xbf16>
    %40 = vector.shape_cast %39 : vector<1x16x288xbf16> to vector<16x288xbf16>
    %cst_37 = arith.constant dense<0.000000e+00> : vector<32x288xf32>
    %41 = tpu.matmul %38, %40, %cst_37 {dimension_numbers = #tpu.dot_dimension_numbers<[1], [0], [0], [1], [0, 0, 1, 1], [], []>} : vector<32x16xbf16>, vector<16x288xbf16>, vector<32x288xf32> -> vector<32x288xf32>
    %42 = arith.addf %36, %41 : vector<32x288xf32>
    %c7 = arith.constant 7 : index
    %c0_38 = arith.constant 0 : index
    %c0_39 = arith.constant 0 : index
    %43 = vector.load %arg2[%c7, %c0_38, %c0_39] : memref<9x32x16xbf16, #tpu.memory_space<vmem>>, vector<1x32x16xbf16>
    %44 = vector.shape_cast %43 : vector<1x32x16xbf16> to vector<32x16xbf16>
    %c0_40 = arith.constant 0 : index
    %c0_41 = arith.constant 0 : index
    %c37 = arith.constant 37 : index
    %45 = vector.load %arg1[%c0_40, %c0_41, %c37] : memref<1x16x342xbf16, #tpu.memory_space<vmem>>, vector<1x16x288xbf16>
    %46 = vector.shape_cast %45 : vector<1x16x288xbf16> to vector<16x288xbf16>
    %cst_42 = arith.constant dense<0.000000e+00> : vector<32x288xf32>
    %47 = tpu.matmul %44, %46, %cst_42 {dimension_numbers = #tpu.dot_dimension_numbers<[1], [0], [0], [1], [0, 0, 1, 1], [], []>} : vector<32x16xbf16>, vector<16x288xbf16>, vector<32x288xf32> -> vector<32x288xf32>
    %48 = arith.addf %42, %47 : vector<32x288xf32>
    %c8 = arith.constant 8 : index
    %c0_43 = arith.constant 0 : index
    %c0_44 = arith.constant 0 : index
    %49 = vector.load %arg2[%c8, %c0_43, %c0_44] : memref<9x32x16xbf16, #tpu.memory_space<vmem>>, vector<1x32x16xbf16>
    %50 = vector.shape_cast %49 : vector<1x32x16xbf16> to vector<32x16xbf16>
    %c0_45 = arith.constant 0 : index
    %c0_46 = arith.constant 0 : index
    %c38 = arith.constant 38 : index
    %51 = vector.load %arg1[%c0_45, %c0_46, %c38] : memref<1x16x342xbf16, #tpu.memory_space<vmem>>, vector<1x16x288xbf16>
    %52 = vector.shape_cast %51 : vector<1x16x288xbf16> to vector<16x288xbf16>
    %cst_47 = arith.constant dense<0.000000e+00> : vector<32x288xf32>
    %53 = tpu.matmul %50, %52, %cst_47 {dimension_numbers = #tpu.dot_dimension_numbers<[1], [0], [0], [1], [0, 0, 1, 1], [], []>} : vector<32x16xbf16>, vector<16x288xbf16>, vector<32x288xf32> -> vector<32x288xf32>
    %54 = arith.addf %48, %53 : vector<32x288xf32>
    %c0_48 = arith.constant 0 : index
    %c0_49 = arith.constant 0 : index
    %55 = vector.load %arg3[%c0_48, %c0_49] : memref<32x1xf32, #tpu.memory_space<vmem>>, vector<32x1xf32>
    %56 = vector.broadcast %55 : vector<32x1xf32> to vector<32x288xf32>
    %57 = arith.addf %54, %56 : vector<32x288xf32>
    %cst_50 = arith.constant 0.000000e+00 : f32
    %58 = vector.broadcast %cst_50 : f32 to vector<32x288xf32>
    %59 = arith.maximumf %57, %58 : vector<32x288xf32>
    %c0_51 = arith.constant 0 : index
    %c0_52 = arith.constant 0 : index
    %60 = vector.load %arg5[%c0_51, %c0_52] : memref<32x288xf32, #tpu.memory_space<vmem>>, vector<32x288xf32>
    tpu.vector_store %arg5[%c0_51, %c0_52], %59 {strides = array<i32>} : memref<32x288xf32, #tpu.memory_space<vmem>>, vector<32x288xf32>,
    %c0_53 = arith.constant 0 : index
    %c0_54 = arith.constant 0 : index
    %61 = vector.load %arg5[%c0_53, %c0_54] : memref<32x288xf32, #tpu.memory_space<vmem>>, vector<32x16xf32>
    %c0_55 = arith.constant 0 : index
    %c1_56 = arith.constant 1 : index
    %62 = vector.load %arg5[%c0_55, %c1_56] : memref<32x288xf32, #tpu.memory_space<vmem>>, vector<32x16xf32>
    %63 = arith.maximumf %61, %62 : vector<32x16xf32>
    %c0_57 = arith.constant 0 : index
    %c18_58 = arith.constant 18 : index
    %64 = vector.load %arg5[%c0_57, %c18_58] : memref<32x288xf32, #tpu.memory_space<vmem>>, vector<32x16xf32>
    %c0_59 = arith.constant 0 : index
    %c19_60 = arith.constant 19 : index
    %65 = vector.load %arg5[%c0_59, %c19_60] : memref<32x288xf32, #tpu.memory_space<vmem>>, vector<32x16xf32>
    %66 = arith.maximumf %64, %65 : vector<32x16xf32>
    %67 = arith.maximumf %63, %66 : vector<32x16xf32>
    %c0_61 = arith.constant 0 : index
    %c0_62 = arith.constant 0 : index
    %c0_63 = arith.constant 0 : index
    %68 = vector.load %arg4[%c0_61, %c0_62, %c0_63] : memref<1x32x128xf32, #tpu.memory_space<vmem>>, vector<1x32x16xf32>
    %69 = vector.shape_cast %68 : vector<1x32x16xf32> to vector<32x16xf32>
    %70 = vector.shape_cast %67 : vector<32x16xf32> to vector<1x32x16xf32>
    tpu.vector_store %arg4[%c0_61, %c0_62, %c0_63], %70 {strides = array<i32>} : memref<1x32x128xf32, #tpu.memory_space<vmem>>, vector<1x32x16xf32>,
    %c0_64 = arith.constant 0 : index
    %c36_65 = arith.constant 36 : index
    %71 = vector.load %arg5[%c0_64, %c36_65] : memref<32x288xf32, #tpu.memory_space<vmem>>, vector<32x16xf32>
    %c0_66 = arith.constant 0 : index
    %c37_67 = arith.constant 37 : index
    %72 = vector.load %arg5[%c0_66, %c37_67] : memref<32x288xf32, #tpu.memory_space<vmem>>, vector<32x16xf32>
    %73 = arith.maximumf %71, %72 : vector<32x16xf32>
    %c0_68 = arith.constant 0 : index
    %c54 = arith.constant 54 : index
    %74 = vector.load %arg5[%c0_68, %c54] : memref<32x288xf32, #tpu.memory_space<vmem>>, vector<32x16xf32>
    %c0_69 = arith.constant 0 : index
    %c55 = arith.constant 55 : index
    %75 = vector.load %arg5[%c0_69, %c55] : memref<32x288xf32, #tpu.memory_space<vmem>>, vector<32x16xf32>
    %76 = arith.maximumf %74, %75 : vector<32x16xf32>
    %77 = arith.maximumf %73, %76 : vector<32x16xf32>
    %c0_70 = arith.constant 0 : index
    %c0_71 = arith.constant 0 : index
    %c16 = arith.constant 16 : index
    %78 = vector.load %arg4[%c0_70, %c0_71, %c16] : memref<1x32x128xf32, #tpu.memory_space<vmem>>, vector<1x32x16xf32>
    %79 = vector.shape_cast %78 : vector<1x32x16xf32> to vector<32x16xf32>
    %80 = vector.shape_cast %77 : vector<32x16xf32> to vector<1x32x16xf32>
    tpu.vector_store %arg4[%c0_70, %c0_71, %c16], %80 {strides = array<i32>} : memref<1x32x128xf32, #tpu.memory_space<vmem>>, vector<1x32x16xf32>,
    %c0_72 = arith.constant 0 : index
    %c72 = arith.constant 72 : index
    %81 = vector.load %arg5[%c0_72, %c72] : memref<32x288xf32, #tpu.memory_space<vmem>>, vector<32x16xf32>
    %c0_73 = arith.constant 0 : index
    %c73 = arith.constant 73 : index
    %82 = vector.load %arg5[%c0_73, %c73] : memref<32x288xf32, #tpu.memory_space<vmem>>, vector<32x16xf32>
    %83 = arith.maximumf %81, %82 : vector<32x16xf32>
    %c0_74 = arith.constant 0 : index
    %c90 = arith.constant 90 : index
    %84 = vector.load %arg5[%c0_74, %c90] : memref<32x288xf32, #tpu.memory_space<vmem>>, vector<32x16xf32>
    %c0_75 = arith.constant 0 : index
    %c91 = arith.constant 91 : index
    %85 = vector.load %arg5[%c0_75, %c91] : memref<32x288xf32, #tpu.memory_space<vmem>>, vector<32x16xf32>
    %86 = arith.maximumf %84, %85 : vector<32x16xf32>
    %87 = arith.maximumf %83, %86 : vector<32x16xf32>
    %c0_76 = arith.constant 0 : index
    %c0_77 = arith.constant 0 : index
    %c32 = arith.constant 32 : index
    %88 = vector.load %arg4[%c0_76, %c0_77, %c32] : memref<1x32x128xf32, #tpu.memory_space<vmem>>, vector<1x32x16xf32>
    %89 = vector.shape_cast %88 : vector<1x32x16xf32> to vector<32x16xf32>
    %90 = vector.shape_cast %87 : vector<32x16xf32> to vector<1x32x16xf32>
    tpu.vector_store %arg4[%c0_76, %c0_77, %c32], %90 {strides = array<i32>} : memref<1x32x128xf32, #tpu.memory_space<vmem>>, vector<1x32x16xf32>,
    %c0_78 = arith.constant 0 : index
    %c108 = arith.constant 108 : index
    %91 = vector.load %arg5[%c0_78, %c108] : memref<32x288xf32, #tpu.memory_space<vmem>>, vector<32x16xf32>
    %c0_79 = arith.constant 0 : index
    %c109 = arith.constant 109 : index
    %92 = vector.load %arg5[%c0_79, %c109] : memref<32x288xf32, #tpu.memory_space<vmem>>, vector<32x16xf32>
    %93 = arith.maximumf %91, %92 : vector<32x16xf32>
    %c0_80 = arith.constant 0 : index
    %c126 = arith.constant 126 : index
    %94 = vector.load %arg5[%c0_80, %c126] : memref<32x288xf32, #tpu.memory_space<vmem>>, vector<32x16xf32>
    %c0_81 = arith.constant 0 : index
    %c127 = arith.constant 127 : index
    %95 = vector.load %arg5[%c0_81, %c127] : memref<32x288xf32, #tpu.memory_space<vmem>>, vector<32x16xf32>
    %96 = arith.maximumf %94, %95 : vector<32x16xf32>
    %97 = arith.maximumf %93, %96 : vector<32x16xf32>
    %c0_82 = arith.constant 0 : index
    %c0_83 = arith.constant 0 : index
    %c48 = arith.constant 48 : index
    %98 = vector.load %arg4[%c0_82, %c0_83, %c48] : memref<1x32x128xf32, #tpu.memory_space<vmem>>, vector<1x32x16xf32>
    %99 = vector.shape_cast %98 : vector<1x32x16xf32> to vector<32x16xf32>
    %100 = vector.shape_cast %97 : vector<32x16xf32> to vector<1x32x16xf32>
    tpu.vector_store %arg4[%c0_82, %c0_83, %c48], %100 {strides = array<i32>} : memref<1x32x128xf32, #tpu.memory_space<vmem>>, vector<1x32x16xf32>,
    %c0_84 = arith.constant 0 : index
    %c144 = arith.constant 144 : index
    %101 = vector.load %arg5[%c0_84, %c144] : memref<32x288xf32, #tpu.memory_space<vmem>>, vector<32x16xf32>
    %c0_85 = arith.constant 0 : index
    %c145 = arith.constant 145 : index
    %102 = vector.load %arg5[%c0_85, %c145] : memref<32x288xf32, #tpu.memory_space<vmem>>, vector<32x16xf32>
    %103 = arith.maximumf %101, %102 : vector<32x16xf32>
    %c0_86 = arith.constant 0 : index
    %c162 = arith.constant 162 : index
    %104 = vector.load %arg5[%c0_86, %c162] : memref<32x288xf32, #tpu.memory_space<vmem>>, vector<32x16xf32>
    %c0_87 = arith.constant 0 : index
    %c163 = arith.constant 163 : index
    %105 = vector.load %arg5[%c0_87, %c163] : memref<32x288xf32, #tpu.memory_space<vmem>>, vector<32x16xf32>
    %106 = arith.maximumf %104, %105 : vector<32x16xf32>
    %107 = arith.maximumf %103, %106 : vector<32x16xf32>
    %c0_88 = arith.constant 0 : index
    %c0_89 = arith.constant 0 : index
    %c64 = arith.constant 64 : index
    %108 = vector.load %arg4[%c0_88, %c0_89, %c64] : memref<1x32x128xf32, #tpu.memory_space<vmem>>, vector<1x32x16xf32>
    %109 = vector.shape_cast %108 : vector<1x32x16xf32> to vector<32x16xf32>
    %110 = vector.shape_cast %107 : vector<32x16xf32> to vector<1x32x16xf32>
    tpu.vector_store %arg4[%c0_88, %c0_89, %c64], %110 {strides = array<i32>} : memref<1x32x128xf32, #tpu.memory_space<vmem>>, vector<1x32x16xf32>,
    %c0_90 = arith.constant 0 : index
    %c180 = arith.constant 180 : index
    %111 = vector.load %arg5[%c0_90, %c180] : memref<32x288xf32, #tpu.memory_space<vmem>>, vector<32x16xf32>
    %c0_91 = arith.constant 0 : index
    %c181 = arith.constant 181 : index
    %112 = vector.load %arg5[%c0_91, %c181] : memref<32x288xf32, #tpu.memory_space<vmem>>, vector<32x16xf32>
    %113 = arith.maximumf %111, %112 : vector<32x16xf32>
    %c0_92 = arith.constant 0 : index
    %c198 = arith.constant 198 : index
    %114 = vector.load %arg5[%c0_92, %c198] : memref<32x288xf32, #tpu.memory_space<vmem>>, vector<32x16xf32>
    %c0_93 = arith.constant 0 : index
    %c199 = arith.constant 199 : index
    %115 = vector.load %arg5[%c0_93, %c199] : memref<32x288xf32, #tpu.memory_space<vmem>>, vector<32x16xf32>
    %116 = arith.maximumf %114, %115 : vector<32x16xf32>
    %117 = arith.maximumf %113, %116 : vector<32x16xf32>
    %c0_94 = arith.constant 0 : index
    %c0_95 = arith.constant 0 : index
    %c80 = arith.constant 80 : index
    %118 = vector.load %arg4[%c0_94, %c0_95, %c80] : memref<1x32x128xf32, #tpu.memory_space<vmem>>, vector<1x32x16xf32>
    %119 = vector.shape_cast %118 : vector<1x32x16xf32> to vector<32x16xf32>
    %120 = vector.shape_cast %117 : vector<32x16xf32> to vector<1x32x16xf32>
    tpu.vector_store %arg4[%c0_94, %c0_95, %c80], %120 {strides = array<i32>} : memref<1x32x128xf32, #tpu.memory_space<vmem>>, vector<1x32x16xf32>,
    %c0_96 = arith.constant 0 : index
    %c216 = arith.constant 216 : index
    %121 = vector.load %arg5[%c0_96, %c216] : memref<32x288xf32, #tpu.memory_space<vmem>>, vector<32x16xf32>
    %c0_97 = arith.constant 0 : index
    %c217 = arith.constant 217 : index
    %122 = vector.load %arg5[%c0_97, %c217] : memref<32x288xf32, #tpu.memory_space<vmem>>, vector<32x16xf32>
    %123 = arith.maximumf %121, %122 : vector<32x16xf32>
    %c0_98 = arith.constant 0 : index
    %c234 = arith.constant 234 : index
    %124 = vector.load %arg5[%c0_98, %c234] : memref<32x288xf32, #tpu.memory_space<vmem>>, vector<32x16xf32>
    %c0_99 = arith.constant 0 : index
    %c235 = arith.constant 235 : index
    %125 = vector.load %arg5[%c0_99, %c235] : memref<32x288xf32, #tpu.memory_space<vmem>>, vector<32x16xf32>
    %126 = arith.maximumf %124, %125 : vector<32x16xf32>
    %127 = arith.maximumf %123, %126 : vector<32x16xf32>
    %c0_100 = arith.constant 0 : index
    %c0_101 = arith.constant 0 : index
    %c96 = arith.constant 96 : index
    %128 = vector.load %arg4[%c0_100, %c0_101, %c96] : memref<1x32x128xf32, #tpu.memory_space<vmem>>, vector<1x32x16xf32>
    %129 = vector.shape_cast %128 : vector<1x32x16xf32> to vector<32x16xf32>
    %130 = vector.shape_cast %127 : vector<32x16xf32> to vector<1x32x16xf32>
    tpu.vector_store %arg4[%c0_100, %c0_101, %c96], %130 {strides = array<i32>} : memref<1x32x128xf32, #tpu.memory_space<vmem>>, vector<1x32x16xf32>,
    %c0_102 = arith.constant 0 : index
    %c252 = arith.constant 252 : index
    %131 = vector.load %arg5[%c0_102, %c252] : memref<32x288xf32, #tpu.memory_space<vmem>>, vector<32x16xf32>
    %c0_103 = arith.constant 0 : index
    %c253 = arith.constant 253 : index
    %132 = vector.load %arg5[%c0_103, %c253] : memref<32x288xf32, #tpu.memory_space<vmem>>, vector<32x16xf32>
    %133 = arith.maximumf %131, %132 : vector<32x16xf32>
    %c0_104 = arith.constant 0 : index
    %c270 = arith.constant 270 : index
    %134 = vector.load %arg5[%c0_104, %c270] : memref<32x288xf32, #tpu.memory_space<vmem>>, vector<32x16xf32>
    %c0_105 = arith.constant 0 : index
    %c271 = arith.constant 271 : index
    %135 = vector.load %arg5[%c0_105, %c271] : memref<32x288xf32, #tpu.memory_space<vmem>>, vector<32x16xf32>
    %136 = arith.maximumf %134, %135 : vector<32x16xf32>
    %137 = arith.maximumf %133, %136 : vector<32x16xf32>
    %c0_106 = arith.constant 0 : index
    %c0_107 = arith.constant 0 : index
    %c112 = arith.constant 112 : index
    %138 = vector.load %arg4[%c0_106, %c0_107, %c112] : memref<1x32x128xf32, #tpu.memory_space<vmem>>, vector<1x32x16xf32>
    %139 = vector.shape_cast %138 : vector<1x32x16xf32> to vector<32x16xf32>
    %140 = vector.shape_cast %137 : vector<32x16xf32> to vector<1x32x16xf32>
    tpu.vector_store %arg4[%c0_106, %c0_107, %c112], %140 {strides = array<i32>} : memref<1x32x128xf32, #tpu.memory_space<vmem>>, vector<1x32x16xf32>,
    return
  }
  func.func @transform_0(%arg0: i32) -> (i32, i32, i32) {
    %c0_i32 = arith.constant 0 : i32
    %c0_i32_0 = arith.constant 0 : i32
    %c0_i32_1 = arith.constant 0 : i32
    return %arg0, %c0_i32, %c0_i32_0 : i32, i32, i32
  }
  func.func @transform_1(%arg0: i32) -> (i32, i32, i32) {
    %c0_i32 = arith.constant 0 : i32
    %c0_i32_0 = arith.constant 0 : i32
    %c0_i32_1 = arith.constant 0 : i32
    %c0_i32_2 = arith.constant 0 : i32
    return %c0_i32, %c0_i32_0, %c0_i32_1 : i32, i32, i32
  }
  func.func @transform_2(%arg0: i32) -> (i32, i32) {
    %c0_i32 = arith.constant 0 : i32
    %c0_i32_0 = arith.constant 0 : i32
    %c0_i32_1 = arith.constant 0 : i32
    return %c0_i32, %c0_i32_0 : i32, i32
  }
  func.func @transform_3(%arg0: i32) -> (i32, i32, i32) {
    %c0_i32 = arith.constant 0 : i32
    %c0_i32_0 = arith.constant 0 : i32
    %c0_i32_1 = arith.constant 0 : i32
    return %arg0, %c0_i32, %c0_i32_0 : i32, i32, i32
  }
}

module attributes {stable_mosaic.version = 11 : i64} {
  func.func @_mlp_head_kernel(%arg0: i32, %arg1: memref<2x2048xbf16, #tpu.memory_space<vmem>>, %arg2: memref<2048x512xbf16, #tpu.memory_space<vmem>>, %arg3: memref<1x512xf32, #tpu.memory_space<vmem>>, %arg4: memref<512x10xbf16, #tpu.memory_space<vmem>>, %arg5: memref<1x10xf32, #tpu.memory_space<vmem>>, %arg6: memref<2x10xf32, #tpu.memory_space<vmem>>) attributes {dimension_semantics = [#tpu.dimension_semantics<parallel>], iteration_bounds = array<i64: 1>, scalar_prefetch = 0 : i64, scratch_operands = 0 : i64, tpu.core_type = #tpu.core_type<tc>, window_params = [{transform_indices = @transform_0, window_bounds = array<i64: 2, 2048>}, {pipeline_mode = #tpu.pipeline_mode<synchronous>, transform_indices = @transform_1, window_bounds = array<i64: 2048, 512>}, {pipeline_mode = #tpu.pipeline_mode<synchronous>, transform_indices = @transform_2, window_bounds = array<i64: 1, 512>}, {pipeline_mode = #tpu.pipeline_mode<synchronous>, transform_indices = @transform_3, window_bounds = array<i64: 512, 10>}, {pipeline_mode = #tpu.pipeline_mode<synchronous>, transform_indices = @transform_4, window_bounds = array<i64: 1, 10>}, {transform_indices = @transform_5, window_bounds = array<i64: 2, 10>}]} {
    %c0 = arith.constant 0 : index
    %c0_0 = arith.constant 0 : index
    %0 = vector.load %arg1[%c0, %c0_0] : memref<2x2048xbf16, #tpu.memory_space<vmem>>, vector<2x2048xbf16>
    %c0_1 = arith.constant 0 : index
    %c0_2 = arith.constant 0 : index
    %1 = vector.load %arg2[%c0_1, %c0_2] : memref<2048x512xbf16, #tpu.memory_space<vmem>>, vector<2048x512xbf16>
    %cst = arith.constant dense<0.000000e+00> : vector<2x512xf32>
    %2 = tpu.matmul %0, %1, %cst {dimension_numbers = #tpu.dot_dimension_numbers<[1], [0], [0], [1], [0, 0, 1, 1], [], []>} : vector<2x2048xbf16>, vector<2048x512xbf16>, vector<2x512xf32> -> vector<2x512xf32>
    %c0_3 = arith.constant 0 : index
    %c0_4 = arith.constant 0 : index
    %3 = vector.load %arg3[%c0_3, %c0_4] : memref<1x512xf32, #tpu.memory_space<vmem>>, vector<1x512xf32>
    %4 = vector.broadcast %3 : vector<1x512xf32> to vector<2x512xf32>
    %5 = arith.addf %2, %4 : vector<2x512xf32>
    %cst_5 = arith.constant 0.000000e+00 : f32
    %6 = vector.broadcast %cst_5 : f32 to vector<2x512xf32>
    %7 = arith.maximumf %5, %6 : vector<2x512xf32>
    %8 = arith.truncf %7 : vector<2x512xf32> to vector<2x512xbf16>
    %c0_6 = arith.constant 0 : index
    %c0_7 = arith.constant 0 : index
    %9 = vector.load %arg4[%c0_6, %c0_7] : memref<512x10xbf16, #tpu.memory_space<vmem>>, vector<512x10xbf16>
    %cst_8 = arith.constant dense<0.000000e+00> : vector<2x10xf32>
    %10 = tpu.matmul %8, %9, %cst_8 {dimension_numbers = #tpu.dot_dimension_numbers<[1], [0], [0], [1], [0, 0, 1, 1], [], []>} : vector<2x512xbf16>, vector<512x10xbf16>, vector<2x10xf32> -> vector<2x10xf32>
    %c0_9 = arith.constant 0 : index
    %c0_10 = arith.constant 0 : index
    %11 = vector.load %arg5[%c0_9, %c0_10] : memref<1x10xf32, #tpu.memory_space<vmem>>, vector<1x10xf32>
    %12 = vector.broadcast %11 : vector<1x10xf32> to vector<2x10xf32>
    %13 = arith.addf %10, %12 : vector<2x10xf32>
    %c0_11 = arith.constant 0 : index
    %c0_12 = arith.constant 0 : index
    %14 = vector.load %arg6[%c0_11, %c0_12] : memref<2x10xf32, #tpu.memory_space<vmem>>, vector<2x10xf32>
    tpu.vector_store %arg6[%c0_11, %c0_12], %13 {strides = array<i32>} : memref<2x10xf32, #tpu.memory_space<vmem>>, vector<2x10xf32>,
    return
  }
  func.func @transform_0(%arg0: i32) -> (i32, i32) {
    %c0_i32 = arith.constant 0 : i32
    %c0_i32_0 = arith.constant 0 : i32
    return %arg0, %c0_i32 : i32, i32
  }
  func.func @transform_1(%arg0: i32) -> (i32, i32) {
    %c0_i32 = arith.constant 0 : i32
    %c0_i32_0 = arith.constant 0 : i32
    %c0_i32_1 = arith.constant 0 : i32
    return %c0_i32, %c0_i32_0 : i32, i32
  }
  func.func @transform_2(%arg0: i32) -> (i32, i32) {
    %c0_i32 = arith.constant 0 : i32
    %c0_i32_0 = arith.constant 0 : i32
    %c0_i32_1 = arith.constant 0 : i32
    return %c0_i32, %c0_i32_0 : i32, i32
  }
  func.func @transform_3(%arg0: i32) -> (i32, i32) {
    %c0_i32 = arith.constant 0 : i32
    %c0_i32_0 = arith.constant 0 : i32
    %c0_i32_1 = arith.constant 0 : i32
    return %c0_i32, %c0_i32_0 : i32, i32
  }
  func.func @transform_4(%arg0: i32) -> (i32, i32) {
    %c0_i32 = arith.constant 0 : i32
    %c0_i32_0 = arith.constant 0 : i32
    %c0_i32_1 = arith.constant 0 : i32
    return %c0_i32, %c0_i32_0 : i32, i32
  }
  func.func @transform_5(%arg0: i32) -> (i32, i32) {
    %c0_i32 = arith.constant 0 : i32
    %c0_i32_0 = arith.constant 0 : i32
    return %arg0, %c0_i32 : i32, i32
  }
}

</mosaic_0001>

<llo_original>
// kernel: simple_cnn_forward.4
$region0: #{simple_cnn_forward.4}
  #allocation0 [shape = 'u32[]', space=smem, size = 0x4, offset = 0x4, fixed_abs, tag = 'smem constant byte address 0x4 - core index']
  #allocation1 [shape = 'u32[144,128]{1,0:T(1,128)}', space=vmem, size = 0x12000, scoped, tag = 'internal scratch']
  #allocation2 [shape = 'f32[32,288]{1,0:T(8,128)}', space=vmem, size = 0xc000, scoped, tag = 'scratch operand']
  %s0 = inlined_call_operand.vmem [shape: bf16[2,16,342], index: 0, kind: input, shape index: {}]
  %s1 = inlined_call_operand.vmem [shape: bf16[9,32,16], index: 1, kind: input, shape index: {}]
  %s2 = inlined_call_operand.vmem [shape: f32[32,1], index: 2, kind: input, shape index: {}]
  %s3 = inlined_call_operand.vmem [shape: f32[2,32,128], index: 3, kind: output, shape index: {}]
  %s4 = sld [smem:[#allocation0]]
  $region45: #{simple_cnn_forward.4} parent=0
    _
  %s6 = ssub.s32 1, %s4
  %s7 = scalar_select 0, %s6, %s4
  loop: start=0, step=1, limit=4
  $region2: #{simple_cnn_forward.4} parent=0 // loop_pre_header
    _
  $region3: #{simple_cnn_forward.4} parent=0 // loop_header
    %s9 = sphi 0, %s13
    %p10 = scmp.ge.s32.totalorder %s9, 4
    %s19 = sphi 0, %s21
    %s22 = sphi 0, %s19
    %s23 = sphi 0, %s22
    %s39 = sphi 0, %s23
    %s43 = sphi 0, %s43
    %s45 = sphi 0, %s43
    %s46 = sphi 0, %s45
    %s60 = sphi 0, %s46
    %s64 = sphi 0, %s64
    %s66 = sphi 0, %s64
    %s67 = sphi 0, %s66
    %s81 = sphi 0, %s67
    %s87 = sphi 0, %s89
    %s90 = sphi 0, %s87
    %s91 = sphi 0, %s90
    %s107 = sphi 0, %s91
  $region4: #{simple_cnn_forward.4} parent=0 // loop_header_branch
    %12 = sbr.rel (%p10) target = $region8
  $region5: #{simple_cnn_forward.4} parent=0 // loop_body
    %s14 = ssub.s32 %s9, 1
    %s15 = ssub.s32 %s9, 2
    %s16 = sadd.s32 %s9, 1
    %s17 = ssub.s32 %s9, %s16
    %p18 = scmp.eq.s32.totalorder %s17, 0
    %s20 = sadd.s32 %s19, 1
    %s21 = scalar_select %p18, %s19, %s20
    %p24 = pneg %p18
    %p25 = scmp.eq.s32.totalorder %s9, 1
    %p26 = por %p24, %p25
    %p27 = scmp.ne.s32.totalorder %s19, %s22
    %p28 = scmp.eq.s32.totalorder %s9, 0
    %p29 = por %p27, %p28
    %p30 = scmp.ne.s32.totalorder %s19, %s22
    %p31 = scmp.eq.s32.totalorder %s14, 1
    %p32 = por %p30, %p31
    %p33 = scmp.ne.s32.totalorder %s22, %s23
    %p34 = scmp.eq.s32.totalorder %s14, 0
    %p35 = por %p33, %p34
    %p36 = scmp.ne.s32.totalorder %s22, %s23
    %p37 = scmp.eq.s32.totalorder %s15, 1
    %p38 = por %p36, %p37
    %p40 = scmp.ne.s32.totalorder %s23, %s39
    %p41 = scmp.eq.s32.totalorder %s15, 0
    %p42 = por %p40, %p41
    %s44 = sadd.s32 %s43, 1
    %p47 = scmp.eq.s32.totalorder %s9, 1
    %p48 = scmp.ne.s32.totalorder %s43, %s45
    %p49 = scmp.eq.s32.totalorder %s9, 0
    %p50 = por %p48, %p49
    %p51 = scmp.ne.s32.totalorder %s43, %s45
    %p52 = scmp.eq.s32.totalorder %s14, 1
    %p53 = por %p51, %p52
    %p54 = scmp.ne.s32.totalorder %s45, %s46
    %p55 = scmp.eq.s32.totalorder %s14, 0
    %p56 = por %p54, %p55
    %p57 = scmp.ne.s32.totalorder %s45, %s46
    %p58 = scmp.eq.s32.totalorder %s15, 1
    %p59 = por %p57, %p58
    %p61 = scmp.ne.s32.totalorder %s46, %s60
    %p62 = scmp.eq.s32.totalorder %s15, 0
    %p63 = por %p61, %p62
    %s65 = sadd.s32 %s64, 1
    %p68 = scmp.eq.s32.totalorder %s9, 1
    %p69 = scmp.ne.s32.totalorder %s64, %s66
    %p70 = scmp.eq.s32.totalorder %s9, 0
    %p71 = por %p69, %p70
    %p72 = scmp.ne.s32.totalorder %s64, %s66
    %p73 = scmp.eq.s32.totalorder %s14, 1
    %p74 = por %p72, %p73
    %p75 = scmp.ne.s32.totalorder %s66, %s67
    %p76 = scmp.eq.s32.totalorder %s14, 0
    %p77 = por %p75, %p76
    %p78 = scmp.ne.s32.totalorder %s66, %s67
    %p79 = scmp.eq.s32.totalorder %s15, 1
    %p80 = por %p78, %p79
    %p82 = scmp.ne.s32.totalorder %s67, %s81
    %p83 = scmp.eq.s32.totalorder %s15, 0
    %p84 = por %p82, %p83
    %s85 = ssub.s32 %s9, %s16
    %p86 = scmp.eq.s32.totalorder %s85, 0
    %s88 = sadd.s32 %s87, 1
    %s89 = scalar_select %p86, %s87, %s88
    %p92 = pneg %p86
    %p93 = scmp.eq.s32.totalorder %s9, 1
    %p94 = por %p92, %p93
    %p95 = scmp.ne.s32.totalorder %s87, %s90
    %p96 = scmp.eq.s32.totalorder %s9, 0
    %p97 = por %p95, %p96
    %p98 = scmp.ne.s32.totalorder %s87, %s90
    %p99 = scmp.eq.s32.totalorder %s14, 1
    %p100 = por %p98, %p99
    %p101 = scmp.ne.s32.totalorder %s90, %s91
    %p102 = scmp.eq.s32.totalorder %s14, 0
    %p103 = por %p101, %p102
    %p104 = scmp.ne.s32.totalorder %s90, %s91
    %p105 = scmp.eq.s32.totalorder %s15, 1
    %p106 = por %p104, %p105
    %p108 = scmp.ne.s32.totalorder %s91, %s107
    %p109 = scmp.eq.s32.totalorder %s15, 0
    %p110 = por %p108, %p109
    %p111 = scmp.le.s32.totalorder 1, %s9
    %p112 = scmp.lt.s32.totalorder %s9, 3
    %p113 = pnand %p111, %p112
    %p114 = pneg %p113
    // Predicated region
    $region9: #{simple_cnn_forward.4} parent=5 // pred_check
      _
    $region10: #{simple_cnn_forward.4} parent=5 // pred_check_branch
      %116 = sbr.rel (%p113) target = $region12
    $region11: #{simple_cnn_forward.4} parent=5 // pred_region
      %s117 = ssub.s32 %s9, 1
      // Predicated region
      $region13: #{simple_cnn_forward.4} parent=11 // pred_check
        %p118 = pneg %p56
      $region14: #{simple_cnn_forward.4} parent=11 // pred_check_branch
        %120 = sbr.rel (%p118) target = $region16
      $region15: #{simple_cnn_forward.4} parent=11 // pred_region
        _
      $region16: #{simple_cnn_forward.4} parent=11 // pred_fallthru
        _
      // Predicated region
      $region17: #{simple_cnn_forward.4} parent=11 // pred_check
        %p121 = pneg %p77
      $region18: #{simple_cnn_forward.4} parent=11 // pred_check_branch
        %123 = sbr.rel (%p121) target = $region20
      $region19: #{simple_cnn_forward.4} parent=11 // pred_region
        _
      $region20: #{simple_cnn_forward.4} parent=11 // pred_fallthru
        _
    $region12: #{simple_cnn_forward.4} parent=5 // pred_fallthru
      _
    %p124 = scmp.lt.s32.totalorder %s9, 2
    // Predicated region
    $region21: #{simple_cnn_forward.4} parent=5 // pred_check
      %p125 = pneg %p124
    $region22: #{simple_cnn_forward.4} parent=5 // pred_check_branch
      %127 = sbr.rel (%p125) target = $region24
    $region23: #{simple_cnn_forward.4} parent=5 // pred_region
      // Predicated region
      $region25: #{simple_cnn_forward.4} parent=23 // pred_check
        %p128 = pneg %p29
      $region26: #{simple_cnn_forward.4} parent=23 // pred_check_branch
        %130 = sbr.rel (%p128) target = $region28
      $region27: #{simple_cnn_forward.4} parent=23 // pred_region
        %p131 = scmp.lt.s32.totalorder %s9, 1
        %s132 = scalar_select %p131, %s9, 1
        %s133 = smul.addr %s132, 6
        %s134 = smul.addr %s133, 4
        %s135 = scalar_lea.vmem %s0, %s134
      $region28: #{simple_cnn_forward.4} parent=23 // pred_fallthru
        _
    $region24: #{simple_cnn_forward.4} parent=5 // pred_fallthru
      _
    %p136 = scmp.le.s32.totalorder 1, %s9
    %p137 = scmp.lt.s32.totalorder %s9, 3
    %p138 = pnand %p136, %p137
    %p139 = pneg %p138
    // Predicated region
    $region29: #{simple_cnn_forward.4} parent=5 // pred_check
      _
    $region30: #{simple_cnn_forward.4} parent=5 // pred_check_branch
      %141 = sbr.rel (%p138) target = $region32
    $region31: #{simple_cnn_forward.4} parent=5 // pred_region
      %s142 = ssub.s32 %s9, 1
      %p143 = scmp.lt.s32.totalorder %s14, 1
      %s144 = scalar_select %p143, %s14, 1
      %s145 = smul.addr %s144, 6
      %s146 = smul.addr %s145, 4
      %s147 = scalar_lea.vmem %s0, %s146
      %p148 = pneg %p35
      %p149 = pneg %p32
      %p150 = pneg %p56
      %p151 = pneg %p53
      %p152 = pneg %p77
      %p153 = pneg %p74
      %p154 = pneg %p103
      %p155 = pneg %p100
      %p156 = scmp.lt.s32.totalorder %s14, 1
      %s157 = scalar_select %p156, %s14, 1
      %s158 = smul.addr %s157, 4
      %s159 = smul.addr %s158, 8
      %s160 = scalar_lea.vmem %s3, %s159
      %p161 = scmp.lt.s32.totalorder %s14, 1
      %s162 = scalar_select %p161, %s14, 1
      %s163 = smul.addr %s162, 6
      %s164 = smul.addr %s163, 4
      %s165 = scalar_lea.vmem %s0, %s164
      %p166 = scmp.lt.s32.totalorder %s14, 1
      %s167 = scalar_select %p166, %s14, 1
      %s168 = smul.addr %s167, 4
      %s169 = smul.addr %s168, 8
      %s170 = scalar_lea.vmem %s3, %s169
      %v172 = vld [vmem:[%s1] sm:$0xf]
      %v173 = vld [vmem:[%s1 + $0x4] sm:$0xf]
      %v174 = vld [vmem:[%s1 + $0x8] sm:$0xf]
      %v175 = vld [vmem:[%s1 + $0xc] sm:$0xf]
      %v176 = vld [vmem:[%s165] sm:$0xff]
      %v177 = vld [vmem:[%s165 + $0x8] sm:$0xf]
      %v178 = vld [vmem:[%s165 + $0xc] sm:$0xff]
      %v179 = vld [vmem:[%s165 + $0x14] sm:$0xf]
      %s180 = scalar_lea.vmem %s1, 16
      %v181 = vld [vmem:[%s180] sm:$0xf]
      %v182 = vld [vmem:[%s180 + $0x4] sm:$0xf]
      %v183 = vld [vmem:[%s180 + $0x8] sm:$0xf]
      %v184 = vld [vmem:[%s180 + $0xc] sm:$0xf]
      %v189 = vunpack.c.l.b16 %v181
      %v190 = vunpack.c.l.b16 %v182
      %v191 = vunpack.c.l.b16 %v183
      %v192 = vunpack.c.l.b16 %v184
      %v193 = vpack.c.b16 %v190, %v189
      %v194 = vpack.c.b16 %v192, %v191
      %v199 = vunpack.c.l.b16 %v176
      %v200 = vunpack.c.h.b16 %v176
      %v201 = vunpack.c.l.b16 %v177
      %v202 = vunpack.c.l.b16 %v178
      %v203 = vunpack.c.h.b16 %v178
      %v204 = vunpack.c.l.b16 %v179
      %v205 = vpack.c.b16 %v202, %v199
      %v206 = vpack.c.b16 %v203, %v200
      %v207 = vpack.c.b16 %v204, %v201
      %208 = vrot.lane.b32.xlu0 %v205, 127
      %v209 = vpop.permute.xlu0 %208
      %210 = vrot.lane.b32.xlu0 %v206, 127
      %v211 = vpop.permute.xlu0 %210
      %212 = vrot.lane.b32.xlu0 %v207, 127
      %v213 = vpop.permute.xlu0 %212
      %vm214 = vcmask 1039360
      %v215 = vsel %vm214, %v209, %v211
      %v216 = vsel %vm214, %v211, %v213
      %vm220 = vcmask 130048
      %v222 = vsel %vm220, %v193, 0
      %v225 = vsel %vm220, %v194, 0
      %227 = vmatprep.subr.bf16.mxu0 0
      %228 = vmatpush1.bf16.msra.mxu0 0
      %229 = vmatprep.subr.bf16.mxu0 0
      %230 = vmatpush1.bf16.msra.mxu0 0
      %231 = vmatprep.subr.bf16.mxu0 0
      %232 = vmatpush1.bf16.msra.mxu0 0
      %233 = vmatprep.subr.bf16.mxu0 0
      %234 = vmatpush1.bf16.msra.mxu0 0
      %235 = vmatprep.subr.bf16.mxu0 0
      %236 = vmatpush1.bf16.msra.mxu0 0
      %237 = vmatprep.subr.bf16.mxu0 0
      %238 = vmatpush1.bf16.msra.mxu0 0
      %239 = vmatprep.subr.bf16.mxu0 0
      %240 = vmatpush1.bf16.msra.mxu0 0
      %241 = vmatprep.subr.bf16.mxu0 %v216
      %242 = vmatpush1.bf16.msra.mxu0 %v215
      %243 = vmatprep.subr.bf16.mxu0 0
      %244 = vmatpush2.bf16.msra.mxu0 0
      %245 = vmatprep.subr.bf16.mxu0 0
      %246 = vmatpush2.bf16.msra.mxu0 0
      %247 = vmatprep.subr.bf16.mxu0 0
      %248 = vmatpush2.bf16.msra.mxu0 0
      %249 = vmatprep.subr.bf16.mxu0 0
      %250 = vmatpush2.bf16.msra.mxu0 0
      %251 = vmatprep.subr.bf16.mxu0 0
      %252 = vmatpush2.bf16.msra.mxu0 0
      %253 = vmatprep.subr.bf16.mxu0 0
      %254 = vmatpush2.bf16.msra.mxu0 0
      %255 = vmatprep.subr.bf16.mxu0 0
      %256 = vmatpush2.bf16.msra.mxu0 0
      %257 = vmatprep.subr.bf16.mxu0 0
      %258 = vmatpush2.bf16.msra.mxu0 0
      %259 = vmatprep.mubr.bf16.mxu0 0
      %260 = vmatmul.mubr.bf16.gmra.mxu0 %v222
      %v261 = vpop.f32.mrf.mxu0
      %v262 = vadd.f32 0.0, %v261
      %v263 = vpop.f32.mrf.mxu0
      %v264 = vadd.f32 0.0, %v263
      %v265 = vpop.f32.mrf.mxu0
      %v266 = vadd.f32 0.0, %v265
      %v267 = vpop.f32.mrf.mxu0
      %v268 = vadd.f32 0.0, %v267
      %269 = vmatprep.mubr.bf16.mxu0 0
      %270 = vmatmul.mubr.bf16.gmra.mxu0 %v225
      %v271 = vpop.f32.mrf.mxu0
      %v272 = vadd.f32 0.0, %v271
      %v273 = vpop.f32.mrf.mxu0
      %v274 = vadd.f32 0.0, %v273
      %v275 = vpop.f32.mrf.mxu0
      %v276 = vadd.f32 0.0, %v275
      %v277 = vpop.f32.mrf.mxu0
      %v278 = vadd.f32 0.0, %v277
      %279 = vdwg.mxu0
      %280 = vmatprep.subr.bf16.mxu0 0
      %281 = vmatpush1.bf16.msra.mxu0 0
      %282 = vmatprep.subr.bf16.mxu0 0
      %283 = vmatpush1.bf16.msra.mxu0 0
      %284 = vmatprep.subr.bf16.mxu0 0
      %285 = vmatpush1.bf16.msra.mxu0 0
      %286 = vmatprep.subr.bf16.mxu0 0
      %287 = vmatpush1.bf16.msra.mxu0 0
      %288 = vmatprep.subr.bf16.mxu0 0
      %289 = vmatpush1.bf16.msra.mxu0 0
      %290 = vmatprep.subr.bf16.mxu0 0
      %291 = vmatpush1.bf16.msra.mxu0 0
      %292 = vmatprep.subr.bf16.mxu0 0
      %293 = vmatpush1.bf16.msra.mxu0 0
      %294 = vmatprep.subr.bf16.mxu0 0
      %295 = vmatpush1.bf16.msra.mxu0 %v213
      %296 = vmatprep.subr.bf16.mxu0 0
      %297 = vmatpush2.bf16.msra.mxu0 0
      %298 = vmatprep.subr.bf16.mxu0 0
      %299 = vmatpush2.bf16.msra.mxu0 0
      %300 = vmatprep.subr.bf16.mxu0 0
      %301 = vmatpush2.bf16.msra.mxu0 0
      %302 = vmatprep.subr.bf16.mxu0 0
      %303 = vmatpush2.bf16.msra.mxu0 0
      %304 = vmatprep.subr.bf16.mxu0 0
      %305 = vmatpush2.bf16.msra.mxu0 0
      %306 = vmatprep.subr.bf16.mxu0 0
      %307 = vmatpush2.bf16.msra.mxu0 0
      %308 = vmatprep.subr.bf16.mxu0 0
      %309 = vmatpush2.bf16.msra.mxu0 0
      %310 = vmatprep.subr.bf16.mxu0 0
      %311 = vmatpush2.bf16.msra.mxu0 0
      %312 = vmatprep.mubr.bf16.mxu0 0
      %313 = vmatmul.mubr.bf16.gmra.mxu0 %v222
      %v314 = vpop.f32.mrf.mxu0
      %v315 = vadd.f32 0.0, %v314
      %v316 = vpop.f32.mrf.mxu0
      %v317 = vpop.f32.mrf.mxu0
      %v318 = vadd.f32 0.0, %v317
      %v319 = vpop.f32.mrf.mxu0
      %320 = vmatprep.mubr.bf16.mxu0 0
      %321 = vmatmul.mubr.bf16.gmra.mxu0 %v225
      %v322 = vpop.f32.mrf.mxu0
      %v323 = vadd.f32 0.0, %v322
      %v324 = vpop.f32.mrf.mxu0
      %v325 = vpop.f32.mrf.mxu0
      %v326 = vadd.f32 0.0, %v325
      %v327 = vpop.f32.mrf.mxu0
      %328 = vdwg.mxu0
      %v333 = vunpack.c.l.b16 %v172
      %v334 = vunpack.c.l.b16 %v173
      %v335 = vunpack.c.l.b16 %v174
      %v336 = vunpack.c.l.b16 %v175
      %v337 = vpack.c.b16 %v334, %v333
      %v338 = vpack.c.b16 %v336, %v335
      %v343 = vsel %vm220, %v337, 0
      %v346 = vsel %vm220, %v338, 0
      %348 = vmatprep.subr.bf16.mxu0 0
      %349 = vmatpush1.bf16.msra.mxu0 0
      %350 = vmatprep.subr.bf16.mxu0 0
      %351 = vmatpush1.bf16.msra.mxu0 0
      %352 = vmatprep.subr.bf16.mxu0 0
      %353 = vmatpush1.bf16.msra.mxu0 0
      %354 = vmatprep.subr.bf16.mxu0 0
      %355 = vmatpush1.bf16.msra.mxu0 0
      %356 = vmatprep.subr.bf16.mxu0 0
      %357 = vmatpush1.bf16.msra.mxu0 0
      %358 = vmatprep.subr.bf16.mxu0 0
      %359 = vmatpush1.bf16.msra.mxu0 0
      %360 = vmatprep.subr.bf16.mxu0 0
      %361 = vmatpush1.bf16.msra.mxu0 0
      %362 = vmatprep.subr.bf16.mxu0 %v206
      %363 = vmatpush1.bf16.msra.mxu0 %v205
      %364 = vmatprep.subr.bf16.mxu0 0
      %365 = vmatpush2.bf16.msra.mxu0 0
      %366 = vmatprep.subr.bf16.mxu0 0
      %367 = vmatpush2.bf16.msra.mxu0 0
      %368 = vmatprep.subr.bf16.mxu0 0
      %369 = vmatpush2.bf16.msra.mxu0 0
      %370 = vmatprep.subr.bf16.mxu0 0
      %371 = vmatpush2.bf16.msra.mxu0 0
      %372 = vmatprep.subr.bf16.mxu0 0
      %373 = vmatpush2.bf16.msra.mxu0 0
      %374 = vmatprep.subr.bf16.mxu0 0
      %375 = vmatpush2.bf16.msra.mxu0 0
      %376 = vmatprep.subr.bf16.mxu0 0
      %377 = vmatpush2.bf16.msra.mxu0 0
      %378 = vmatprep.subr.bf16.mxu0 0
      %379 = vmatpush2.bf16.msra.mxu0 0
      %380 = vmatprep.mubr.bf16.mxu0 0
      %381 = vmatmul.mubr.bf16.gmra.mxu0 %v343
      %v382 = vpop.f32.mrf.mxu0
      %v383 = vadd.f32 %v262, %v382
      %v384 = vpop.f32.mrf.mxu0
      %v385 = vadd.f32 %v264, %v384
      %v386 = vpop.f32.mrf.mxu0
      %v387 = vadd.f32 %v266, %v386
      %v388 = vpop.f32.mrf.mxu0
      %v389 = vadd.f32 %v268, %v388
      %390 = vmatprep.mubr.bf16.mxu0 0
      %391 = vmatmul.mubr.bf16.gmra.mxu0 %v346
      %v392 = vpop.f32.mrf.mxu0
      %v393 = vadd.f32 %v272, %v392
      %v394 = vpop.f32.mrf.mxu0
      %v395 = vadd.f32 %v274, %v394
      %v396 = vpop.f32.mrf.mxu0
      %v397 = vadd.f32 %v276, %v396
      %v398 = vpop.f32.mrf.mxu0
      %v399 = vadd.f32 %v278, %v398
      %400 = vdwg.mxu0
      %401 = vmatprep.subr.bf16.mxu0 0
      %402 = vmatpush1.bf16.msra.mxu0 0
      %403 = vmatprep.subr.bf16.mxu0 0
      %404 = vmatpush1.bf16.msra.mxu0 0
      %405 = vmatprep.subr.bf16.mxu0 0
      %406 = vmatpush1.bf16.msra.mxu0 0
      %407 = vmatprep.subr.bf16.mxu0 0
      %408 = vmatpush1.bf16.msra.mxu0 0
      %409 = vmatprep.subr.bf16.mxu0 0
      %410 = vmatpush1.bf16.msra.mxu0 0
      %411 = vmatprep.subr.bf16.mxu0 0
      %412 = vmatpush1.bf16.msra.mxu0 0
      %413 = vmatprep.subr.bf16.mxu0 0
      %414 = vmatpush1.bf16.msra.mxu0 0
      %415 = vmatprep.subr.bf16.mxu0 0
      %416 = vmatpush1.bf16.msra.mxu0 %v207
      %417 = vmatprep.subr.bf16.mxu0 0
      %418 = vmatpush2.bf16.msra.mxu0 0
      %419 = vmatprep.subr.bf16.mxu0 0
      %420 = vmatpush2.bf16.msra.mxu0 0
      %421 = vmatprep.subr.bf16.mxu0 0
      %422 = vmatpush2.bf16.msra.mxu0 0
      %423 = vmatprep.subr.bf16.mxu0 0
      %424 = vmatpush2.bf16.msra.mxu0 0
      %425 = vmatprep.subr.bf16.mxu0 0
      %426 = vmatpush2.bf16.msra.mxu0 0
      %427 = vmatprep.subr.bf16.mxu0 0
      %428 = vmatpush2.bf16.msra.mxu0 0
      %429 = vmatprep.subr.bf16.mxu0 0
      %430 = vmatpush2.bf16.msra.mxu0 0
      %431 = vmatprep.subr.bf16.mxu0 0
      %432 = vmatpush2.bf16.msra.mxu0 0
      %433 = vmatprep.mubr.bf16.mxu0 0
      %434 = vmatmul.mubr.bf16.gmra.mxu0 %v343
      %v435 = vpop.f32.mrf.mxu0
      %v436 = vadd.f32 %v315, %v435
      %v437 = vpop.f32.mrf.mxu0
      %v438 = vpop.f32.mrf.mxu0
      %v439 = vadd.f32 %v318, %v438
      %v440 = vpop.f32.mrf.mxu0
      %441 = vmatprep.mubr.bf16.mxu0 0
      %442 = vmatmul.mubr.bf16.gmra.mxu0 %v346
      %v443 = vpop.f32.mrf.mxu0
      %v444 = vadd.f32 %v323, %v443
      %v445 = vpop.f32.mrf.mxu0
      %v446 = vpop.f32.mrf.mxu0
      %v447 = vadd.f32 %v326, %v446
      %v448 = vpop.f32.mrf.mxu0
      %449 = vdwg.mxu0
      %s450 = scalar_lea.vmem %s1, 32
      %v451 = vld [vmem:[%s450] sm:$0xf]
      %v452 = vld [vmem:[%s450 + $0x4] sm:$0xf]
      %v453 = vld [vmem:[%s450 + $0x8] sm:$0xf]
      %v454 = vld [vmem:[%s450 + $0xc] sm:$0xf]
      %v459 = vunpack.c.l.b16 %v451
      %v460 = vunpack.c.l.b16 %v452
      %v461 = vunpack.c.l.b16 %v453
      %v462 = vunpack.c.l.b16 %v454
      %v463 = vpack.c.b16 %v460, %v459
      %v464 = vpack.c.b16 %v462, %v461
      %465 = vrot.lane.b32.xlu0 %v205, 126
      %v466 = vpop.permute.xlu0 %465
      %467 = vrot.lane.b32.xlu0 %v206, 126
      %v468 = vpop.permute.xlu0 %467
      %469 = vrot.lane.b32.xlu0 %v207, 126
      %v470 = vpop.permute.xlu0 %469
      %vm471 = vcmask 1031168
      %v472 = vsel %vm471, %v466, %v468
      %v473 = vsel %vm471, %v468, %v470
      %v478 = vsel %vm220, %v463, 0
      %v481 = vsel %vm220, %v464, 0
      %483 = vmatprep.subr.bf16.mxu0 0
      %484 = vmatpush1.bf16.msra.mxu0 0
      %485 = vmatprep.subr.bf16.mxu0 0
      %486 = vmatpush1.bf16.msra.mxu0 0
      %487 = vmatprep.subr.bf16.mxu0 0
      %488 = vmatpush1.bf16.msra.mxu0 0
      %489 = vmatprep.subr.bf16.mxu0 0
      %490 = vmatpush1.bf16.msra.mxu0 0
      %491 = vmatprep.subr.bf16.mxu0 0
      %492 = vmatpush1.bf16.msra.mxu0 0
      %493 = vmatprep.subr.bf16.mxu0 0
      %494 = vmatpush1.bf16.msra.mxu0 0
      %495 = vmatprep.subr.bf16.mxu0 0
      %496 = vmatpush1.bf16.msra.mxu0 0
      %497 = vmatprep.subr.bf16.mxu0 %v473
      %498 = vmatpush1.bf16.msra.mxu0 %v472
      %499 = vmatprep.subr.bf16.mxu0 0
      %500 = vmatpush2.bf16.msra.mxu0 0
      %501 = vmatprep.subr.bf16.mxu0 0
      %502 = vmatpush2.bf16.msra.mxu0 0
      %503 = vmatprep.subr.bf16.mxu0 0
      %504 = vmatpush2.bf16.msra.mxu0 0
      %505 = vmatprep.subr.bf16.mxu0 0
      %506 = vmatpush2.bf16.msra.mxu0 0
      %507 = vmatprep.subr.bf16.mxu0 0
      %508 = vmatpush2.bf16.msra.mxu0 0
      %509 = vmatprep.subr.bf16.mxu0 0
      %510 = vmatpush2.bf16.msra.mxu0 0
      %511 = vmatprep.subr.bf16.mxu0 0
      %512 = vmatpush2.bf16.msra.mxu0 0
      %513 = vmatprep.subr.bf16.mxu0 0
      %514 = vmatpush2.bf16.msra.mxu0 0
      %515 = vmatprep.mubr.bf16.mxu0 0
      %516 = vmatmul.mubr.bf16.gmra.mxu0 %v478
      %v517 = vpop.f32.mrf.mxu0
      %v518 = vadd.f32 0.0, %v517
      %v519 = vpop.f32.mrf.mxu0
      %v520 = vadd.f32 0.0, %v519
      %v521 = vpop.f32.mrf.mxu0
      %v522 = vadd.f32 0.0, %v521
      %v523 = vpop.f32.mrf.mxu0
      %v524 = vadd.f32 0.0, %v523
      %525 = vmatprep.mubr.bf16.mxu0 0
      %526 = vmatmul.mubr.bf16.gmra.mxu0 %v481
      %v527 = vpop.f32.mrf.mxu0
      %v528 = vadd.f32 0.0, %v527
      %v529 = vpop.f32.mrf.mxu0
      %v530 = vadd.f32 0.0, %v529
      %v531 = vpop.f32.mrf.mxu0
      %v532 = vadd.f32 0.0, %v531
      %v533 = vpop.f32.mrf.mxu0
      %v534 = vadd.f32 0.0, %v533
      %535 = vdwg.mxu0
      %536 = vmatprep.subr.bf16.mxu0 0
      %537 = vmatpush1.bf16.msra.mxu0 0
      %538 = vmatprep.subr.bf16.mxu0 0
      %539 = vmatpush1.bf16.msra.mxu0 0
      %540 = vmatprep.subr.bf16.mxu0 0
      %541 = vmatpush1.bf16.msra.mxu0 0
      %542 = vmatprep.subr.bf16.mxu0 0
      %543 = vmatpush1.bf16.msra.mxu0 0
      %544 = vmatprep.subr.bf16.mxu0 0
      %545 = vmatpush1.bf16.msra.mxu0 0
      %546 = vmatprep.subr.bf16.mxu0 0
      %547 = vmatpush1.bf16.msra.mxu0 0
      %548 = vmatprep.subr.bf16.mxu0 0
      %549 = vmatpush1.bf16.msra.mxu0 0
      %550 = vmatprep.subr.bf16.mxu0 0
      %551 = vmatpush1.bf16.msra.mxu0 %v470
      %552 = vmatprep.subr.bf16.mxu0 0
      %553 = vmatpush2.bf16.msra.mxu0 0
      %554 = vmatprep.subr.bf16.mxu0 0
      %555 = vmatpush2.bf16.msra.mxu0 0
      %556 = vmatprep.subr.bf16.mxu0 0
      %557 = vmatpush2.bf16.msra.mxu0 0
      %558 = vmatprep.subr.bf16.mxu0 0
      %559 = vmatpush2.bf16.msra.mxu0 0
      %560 = vmatprep.subr.bf16.mxu0 0
      %561 = vmatpush2.bf16.msra.mxu0 0
      %562 = vmatprep.subr.bf16.mxu0 0
      %563 = vmatpush2.bf16.msra.mxu0 0
      %564 = vmatprep.subr.bf16.mxu0 0
      %565 = vmatpush2.bf16.msra.mxu0 0
      %566 = vmatprep.subr.bf16.mxu0 0
      %567 = vmatpush2.bf16.msra.mxu0 0
      %568 = vmatprep.mubr.bf16.mxu0 0
      %569 = vmatmul.mubr.bf16.gmra.mxu0 %v478
      %v570 = vpop.f32.mrf.mxu0
      %v571 = vadd.f32 0.0, %v570
      %v572 = vpop.f32.mrf.mxu0
      %v573 = vpop.f32.mrf.mxu0
      %v574 = vadd.f32 0.0, %v573
      %v575 = vpop.f32.mrf.mxu0
      %576 = vmatprep.mubr.bf16.mxu0 0
      %577 = vmatmul.mubr.bf16.gmra.mxu0 %v481
      %v578 = vpop.f32.mrf.mxu0
      %v579 = vadd.f32 0.0, %v578
      %v580 = vpop.f32.mrf.mxu0
      %v581 = vpop.f32.mrf.mxu0
      %v582 = vadd.f32 0.0, %v581
      %v583 = vpop.f32.mrf.mxu0
      %584 = vdwg.mxu0
      %v585 = vadd.f32 %v383, %v518
      %v586 = vadd.f32 %v385, %v520
      %v587 = vadd.f32 %v436, %v571
      %v588 = vadd.f32 %v387, %v522
      %v589 = vadd.f32 %v389, %v524
      %v590 = vadd.f32 %v439, %v574
      %v591 = vadd.f32 %v393, %v528
      %v592 = vadd.f32 %v395, %v530
      %v593 = vadd.f32 %v444, %v579
      %v594 = vadd.f32 %v397, %v532
      %v595 = vadd.f32 %v399, %v534
      %v596 = vadd.f32 %v447, %v582
      %s597 = scalar_lea.vmem %s1, 48
      %v598 = vld [vmem:[%s597] sm:$0xf]
      %v599 = vld [vmem:[%s597 + $0x4] sm:$0xf]
      %v600 = vld [vmem:[%s597 + $0x8] sm:$0xf]
      %v601 = vld [vmem:[%s597 + $0xc] sm:$0xf]
      %v606 = vunpack.c.l.b16 %v598
      %v607 = vunpack.c.l.b16 %v599
      %v608 = vunpack.c.l.b16 %v600
      %v609 = vunpack.c.l.b16 %v601
      %v610 = vpack.c.b16 %v607, %v606
      %v611 = vpack.c.b16 %v609, %v608
      %612 = vrot.lane.b32.xlu0 %v205, 110
      %v613 = vpop.permute.xlu0 %612
      %614 = vrot.lane.b32.xlu0 %v206, 110
      %v615 = vpop.permute.xlu0 %614
      %616 = vrot.lane.b32.xlu0 %v207, 110
      %v617 = vpop.permute.xlu0 %616
      %vm618 = vcmask 900096
      %v619 = vsel %vm618, %v613, %v615
      %v620 = vsel %vm618, %v615, %v617
      %v625 = vsel %vm220, %v610, 0
      %v628 = vsel %vm220, %v611, 0
      %630 = vmatprep.subr.bf16.mxu0 0
      %631 = vmatpush1.bf16.msra.mxu0 0
      %632 = vmatprep.subr.bf16.mxu0 0
      %633 = vmatpush1.bf16.msra.mxu0 0
      %634 = vmatprep.subr.bf16.mxu0 0
      %635 = vmatpush1.bf16.msra.mxu0 0
      %636 = vmatprep.subr.bf16.mxu0 0
      %637 = vmatpush1.bf16.msra.mxu0 0
      %638 = vmatprep.subr.bf16.mxu0 0
      %639 = vmatpush1.bf16.msra.mxu0 0
      %640 = vmatprep.subr.bf16.mxu0 0
      %641 = vmatpush1.bf16.msra.mxu0 0
      %642 = vmatprep.subr.bf16.mxu0 0
      %643 = vmatpush1.bf16.msra.mxu0 0
      %644 = vmatprep.subr.bf16.mxu0 %v620
      %645 = vmatpush1.bf16.msra.mxu0 %v619
      %646 = vmatprep.subr.bf16.mxu0 0
      %647 = vmatpush2.bf16.msra.mxu0 0
      %648 = vmatprep.subr.bf16.mxu0 0
      %649 = vmatpush2.bf16.msra.mxu0 0
      %650 = vmatprep.subr.bf16.mxu0 0
      %651 = vmatpush2.bf16.msra.mxu0 0
      %652 = vmatprep.subr.bf16.mxu0 0
      %653 = vmatpush2.bf16.msra.mxu0 0
      %654 = vmatprep.subr.bf16.mxu0 0
      %655 = vmatpush2.bf16.msra.mxu0 0
      %656 = vmatprep.subr.bf16.mxu0 0
      %657 = vmatpush2.bf16.msra.mxu0 0
      %658 = vmatprep.subr.bf16.mxu0 0
      %659 = vmatpush2.bf16.msra.mxu0 0
      %660 = vmatprep.subr.bf16.mxu0 0
      %661 = vmatpush2.bf16.msra.mxu0 0
      %662 = vmatprep.mubr.bf16.mxu0 0
      %663 = vmatmul.mubr.bf16.gmra.mxu0 %v625
      %v664 = vpop.f32.mrf.mxu0
      %v665 = vadd.f32 0.0, %v664
      %v666 = vpop.f32.mrf.mxu0
      %v667 = vadd.f32 0.0, %v666
      %v668 = vpop.f32.mrf.mxu0
      %v669 = vadd.f32 0.0, %v668
      %v670 = vpop.f32.mrf.mxu0
      %v671 = vadd.f32 0.0, %v670
      %672 = vmatprep.mubr.bf16.mxu0 0
      %673 = vmatmul.mubr.bf16.gmra.mxu0 %v628
      %v674 = vpop.f32.mrf.mxu0
      %v675 = vadd.f32 0.0, %v674
      %v676 = vpop.f32.mrf.mxu0
      %v677 = vadd.f32 0.0, %v676
      %v678 = vpop.f32.mrf.mxu0
      %v679 = vadd.f32 0.0, %v678
      %v680 = vpop.f32.mrf.mxu0
      %v681 = vadd.f32 0.0, %v680
      %682 = vdwg.mxu0
      %683 = vmatprep.subr.bf16.mxu0 0
      %684 = vmatpush1.bf16.msra.mxu0 0
      %685 = vmatprep.subr.bf16.mxu0 0
      %686 = vmatpush1.bf16.msra.mxu0 0
      %687 = vmatprep.subr.bf16.mxu0 0
      %688 = vmatpush1.bf16.msra.mxu0 0
      %689 = vmatprep.subr.bf16.mxu0 0
      %690 = vmatpush1.bf16.msra.mxu0 0
      %691 = vmatprep.subr.bf16.mxu0 0
      %692 = vmatpush1.bf16.msra.mxu0 0
      %693 = vmatprep.subr.bf16.mxu0 0
      %694 = vmatpush1.bf16.msra.mxu0 0
      %695 = vmatprep.subr.bf16.mxu0 0
      %696 = vmatpush1.bf16.msra.mxu0 0
      %697 = vmatprep.subr.bf16.mxu0 0
      %698 = vmatpush1.bf16.msra.mxu0 %v617
      %699 = vmatprep.subr.bf16.mxu0 0
      %700 = vmatpush2.bf16.msra.mxu0 0
      %701 = vmatprep.subr.bf16.mxu0 0
      %702 = vmatpush2.bf16.msra.mxu0 0
      %703 = vmatprep.subr.bf16.mxu0 0
      %704 = vmatpush2.bf16.msra.mxu0 0
      %705 = vmatprep.subr.bf16.mxu0 0
      %706 = vmatpush2.bf16.msra.mxu0 0
      %707 = vmatprep.subr.bf16.mxu0 0
      %708 = vmatpush2.bf16.msra.mxu0 0
      %709 = vmatprep.subr.bf16.mxu0 0
      %710 = vmatpush2.bf16.msra.mxu0 0
      %711 = vmatprep.subr.bf16.mxu0 0
      %712 = vmatpush2.bf16.msra.mxu0 0
      %713 = vmatprep.subr.bf16.mxu0 0
      %714 = vmatpush2.bf16.msra.mxu0 0
      %715 = vmatprep.mubr.bf16.mxu0 0
      %716 = vmatmul.mubr.bf16.gmra.mxu0 %v625
      %v717 = vpop.f32.mrf.mxu0
      %v718 = vadd.f32 0.0, %v717
      %v719 = vpop.f32.mrf.mxu0
      %v720 = vpop.f32.mrf.mxu0
      %v721 = vadd.f32 0.0, %v720
      %v722 = vpop.f32.mrf.mxu0
      %723 = vmatprep.mubr.bf16.mxu0 0
      %724 = vmatmul.mubr.bf16.gmra.mxu0 %v628
      %v725 = vpop.f32.mrf.mxu0
      %v726 = vadd.f32 0.0, %v725
      %v727 = vpop.f32.mrf.mxu0
      %v728 = vpop.f32.mrf.mxu0
      %v729 = vadd.f32 0.0, %v728
      %v730 = vpop.f32.mrf.mxu0
      %731 = vdwg.mxu0
      %v732 = vadd.f32 %v585, %v665
      %v733 = vadd.f32 %v586, %v667
      %v734 = vadd.f32 %v587, %v718
      %v735 = vadd.f32 %v588, %v669
      %v736 = vadd.f32 %v589, %v671
      %v737 = vadd.f32 %v590, %v721
      %v738 = vadd.f32 %v591, %v675
      %v739 = vadd.f32 %v592, %v677
      %v740 = vadd.f32 %v593, %v726
      %v741 = vadd.f32 %v594, %v679
      %v742 = vadd.f32 %v595, %v681
      %v743 = vadd.f32 %v596, %v729
      %s744 = scalar_lea.vmem %s1, 64
      %v745 = vld [vmem:[%s744] sm:$0xf]
      %v746 = vld [vmem:[%s744 + $0x4] sm:$0xf]
      %v747 = vld [vmem:[%s744 + $0x8] sm:$0xf]
      %v748 = vld [vmem:[%s744 + $0xc] sm:$0xf]
      %v753 = vunpack.c.l.b16 %v745
      %v754 = vunpack.c.l.b16 %v746
      %v755 = vunpack.c.l.b16 %v747
      %v756 = vunpack.c.l.b16 %v748
      %v757 = vpack.c.b16 %v754, %v753
      %v758 = vpack.c.b16 %v756, %v755
      %759 = vrot.lane.b32.xlu0 %v205, 109
      %v760 = vpop.permute.xlu0 %759
      %761 = vrot.lane.b32.xlu0 %v206, 109
      %v762 = vpop.permute.xlu0 %761
      %763 = vrot.lane.b32.xlu0 %v207, 109
      %v764 = vpop.permute.xlu0 %763
      %vm765 = vcmask 891904
      %v766 = vsel %vm765, %v760, %v762
      %v767 = vsel %vm765, %v762, %v764
      %v772 = vsel %vm220, %v757, 0
      %v775 = vsel %vm220, %v758, 0
      %777 = vmatprep.subr.bf16.mxu0 0
      %778 = vmatpush1.bf16.msra.mxu0 0
      %779 = vmatprep.subr.bf16.mxu0 0
      %780 = vmatpush1.bf16.msra.mxu0 0
      %781 = vmatprep.subr.bf16.mxu0 0
      %782 = vmatpush1.bf16.msra.mxu0 0
      %783 = vmatprep.subr.bf16.mxu0 0
      %784 = vmatpush1.bf16.msra.mxu0 0
      %785 = vmatprep.subr.bf16.mxu0 0
      %786 = vmatpush1.bf16.msra.mxu0 0
      %787 = vmatprep.subr.bf16.mxu0 0
      %788 = vmatpush1.bf16.msra.mxu0 0
      %789 = vmatprep.subr.bf16.mxu0 0
      %790 = vmatpush1.bf16.msra.mxu0 0
      %791 = vmatprep.subr.bf16.mxu0 %v767
      %792 = vmatpush1.bf16.msra.mxu0 %v766
      %793 = vmatprep.subr.bf16.mxu0 0
      %794 = vmatpush2.bf16.msra.mxu0 0
      %795 = vmatprep.subr.bf16.mxu0 0
      %796 = vmatpush2.bf16.msra.mxu0 0
      %797 = vmatprep.subr.bf16.mxu0 0
      %798 = vmatpush2.bf16.msra.mxu0 0
      %799 = vmatprep.subr.bf16.mxu0 0
      %800 = vmatpush2.bf16.msra.mxu0 0
      %801 = vmatprep.subr.bf16.mxu0 0
      %802 = vmatpush2.bf16.msra.mxu0 0
      %803 = vmatprep.subr.bf16.mxu0 0
      %804 = vmatpush2.bf16.msra.mxu0 0
      %805 = vmatprep.subr.bf16.mxu0 0
      %806 = vmatpush2.bf16.msra.mxu0 0
      %807 = vmatprep.subr.bf16.mxu0 0
      %808 = vmatpush2.bf16.msra.mxu0 0
      %809 = vmatprep.mubr.bf16.mxu0 0
      %810 = vmatmul.mubr.bf16.gmra.mxu0 %v772
      %v811 = vpop.f32.mrf.mxu0
      %v812 = vadd.f32 0.0, %v811
      %v813 = vpop.f32.mrf.mxu0
      %v814 = vadd.f32 0.0, %v813
      %v815 = vpop.f32.mrf.mxu0
      %v816 = vadd.f32 0.0, %v815
      %v817 = vpop.f32.mrf.mxu0
      %v818 = vadd.f32 0.0, %v817
      %819 = vmatprep.mubr.bf16.mxu0 0
      %820 = vmatmul.mubr.bf16.gmra.mxu0 %v775
      %v821 = vpop.f32.mrf.mxu0
      %v822 = vadd.f32 0.0, %v821
      %v823 = vpop.f32.mrf.mxu0
      %v824 = vadd.f32 0.0, %v823
      %v825 = vpop.f32.mrf.mxu0
      %v826 = vadd.f32 0.0, %v825
      %v827 = vpop.f32.mrf.mxu0
      %v828 = vadd.f32 0.0, %v827
      %829 = vdwg.mxu0
      %830 = vmatprep.subr.bf16.mxu0 0
      %831 = vmatpush1.bf16.msra.mxu0 0
      %832 = vmatprep.subr.bf16.mxu0 0
      %833 = vmatpush1.bf16.msra.mxu0 0
      %834 = vmatprep.subr.bf16.mxu0 0
      %835 = vmatpush1.bf16.msra.mxu0 0
      %836 = vmatprep.subr.bf16.mxu0 0
      %837 = vmatpush1.bf16.msra.mxu0 0
      %838 = vmatprep.subr.bf16.mxu0 0
      %839 = vmatpush1.bf16.msra.mxu0 0
      %840 = vmatprep.subr.bf16.mxu0 0
      %841 = vmatpush1.bf16.msra.mxu0 0
      %842 = vmatprep.subr.bf16.mxu0 0
      %843 = vmatpush1.bf16.msra.mxu0 0
      %844 = vmatprep.subr.bf16.mxu0 0
      %845 = vmatpush1.bf16.msra.mxu0 %v764
      %846 = vmatprep.subr.bf16.mxu0 0
      %847 = vmatpush2.bf16.msra.mxu0 0
      %848 = vmatprep.subr.bf16.mxu0 0
      %849 = vmatpush2.bf16.msra.mxu0 0
      %850 = vmatprep.subr.bf16.mxu0 0
      %851 = vmatpush2.bf16.msra.mxu0 0
      %852 = vmatprep.subr.bf16.mxu0 0
      %853 = vmatpush2.bf16.msra.mxu0 0
      %854 = vmatprep.subr.bf16.mxu0 0
      %855 = vmatpush2.bf16.msra.mxu0 0
      %856 = vmatprep.subr.bf16.mxu0 0
      %857 = vmatpush2.bf16.msra.mxu0 0
      %858 = vmatprep.subr.bf16.mxu0 0
      %859 = vmatpush2.bf16.msra.mxu0 0
      %860 = vmatprep.subr.bf16.mxu0 0
      %861 = vmatpush2.bf16.msra.mxu0 0
      %862 = vmatprep.mubr.bf16.mxu0 0
      %863 = vmatmul.mubr.bf16.gmra.mxu0 %v772
      %v864 = vpop.f32.mrf.mxu0
      %v865 = vadd.f32 0.0, %v864
      %v866 = vpop.f32.mrf.mxu0
      %v867 = vpop.f32.mrf.mxu0
      %v868 = vadd.f32 0.0, %v867
      %v869 = vpop.f32.mrf.mxu0
      %870 = vmatprep.mubr.bf16.mxu0 0
      %871 = vmatmul.mubr.bf16.gmra.mxu0 %v775
      %v872 = vpop.f32.mrf.mxu0
      %v873 = vadd.f32 0.0, %v872
      %v874 = vpop.f32.mrf.mxu0
      %v875 = vpop.f32.mrf.mxu0
      %v876 = vadd.f32 0.0, %v875
      %v877 = vpop.f32.mrf.mxu0
      %878 = vdwg.mxu0
      %v879 = vadd.f32 %v732, %v812
      %v880 = vadd.f32 %v733, %v814
      %v881 = vadd.f32 %v734, %v865
      %v882 = vadd.f32 %v735, %v816
      %v883 = vadd.f32 %v736, %v818
      %v884 = vadd.f32 %v737, %v868
      %v885 = vadd.f32 %v738, %v822
      %v886 = vadd.f32 %v739, %v824
      %v887 = vadd.f32 %v740, %v873
      %v888 = vadd.f32 %v741, %v826
      %v889 = vadd.f32 %v742, %v828
      %v890 = vadd.f32 %v743, %v876
      %s891 = scalar_lea.vmem %s1, 80
      %v892 = vld [vmem:[%s891] sm:$0xf]
      %v893 = vld [vmem:[%s891 + $0x4] sm:$0xf]
      %v894 = vld [vmem:[%s891 + $0x8] sm:$0xf]
      %v895 = vld [vmem:[%s891 + $0xc] sm:$0xf]
      %v900 = vunpack.c.l.b16 %v892
      %v901 = vunpack.c.l.b16 %v893
      %v902 = vunpack.c.l.b16 %v894
      %v903 = vunpack.c.l.b16 %v895
      %v904 = vpack.c.b16 %v901, %v900
      %v905 = vpack.c.b16 %v903, %v902
      %906 = vrot.lane.b32.xlu0 %v205, 108
      %v907 = vpop.permute.xlu0 %906
      %908 = vrot.lane.b32.xlu0 %v206, 108
      %v909 = vpop.permute.xlu0 %908
      %910 = vrot.lane.b32.xlu0 %v207, 108
      %v911 = vpop.permute.xlu0 %910
      %vm912 = vcmask 883712
      %v913 = vsel %vm912, %v907, %v909
      %v914 = vsel %vm912, %v909, %v911
      %v919 = vsel %vm220, %v904, 0
      %v922 = vsel %vm220, %v905, 0
      %924 = vmatprep.subr.bf16.mxu0 0
      %925 = vmatpush1.bf16.msra.mxu0 0
      %926 = vmatprep.subr.bf16.mxu0 0
      %927 = vmatpush1.bf16.msra.mxu0 0
      %928 = vmatprep.subr.bf16.mxu0 0
      %929 = vmatpush1.bf16.msra.mxu0 0
      %930 = vmatprep.subr.bf16.mxu0 0
      %931 = vmatpush1.bf16.msra.mxu0 0
      %932 = vmatprep.subr.bf16.mxu0 0
      %933 = vmatpush1.bf16.msra.mxu0 0
      %934 = vmatprep.subr.bf16.mxu0 0
      %935 = vmatpush1.bf16.msra.mxu0 0
      %936 = vmatprep.subr.bf16.mxu0 0
      %937 = vmatpush1.bf16.msra.mxu0 0
      %938 = vmatprep.subr.bf16.mxu0 %v914
      %939 = vmatpush1.bf16.msra.mxu0 %v913
      %940 = vmatprep.subr.bf16.mxu0 0
      %941 = vmatpush2.bf16.msra.mxu0 0
      %942 = vmatprep.subr.bf16.mxu0 0
      %943 = vmatpush2.bf16.msra.mxu0 0
      %944 = vmatprep.subr.bf16.mxu0 0
      %945 = vmatpush2.bf16.msra.mxu0 0
      %946 = vmatprep.subr.bf16.mxu0 0
      %947 = vmatpush2.bf16.msra.mxu0 0
      %948 = vmatprep.subr.bf16.mxu0 0
      %949 = vmatpush2.bf16.msra.mxu0 0
      %950 = vmatprep.subr.bf16.mxu0 0
      %951 = vmatpush2.bf16.msra.mxu0 0
      %952 = vmatprep.subr.bf16.mxu0 0
      %953 = vmatpush2.bf16.msra.mxu0 0
      %954 = vmatprep.subr.bf16.mxu0 0
      %955 = vmatpush2.bf16.msra.mxu0 0
      %956 = vmatprep.mubr.bf16.mxu0 0
      %957 = vmatmul.mubr.bf16.gmra.mxu0 %v919
      %v958 = vpop.f32.mrf.mxu0
      %v959 = vadd.f32 0.0, %v958
      %v960 = vpop.f32.mrf.mxu0
      %v961 = vadd.f32 0.0, %v960
      %v962 = vpop.f32.mrf.mxu0
      %v963 = vadd.f32 0.0, %v962
      %v964 = vpop.f32.mrf.mxu0
      %v965 = vadd.f32 0.0, %v964
      %966 = vmatprep.mubr.bf16.mxu0 0
      %967 = vmatmul.mubr.bf16.gmra.mxu0 %v922
      %v968 = vpop.f32.mrf.mxu0
      %v969 = vadd.f32 0.0, %v968
      %v970 = vpop.f32.mrf.mxu0
      %v971 = vadd.f32 0.0, %v970
      %v972 = vpop.f32.mrf.mxu0
      %v973 = vadd.f32 0.0, %v972
      %v974 = vpop.f32.mrf.mxu0
      %v975 = vadd.f32 0.0, %v974
      %976 = vdwg.mxu0
      %977 = vmatprep.subr.bf16.mxu0 0
      %978 = vmatpush1.bf16.msra.mxu0 0
      %979 = vmatprep.subr.bf16.mxu0 0
      %980 = vmatpush1.bf16.msra.mxu0 0
      %981 = vmatprep.subr.bf16.mxu0 0
      %982 = vmatpush1.bf16.msra.mxu0 0
      %983 = vmatprep.subr.bf16.mxu0 0
      %984 = vmatpush1.bf16.msra.mxu0 0
      %985 = vmatprep.subr.bf16.mxu0 0
      %986 = vmatpush1.bf16.msra.mxu0 0
      %987 = vmatprep.subr.bf16.mxu0 0
      %988 = vmatpush1.bf16.msra.mxu0 0
      %989 = vmatprep.subr.bf16.mxu0 0
      %990 = vmatpush1.bf16.msra.mxu0 0
      %991 = vmatprep.subr.bf16.mxu0 0
      %992 = vmatpush1.bf16.msra.mxu0 %v911
      %993 = vmatprep.subr.bf16.mxu0 0
      %994 = vmatpush2.bf16.msra.mxu0 0
      %995 = vmatprep.subr.bf16.mxu0 0
      %996 = vmatpush2.bf16.msra.mxu0 0
      %997 = vmatprep.subr.bf16.mxu0 0
      %998 = vmatpush2.bf16.msra.mxu0 0
      %999 = vmatprep.subr.bf16.mxu0 0
      %1000 = vmatpush2.bf16.msra.mxu0 0
      %1001 = vmatprep.subr.bf16.mxu0 0
      %1002 = vmatpush2.bf16.msra.mxu0 0
      %1003 = vmatprep.subr.bf16.mxu0 0
      %1004 = vmatpush2.bf16.msra.mxu0 0
      %1005 = vmatprep.subr.bf16.mxu0 0
      %1006 = vmatpush2.bf16.msra.mxu0 0
      %1007 = vmatprep.subr.bf16.mxu0 0
      %1008 = vmatpush2.bf16.msra.mxu0 0
      %1009 = vmatprep.mubr.bf16.mxu0 0
      %1010 = vmatmul.mubr.bf16.gmra.mxu0 %v919
      %v1011 = vpop.f32.mrf.mxu0
      %v1012 = vadd.f32 0.0, %v1011
      %v1013 = vpop.f32.mrf.mxu0
      %v1014 = vpop.f32.mrf.mxu0
      %v1015 = vadd.f32 0.0, %v1014
      %v1016 = vpop.f32.mrf.mxu0
      %1017 = vmatprep.mubr.bf16.mxu0 0
      %1018 = vmatmul.mubr.bf16.gmra.mxu0 %v922
      %v1019 = vpop.f32.mrf.mxu0
      %v1020 = vadd.f32 0.0, %v1019
      %v1021 = vpop.f32.mrf.mxu0
      %v1022 = vpop.f32.mrf.mxu0
      %v1023 = vadd.f32 0.0, %v1022
      %v1024 = vpop.f32.mrf.mxu0
      %1025 = vdwg.mxu0
      %v1026 = vadd.f32 %v879, %v959
      %v1027 = vadd.f32 %v880, %v961
      %v1028 = vadd.f32 %v881, %v1012
      %v1029 = vadd.f32 %v882, %v963
      %v1030 = vadd.f32 %v883, %v965
      %v1031 = vadd.f32 %v884, %v1015
      %v1032 = vadd.f32 %v885, %v969
      %v1033 = vadd.f32 %v886, %v971
      %v1034 = vadd.f32 %v887, %v1020
      %v1035 = vadd.f32 %v888, %v973
      %v1036 = vadd.f32 %v889, %v975
      %v1037 = vadd.f32 %v890, %v1023
      %s1038 = scalar_lea.vmem %s1, 96
      %v1039 = vld [vmem:[%s1038] sm:$0xf]
      %v1040 = vld [vmem:[%s1038 + $0x4] sm:$0xf]
      %v1041 = vld [vmem:[%s1038 + $0x8] sm:$0xf]
      %v1042 = vld [vmem:[%s1038 + $0xc] sm:$0xf]
      %v1047 = vunpack.c.l.b16 %v1039
      %v1048 = vunpack.c.l.b16 %v1040
      %v1049 = vunpack.c.l.b16 %v1041
      %v1050 = vunpack.c.l.b16 %v1042
      %v1051 = vpack.c.b16 %v1048, %v1047
      %v1052 = vpack.c.b16 %v1050, %v1049
      %1053 = vrot.lane.b32.xlu0 %v205, 92
      %v1054 = vpop.permute.xlu0 %1053
      %1055 = vrot.lane.b32.xlu0 %v206, 92
      %v1056 = vpop.permute.xlu0 %1055
      %1057 = vrot.lane.b32.xlu0 %v207, 92
      %v1058 = vpop.permute.xlu0 %1057
      %vm1059 = vcmask 752640
      %v1060 = vsel %vm1059, %v1054, %v1056
      %v1061 = vsel %vm1059, %v1056, %v1058
      %v1066 = vsel %vm220, %v1051, 0
      %v1069 = vsel %vm220, %v1052, 0
      %1071 = vmatprep.subr.bf16.mxu0 0
      %1072 = vmatpush1.bf16.msra.mxu0 0
      %1073 = vmatprep.subr.bf16.mxu0 0
      %1074 = vmatpush1.bf16.msra.mxu0 0
      %1075 = vmatprep.subr.bf16.mxu0 0
      %1076 = vmatpush1.bf16.msra.mxu0 0
      %1077 = vmatprep.subr.bf16.mxu0 0
      %1078 = vmatpush1.bf16.msra.mxu0 0
      %1079 = vmatprep.subr.bf16.mxu0 0
      %1080 = vmatpush1.bf16.msra.mxu0 0
      %1081 = vmatprep.subr.bf16.mxu0 0
      %1082 = vmatpush1.bf16.msra.mxu0 0
      %1083 = vmatprep.subr.bf16.mxu0 0
      %1084 = vmatpush1.bf16.msra.mxu0 0
      %1085 = vmatprep.subr.bf16.mxu0 %v1061
      %1086 = vmatpush1.bf16.msra.mxu0 %v1060
      %1087 = vmatprep.subr.bf16.mxu0 0
      %1088 = vmatpush2.bf16.msra.mxu0 0
      %1089 = vmatprep.subr.bf16.mxu0 0
      %1090 = vmatpush2.bf16.msra.mxu0 0
      %1091 = vmatprep.subr.bf16.mxu0 0
      %1092 = vmatpush2.bf16.msra.mxu0 0
      %1093 = vmatprep.subr.bf16.mxu0 0
      %1094 = vmatpush2.bf16.msra.mxu0 0
      %1095 = vmatprep.subr.bf16.mxu0 0
      %1096 = vmatpush2.bf16.msra.mxu0 0
      %1097 = vmatprep.subr.bf16.mxu0 0
      %1098 = vmatpush2.bf16.msra.mxu0 0
      %1099 = vmatprep.subr.bf16.mxu0 0
      %1100 = vmatpush2.bf16.msra.mxu0 0
      %1101 = vmatprep.subr.bf16.mxu0 0
      %1102 = vmatpush2.bf16.msra.mxu0 0
      %1103 = vmatprep.mubr.bf16.mxu0 0
      %1104 = vmatmul.mubr.bf16.gmra.mxu0 %v1066
      %v1105 = vpop.f32.mrf.mxu0
      %v1106 = vadd.f32 0.0, %v1105
      %v1107 = vpop.f32.mrf.mxu0
      %v1108 = vadd.f32 0.0, %v1107
      %v1109 = vpop.f32.mrf.mxu0
      %v1110 = vadd.f32 0.0, %v1109
      %v1111 = vpop.f32.mrf.mxu0
      %v1112 = vadd.f32 0.0, %v1111
      %1113 = vmatprep.mubr.bf16.mxu0 0
      %1114 = vmatmul.mubr.bf16.gmra.mxu0 %v1069
      %v1115 = vpop.f32.mrf.mxu0
      %v1116 = vadd.f32 0.0, %v1115
      %v1117 = vpop.f32.mrf.mxu0
      %v1118 = vadd.f32 0.0, %v1117
      %v1119 = vpop.f32.mrf.mxu0
      %v1120 = vadd.f32 0.0, %v1119
      %v1121 = vpop.f32.mrf.mxu0
      %v1122 = vadd.f32 0.0, %v1121
      %1123 = vdwg.mxu0
      %1124 = vmatprep.subr.bf16.mxu0 0
      %1125 = vmatpush1.bf16.msra.mxu0 0
      %1126 = vmatprep.subr.bf16.mxu0 0
      %1127 = vmatpush1.bf16.msra.mxu0 0
      %1128 = vmatprep.subr.bf16.mxu0 0
      %1129 = vmatpush1.bf16.msra.mxu0 0
      %1130 = vmatprep.subr.bf16.mxu0 0
      %1131 = vmatpush1.bf16.msra.mxu0 0
      %1132 = vmatprep.subr.bf16.mxu0 0
      %1133 = vmatpush1.bf16.msra.mxu0 0
      %1134 = vmatprep.subr.bf16.mxu0 0
      %1135 = vmatpush1.bf16.msra.mxu0 0
      %1136 = vmatprep.subr.bf16.mxu0 0
      %1137 = vmatpush1.bf16.msra.mxu0 0
      %1138 = vmatprep.subr.bf16.mxu0 0
      %1139 = vmatpush1.bf16.msra.mxu0 %v1058
      %1140 = vmatprep.subr.bf16.mxu0 0
      %1141 = vmatpush2.bf16.msra.mxu0 0
      %1142 = vmatprep.subr.bf16.mxu0 0
      %1143 = vmatpush2.bf16.msra.mxu0 0
      %1144 = vmatprep.subr.bf16.mxu0 0
      %1145 = vmatpush2.bf16.msra.mxu0 0
      %1146 = vmatprep.subr.bf16.mxu0 0
      %1147 = vmatpush2.bf16.msra.mxu0 0
      %1148 = vmatprep.subr.bf16.mxu0 0
      %1149 = vmatpush2.bf16.msra.mxu0 0
      %1150 = vmatprep.subr.bf16.mxu0 0
      %1151 = vmatpush2.bf16.msra.mxu0 0
      %1152 = vmatprep.subr.bf16.mxu0 0
      %1153 = vmatpush2.bf16.msra.mxu0 0
      %1154 = vmatprep.subr.bf16.mxu0 0
      %1155 = vmatpush2.bf16.msra.mxu0 0
      %1156 = vmatprep.mubr.bf16.mxu0 0
      %1157 = vmatmul.mubr.bf16.gmra.mxu0 %v1066
      %v1158 = vpop.f32.mrf.mxu0
      %v1159 = vadd.f32 0.0, %v1158
      %v1160 = vpop.f32.mrf.mxu0
      %v1161 = vpop.f32.mrf.mxu0
      %v1162 = vadd.f32 0.0, %v1161
      %v1163 = vpop.f32.mrf.mxu0
      %1164 = vmatprep.mubr.bf16.mxu0 0
      %1165 = vmatmul.mubr.bf16.gmra.mxu0 %v1069
      %v1166 = vpop.f32.mrf.mxu0
      %v1167 = vadd.f32 0.0, %v1166
      %v1168 = vpop.f32.mrf.mxu0
      %v1169 = vpop.f32.mrf.mxu0
      %v1170 = vadd.f32 0.0, %v1169
      %v1171 = vpop.f32.mrf.mxu0
      %1172 = vdwg.mxu0
      %v1173 = vadd.f32 %v1026, %v1106
      %v1174 = vadd.f32 %v1027, %v1108
      %v1175 = vadd.f32 %v1028, %v1159
      %v1176 = vadd.f32 %v1029, %v1110
      %v1177 = vadd.f32 %v1030, %v1112
      %v1178 = vadd.f32 %v1031, %v1162
      %v1179 = vadd.f32 %v1032, %v1116
      %v1180 = vadd.f32 %v1033, %v1118
      %v1181 = vadd.f32 %v1034, %v1167
      %v1182 = vadd.f32 %v1035, %v1120
      %v1183 = vadd.f32 %v1036, %v1122
      %v1184 = vadd.f32 %v1037, %v1170
      %s1185 = scalar_lea.vmem %s1, 112
      %v1186 = vld [vmem:[%s1185] sm:$0xf]
      %v1187 = vld [vmem:[%s1185 + $0x4] sm:$0xf]
      %v1188 = vld [vmem:[%s1185 + $0x8] sm:$0xf]
      %v1189 = vld [vmem:[%s1185 + $0xc] sm:$0xf]
      %v1194 = vunpack.c.l.b16 %v1186
      %v1195 = vunpack.c.l.b16 %v1187
      %v1196 = vunpack.c.l.b16 %v1188
      %v1197 = vunpack.c.l.b16 %v1189
      %v1198 = vpack.c.b16 %v1195, %v1194
      %v1199 = vpack.c.b16 %v1197, %v1196
      %1200 = vrot.lane.b32.xlu0 %v205, 91
      %v1201 = vpop.permute.xlu0 %1200
      %1202 = vrot.lane.b32.xlu0 %v206, 91
      %v1203 = vpop.permute.xlu0 %1202
      %1204 = vrot.lane.b32.xlu0 %v207, 91
      %v1205 = vpop.permute.xlu0 %1204
      %vm1206 = vcmask 744448
      %v1207 = vsel %vm1206, %v1201, %v1203
      %v1208 = vsel %vm1206, %v1203, %v1205
      %v1213 = vsel %vm220, %v1198, 0
      %v1216 = vsel %vm220, %v1199, 0
      %1218 = vmatprep.subr.bf16.mxu0 0
      %1219 = vmatpush1.bf16.msra.mxu0 0
      %1220 = vmatprep.subr.bf16.mxu0 0
      %1221 = vmatpush1.bf16.msra.mxu0 0
      %1222 = vmatprep.subr.bf16.mxu0 0
      %1223 = vmatpush1.bf16.msra.mxu0 0
      %1224 = vmatprep.subr.bf16.mxu0 0
      %1225 = vmatpush1.bf16.msra.mxu0 0
      %1226 = vmatprep.subr.bf16.mxu0 0
      %1227 = vmatpush1.bf16.msra.mxu0 0
      %1228 = vmatprep.subr.bf16.mxu0 0
      %1229 = vmatpush1.bf16.msra.mxu0 0
      %1230 = vmatprep.subr.bf16.mxu0 0
      %1231 = vmatpush1.bf16.msra.mxu0 0
      %1232 = vmatprep.subr.bf16.mxu0 %v1208
      %1233 = vmatpush1.bf16.msra.mxu0 %v1207
      %1234 = vmatprep.subr.bf16.mxu0 0
      %1235 = vmatpush2.bf16.msra.mxu0 0
      %1236 = vmatprep.subr.bf16.mxu0 0
      %1237 = vmatpush2.bf16.msra.mxu0 0
      %1238 = vmatprep.subr.bf16.mxu0 0
      %1239 = vmatpush2.bf16.msra.mxu0 0
      %1240 = vmatprep.subr.bf16.mxu0 0
      %1241 = vmatpush2.bf16.msra.mxu0 0
      %1242 = vmatprep.subr.bf16.mxu0 0
      %1243 = vmatpush2.bf16.msra.mxu0 0
      %1244 = vmatprep.subr.bf16.mxu0 0
      %1245 = vmatpush2.bf16.msra.mxu0 0
      %1246 = vmatprep.subr.bf16.mxu0 0
      %1247 = vmatpush2.bf16.msra.mxu0 0
      %1248 = vmatprep.subr.bf16.mxu0 0
      %1249 = vmatpush2.bf16.msra.mxu0 0
      %1250 = vmatprep.mubr.bf16.mxu0 0
      %1251 = vmatmul.mubr.bf16.gmra.mxu0 %v1213
      %v1252 = vpop.f32.mrf.mxu0
      %v1253 = vadd.f32 0.0, %v1252
      %v1254 = vpop.f32.mrf.mxu0
      %v1255 = vadd.f32 0.0, %v1254
      %v1256 = vpop.f32.mrf.mxu0
      %v1257 = vadd.f32 0.0, %v1256
      %v1258 = vpop.f32.mrf.mxu0
      %v1259 = vadd.f32 0.0, %v1258
      %1260 = vmatprep.mubr.bf16.mxu0 0
      %1261 = vmatmul.mubr.bf16.gmra.mxu0 %v1216
      %v1262 = vpop.f32.mrf.mxu0
      %v1263 = vadd.f32 0.0, %v1262
      %v1264 = vpop.f32.mrf.mxu0
      %v1265 = vadd.f32 0.0, %v1264
      %v1266 = vpop.f32.mrf.mxu0
      %v1267 = vadd.f32 0.0, %v1266
      %v1268 = vpop.f32.mrf.mxu0
      %v1269 = vadd.f32 0.0, %v1268
      %1270 = vdwg.mxu0
      %1271 = vmatprep.subr.bf16.mxu0 0
      %1272 = vmatpush1.bf16.msra.mxu0 0
      %1273 = vmatprep.subr.bf16.mxu0 0
      %1274 = vmatpush1.bf16.msra.mxu0 0
      %1275 = vmatprep.subr.bf16.mxu0 0
      %1276 = vmatpush1.bf16.msra.mxu0 0
      %1277 = vmatprep.subr.bf16.mxu0 0
      %1278 = vmatpush1.bf16.msra.mxu0 0
      %1279 = vmatprep.subr.bf16.mxu0 0
      %1280 = vmatpush1.bf16.msra.mxu0 0
      %1281 = vmatprep.subr.bf16.mxu0 0
      %1282 = vmatpush1.bf16.msra.mxu0 0
      %1283 = vmatprep.subr.bf16.mxu0 0
      %1284 = vmatpush1.bf16.msra.mxu0 0
      %1285 = vmatprep.subr.bf16.mxu0 0
      %1286 = vmatpush1.bf16.msra.mxu0 %v1205
      %1287 = vmatprep.subr.bf16.mxu0 0
      %1288 = vmatpush2.bf16.msra.mxu0 0
      %1289 = vmatprep.subr.bf16.mxu0 0
      %1290 = vmatpush2.bf16.msra.mxu0 0
      %1291 = vmatprep.subr.bf16.mxu0 0
      %1292 = vmatpush2.bf16.msra.mxu0 0
      %1293 = vmatprep.subr.bf16.mxu0 0
      %1294 = vmatpush2.bf16.msra.mxu0 0
      %1295 = vmatprep.subr.bf16.mxu0 0
      %1296 = vmatpush2.bf16.msra.mxu0 0
      %1297 = vmatprep.subr.bf16.mxu0 0
      %1298 = vmatpush2.bf16.msra.mxu0 0
      %1299 = vmatprep.subr.bf16.mxu0 0
      %1300 = vmatpush2.bf16.msra.mxu0 0
      %1301 = vmatprep.subr.bf16.mxu0 0
      %1302 = vmatpush2.bf16.msra.mxu0 0
      %1303 = vmatprep.mubr.bf16.mxu0 0
      %1304 = vmatmul.mubr.bf16.gmra.mxu0 %v1213
      %v1305 = vpop.f32.mrf.mxu0
      %v1306 = vadd.f32 0.0, %v1305
      %v1307 = vpop.f32.mrf.mxu0
      %v1308 = vpop.f32.mrf.mxu0
      %v1309 = vadd.f32 0.0, %v1308
      %v1310 = vpop.f32.mrf.mxu0
      %1311 = vmatprep.mubr.bf16.mxu0 0
      %1312 = vmatmul.mubr.bf16.gmra.mxu0 %v1216
      %v1313 = vpop.f32.mrf.mxu0
      %v1314 = vadd.f32 0.0, %v1313
      %v1315 = vpop.f32.mrf.mxu0
      %v1316 = vpop.f32.mrf.mxu0
      %v1317 = vadd.f32 0.0, %v1316
      %v1318 = vpop.f32.mrf.mxu0
      %1319 = vdwg.mxu0
      %v1320 = vadd.f32 %v1173, %v1253
      %v1321 = vadd.f32 %v1174, %v1255
      %v1322 = vadd.f32 %v1175, %v1306
      %v1323 = vadd.f32 %v1176, %v1257
      %v1324 = vadd.f32 %v1177, %v1259
      %v1325 = vadd.f32 %v1178, %v1309
      %v1326 = vadd.f32 %v1179, %v1263
      %v1327 = vadd.f32 %v1180, %v1265
      %v1328 = vadd.f32 %v1181, %v1314
      %v1329 = vadd.f32 %v1182, %v1267
      %v1330 = vadd.f32 %v1183, %v1269
      %v1331 = vadd.f32 %v1184, %v1317
      %s1332 = scalar_lea.vmem %s1, 128
      %v1333 = vld [vmem:[%s1332] sm:$0xf]
      %v1334 = vld [vmem:[%s1332 + $0x4] sm:$0xf]
      %v1335 = vld [vmem:[%s1332 + $0x8] sm:$0xf]
      %v1336 = vld [vmem:[%s1332 + $0xc] sm:$0xf]
      %v1341 = vunpack.c.l.b16 %v1333
      %v1342 = vunpack.c.l.b16 %v1334
      %v1343 = vunpack.c.l.b16 %v1335
      %v1344 = vunpack.c.l.b16 %v1336
      %v1345 = vpack.c.b16 %v1342, %v1341
      %v1346 = vpack.c.b16 %v1344, %v1343
      %1347 = vrot.lane.b32.xlu0 %v205, 90
      %v1348 = vpop.permute.xlu0 %1347
      %1349 = vrot.lane.b32.xlu0 %v206, 90
      %v1350 = vpop.permute.xlu0 %1349
      %1351 = vrot.lane.b32.xlu0 %v207, 90
      %v1352 = vpop.permute.xlu0 %1351
      %vm1353 = vcmask 736256
      %v1354 = vsel %vm1353, %v1348, %v1350
      %v1355 = vsel %vm1353, %v1350, %v1352
      %v1360 = vsel %vm220, %v1345, 0
      %v1363 = vsel %vm220, %v1346, 0
      %1365 = vmatprep.subr.bf16.mxu0 0
      %1366 = vmatpush1.bf16.msra.mxu0 0
      %1367 = vmatprep.subr.bf16.mxu0 0
      %1368 = vmatpush1.bf16.msra.mxu0 0
      %1369 = vmatprep.subr.bf16.mxu0 0
      %1370 = vmatpush1.bf16.msra.mxu0 0
      %1371 = vmatprep.subr.bf16.mxu0 0
      %1372 = vmatpush1.bf16.msra.mxu0 0
      %1373 = vmatprep.subr.bf16.mxu0 0
      %1374 = vmatpush1.bf16.msra.mxu0 0
      %1375 = vmatprep.subr.bf16.mxu0 0
      %1376 = vmatpush1.bf16.msra.mxu0 0
      %1377 = vmatprep.subr.bf16.mxu0 0
      %1378 = vmatpush1.bf16.msra.mxu0 0
      %1379 = vmatprep.subr.bf16.mxu0 %v1355
      %1380 = vmatpush1.bf16.msra.mxu0 %v1354
      %1381 = vmatprep.subr.bf16.mxu0 0
      %1382 = vmatpush2.bf16.msra.mxu0 0
      %1383 = vmatprep.subr.bf16.mxu0 0
      %1384 = vmatpush2.bf16.msra.mxu0 0
      %1385 = vmatprep.subr.bf16.mxu0 0
      %1386 = vmatpush2.bf16.msra.mxu0 0
      %1387 = vmatprep.subr.bf16.mxu0 0
      %1388 = vmatpush2.bf16.msra.mxu0 0
      %1389 = vmatprep.subr.bf16.mxu0 0
      %1390 = vmatpush2.bf16.msra.mxu0 0
      %1391 = vmatprep.subr.bf16.mxu0 0
      %1392 = vmatpush2.bf16.msra.mxu0 0
      %1393 = vmatprep.subr.bf16.mxu0 0
      %1394 = vmatpush2.bf16.msra.mxu0 0
      %1395 = vmatprep.subr.bf16.mxu0 0
      %1396 = vmatpush2.bf16.msra.mxu0 0
      %1397 = vmatprep.mubr.bf16.mxu0 0
      %1398 = vmatmul.mubr.bf16.gmra.mxu0 %v1360
      %v1399 = vpop.f32.mrf.mxu0
      %v1400 = vadd.f32 0.0, %v1399
      %v1401 = vpop.f32.mrf.mxu0
      %v1402 = vadd.f32 0.0, %v1401
      %v1403 = vpop.f32.mrf.mxu0
      %v1404 = vadd.f32 0.0, %v1403
      %v1405 = vpop.f32.mrf.mxu0
      %v1406 = vadd.f32 0.0, %v1405
      %1407 = vmatprep.mubr.bf16.mxu0 0
      %1408 = vmatmul.mubr.bf16.gmra.mxu0 %v1363
      %v1409 = vpop.f32.mrf.mxu0
      %v1410 = vadd.f32 0.0, %v1409
      %v1411 = vpop.f32.mrf.mxu0
      %v1412 = vadd.f32 0.0, %v1411
      %v1413 = vpop.f32.mrf.mxu0
      %v1414 = vadd.f32 0.0, %v1413
      %v1415 = vpop.f32.mrf.mxu0
      %v1416 = vadd.f32 0.0, %v1415
      %1417 = vdwg.mxu0
      %1418 = vmatprep.subr.bf16.mxu0 0
      %1419 = vmatpush1.bf16.msra.mxu0 0
      %1420 = vmatprep.subr.bf16.mxu0 0
      %1421 = vmatpush1.bf16.msra.mxu0 0
      %1422 = vmatprep.subr.bf16.mxu0 0
      %1423 = vmatpush1.bf16.msra.mxu0 0
      %1424 = vmatprep.subr.bf16.mxu0 0
      %1425 = vmatpush1.bf16.msra.mxu0 0
      %1426 = vmatprep.subr.bf16.mxu0 0
      %1427 = vmatpush1.bf16.msra.mxu0 0
      %1428 = vmatprep.subr.bf16.mxu0 0
      %1429 = vmatpush1.bf16.msra.mxu0 0
      %1430 = vmatprep.subr.bf16.mxu0 0
      %1431 = vmatpush1.bf16.msra.mxu0 0
      %1432 = vmatprep.subr.bf16.mxu0 0
      %1433 = vmatpush1.bf16.msra.mxu0 %v1352
      %1434 = vmatprep.subr.bf16.mxu0 0
      %1435 = vmatpush2.bf16.msra.mxu0 0
      %1436 = vmatprep.subr.bf16.mxu0 0
      %1437 = vmatpush2.bf16.msra.mxu0 0
      %1438 = vmatprep.subr.bf16.mxu0 0
      %1439 = vmatpush2.bf16.msra.mxu0 0
      %1440 = vmatprep.subr.bf16.mxu0 0
      %1441 = vmatpush2.bf16.msra.mxu0 0
      %1442 = vmatprep.subr.bf16.mxu0 0
      %1443 = vmatpush2.bf16.msra.mxu0 0
      %1444 = vmatprep.subr.bf16.mxu0 0
      %1445 = vmatpush2.bf16.msra.mxu0 0
      %1446 = vmatprep.subr.bf16.mxu0 0
      %1447 = vmatpush2.bf16.msra.mxu0 0
      %1448 = vmatprep.subr.bf16.mxu0 0
      %1449 = vmatpush2.bf16.msra.mxu0 0
      %1450 = vmatprep.mubr.bf16.mxu0 0
      %1451 = vmatmul.mubr.bf16.gmra.mxu0 %v1360
      %v1452 = vpop.f32.mrf.mxu0
      %v1453 = vadd.f32 0.0, %v1452
      %v1454 = vpop.f32.mrf.mxu0
      %v1455 = vpop.f32.mrf.mxu0
      %v1456 = vadd.f32 0.0, %v1455
      %v1457 = vpop.f32.mrf.mxu0
      %1458 = vmatprep.mubr.bf16.mxu0 0
      %1459 = vmatmul.mubr.bf16.gmra.mxu0 %v1363
      %v1460 = vpop.f32.mrf.mxu0
      %v1461 = vadd.f32 0.0, %v1460
      %v1462 = vpop.f32.mrf.mxu0
      %v1463 = vpop.f32.mrf.mxu0
      %v1464 = vadd.f32 0.0, %v1463
      %v1465 = vpop.f32.mrf.mxu0
      %1466 = vdwg.mxu0
      %v1467 = vadd.f32 %v1320, %v1400
      %v1468 = vadd.f32 %v1321, %v1402
      %v1469 = vadd.f32 %v1322, %v1453
      %v1470 = vadd.f32 %v1323, %v1404
      %v1471 = vadd.f32 %v1324, %v1406
      %v1472 = vadd.f32 %v1325, %v1456
      %v1473 = vadd.f32 %v1326, %v1410
      %v1474 = vadd.f32 %v1327, %v1412
      %v1475 = vadd.f32 %v1328, %v1461
      %v1476 = vadd.f32 %v1329, %v1414
      %v1477 = vadd.f32 %v1330, %v1416
      %v1478 = vadd.f32 %v1331, %v1464
      %v1479 = vld [vmem:[%s2] sm:$0xff]
      %v1480 = vld [vmem:[%s2 + $0x8] sm:$0xff]
      %v1481 = vld [vmem:[%s2 + $0x10] sm:$0xff]
      %v1482 = vld [vmem:[%s2 + $0x18] sm:$0xff]
      %1484 = vset.pattern.permute.xlu0 0
      %1485 = vperm.xlu0 %1484, %v1479
      %v1486 = vpop.permute.xlu0 %1485
      %1489 = vset.pattern.permute.xlu0 0
      %1490 = vperm.xlu0 %1489, %v1480
      %v1491 = vpop.permute.xlu0 %1490
      %1494 = vset.pattern.permute.xlu0 0
      %1495 = vperm.xlu0 %1494, %v1481
      %v1496 = vpop.permute.xlu0 %1495
      %1499 = vset.pattern.permute.xlu0 0
      %1500 = vperm.xlu0 %1499, %v1482
      %v1501 = vpop.permute.xlu0 %1500
      %v1503 = vadd.f32 %v1467, %v1486
      %v1504 = vadd.f32 %v1468, %v1486
      %v1505 = vadd.f32 %v1469, %v1486
      %v1506 = vadd.f32 %v1470, %v1491
      %v1507 = vadd.f32 %v1471, %v1491
      %v1508 = vadd.f32 %v1472, %v1491
      %v1509 = vadd.f32 %v1473, %v1496
      %v1510 = vadd.f32 %v1474, %v1496
      %v1511 = vadd.f32 %v1475, %v1496
      %v1512 = vadd.f32 %v1476, %v1501
      %v1513 = vadd.f32 %v1477, %v1501
      %v1514 = vadd.f32 %v1478, %v1501
      %v1515 = vmax.f32 %v1503, 0.0
      %v1516 = vmax.f32 %v1504, 0.0
      %v1517 = vmax.f32 %v1505, 0.0
      %v1518 = vmax.f32 %v1506, 0.0
      %v1519 = vmax.f32 %v1507, 0.0
      %v1520 = vmax.f32 %v1508, 0.0
      %v1521 = vmax.f32 %v1509, 0.0
      %v1522 = vmax.f32 %v1510, 0.0
      %v1523 = vmax.f32 %v1511, 0.0
      %v1524 = vmax.f32 %v1512, 0.0
      %v1525 = vmax.f32 %v1513, 0.0
      %v1526 = vmax.f32 %v1514, 0.0
      %1527 = vst [vmem:[#allocation2] sm:$0xff] %v1515
      %1528 = vst [vmem:[#allocation2 + $0x8] sm:$0xff] %v1516
      %vm1529 = vcmask 261120
      %1530 = vst.msk [vmem:[#allocation2 + $0x10] sm:$0xff] %vm1529, %v1517
      %1531 = vst [vmem:[#allocation2 + $0x18] sm:$0xff] %v1518
      %1532 = vst [vmem:[#allocation2 + $0x20] sm:$0xff] %v1519
      %1533 = vst.msk [vmem:[#allocation2 + $0x28] sm:$0xff] %vm1529, %v1520
      %1534 = vst [vmem:[#allocation2 + $0x30] sm:$0xff] %v1521
      %1535 = vst [vmem:[#allocation2 + $0x38] sm:$0xff] %v1522
      %1536 = vst.msk [vmem:[#allocation2 + $0x40] sm:$0xff] %vm1529, %v1523
      %1537 = vst [vmem:[#allocation2 + $0x48] sm:$0xff] %v1524
      %1538 = vst [vmem:[#allocation2 + $0x50] sm:$0xff] %v1525
      %1539 = vst.msk [vmem:[#allocation2 + $0x58] sm:$0xff] %vm1529, %v1526
      %v1540 = vld [vmem:[#allocation2] sm:$0xff]
      %v1541 = vld [vmem:[#allocation2 + $0x18] sm:$0xff]
      %v1542 = vld [vmem:[#allocation2 + $0x30] sm:$0xff]
      %v1543 = vld [vmem:[#allocation2 + $0x48] sm:$0xff]
      %1548 = vrot.lane.b32.xlu0 %v1540, 127
      %v1549 = vpop.permute.xlu0 %1548
      %1550 = vrot.lane.b32.xlu0 %v1541, 127
      %v1551 = vpop.permute.xlu0 %1550
      %1552 = vrot.lane.b32.xlu0 %v1542, 127
      %v1553 = vpop.permute.xlu0 %1552
      %1554 = vrot.lane.b32.xlu0 %v1543, 127
      %v1555 = vpop.permute.xlu0 %1554
      %v1560 = vmax.f32 %v1540, %v1549
      %v1561 = vmax.f32 %v1541, %v1551
      %v1562 = vmax.f32 %v1542, %v1553
      %v1563 = vmax.f32 %v1543, %v1555
      %1568 = vrot.lane.b32.xlu0 %v1560, 110
      %v1569 = vpop.permute.xlu0 %1568
      %1570 = vrot.lane.b32.xlu0 %v1561, 110
      %v1571 = vpop.permute.xlu0 %1570
      %1572 = vrot.lane.b32.xlu0 %v1562, 110
      %v1573 = vpop.permute.xlu0 %1572
      %1574 = vrot.lane.b32.xlu0 %v1563, 110
      %v1575 = vpop.permute.xlu0 %1574
      %v1580 = vmax.f32 %v1560, %v1569
      %v1581 = vmax.f32 %v1561, %v1571
      %v1582 = vmax.f32 %v1562, %v1573
      %v1583 = vmax.f32 %v1563, %v1575
      %1584 = vst.msk [vmem:[%s170] sm:$0xff] %vm220, %v1580
      %1585 = vst.msk [vmem:[%s170 + $0x8] sm:$0xff] %vm220, %v1581
      %1586 = vst.msk [vmem:[%s170 + $0x10] sm:$0xff] %vm220, %v1582
      %1587 = vst.msk [vmem:[%s170 + $0x18] sm:$0xff] %vm220, %v1583
      %v1588 = vld [vmem:[#allocation2] sm:$0xff]
      %v1589 = vld [vmem:[#allocation2 + $0x18] sm:$0xff]
      %v1590 = vld [vmem:[#allocation2 + $0x30] sm:$0xff]
      %v1591 = vld [vmem:[#allocation2 + $0x48] sm:$0xff]
      %1596 = vrot.lane.b32.xlu0 %v1588, 127
      %v1597 = vpop.permute.xlu0 %1596
      %1598 = vrot.lane.b32.xlu0 %v1589, 127
      %v1599 = vpop.permute.xlu0 %1598
      %1600 = vrot.lane.b32.xlu0 %v1590, 127
      %v1601 = vpop.permute.xlu0 %1600
      %1602 = vrot.lane.b32.xlu0 %v1591, 127
      %v1603 = vpop.permute.xlu0 %1602
      %v1608 = vmax.f32 %v1588, %v1597
      %v1609 = vmax.f32 %v1589, %v1599
      %v1610 = vmax.f32 %v1590, %v1601
      %v1611 = vmax.f32 %v1591, %v1603
      %1616 = vrot.lane.b32.xlu0 %v1608, 110
      %v1617 = vpop.permute.xlu0 %1616
      %1618 = vrot.lane.b32.xlu0 %v1609, 110
      %v1619 = vpop.permute.xlu0 %1618
      %1620 = vrot.lane.b32.xlu0 %v1610, 110
      %v1621 = vpop.permute.xlu0 %1620
      %1622 = vrot.lane.b32.xlu0 %v1611, 110
      %v1623 = vpop.permute.xlu0 %1622
      %v1628 = vmax.f32 %v1608, %v1617
      %v1629 = vmax.f32 %v1609, %v1619
      %v1630 = vmax.f32 %v1610, %v1621
      %v1631 = vmax.f32 %v1611, %v1623
      %1636 = vrot.lane.b32.xlu0 %v1628, 108
      %v1637 = vpop.permute.xlu0 %1636
      %1638 = vrot.lane.b32.xlu0 %v1629, 108
      %v1639 = vpop.permute.xlu0 %1638
      %1640 = vrot.lane.b32.xlu0 %v1630, 108
      %v1641 = vpop.permute.xlu0 %1640
      %1642 = vrot.lane.b32.xlu0 %v1631, 108
      %v1643 = vpop.permute.xlu0 %1642
      %vm1648 = vcmask 261248
      %1649 = vst.msk [vmem:[%s170] sm:$0xff] %vm1648, %v1637
      %1650 = vst.msk [vmem:[%s170 + $0x8] sm:$0xff] %vm1648, %v1639
      %1651 = vst.msk [vmem:[%s170 + $0x10] sm:$0xff] %vm1648, %v1641
      %1652 = vst.msk [vmem:[%s170 + $0x18] sm:$0xff] %vm1648, %v1643
      %v1653 = vld [vmem:[#allocation2] sm:$0xff]
      %v1654 = vld [vmem:[#allocation2 + $0x18] sm:$0xff]
      %v1655 = vld [vmem:[#allocation2 + $0x30] sm:$0xff]
      %v1656 = vld [vmem:[#allocation2 + $0x48] sm:$0xff]
      %1661 = vrot.lane.b32.xlu0 %v1653, 127
      %v1662 = vpop.permute.xlu0 %1661
      %1663 = vrot.lane.b32.xlu0 %v1654, 127
      %v1664 = vpop.permute.xlu0 %1663
      %1665 = vrot.lane.b32.xlu0 %v1655, 127
      %v1666 = vpop.permute.xlu0 %1665
      %1667 = vrot.lane.b32.xlu0 %v1656, 127
      %v1668 = vpop.permute.xlu0 %1667
      %v1673 = vmax.f32 %v1653, %v1662
      %v1674 = vmax.f32 %v1654, %v1664
      %v1675 = vmax.f32 %v1655, %v1666
      %v1676 = vmax.f32 %v1656, %v1668
      %1681 = vrot.lane.b32.xlu0 %v1673, 110
      %v1682 = vpop.permute.xlu0 %1681
      %1683 = vrot.lane.b32.xlu0 %v1674, 110
      %v1684 = vpop.permute.xlu0 %1683
      %1685 = vrot.lane.b32.xlu0 %v1675, 110
      %v1686 = vpop.permute.xlu0 %1685
      %1687 = vrot.lane.b32.xlu0 %v1676, 110
      %v1688 = vpop.permute.xlu0 %1687
      %v1693 = vmax.f32 %v1673, %v1682
      %v1694 = vmax.f32 %v1674, %v1684
      %v1695 = vmax.f32 %v1675, %v1686
      %v1696 = vmax.f32 %v1676, %v1688
      %1701 = vrot.lane.b32.xlu0 %v1693, 88
      %v1702 = vpop.permute.xlu0 %1701
      %1703 = vrot.lane.b32.xlu0 %v1694, 88
      %v1704 = vpop.permute.xlu0 %1703
      %1705 = vrot.lane.b32.xlu0 %v1695, 88
      %v1706 = vpop.permute.xlu0 %1705
      %1707 = vrot.lane.b32.xlu0 %v1696, 88
      %v1708 = vpop.permute.xlu0 %1707
      %vm1713 = vcmask 392448
      %1714 = vst.msk [vmem:[%s170] sm:$0xff] %vm1713, %v1702
      %1715 = vst.msk [vmem:[%s170 + $0x8] sm:$0xff] %vm1713, %v1704
      %1716 = vst.msk [vmem:[%s170 + $0x10] sm:$0xff] %vm1713, %v1706
      %1717 = vst.msk [vmem:[%s170 + $0x18] sm:$0xff] %vm1713, %v1708
      %v1718 = vld [vmem:[#allocation2] sm:$0xff]
      %v1719 = vld [vmem:[#allocation2 + $0x18] sm:$0xff]
      %v1720 = vld [vmem:[#allocation2 + $0x30] sm:$0xff]
      %v1721 = vld [vmem:[#allocation2 + $0x48] sm:$0xff]
      %1726 = vrot.lane.b32.xlu0 %v1718, 127
      %v1727 = vpop.permute.xlu0 %1726
      %1728 = vrot.lane.b32.xlu0 %v1719, 127
      %v1729 = vpop.permute.xlu0 %1728
      %1730 = vrot.lane.b32.xlu0 %v1720, 127
      %v1731 = vpop.permute.xlu0 %1730
      %1732 = vrot.lane.b32.xlu0 %v1721, 127
      %v1733 = vpop.permute.xlu0 %1732
      %v1738 = vmax.f32 %v1718, %v1727
      %v1739 = vmax.f32 %v1719, %v1729
      %v1740 = vmax.f32 %v1720, %v1731
      %v1741 = vmax.f32 %v1721, %v1733
      %v1742 = vld [vmem:[#allocation2 + $0x8] sm:$0xff]
      %v1743 = vld [vmem:[#allocation2 + $0x20] sm:$0xff]
      %v1744 = vld [vmem:[#allocation2 + $0x38] sm:$0xff]
      %v1745 = vld [vmem:[#allocation2 + $0x50] sm:$0xff]
      %1750 = vrot.lane.b32.xlu0 %v1742, 127
      %v1751 = vpop.permute.xlu0 %1750
      %1752 = vrot.lane.b32.xlu0 %v1743, 127
      %v1753 = vpop.permute.xlu0 %1752
      %1754 = vrot.lane.b32.xlu0 %v1744, 127
      %v1755 = vpop.permute.xlu0 %1754
      %1756 = vrot.lane.b32.xlu0 %v1745, 127
      %v1757 = vpop.permute.xlu0 %1756
      %vm1758 = vcmask 1039360
      %v1759 = vsel %vm1758, %v1727, %v1751
      %v1760 = vsel %vm1758, %v1729, %v1753
      %v1761 = vsel %vm1758, %v1731, %v1755
      %v1762 = vsel %vm1758, %v1733, %v1757
      %v1771 = vmax.f32 %v1718, %v1759
      %v1772 = vmax.f32 %v1742, %v1751
      %v1773 = vmax.f32 %v1719, %v1760
      %v1774 = vmax.f32 %v1743, %v1753
      %v1775 = vmax.f32 %v1720, %v1761
      %v1776 = vmax.f32 %v1744, %v1755
      %v1777 = vmax.f32 %v1721, %v1762
      %v1778 = vmax.f32 %v1745, %v1757
      %1787 = vrot.lane.b32.xlu0 %v1771, 110
      %v1788 = vpop.permute.xlu0 %1787
      %1789 = vrot.lane.b32.xlu0 %v1772, 110
      %v1790 = vpop.permute.xlu0 %1789
      %1791 = vrot.lane.b32.xlu0 %v1773, 110
      %v1792 = vpop.permute.xlu0 %1791
      %1793 = vrot.lane.b32.xlu0 %v1774, 110
      %v1794 = vpop.permute.xlu0 %1793
      %1795 = vrot.lane.b32.xlu0 %v1775, 110
      %v1796 = vpop.permute.xlu0 %1795
      %1797 = vrot.lane.b32.xlu0 %v1776, 110
      %v1798 = vpop.permute.xlu0 %1797
      %1799 = vrot.lane.b32.xlu0 %v1777, 110
      %v1800 = vpop.permute.xlu0 %1799
      %1801 = vrot.lane.b32.xlu0 %v1778, 110
      %v1802 = vpop.permute.xlu0 %1801
      %vm1803 = vcmask 900096
      %v1804 = vsel %vm1803, %v1788, %v1790
      %v1805 = vsel %vm1803, %v1792, %v1794
      %v1806 = vsel %vm1803, %v1796, %v1798
      %v1807 = vsel %vm1803, %v1800, %v1802
      %v1812 = vmax.f32 %v1738, %v1804
      %v1813 = vmax.f32 %v1739, %v1805
      %v1814 = vmax.f32 %v1740, %v1806
      %v1815 = vmax.f32 %v1741, %v1807
      %1820 = vrot.lane.b32.xlu0 %v1812, 68
      %v1821 = vpop.permute.xlu0 %1820
      %1822 = vrot.lane.b32.xlu0 %v1813, 68
      %v1823 = vpop.permute.xlu0 %1822
      %1824 = vrot.lane.b32.xlu0 %v1814, 68
      %v1825 = vpop.permute.xlu0 %1824
      %1826 = vrot.lane.b32.xlu0 %v1815, 68
      %v1827 = vpop.permute.xlu0 %1826
      %vm1832 = vcmask 523648
      %1833 = vst.msk [vmem:[%s170] sm:$0xff] %vm1832, %v1821
      %1834 = vst.msk [vmem:[%s170 + $0x8] sm:$0xff] %vm1832, %v1823
      %1835 = vst.msk [vmem:[%s170 + $0x10] sm:$0xff] %vm1832, %v1825
      %1836 = vst.msk [vmem:[%s170 + $0x18] sm:$0xff] %vm1832, %v1827
      %v1837 = vld [vmem:[#allocation2 + $0x8] sm:$0xff]
      %v1838 = vld [vmem:[#allocation2 + $0x20] sm:$0xff]
      %v1839 = vld [vmem:[#allocation2 + $0x38] sm:$0xff]
      %v1840 = vld [vmem:[#allocation2 + $0x50] sm:$0xff]
      %1845 = vrot.lane.b32.xlu0 %v1837, 127
      %v1846 = vpop.permute.xlu0 %1845
      %1847 = vrot.lane.b32.xlu0 %v1838, 127
      %v1848 = vpop.permute.xlu0 %1847
      %1849 = vrot.lane.b32.xlu0 %v1839, 127
      %v1850 = vpop.permute.xlu0 %1849
      %1851 = vrot.lane.b32.xlu0 %v1840, 127
      %v1852 = vpop.permute.xlu0 %1851
      %v1857 = vmax.f32 %v1837, %v1846
      %v1858 = vmax.f32 %v1838, %v1848
      %v1859 = vmax.f32 %v1839, %v1850
      %v1860 = vmax.f32 %v1840, %v1852
      %1865 = vrot.lane.b32.xlu0 %v1857, 110
      %v1866 = vpop.permute.xlu0 %1865
      %1867 = vrot.lane.b32.xlu0 %v1858, 110
      %v1868 = vpop.permute.xlu0 %1867
      %1869 = vrot.lane.b32.xlu0 %v1859, 110
      %v1870 = vpop.permute.xlu0 %1869
      %1871 = vrot.lane.b32.xlu0 %v1860, 110
      %v1872 = vpop.permute.xlu0 %1871
      %v1877 = vmax.f32 %v1857, %v1866
      %v1878 = vmax.f32 %v1858, %v1868
      %v1879 = vmax.f32 %v1859, %v1870
      %v1880 = vmax.f32 %v1860, %v1872
      %1885 = vrot.lane.b32.xlu0 %v1877, 48
      %v1886 = vpop.permute.xlu0 %1885
      %1887 = vrot.lane.b32.xlu0 %v1878, 48
      %v1888 = vpop.permute.xlu0 %1887
      %1889 = vrot.lane.b32.xlu0 %v1879, 48
      %v1890 = vpop.permute.xlu0 %1889
      %1891 = vrot.lane.b32.xlu0 %v1880, 48
      %v1892 = vpop.permute.xlu0 %1891
      %vm1897 = vcmask 654848
      %1898 = vst.msk [vmem:[%s170] sm:$0xff] %vm1897, %v1886
      %1899 = vst.msk [vmem:[%s170 + $0x8] sm:$0xff] %vm1897, %v1888
      %1900 = vst.msk [vmem:[%s170 + $0x10] sm:$0xff] %vm1897, %v1890
      %1901 = vst.msk [vmem:[%s170 + $0x18] sm:$0xff] %vm1897, %v1892
      %v1902 = vld [vmem:[#allocation2 + $0x8] sm:$0xff]
      %v1903 = vld [vmem:[#allocation2 + $0x20] sm:$0xff]
      %v1904 = vld [vmem:[#allocation2 + $0x38] sm:$0xff]
      %v1905 = vld [vmem:[#allocation2 + $0x50] sm:$0xff]
      %1910 = vrot.lane.b32.xlu0 %v1902, 127
      %v1911 = vpop.permute.xlu0 %1910
      %1912 = vrot.lane.b32.xlu0 %v1903, 127
      %v1913 = vpop.permute.xlu0 %1912
      %1914 = vrot.lane.b32.xlu0 %v1904, 127
      %v1915 = vpop.permute.xlu0 %1914
      %1916 = vrot.lane.b32.xlu0 %v1905, 127
      %v1917 = vpop.permute.xlu0 %1916
      %v1922 = vmax.f32 %v1902, %v1911
      %v1923 = vmax.f32 %v1903, %v1913
      %v1924 = vmax.f32 %v1904, %v1915
      %v1925 = vmax.f32 %v1905, %v1917
      %1930 = vrot.lane.b32.xlu0 %v1922, 110
      %v1931 = vpop.permute.xlu0 %1930
      %1932 = vrot.lane.b32.xlu0 %v1923, 110
      %v1933 = vpop.permute.xlu0 %1932
      %1934 = vrot.lane.b32.xlu0 %v1924, 110
      %v1935 = vpop.permute.xlu0 %1934
      %1936 = vrot.lane.b32.xlu0 %v1925, 110
      %v1937 = vpop.permute.xlu0 %1936
      %v1942 = vmax.f32 %v1922, %v1931
      %v1943 = vmax.f32 %v1923, %v1933
      %v1944 = vmax.f32 %v1924, %v1935
      %v1945 = vmax.f32 %v1925, %v1937
      %1950 = vrot.lane.b32.xlu0 %v1942, 28
      %v1951 = vpop.permute.xlu0 %1950
      %1952 = vrot.lane.b32.xlu0 %v1943, 28
      %v1953 = vpop.permute.xlu0 %1952
      %1954 = vrot.lane.b32.xlu0 %v1944, 28
      %v1955 = vpop.permute.xlu0 %1954
      %1956 = vrot.lane.b32.xlu0 %v1945, 28
      %v1957 = vpop.permute.xlu0 %1956
      %vm1962 = vcmask 786048
      %1963 = vst.msk [vmem:[%s170] sm:$0xff] %vm1962, %v1951
      %1964 = vst.msk [vmem:[%s170 + $0x8] sm:$0xff] %vm1962, %v1953
      %1965 = vst.msk [vmem:[%s170 + $0x10] sm:$0xff] %vm1962, %v1955
      %1966 = vst.msk [vmem:[%s170 + $0x18] sm:$0xff] %vm1962, %v1957
      %v1967 = vld [vmem:[#allocation2 + $0x8] sm:$0xff]
      %v1968 = vld [vmem:[#allocation2 + $0x20] sm:$0xff]
      %v1969 = vld [vmem:[#allocation2 + $0x38] sm:$0xff]
      %v1970 = vld [vmem:[#allocation2 + $0x50] sm:$0xff]
      %1975 = vrot.lane.b32.xlu0 %v1967, 127
      %v1976 = vpop.permute.xlu0 %1975
      %1977 = vrot.lane.b32.xlu0 %v1968, 127
      %v1978 = vpop.permute.xlu0 %1977
      %1979 = vrot.lane.b32.xlu0 %v1969, 127
      %v1980 = vpop.permute.xlu0 %1979
      %1981 = vrot.lane.b32.xlu0 %v1970, 127
      %v1982 = vpop.permute.xlu0 %1981
      %v1987 = vmax.f32 %v1967, %v1976
      %v1988 = vmax.f32 %v1968, %v1978
      %v1989 = vmax.f32 %v1969, %v1980
      %v1990 = vmax.f32 %v1970, %v1982
      %1995 = vrot.lane.b32.xlu0 %v1987, 110
      %v1996 = vpop.permute.xlu0 %1995
      %1997 = vrot.lane.b32.xlu0 %v1988, 110
      %v1998 = vpop.permute.xlu0 %1997
      %1999 = vrot.lane.b32.xlu0 %v1989, 110
      %v2000 = vpop.permute.xlu0 %1999
      %2001 = vrot.lane.b32.xlu0 %v1990, 110
      %v2002 = vpop.permute.xlu0 %2001
      %v2007 = vmax.f32 %v1987, %v1996
      %v2008 = vmax.f32 %v1988, %v1998
      %v2009 = vmax.f32 %v1989, %v2000
      %v2010 = vmax.f32 %v1990, %v2002
      %2015 = vrot.lane.b32.xlu0 %v2007, 8
      %v2016 = vpop.permute.xlu0 %2015
      %2017 = vrot.lane.b32.xlu0 %v2008, 8
      %v2018 = vpop.permute.xlu0 %2017
      %2019 = vrot.lane.b32.xlu0 %v2009, 8
      %v2020 = vpop.permute.xlu0 %2019
      %2021 = vrot.lane.b32.xlu0 %v2010, 8
      %v2022 = vpop.permute.xlu0 %2021
      %vm2027 = vcmask 917248
      %2028 = vst.msk [vmem:[%s170] sm:$0xff] %vm2027, %v2016
      %2029 = vst.msk [vmem:[%s170 + $0x8] sm:$0xff] %vm2027, %v2018
      %2030 = vst.msk [vmem:[%s170 + $0x10] sm:$0xff] %vm2027, %v2020
      %2031 = vst.msk [vmem:[%s170 + $0x18] sm:$0xff] %vm2027, %v2022
      %v2032 = vld [vmem:[#allocation2 + $0x8] sm:$0xff]
      %v2033 = vld [vmem:[#allocation2 + $0x10] sm:$0xff]
      %v2034 = vld [vmem:[#allocation2 + $0x20] sm:$0xff]
      %v2035 = vld [vmem:[#allocation2 + $0x28] sm:$0xff]
      %v2036 = vld [vmem:[#allocation2 + $0x38] sm:$0xff]
      %v2037 = vld [vmem:[#allocation2 + $0x40] sm:$0xff]
      %v2038 = vld [vmem:[#allocation2 + $0x50] sm:$0xff]
      %v2039 = vld [vmem:[#allocation2 + $0x58] sm:$0xff]
      %2048 = vrot.lane.b32.xlu0 %v2032, 127
      %v2049 = vpop.permute.xlu0 %2048
      %2050 = vrot.lane.b32.xlu0 %v2033, 127
      %v2051 = vpop.permute.xlu0 %2050
      %2052 = vrot.lane.b32.xlu0 %v2034, 127
      %v2053 = vpop.permute.xlu0 %2052
      %2054 = vrot.lane.b32.xlu0 %v2035, 127
      %v2055 = vpop.permute.xlu0 %2054
      %2056 = vrot.lane.b32.xlu0 %v2036, 127
      %v2057 = vpop.permute.xlu0 %2056
      %2058 = vrot.lane.b32.xlu0 %v2037, 127
      %v2059 = vpop.permute.xlu0 %2058
      %2060 = vrot.lane.b32.xlu0 %v2038, 127
      %v2061 = vpop.permute.xlu0 %2060
      %2062 = vrot.lane.b32.xlu0 %v2039, 127
      %v2063 = vpop.permute.xlu0 %2062
      %v2064 = vsel %vm1758, %v2049, %v2051
      %v2065 = vsel %vm1758, %v2053, %v2055
      %v2066 = vsel %vm1758, %v2057, %v2059
      %v2067 = vsel %vm1758, %v2061, %v2063
      %v2076 = vmax.f32 %v2032, %v2064
      %v2077 = vmax.f32 %v2033, %v2051
      %v2078 = vmax.f32 %v2034, %v2065
      %v2079 = vmax.f32 %v2035, %v2055
      %v2080 = vmax.f32 %v2036, %v2066
      %v2081 = vmax.f32 %v2037, %v2059
      %v2082 = vmax.f32 %v2038, %v2067
      %v2083 = vmax.f32 %v2039, %v2063
      %2088 = vrot.lane.b32.xlu0 %v2077, 110
      %v2089 = vpop.permute.xlu0 %2088
      %2090 = vrot.lane.b32.xlu0 %v2079, 110
      %v2091 = vpop.permute.xlu0 %2090
      %2092 = vrot.lane.b32.xlu0 %v2081, 110
      %v2093 = vpop.permute.xlu0 %2092
      %2094 = vrot.lane.b32.xlu0 %v2083, 110
      %v2095 = vpop.permute.xlu0 %2094
      %v2100 = vmax.f32 %v2076, %v2089
      %v2101 = vmax.f32 %v2077, %v2089
      %v2102 = vmax.f32 %v2078, %v2091
      %v2103 = vmax.f32 %v2079, %v2091
      %v2104 = vmax.f32 %v2080, %v2093
      %v2105 = vmax.f32 %v2081, %v2093
      %v2106 = vmax.f32 %v2082, %v2095
      %v2107 = vmax.f32 %v2083, %v2095
      %2116 = vrot.lane.b32.xlu0 %v2100, 116
      %v2117 = vpop.permute.xlu0 %2116
      %2118 = vrot.lane.b32.xlu0 %v2101, 116
      %v2119 = vpop.permute.xlu0 %2118
      %2120 = vrot.lane.b32.xlu0 %v2102, 116
      %v2121 = vpop.permute.xlu0 %2120
      %2122 = vrot.lane.b32.xlu0 %v2103, 116
      %v2123 = vpop.permute.xlu0 %2122
      %2124 = vrot.lane.b32.xlu0 %v2104, 116
      %v2125 = vpop.permute.xlu0 %2124
      %2126 = vrot.lane.b32.xlu0 %v2105, 116
      %v2127 = vpop.permute.xlu0 %2126
      %2128 = vrot.lane.b32.xlu0 %v2106, 116
      %v2129 = vpop.permute.xlu0 %2128
      %2130 = vrot.lane.b32.xlu0 %v2107, 116
      %v2131 = vpop.permute.xlu0 %2130
      %vm2132 = vcmask 949248
      %v2133 = vsel %vm2132, %v2117, %v2119
      %v2134 = vsel %vm2132, %v2121, %v2123
      %v2135 = vsel %vm2132, %v2125, %v2127
      %v2136 = vsel %vm2132, %v2129, %v2131
      %vm2141 = vcmask 1048448
      %2142 = vst.msk [vmem:[%s170] sm:$0xff] %vm2141, %v2133
      %2143 = vst.msk [vmem:[%s170 + $0x8] sm:$0xff] %vm2141, %v2134
      %2144 = vst.msk [vmem:[%s170 + $0x10] sm:$0xff] %vm2141, %v2135
      %2145 = vst.msk [vmem:[%s170 + $0x18] sm:$0xff] %vm2141, %v2136
      %p2146 = scmp.lt.s32.totalorder %s14, 1
      %s2147 = scalar_select %p2146, %s14, 1
      %s2148 = smul.addr %s2147, 4
      %s2149 = smul.addr %s2148, 8
      %s2150 = scalar_lea.vmem %s3, %s2149
      // Predicated region
      $region33: #{simple_cnn_forward.4} parent=31 // pred_check
        %p2151 = pneg %p100
      $region34: #{simple_cnn_forward.4} parent=31 // pred_check_branch
        %2153 = sbr.rel (%p2151) target = $region36
      $region35: #{simple_cnn_forward.4} parent=31 // pred_region
        _
      $region36: #{simple_cnn_forward.4} parent=31 // pred_fallthru
        _
    $region32: #{simple_cnn_forward.4} parent=5 // pred_fallthru
      _
    %p2154 = scmp.le.s32.totalorder 2, %s9
    // Predicated region
    $region37: #{simple_cnn_forward.4} parent=5 // pred_check
      %p2155 = pneg %p2154
    $region38: #{simple_cnn_forward.4} parent=5 // pred_check_branch
      %2157 = sbr.rel (%p2155) target = $region40
    $region39: #{simple_cnn_forward.4} parent=5 // pred_region
      %s2158 = ssub.s32 %s9, 2
      // Predicated region
      $region41: #{simple_cnn_forward.4} parent=39 // pred_check
        %p2159 = pneg %p106
      $region42: #{simple_cnn_forward.4} parent=39 // pred_check_branch
        %2161 = sbr.rel (%p2159) target = $region44
      $region43: #{simple_cnn_forward.4} parent=39 // pred_region
        %p2162 = scmp.lt.s32.totalorder %s15, 1
        %s2163 = scalar_select %p2162, %s15, 1
        %s2164 = smul.addr %s2163, 4
        %s2165 = smul.addr %s2164, 8
        %s2166 = scalar_lea.vmem %s3, %s2165
      $region44: #{simple_cnn_forward.4} parent=39 // pred_fallthru
        _
    $region40: #{simple_cnn_forward.4} parent=5 // pred_fallthru
      _
  $region6: #{simple_cnn_forward.4} parent=0 // loop_footer
    %s13 = sadd.s32 1, %s9
  $region7: #{simple_cnn_forward.4} parent=0 // loop_footer_branch
    %8 = sbr.rel target = $region3
  $region8: #{simple_cnn_forward.4} parent=0 // loop_exit
    _

// kernel: simple_cnn_forward.3
$region0: #{simple_cnn_forward.3}
  #allocation0 [shape = 'u32[]', space=smem, size = 0x4, offset = 0x4, fixed_abs, tag = 'smem constant byte address 0x4 - core index']
  #allocation1 [shape = 'u32[144,128]{1,0:T(1,128)}', space=vmem, size = 0x12000, scoped, tag = 'internal scratch']
  #allocation2 [shape = 'f32[16,1088]{1,0:T(8,128)}', space=vmem, size = 0x12000, scoped, tag = 'scratch operand']
  %s0 = inlined_call_operand.vmem [shape: bf16[2,8,1190], index: 0, kind: input, shape index: {}]
  %s1 = inlined_call_operand.vmem [shape: bf16[9,16,8], index: 1, kind: input, shape index: {}]
  %s2 = inlined_call_operand.vmem [shape: f32[16,1], index: 2, kind: input, shape index: {}]
  %s3 = inlined_call_operand.vmem [shape: f32[2,16,512], index: 3, kind: output, shape index: {}]
  %s4 = sld [smem:[#allocation0]]
  $region45: #{simple_cnn_forward.3} parent=0
    _
  %s6 = ssub.s32 1, %s4
  %s7 = scalar_select 0, %s6, %s4
  loop: start=0, step=1, limit=4
  $region2: #{simple_cnn_forward.3} parent=0 // loop_pre_header
    _
  $region3: #{simple_cnn_forward.3} parent=0 // loop_header
    %s9 = sphi 0, %s13
    %p10 = scmp.ge.s32.totalorder %s9, 4
    %s19 = sphi 0, %s21
    %s22 = sphi 0, %s19
    %s23 = sphi 0, %s22
    %s39 = sphi 0, %s23
    %s43 = sphi 0, %s43
    %s45 = sphi 0, %s43
    %s46 = sphi 0, %s45
    %s60 = sphi 0, %s46
    %s64 = sphi 0, %s64
    %s66 = sphi 0, %s64
    %s67 = sphi 0, %s66
    %s81 = sphi 0, %s67
    %s87 = sphi 0, %s89
    %s90 = sphi 0, %s87
    %s91 = sphi 0, %s90
    %s107 = sphi 0, %s91
  $region4: #{simple_cnn_forward.3} parent=0 // loop_header_branch
    %12 = sbr.rel (%p10) target = $region8
  $region5: #{simple_cnn_forward.3} parent=0 // loop_body
    %s14 = ssub.s32 %s9, 1
    %s15 = ssub.s32 %s9, 2
    %s16 = sadd.s32 %s9, 1
    %s17 = ssub.s32 %s9, %s16
    %p18 = scmp.eq.s32.totalorder %s17, 0
    %s20 = sadd.s32 %s19, 1
    %s21 = scalar_select %p18, %s19, %s20
    %p24 = pneg %p18
    %p25 = scmp.eq.s32.totalorder %s9, 1
    %p26 = por %p24, %p25
    %p27 = scmp.ne.s32.totalorder %s19, %s22
    %p28 = scmp.eq.s32.totalorder %s9, 0
    %p29 = por %p27, %p28
    %p30 = scmp.ne.s32.totalorder %s19, %s22
    %p31 = scmp.eq.s32.totalorder %s14, 1
    %p32 = por %p30, %p31
    %p33 = scmp.ne.s32.totalorder %s22, %s23
    %p34 = scmp.eq.s32.totalorder %s14, 0
    %p35 = por %p33, %p34
    %p36 = scmp.ne.s32.totalorder %s22, %s23
    %p37 = scmp.eq.s32.totalorder %s15, 1
    %p38 = por %p36, %p37
    %p40 = scmp.ne.s32.totalorder %s23, %s39
    %p41 = scmp.eq.s32.totalorder %s15, 0
    %p42 = por %p40, %p41
    %s44 = sadd.s32 %s43, 1
    %p47 = scmp.eq.s32.totalorder %s9, 1
    %p48 = scmp.ne.s32.totalorder %s43, %s45
    %p49 = scmp.eq.s32.totalorder %s9, 0
    %p50 = por %p48, %p49
    %p51 = scmp.ne.s32.totalorder %s43, %s45
    %p52 = scmp.eq.s32.totalorder %s14, 1
    %p53 = por %p51, %p52
    %p54 = scmp.ne.s32.totalorder %s45, %s46
    %p55 = scmp.eq.s32.totalorder %s14, 0
    %p56 = por %p54, %p55
    %p57 = scmp.ne.s32.totalorder %s45, %s46
    %p58 = scmp.eq.s32.totalorder %s15, 1
    %p59 = por %p57, %p58
    %p61 = scmp.ne.s32.totalorder %s46, %s60
    %p62 = scmp.eq.s32.totalorder %s15, 0
    %p63 = por %p61, %p62
    %s65 = sadd.s32 %s64, 1
    %p68 = scmp.eq.s32.totalorder %s9, 1
    %p69 = scmp.ne.s32.totalorder %s64, %s66
    %p70 = scmp.eq.s32.totalorder %s9, 0
    %p71 = por %p69, %p70
    %p72 = scmp.ne.s32.totalorder %s64, %s66
    %p73 = scmp.eq.s32.totalorder %s14, 1
    %p74 = por %p72, %p73
    %p75 = scmp.ne.s32.totalorder %s66, %s67
    %p76 = scmp.eq.s32.totalorder %s14, 0
    %p77 = por %p75, %p76
    %p78 = scmp.ne.s32.totalorder %s66, %s67
    %p79 = scmp.eq.s32.totalorder %s15, 1
    %p80 = por %p78, %p79
    %p82 = scmp.ne.s32.totalorder %s67, %s81
    %p83 = scmp.eq.s32.totalorder %s15, 0
    %p84 = por %p82, %p83
    %s85 = ssub.s32 %s9, %s16
    %p86 = scmp.eq.s32.totalorder %s85, 0
    %s88 = sadd.s32 %s87, 1
    %s89 = scalar_select %p86, %s87, %s88
    %p92 = pneg %p86
    %p93 = scmp.eq.s32.totalorder %s9, 1
    %p94 = por %p92, %p93
    %p95 = scmp.ne.s32.totalorder %s87, %s90
    %p96 = scmp.eq.s32.totalorder %s9, 0
    %p97 = por %p95, %p96
    %p98 = scmp.ne.s32.totalorder %s87, %s90
    %p99 = scmp.eq.s32.totalorder %s14, 1
    %p100 = por %p98, %p99
    %p101 = scmp.ne.s32.totalorder %s90, %s91
    %p102 = scmp.eq.s32.totalorder %s14, 0
    %p103 = por %p101, %p102
    %p104 = scmp.ne.s32.totalorder %s90, %s91
    %p105 = scmp.eq.s32.totalorder %s15, 1
    %p106 = por %p104, %p105
    %p108 = scmp.ne.s32.totalorder %s91, %s107
    %p109 = scmp.eq.s32.totalorder %s15, 0
    %p110 = por %p108, %p109
    %p111 = scmp.le.s32.totalorder 1, %s9
    %p112 = scmp.lt.s32.totalorder %s9, 3
    %p113 = pnand %p111, %p112
    %p114 = pneg %p113
    // Predicated region
    $region9: #{simple_cnn_forward.3} parent=5 // pred_check
      _
    $region10: #{simple_cnn_forward.3} parent=5 // pred_check_branch
      %116 = sbr.rel (%p113) target = $region12
    $region11: #{simple_cnn_forward.3} parent=5 // pred_region
      %s117 = ssub.s32 %s9, 1
      // Predicated region
      $region13: #{simple_cnn_forward.3} parent=11 // pred_check
        %p118 = pneg %p56
      $region14: #{simple_cnn_forward.3} parent=11 // pred_check_branch
        %120 = sbr.rel (%p118) target = $region16
      $region15: #{simple_cnn_forward.3} parent=11 // pred_region
        _
      $region16: #{simple_cnn_forward.3} parent=11 // pred_fallthru
        _
      // Predicated region
      $region17: #{simple_cnn_forward.3} parent=11 // pred_check
        %p121 = pneg %p77
      $region18: #{simple_cnn_forward.3} parent=11 // pred_check_branch
        %123 = sbr.rel (%p121) target = $region20
      $region19: #{simple_cnn_forward.3} parent=11 // pred_region
        _
      $region20: #{simple_cnn_forward.3} parent=11 // pred_fallthru
        _
    $region12: #{simple_cnn_forward.3} parent=5 // pred_fallthru
      _
    %p124 = scmp.lt.s32.totalorder %s9, 2
    // Predicated region
    $region21: #{simple_cnn_forward.3} parent=5 // pred_check
      %p125 = pneg %p124
    $region22: #{simple_cnn_forward.3} parent=5 // pred_check_branch
      %127 = sbr.rel (%p125) target = $region24
    $region23: #{simple_cnn_forward.3} parent=5 // pred_region
      // Predicated region
      $region25: #{simple_cnn_forward.3} parent=23 // pred_check
        %p128 = pneg %p29
      $region26: #{simple_cnn_forward.3} parent=23 // pred_check_branch
        %130 = sbr.rel (%p128) target = $region28
      $region27: #{simple_cnn_forward.3} parent=23 // pred_region
        %p131 = scmp.lt.s32.totalorder %s9, 1
        %s132 = scalar_select %p131, %s9, 1
        %s133 = smul.addr %s132, 10
        %s134 = smul.addr %s133, 4
        %s135 = scalar_lea.vmem %s0, %s134
      $region28: #{simple_cnn_forward.3} parent=23 // pred_fallthru
        _
    $region24: #{simple_cnn_forward.3} parent=5 // pred_fallthru
      _
    %p136 = scmp.le.s32.totalorder 1, %s9
    %p137 = scmp.lt.s32.totalorder %s9, 3
    %p138 = pnand %p136, %p137
    %p139 = pneg %p138
    // Predicated region
    $region29: #{simple_cnn_forward.3} parent=5 // pred_check
      _
    $region30: #{simple_cnn_forward.3} parent=5 // pred_check_branch
      %141 = sbr.rel (%p138) target = $region32
    $region31: #{simple_cnn_forward.3} parent=5 // pred_region
      %s142 = ssub.s32 %s9, 1
      %p143 = scmp.lt.s32.totalorder %s14, 1
      %s144 = scalar_select %p143, %s14, 1
      %s145 = smul.addr %s144, 10
      %s146 = smul.addr %s145, 4
      %s147 = scalar_lea.vmem %s0, %s146
      %p148 = pneg %p35
      %p149 = pneg %p32
      %p150 = pneg %p56
      %p151 = pneg %p53
      %p152 = pneg %p77
      %p153 = pneg %p74
      %p154 = pneg %p103
      %p155 = pneg %p100
      %p156 = scmp.lt.s32.totalorder %s14, 1
      %s157 = scalar_select %p156, %s14, 1
      %s158 = smul.addr %s157, 8
      %s159 = smul.addr %s158, 8
      %s160 = scalar_lea.vmem %s3, %s159
      %p161 = scmp.lt.s32.totalorder %s14, 1
      %s162 = scalar_select %p161, %s14, 1
      %s163 = smul.addr %s162, 10
      %s164 = smul.addr %s163, 4
      %s165 = scalar_lea.vmem %s0, %s164
      %p166 = scmp.lt.s32.totalorder %s14, 1
      %s167 = scalar_select %p166, %s14, 1
      %s168 = smul.addr %s167, 8
      %s169 = smul.addr %s168, 8
      %s170 = scalar_lea.vmem %s3, %s169
      %v172 = vld [vmem:[%s1] sm:$0xf]
      %v173 = vld [vmem:[%s1 + $0x4] sm:$0xf]
      %v174 = vld [vmem:[%s165] sm:$0xff]
      %v175 = vld [vmem:[%s165 + $0x8] sm:$0xff]
      %v176 = vld [vmem:[%s165 + $0x10] sm:$0xff]
      %v177 = vld [vmem:[%s165 + $0x18] sm:$0xff]
      %v178 = vld [vmem:[%s165 + $0x20] sm:$0xf]
      %s179 = scalar_lea.vmem %s1, 8
      %v180 = vld [vmem:[%s179] sm:$0xf]
      %v181 = vld [vmem:[%s179 + $0x4] sm:$0xf]
      %v184 = vunpack.c.l.b16 %v180
      %v185 = vunpack.c.l.b16 %v181
      %v186 = vpack.c.b16 %v185, %v184
      %v192 = vunpack.c.l.b16 %v174
      %v193 = vunpack.c.h.b16 %v174
      %v194 = vunpack.c.l.b16 %v175
      %v195 = vunpack.c.h.b16 %v175
      %v196 = vunpack.c.l.b16 %v176
      %v197 = vunpack.c.h.b16 %v176
      %v198 = vunpack.c.l.b16 %v177
      %v199 = vunpack.c.h.b16 %v177
      %v200 = vunpack.c.l.b16 %v178
      %v201 = vpack.c.b16 %v192, %v192
      %v202 = vpack.c.b16 %v193, %v193
      %v203 = vpack.c.b16 %v194, %v194
      %v204 = vpack.c.b16 %v195, %v195
      %v205 = vpack.c.b16 %v196, %v196
      %v206 = vpack.c.b16 %v197, %v197
      %v207 = vpack.c.b16 %v198, %v198
      %v208 = vpack.c.b16 %v199, %v199
      %v209 = vpack.c.b16 %v200, %v200
      %210 = vrot.lane.b32.xlu0 %v201, 127
      %v211 = vpop.permute.xlu0 %210
      %212 = vrot.lane.b32.xlu0 %v202, 127
      %v213 = vpop.permute.xlu0 %212
      %214 = vrot.lane.b32.xlu0 %v203, 127
      %v215 = vpop.permute.xlu0 %214
      %216 = vrot.lane.b32.xlu0 %v204, 127
      %v217 = vpop.permute.xlu0 %216
      %218 = vrot.lane.b32.xlu0 %v205, 127
      %v219 = vpop.permute.xlu0 %218
      %220 = vrot.lane.b32.xlu0 %v206, 127
      %v221 = vpop.permute.xlu0 %220
      %222 = vrot.lane.b32.xlu0 %v207, 127
      %v223 = vpop.permute.xlu0 %222
      %224 = vrot.lane.b32.xlu0 %v208, 127
      %v225 = vpop.permute.xlu0 %224
      %226 = vrot.lane.b32.xlu0 %v209, 127
      %v227 = vpop.permute.xlu0 %226
      %vm228 = vcmask 1039360
      %v229 = vsel %vm228, %v211, %v213
      %v230 = vsel %vm228, %v213, %v215
      %v231 = vsel %vm228, %v215, %v217
      %v232 = vsel %vm228, %v217, %v219
      %v233 = vsel %vm228, %v219, %v221
      %v234 = vsel %vm228, %v221, %v223
      %v235 = vsel %vm228, %v223, %v225
      %v236 = vsel %vm228, %v225, %v227
      %vm237 = vcmask 64512
      %v239 = vsel %vm237, %v186, 0
      %vm241 = vcmask 1043456
      %v243 = vsel %vm241, %v229, 0
      %v246 = vsel %vm241, %v230, 0
      %v249 = vsel %vm241, %v231, 0
      %v252 = vsel %vm241, %v232, 0
      %v255 = vsel %vm241, %v233, 0
      %v258 = vsel %vm241, %v234, 0
      %v261 = vsel %vm241, %v235, 0
      %v264 = vsel %vm241, %v236, 0
      %v267 = vsel %vm241, %v227, 0
      %269 = vmatprep.subr.bf16.mxu0 0
      %270 = vmatpush1.bf16.msra.mxu0 0
      %271 = vmatprep.subr.bf16.mxu0 0
      %272 = vmatpush1.bf16.msra.mxu0 0
      %273 = vmatprep.subr.bf16.mxu0 0
      %274 = vmatpush1.bf16.msra.mxu0 0
      %275 = vmatprep.subr.bf16.mxu0 0
      %276 = vmatpush1.bf16.msra.mxu0 0
      %277 = vmatprep.subr.bf16.mxu0 0
      %278 = vmatpush1.bf16.msra.mxu0 0
      %279 = vmatprep.subr.bf16.mxu0 0
      %280 = vmatpush1.bf16.msra.mxu0 0
      %281 = vmatprep.subr.bf16.mxu0 0
      %282 = vmatpush1.bf16.msra.mxu0 0
      %283 = vmatprep.subr.bf16.mxu0 %v246
      %284 = vmatpush1.bf16.msra.mxu0 %v243
      %285 = vmatprep.subr.bf16.mxu0 0
      %286 = vmatpush2.bf16.msra.mxu0 0
      %287 = vmatprep.subr.bf16.mxu0 0
      %288 = vmatpush2.bf16.msra.mxu0 0
      %289 = vmatprep.subr.bf16.mxu0 0
      %290 = vmatpush2.bf16.msra.mxu0 0
      %291 = vmatprep.subr.bf16.mxu0 0
      %292 = vmatpush2.bf16.msra.mxu0 0
      %293 = vmatprep.subr.bf16.mxu0 0
      %294 = vmatpush2.bf16.msra.mxu0 0
      %295 = vmatprep.subr.bf16.mxu0 0
      %296 = vmatpush2.bf16.msra.mxu0 0
      %297 = vmatprep.subr.bf16.mxu0 0
      %298 = vmatpush2.bf16.msra.mxu0 0
      %299 = vmatprep.subr.bf16.mxu0 0
      %300 = vmatpush2.bf16.msra.mxu0 0
      %301 = vmatprep.mubr.bf16.mxu0 0
      %302 = vmatmul.mubr.bf16.gmra.mxu0 %v239
      %v303 = vpop.f32.mrf.mxu0
      %v304 = vadd.f32 0.0, %v303
      %v305 = vpop.f32.mrf.mxu0
      %v306 = vadd.f32 0.0, %v305
      %v307 = vpop.f32.mrf.mxu0
      %v308 = vadd.f32 0.0, %v307
      %v309 = vpop.f32.mrf.mxu0
      %v310 = vadd.f32 0.0, %v309
      %311 = vdwg.mxu0
      %312 = vmatprep.subr.bf16.mxu0 0
      %313 = vmatpush1.bf16.msra.mxu0 0
      %314 = vmatprep.subr.bf16.mxu0 0
      %315 = vmatpush1.bf16.msra.mxu0 0
      %316 = vmatprep.subr.bf16.mxu0 0
      %317 = vmatpush1.bf16.msra.mxu0 0
      %318 = vmatprep.subr.bf16.mxu0 0
      %319 = vmatpush1.bf16.msra.mxu0 0
      %320 = vmatprep.subr.bf16.mxu0 0
      %321 = vmatpush1.bf16.msra.mxu0 0
      %322 = vmatprep.subr.bf16.mxu0 0
      %323 = vmatpush1.bf16.msra.mxu0 0
      %324 = vmatprep.subr.bf16.mxu0 0
      %325 = vmatpush1.bf16.msra.mxu0 0
      %326 = vmatprep.subr.bf16.mxu0 %v252
      %327 = vmatpush1.bf16.msra.mxu0 %v249
      %328 = vmatprep.subr.bf16.mxu0 0
      %329 = vmatpush2.bf16.msra.mxu0 0
      %330 = vmatprep.subr.bf16.mxu0 0
      %331 = vmatpush2.bf16.msra.mxu0 0
      %332 = vmatprep.subr.bf16.mxu0 0
      %333 = vmatpush2.bf16.msra.mxu0 0
      %334 = vmatprep.subr.bf16.mxu0 0
      %335 = vmatpush2.bf16.msra.mxu0 0
      %336 = vmatprep.subr.bf16.mxu0 0
      %337 = vmatpush2.bf16.msra.mxu0 0
      %338 = vmatprep.subr.bf16.mxu0 0
      %339 = vmatpush2.bf16.msra.mxu0 0
      %340 = vmatprep.subr.bf16.mxu0 0
      %341 = vmatpush2.bf16.msra.mxu0 0
      %342 = vmatprep.subr.bf16.mxu0 0
      %343 = vmatpush2.bf16.msra.mxu0 0
      %344 = vmatprep.mubr.bf16.mxu0 0
      %345 = vmatmul.mubr.bf16.gmra.mxu0 %v239
      %v346 = vpop.f32.mrf.mxu0
      %v347 = vadd.f32 0.0, %v346
      %v348 = vpop.f32.mrf.mxu0
      %v349 = vadd.f32 0.0, %v348
      %v350 = vpop.f32.mrf.mxu0
      %v351 = vadd.f32 0.0, %v350
      %v352 = vpop.f32.mrf.mxu0
      %v353 = vadd.f32 0.0, %v352
      %354 = vdwg.mxu0
      %355 = vmatprep.subr.bf16.mxu0 0
      %356 = vmatpush1.bf16.msra.mxu0 0
      %357 = vmatprep.subr.bf16.mxu0 0
      %358 = vmatpush1.bf16.msra.mxu0 0
      %359 = vmatprep.subr.bf16.mxu0 0
      %360 = vmatpush1.bf16.msra.mxu0 0
      %361 = vmatprep.subr.bf16.mxu0 0
      %362 = vmatpush1.bf16.msra.mxu0 0
      %363 = vmatprep.subr.bf16.mxu0 0
      %364 = vmatpush1.bf16.msra.mxu0 0
      %365 = vmatprep.subr.bf16.mxu0 0
      %366 = vmatpush1.bf16.msra.mxu0 0
      %367 = vmatprep.subr.bf16.mxu0 0
      %368 = vmatpush1.bf16.msra.mxu0 0
      %369 = vmatprep.subr.bf16.mxu0 %v258
      %370 = vmatpush1.bf16.msra.mxu0 %v255
      %371 = vmatprep.subr.bf16.mxu0 0
      %372 = vmatpush2.bf16.msra.mxu0 0
      %373 = vmatprep.subr.bf16.mxu0 0
      %374 = vmatpush2.bf16.msra.mxu0 0
      %375 = vmatprep.subr.bf16.mxu0 0
      %376 = vmatpush2.bf16.msra.mxu0 0
      %377 = vmatprep.subr.bf16.mxu0 0
      %378 = vmatpush2.bf16.msra.mxu0 0
      %379 = vmatprep.subr.bf16.mxu0 0
      %380 = vmatpush2.bf16.msra.mxu0 0
      %381 = vmatprep.subr.bf16.mxu0 0
      %382 = vmatpush2.bf16.msra.mxu0 0
      %383 = vmatprep.subr.bf16.mxu0 0
      %384 = vmatpush2.bf16.msra.mxu0 0
      %385 = vmatprep.subr.bf16.mxu0 0
      %386 = vmatpush2.bf16.msra.mxu0 0
      %387 = vmatprep.mubr.bf16.mxu0 0
      %388 = vmatmul.mubr.bf16.gmra.mxu0 %v239
      %v389 = vpop.f32.mrf.mxu0
      %v390 = vadd.f32 0.0, %v389
      %v391 = vpop.f32.mrf.mxu0
      %v392 = vadd.f32 0.0, %v391
      %v393 = vpop.f32.mrf.mxu0
      %v394 = vadd.f32 0.0, %v393
      %v395 = vpop.f32.mrf.mxu0
      %v396 = vadd.f32 0.0, %v395
      %397 = vdwg.mxu0
      %398 = vmatprep.subr.bf16.mxu0 0
      %399 = vmatpush1.bf16.msra.mxu0 0
      %400 = vmatprep.subr.bf16.mxu0 0
      %401 = vmatpush1.bf16.msra.mxu0 0
      %402 = vmatprep.subr.bf16.mxu0 0
      %403 = vmatpush1.bf16.msra.mxu0 0
      %404 = vmatprep.subr.bf16.mxu0 0
      %405 = vmatpush1.bf16.msra.mxu0 0
      %406 = vmatprep.subr.bf16.mxu0 0
      %407 = vmatpush1.bf16.msra.mxu0 0
      %408 = vmatprep.subr.bf16.mxu0 0
      %409 = vmatpush1.bf16.msra.mxu0 0
      %410 = vmatprep.subr.bf16.mxu0 0
      %411 = vmatpush1.bf16.msra.mxu0 0
      %412 = vmatprep.subr.bf16.mxu0 %v264
      %413 = vmatpush1.bf16.msra.mxu0 %v261
      %414 = vmatprep.subr.bf16.mxu0 0
      %415 = vmatpush2.bf16.msra.mxu0 0
      %416 = vmatprep.subr.bf16.mxu0 0
      %417 = vmatpush2.bf16.msra.mxu0 0
      %418 = vmatprep.subr.bf16.mxu0 0
      %419 = vmatpush2.bf16.msra.mxu0 0
      %420 = vmatprep.subr.bf16.mxu0 0
      %421 = vmatpush2.bf16.msra.mxu0 0
      %422 = vmatprep.subr.bf16.mxu0 0
      %423 = vmatpush2.bf16.msra.mxu0 0
      %424 = vmatprep.subr.bf16.mxu0 0
      %425 = vmatpush2.bf16.msra.mxu0 0
      %426 = vmatprep.subr.bf16.mxu0 0
      %427 = vmatpush2.bf16.msra.mxu0 0
      %428 = vmatprep.subr.bf16.mxu0 0
      %429 = vmatpush2.bf16.msra.mxu0 0
      %430 = vmatprep.mubr.bf16.mxu0 0
      %431 = vmatmul.mubr.bf16.gmra.mxu0 %v239
      %v432 = vpop.f32.mrf.mxu0
      %v433 = vadd.f32 0.0, %v432
      %v434 = vpop.f32.mrf.mxu0
      %v435 = vadd.f32 0.0, %v434
      %v436 = vpop.f32.mrf.mxu0
      %v437 = vadd.f32 0.0, %v436
      %v438 = vpop.f32.mrf.mxu0
      %v439 = vadd.f32 0.0, %v438
      %440 = vdwg.mxu0
      %441 = vmatprep.subr.bf16.mxu0 0
      %442 = vmatpush1.bf16.msra.mxu0 0
      %443 = vmatprep.subr.bf16.mxu0 0
      %444 = vmatpush1.bf16.msra.mxu0 0
      %445 = vmatprep.subr.bf16.mxu0 0
      %446 = vmatpush1.bf16.msra.mxu0 0
      %447 = vmatprep.subr.bf16.mxu0 0
      %448 = vmatpush1.bf16.msra.mxu0 0
      %449 = vmatprep.subr.bf16.mxu0 0
      %450 = vmatpush1.bf16.msra.mxu0 0
      %451 = vmatprep.subr.bf16.mxu0 0
      %452 = vmatpush1.bf16.msra.mxu0 0
      %453 = vmatprep.subr.bf16.mxu0 0
      %454 = vmatpush1.bf16.msra.mxu0 0
      %455 = vmatprep.subr.bf16.mxu0 0
      %456 = vmatpush1.bf16.msra.mxu0 %v267
      %457 = vmatprep.subr.bf16.mxu0 0
      %458 = vmatpush2.bf16.msra.mxu0 0
      %459 = vmatprep.subr.bf16.mxu0 0
      %460 = vmatpush2.bf16.msra.mxu0 0
      %461 = vmatprep.subr.bf16.mxu0 0
      %462 = vmatpush2.bf16.msra.mxu0 0
      %463 = vmatprep.subr.bf16.mxu0 0
      %464 = vmatpush2.bf16.msra.mxu0 0
      %465 = vmatprep.subr.bf16.mxu0 0
      %466 = vmatpush2.bf16.msra.mxu0 0
      %467 = vmatprep.subr.bf16.mxu0 0
      %468 = vmatpush2.bf16.msra.mxu0 0
      %469 = vmatprep.subr.bf16.mxu0 0
      %470 = vmatpush2.bf16.msra.mxu0 0
      %471 = vmatprep.subr.bf16.mxu0 0
      %472 = vmatpush2.bf16.msra.mxu0 0
      %473 = vmatprep.mubr.bf16.mxu0 0
      %474 = vmatmul.mubr.bf16.gmra.mxu0 %v239
      %v475 = vpop.f32.mrf.mxu0
      %v476 = vadd.f32 0.0, %v475
      %v477 = vpop.f32.mrf.mxu0
      %v478 = vpop.f32.mrf.mxu0
      %v479 = vadd.f32 0.0, %v478
      %v480 = vpop.f32.mrf.mxu0
      %481 = vdwg.mxu0
      %v484 = vunpack.c.l.b16 %v172
      %v485 = vunpack.c.l.b16 %v173
      %v486 = vpack.c.b16 %v485, %v484
      %v488 = vsel %vm237, %v486, 0
      %v491 = vsel %vm241, %v201, 0
      %v494 = vsel %vm241, %v202, 0
      %v497 = vsel %vm241, %v203, 0
      %v500 = vsel %vm241, %v204, 0
      %v503 = vsel %vm241, %v205, 0
      %v506 = vsel %vm241, %v206, 0
      %v509 = vsel %vm241, %v207, 0
      %v512 = vsel %vm241, %v208, 0
      %v515 = vsel %vm241, %v209, 0
      %517 = vmatprep.subr.bf16.mxu0 0
      %518 = vmatpush1.bf16.msra.mxu0 0
      %519 = vmatprep.subr.bf16.mxu0 0
      %520 = vmatpush1.bf16.msra.mxu0 0
      %521 = vmatprep.subr.bf16.mxu0 0
      %522 = vmatpush1.bf16.msra.mxu0 0
      %523 = vmatprep.subr.bf16.mxu0 0
      %524 = vmatpush1.bf16.msra.mxu0 0
      %525 = vmatprep.subr.bf16.mxu0 0
      %526 = vmatpush1.bf16.msra.mxu0 0
      %527 = vmatprep.subr.bf16.mxu0 0
      %528 = vmatpush1.bf16.msra.mxu0 0
      %529 = vmatprep.subr.bf16.mxu0 0
      %530 = vmatpush1.bf16.msra.mxu0 0
      %531 = vmatprep.subr.bf16.mxu0 %v494
      %532 = vmatpush1.bf16.msra.mxu0 %v491
      %533 = vmatprep.subr.bf16.mxu0 0
      %534 = vmatpush2.bf16.msra.mxu0 0
      %535 = vmatprep.subr.bf16.mxu0 0
      %536 = vmatpush2.bf16.msra.mxu0 0
      %537 = vmatprep.subr.bf16.mxu0 0
      %538 = vmatpush2.bf16.msra.mxu0 0
      %539 = vmatprep.subr.bf16.mxu0 0
      %540 = vmatpush2.bf16.msra.mxu0 0
      %541 = vmatprep.subr.bf16.mxu0 0
      %542 = vmatpush2.bf16.msra.mxu0 0
      %543 = vmatprep.subr.bf16.mxu0 0
      %544 = vmatpush2.bf16.msra.mxu0 0
      %545 = vmatprep.subr.bf16.mxu0 0
      %546 = vmatpush2.bf16.msra.mxu0 0
      %547 = vmatprep.subr.bf16.mxu0 0
      %548 = vmatpush2.bf16.msra.mxu0 0
      %549 = vmatprep.mubr.bf16.mxu0 0
      %550 = vmatmul.mubr.bf16.gmra.mxu0 %v488
      %v551 = vpop.f32.mrf.mxu0
      %v552 = vadd.f32 %v304, %v551
      %v553 = vpop.f32.mrf.mxu0
      %v554 = vadd.f32 %v306, %v553
      %v555 = vpop.f32.mrf.mxu0
      %v556 = vadd.f32 %v308, %v555
      %v557 = vpop.f32.mrf.mxu0
      %v558 = vadd.f32 %v310, %v557
      %559 = vdwg.mxu0
      %560 = vmatprep.subr.bf16.mxu0 0
      %561 = vmatpush1.bf16.msra.mxu0 0
      %562 = vmatprep.subr.bf16.mxu0 0
      %563 = vmatpush1.bf16.msra.mxu0 0
      %564 = vmatprep.subr.bf16.mxu0 0
      %565 = vmatpush1.bf16.msra.mxu0 0
      %566 = vmatprep.subr.bf16.mxu0 0
      %567 = vmatpush1.bf16.msra.mxu0 0
      %568 = vmatprep.subr.bf16.mxu0 0
      %569 = vmatpush1.bf16.msra.mxu0 0
      %570 = vmatprep.subr.bf16.mxu0 0
      %571 = vmatpush1.bf16.msra.mxu0 0
      %572 = vmatprep.subr.bf16.mxu0 0
      %573 = vmatpush1.bf16.msra.mxu0 0
      %574 = vmatprep.subr.bf16.mxu0 %v500
      %575 = vmatpush1.bf16.msra.mxu0 %v497
      %576 = vmatprep.subr.bf16.mxu0 0
      %577 = vmatpush2.bf16.msra.mxu0 0
      %578 = vmatprep.subr.bf16.mxu0 0
      %579 = vmatpush2.bf16.msra.mxu0 0
      %580 = vmatprep.subr.bf16.mxu0 0
      %581 = vmatpush2.bf16.msra.mxu0 0
      %582 = vmatprep.subr.bf16.mxu0 0
      %583 = vmatpush2.bf16.msra.mxu0 0
      %584 = vmatprep.subr.bf16.mxu0 0
      %585 = vmatpush2.bf16.msra.mxu0 0
      %586 = vmatprep.subr.bf16.mxu0 0
      %587 = vmatpush2.bf16.msra.mxu0 0
      %588 = vmatprep.subr.bf16.mxu0 0
      %589 = vmatpush2.bf16.msra.mxu0 0
      %590 = vmatprep.subr.bf16.mxu0 0
      %591 = vmatpush2.bf16.msra.mxu0 0
      %592 = vmatprep.mubr.bf16.mxu0 0
      %593 = vmatmul.mubr.bf16.gmra.mxu0 %v488
      %v594 = vpop.f32.mrf.mxu0
      %v595 = vadd.f32 %v347, %v594
      %v596 = vpop.f32.mrf.mxu0
      %v597 = vadd.f32 %v349, %v596
      %v598 = vpop.f32.mrf.mxu0
      %v599 = vadd.f32 %v351, %v598
      %v600 = vpop.f32.mrf.mxu0
      %v601 = vadd.f32 %v353, %v600
      %602 = vdwg.mxu0
      %603 = vmatprep.subr.bf16.mxu0 0
      %604 = vmatpush1.bf16.msra.mxu0 0
      %605 = vmatprep.subr.bf16.mxu0 0
      %606 = vmatpush1.bf16.msra.mxu0 0
      %607 = vmatprep.subr.bf16.mxu0 0
      %608 = vmatpush1.bf16.msra.mxu0 0
      %609 = vmatprep.subr.bf16.mxu0 0
      %610 = vmatpush1.bf16.msra.mxu0 0
      %611 = vmatprep.subr.bf16.mxu0 0
      %612 = vmatpush1.bf16.msra.mxu0 0
      %613 = vmatprep.subr.bf16.mxu0 0
      %614 = vmatpush1.bf16.msra.mxu0 0
      %615 = vmatprep.subr.bf16.mxu0 0
      %616 = vmatpush1.bf16.msra.mxu0 0
      %617 = vmatprep.subr.bf16.mxu0 %v506
      %618 = vmatpush1.bf16.msra.mxu0 %v503
      %619 = vmatprep.subr.bf16.mxu0 0
      %620 = vmatpush2.bf16.msra.mxu0 0
      %621 = vmatprep.subr.bf16.mxu0 0
      %622 = vmatpush2.bf16.msra.mxu0 0
      %623 = vmatprep.subr.bf16.mxu0 0
      %624 = vmatpush2.bf16.msra.mxu0 0
      %625 = vmatprep.subr.bf16.mxu0 0
      %626 = vmatpush2.bf16.msra.mxu0 0
      %627 = vmatprep.subr.bf16.mxu0 0
      %628 = vmatpush2.bf16.msra.mxu0 0
      %629 = vmatprep.subr.bf16.mxu0 0
      %630 = vmatpush2.bf16.msra.mxu0 0
      %631 = vmatprep.subr.bf16.mxu0 0
      %632 = vmatpush2.bf16.msra.mxu0 0
      %633 = vmatprep.subr.bf16.mxu0 0
      %634 = vmatpush2.bf16.msra.mxu0 0
      %635 = vmatprep.mubr.bf16.mxu0 0
      %636 = vmatmul.mubr.bf16.gmra.mxu0 %v488
      %v637 = vpop.f32.mrf.mxu0
      %v638 = vadd.f32 %v390, %v637
      %v639 = vpop.f32.mrf.mxu0
      %v640 = vadd.f32 %v392, %v639
      %v641 = vpop.f32.mrf.mxu0
      %v642 = vadd.f32 %v394, %v641
      %v643 = vpop.f32.mrf.mxu0
      %v644 = vadd.f32 %v396, %v643
      %645 = vdwg.mxu0
      %646 = vmatprep.subr.bf16.mxu0 0
      %647 = vmatpush1.bf16.msra.mxu0 0
      %648 = vmatprep.subr.bf16.mxu0 0
      %649 = vmatpush1.bf16.msra.mxu0 0
      %650 = vmatprep.subr.bf16.mxu0 0
      %651 = vmatpush1.bf16.msra.mxu0 0
      %652 = vmatprep.subr.bf16.mxu0 0
      %653 = vmatpush1.bf16.msra.mxu0 0
      %654 = vmatprep.subr.bf16.mxu0 0
      %655 = vmatpush1.bf16.msra.mxu0 0
      %656 = vmatprep.subr.bf16.mxu0 0
      %657 = vmatpush1.bf16.msra.mxu0 0
      %658 = vmatprep.subr.bf16.mxu0 0
      %659 = vmatpush1.bf16.msra.mxu0 0
      %660 = vmatprep.subr.bf16.mxu0 %v512
      %661 = vmatpush1.bf16.msra.mxu0 %v509
      %662 = vmatprep.subr.bf16.mxu0 0
      %663 = vmatpush2.bf16.msra.mxu0 0
      %664 = vmatprep.subr.bf16.mxu0 0
      %665 = vmatpush2.bf16.msra.mxu0 0
      %666 = vmatprep.subr.bf16.mxu0 0
      %667 = vmatpush2.bf16.msra.mxu0 0
      %668 = vmatprep.subr.bf16.mxu0 0
      %669 = vmatpush2.bf16.msra.mxu0 0
      %670 = vmatprep.subr.bf16.mxu0 0
      %671 = vmatpush2.bf16.msra.mxu0 0
      %672 = vmatprep.subr.bf16.mxu0 0
      %673 = vmatpush2.bf16.msra.mxu0 0
      %674 = vmatprep.subr.bf16.mxu0 0
      %675 = vmatpush2.bf16.msra.mxu0 0
      %676 = vmatprep.subr.bf16.mxu0 0
      %677 = vmatpush2.bf16.msra.mxu0 0
      %678 = vmatprep.mubr.bf16.mxu0 0
      %679 = vmatmul.mubr.bf16.gmra.mxu0 %v488
      %v680 = vpop.f32.mrf.mxu0
      %v681 = vadd.f32 %v433, %v680
      %v682 = vpop.f32.mrf.mxu0
      %v683 = vadd.f32 %v435, %v682
      %v684 = vpop.f32.mrf.mxu0
      %v685 = vadd.f32 %v437, %v684
      %v686 = vpop.f32.mrf.mxu0
      %v687 = vadd.f32 %v439, %v686
      %688 = vdwg.mxu0
      %689 = vmatprep.subr.bf16.mxu0 0
      %690 = vmatpush1.bf16.msra.mxu0 0
      %691 = vmatprep.subr.bf16.mxu0 0
      %692 = vmatpush1.bf16.msra.mxu0 0
      %693 = vmatprep.subr.bf16.mxu0 0
      %694 = vmatpush1.bf16.msra.mxu0 0
      %695 = vmatprep.subr.bf16.mxu0 0
      %696 = vmatpush1.bf16.msra.mxu0 0
      %697 = vmatprep.subr.bf16.mxu0 0
      %698 = vmatpush1.bf16.msra.mxu0 0
      %699 = vmatprep.subr.bf16.mxu0 0
      %700 = vmatpush1.bf16.msra.mxu0 0
      %701 = vmatprep.subr.bf16.mxu0 0
      %702 = vmatpush1.bf16.msra.mxu0 0
      %703 = vmatprep.subr.bf16.mxu0 0
      %704 = vmatpush1.bf16.msra.mxu0 %v515
      %705 = vmatprep.subr.bf16.mxu0 0
      %706 = vmatpush2.bf16.msra.mxu0 0
      %707 = vmatprep.subr.bf16.mxu0 0
      %708 = vmatpush2.bf16.msra.mxu0 0
      %709 = vmatprep.subr.bf16.mxu0 0
      %710 = vmatpush2.bf16.msra.mxu0 0
      %711 = vmatprep.subr.bf16.mxu0 0
      %712 = vmatpush2.bf16.msra.mxu0 0
      %713 = vmatprep.subr.bf16.mxu0 0
      %714 = vmatpush2.bf16.msra.mxu0 0
      %715 = vmatprep.subr.bf16.mxu0 0
      %716 = vmatpush2.bf16.msra.mxu0 0
      %717 = vmatprep.subr.bf16.mxu0 0
      %718 = vmatpush2.bf16.msra.mxu0 0
      %719 = vmatprep.subr.bf16.mxu0 0
      %720 = vmatpush2.bf16.msra.mxu0 0
      %721 = vmatprep.mubr.bf16.mxu0 0
      %722 = vmatmul.mubr.bf16.gmra.mxu0 %v488
      %v723 = vpop.f32.mrf.mxu0
      %v724 = vadd.f32 %v476, %v723
      %v725 = vpop.f32.mrf.mxu0
      %v726 = vpop.f32.mrf.mxu0
      %v727 = vadd.f32 %v479, %v726
      %v728 = vpop.f32.mrf.mxu0
      %729 = vdwg.mxu0
      %s730 = scalar_lea.vmem %s1, 16
      %v731 = vld [vmem:[%s730] sm:$0xf]
      %v732 = vld [vmem:[%s730 + $0x4] sm:$0xf]
      %v735 = vunpack.c.l.b16 %v731
      %v736 = vunpack.c.l.b16 %v732
      %v737 = vpack.c.b16 %v736, %v735
      %738 = vrot.lane.b32.xlu0 %v201, 126
      %v739 = vpop.permute.xlu0 %738
      %740 = vrot.lane.b32.xlu0 %v202, 126
      %v741 = vpop.permute.xlu0 %740
      %742 = vrot.lane.b32.xlu0 %v203, 126
      %v743 = vpop.permute.xlu0 %742
      %744 = vrot.lane.b32.xlu0 %v204, 126
      %v745 = vpop.permute.xlu0 %744
      %746 = vrot.lane.b32.xlu0 %v205, 126
      %v747 = vpop.permute.xlu0 %746
      %748 = vrot.lane.b32.xlu0 %v206, 126
      %v749 = vpop.permute.xlu0 %748
      %750 = vrot.lane.b32.xlu0 %v207, 126
      %v751 = vpop.permute.xlu0 %750
      %752 = vrot.lane.b32.xlu0 %v208, 126
      %v753 = vpop.permute.xlu0 %752
      %754 = vrot.lane.b32.xlu0 %v209, 126
      %v755 = vpop.permute.xlu0 %754
      %vm756 = vcmask 1031168
      %v757 = vsel %vm756, %v739, %v741
      %v758 = vsel %vm756, %v741, %v743
      %v759 = vsel %vm756, %v743, %v745
      %v760 = vsel %vm756, %v745, %v747
      %v761 = vsel %vm756, %v747, %v749
      %v762 = vsel %vm756, %v749, %v751
      %v763 = vsel %vm756, %v751, %v753
      %v764 = vsel %vm756, %v753, %v755
      %v766 = vsel %vm237, %v737, 0
      %v769 = vsel %vm241, %v757, 0
      %v772 = vsel %vm241, %v758, 0
      %v775 = vsel %vm241, %v759, 0
      %v778 = vsel %vm241, %v760, 0
      %v781 = vsel %vm241, %v761, 0
      %v784 = vsel %vm241, %v762, 0
      %v787 = vsel %vm241, %v763, 0
      %v790 = vsel %vm241, %v764, 0
      %v793 = vsel %vm241, %v755, 0
      %795 = vmatprep.subr.bf16.mxu0 0
      %796 = vmatpush1.bf16.msra.mxu0 0
      %797 = vmatprep.subr.bf16.mxu0 0
      %798 = vmatpush1.bf16.msra.mxu0 0
      %799 = vmatprep.subr.bf16.mxu0 0
      %800 = vmatpush1.bf16.msra.mxu0 0
      %801 = vmatprep.subr.bf16.mxu0 0
      %802 = vmatpush1.bf16.msra.mxu0 0
      %803 = vmatprep.subr.bf16.mxu0 0
      %804 = vmatpush1.bf16.msra.mxu0 0
      %805 = vmatprep.subr.bf16.mxu0 0
      %806 = vmatpush1.bf16.msra.mxu0 0
      %807 = vmatprep.subr.bf16.mxu0 0
      %808 = vmatpush1.bf16.msra.mxu0 0
      %809 = vmatprep.subr.bf16.mxu0 %v772
      %810 = vmatpush1.bf16.msra.mxu0 %v769
      %811 = vmatprep.subr.bf16.mxu0 0
      %812 = vmatpush2.bf16.msra.mxu0 0
      %813 = vmatprep.subr.bf16.mxu0 0
      %814 = vmatpush2.bf16.msra.mxu0 0
      %815 = vmatprep.subr.bf16.mxu0 0
      %816 = vmatpush2.bf16.msra.mxu0 0
      %817 = vmatprep.subr.bf16.mxu0 0
      %818 = vmatpush2.bf16.msra.mxu0 0
      %819 = vmatprep.subr.bf16.mxu0 0
      %820 = vmatpush2.bf16.msra.mxu0 0
      %821 = vmatprep.subr.bf16.mxu0 0
      %822 = vmatpush2.bf16.msra.mxu0 0
      %823 = vmatprep.subr.bf16.mxu0 0
      %824 = vmatpush2.bf16.msra.mxu0 0
      %825 = vmatprep.subr.bf16.mxu0 0
      %826 = vmatpush2.bf16.msra.mxu0 0
      %827 = vmatprep.mubr.bf16.mxu0 0
      %828 = vmatmul.mubr.bf16.gmra.mxu0 %v766
      %v829 = vpop.f32.mrf.mxu0
      %v830 = vadd.f32 0.0, %v829
      %v831 = vpop.f32.mrf.mxu0
      %v832 = vadd.f32 0.0, %v831
      %v833 = vpop.f32.mrf.mxu0
      %v834 = vadd.f32 0.0, %v833
      %v835 = vpop.f32.mrf.mxu0
      %v836 = vadd.f32 0.0, %v835
      %837 = vdwg.mxu0
      %838 = vmatprep.subr.bf16.mxu0 0
      %839 = vmatpush1.bf16.msra.mxu0 0
      %840 = vmatprep.subr.bf16.mxu0 0
      %841 = vmatpush1.bf16.msra.mxu0 0
      %842 = vmatprep.subr.bf16.mxu0 0
      %843 = vmatpush1.bf16.msra.mxu0 0
      %844 = vmatprep.subr.bf16.mxu0 0
      %845 = vmatpush1.bf16.msra.mxu0 0
      %846 = vmatprep.subr.bf16.mxu0 0
      %847 = vmatpush1.bf16.msra.mxu0 0
      %848 = vmatprep.subr.bf16.mxu0 0
      %849 = vmatpush1.bf16.msra.mxu0 0
      %850 = vmatprep.subr.bf16.mxu0 0
      %851 = vmatpush1.bf16.msra.mxu0 0
      %852 = vmatprep.subr.bf16.mxu0 %v778
      %853 = vmatpush1.bf16.msra.mxu0 %v775
      %854 = vmatprep.subr.bf16.mxu0 0
      %855 = vmatpush2.bf16.msra.mxu0 0
      %856 = vmatprep.subr.bf16.mxu0 0
      %857 = vmatpush2.bf16.msra.mxu0 0
      %858 = vmatprep.subr.bf16.mxu0 0
      %859 = vmatpush2.bf16.msra.mxu0 0
      %860 = vmatprep.subr.bf16.mxu0 0
      %861 = vmatpush2.bf16.msra.mxu0 0
      %862 = vmatprep.subr.bf16.mxu0 0
      %863 = vmatpush2.bf16.msra.mxu0 0
      %864 = vmatprep.subr.bf16.mxu0 0
      %865 = vmatpush2.bf16.msra.mxu0 0
      %866 = vmatprep.subr.bf16.mxu0 0
      %867 = vmatpush2.bf16.msra.mxu0 0
      %868 = vmatprep.subr.bf16.mxu0 0
      %869 = vmatpush2.bf16.msra.mxu0 0
      %870 = vmatprep.mubr.bf16.mxu0 0
      %871 = vmatmul.mubr.bf16.gmra.mxu0 %v766
      %v872 = vpop.f32.mrf.mxu0
      %v873 = vadd.f32 0.0, %v872
      %v874 = vpop.f32.mrf.mxu0
      %v875 = vadd.f32 0.0, %v874
      %v876 = vpop.f32.mrf.mxu0
      %v877 = vadd.f32 0.0, %v876
      %v878 = vpop.f32.mrf.mxu0
      %v879 = vadd.f32 0.0, %v878
      %880 = vdwg.mxu0
      %881 = vmatprep.subr.bf16.mxu0 0
      %882 = vmatpush1.bf16.msra.mxu0 0
      %883 = vmatprep.subr.bf16.mxu0 0
      %884 = vmatpush1.bf16.msra.mxu0 0
      %885 = vmatprep.subr.bf16.mxu0 0
      %886 = vmatpush1.bf16.msra.mxu0 0
      %887 = vmatprep.subr.bf16.mxu0 0
      %888 = vmatpush1.bf16.msra.mxu0 0
      %889 = vmatprep.subr.bf16.mxu0 0
      %890 = vmatpush1.bf16.msra.mxu0 0
      %891 = vmatprep.subr.bf16.mxu0 0
      %892 = vmatpush1.bf16.msra.mxu0 0
      %893 = vmatprep.subr.bf16.mxu0 0
      %894 = vmatpush1.bf16.msra.mxu0 0
      %895 = vmatprep.subr.bf16.mxu0 %v784
      %896 = vmatpush1.bf16.msra.mxu0 %v781
      %897 = vmatprep.subr.bf16.mxu0 0
      %898 = vmatpush2.bf16.msra.mxu0 0
      %899 = vmatprep.subr.bf16.mxu0 0
      %900 = vmatpush2.bf16.msra.mxu0 0
      %901 = vmatprep.subr.bf16.mxu0 0
      %902 = vmatpush2.bf16.msra.mxu0 0
      %903 = vmatprep.subr.bf16.mxu0 0
      %904 = vmatpush2.bf16.msra.mxu0 0
      %905 = vmatprep.subr.bf16.mxu0 0
      %906 = vmatpush2.bf16.msra.mxu0 0
      %907 = vmatprep.subr.bf16.mxu0 0
      %908 = vmatpush2.bf16.msra.mxu0 0
      %909 = vmatprep.subr.bf16.mxu0 0
      %910 = vmatpush2.bf16.msra.mxu0 0
      %911 = vmatprep.subr.bf16.mxu0 0
      %912 = vmatpush2.bf16.msra.mxu0 0
      %913 = vmatprep.mubr.bf16.mxu0 0
      %914 = vmatmul.mubr.bf16.gmra.mxu0 %v766
      %v915 = vpop.f32.mrf.mxu0
      %v916 = vadd.f32 0.0, %v915
      %v917 = vpop.f32.mrf.mxu0
      %v918 = vadd.f32 0.0, %v917
      %v919 = vpop.f32.mrf.mxu0
      %v920 = vadd.f32 0.0, %v919
      %v921 = vpop.f32.mrf.mxu0
      %v922 = vadd.f32 0.0, %v921
      %923 = vdwg.mxu0
      %924 = vmatprep.subr.bf16.mxu0 0
      %925 = vmatpush1.bf16.msra.mxu0 0
      %926 = vmatprep.subr.bf16.mxu0 0
      %927 = vmatpush1.bf16.msra.mxu0 0
      %928 = vmatprep.subr.bf16.mxu0 0
      %929 = vmatpush1.bf16.msra.mxu0 0
      %930 = vmatprep.subr.bf16.mxu0 0
      %931 = vmatpush1.bf16.msra.mxu0 0
      %932 = vmatprep.subr.bf16.mxu0 0
      %933 = vmatpush1.bf16.msra.mxu0 0
      %934 = vmatprep.subr.bf16.mxu0 0
      %935 = vmatpush1.bf16.msra.mxu0 0
      %936 = vmatprep.subr.bf16.mxu0 0
      %937 = vmatpush1.bf16.msra.mxu0 0
      %938 = vmatprep.subr.bf16.mxu0 %v790
      %939 = vmatpush1.bf16.msra.mxu0 %v787
      %940 = vmatprep.subr.bf16.mxu0 0
      %941 = vmatpush2.bf16.msra.mxu0 0
      %942 = vmatprep.subr.bf16.mxu0 0
      %943 = vmatpush2.bf16.msra.mxu0 0
      %944 = vmatprep.subr.bf16.mxu0 0
      %945 = vmatpush2.bf16.msra.mxu0 0
      %946 = vmatprep.subr.bf16.mxu0 0
      %947 = vmatpush2.bf16.msra.mxu0 0
      %948 = vmatprep.subr.bf16.mxu0 0
      %949 = vmatpush2.bf16.msra.mxu0 0
      %950 = vmatprep.subr.bf16.mxu0 0
      %951 = vmatpush2.bf16.msra.mxu0 0
      %952 = vmatprep.subr.bf16.mxu0 0
      %953 = vmatpush2.bf16.msra.mxu0 0
      %954 = vmatprep.subr.bf16.mxu0 0
      %955 = vmatpush2.bf16.msra.mxu0 0
      %956 = vmatprep.mubr.bf16.mxu0 0
      %957 = vmatmul.mubr.bf16.gmra.mxu0 %v766
      %v958 = vpop.f32.mrf.mxu0
      %v959 = vadd.f32 0.0, %v958
      %v960 = vpop.f32.mrf.mxu0
      %v961 = vadd.f32 0.0, %v960
      %v962 = vpop.f32.mrf.mxu0
      %v963 = vadd.f32 0.0, %v962
      %v964 = vpop.f32.mrf.mxu0
      %v965 = vadd.f32 0.0, %v964
      %966 = vdwg.mxu0
      %967 = vmatprep.subr.bf16.mxu0 0
      %968 = vmatpush1.bf16.msra.mxu0 0
      %969 = vmatprep.subr.bf16.mxu0 0
      %970 = vmatpush1.bf16.msra.mxu0 0
      %971 = vmatprep.subr.bf16.mxu0 0
      %972 = vmatpush1.bf16.msra.mxu0 0
      %973 = vmatprep.subr.bf16.mxu0 0
      %974 = vmatpush1.bf16.msra.mxu0 0
      %975 = vmatprep.subr.bf16.mxu0 0
      %976 = vmatpush1.bf16.msra.mxu0 0
      %977 = vmatprep.subr.bf16.mxu0 0
      %978 = vmatpush1.bf16.msra.mxu0 0
      %979 = vmatprep.subr.bf16.mxu0 0
      %980 = vmatpush1.bf16.msra.mxu0 0
      %981 = vmatprep.subr.bf16.mxu0 0
      %982 = vmatpush1.bf16.msra.mxu0 %v793
      %983 = vmatprep.subr.bf16.mxu0 0
      %984 = vmatpush2.bf16.msra.mxu0 0
      %985 = vmatprep.subr.bf16.mxu0 0
      %986 = vmatpush2.bf16.msra.mxu0 0
      %987 = vmatprep.subr.bf16.mxu0 0
      %988 = vmatpush2.bf16.msra.mxu0 0
      %989 = vmatprep.subr.bf16.mxu0 0
      %990 = vmatpush2.bf16.msra.mxu0 0
      %991 = vmatprep.subr.bf16.mxu0 0
      %992 = vmatpush2.bf16.msra.mxu0 0
      %993 = vmatprep.subr.bf16.mxu0 0
      %994 = vmatpush2.bf16.msra.mxu0 0
      %995 = vmatprep.subr.bf16.mxu0 0
      %996 = vmatpush2.bf16.msra.mxu0 0
      %997 = vmatprep.subr.bf16.mxu0 0
      %998 = vmatpush2.bf16.msra.mxu0 0
      %999 = vmatprep.mubr.bf16.mxu0 0
      %1000 = vmatmul.mubr.bf16.gmra.mxu0 %v766
      %v1001 = vpop.f32.mrf.mxu0
      %v1002 = vadd.f32 0.0, %v1001
      %v1003 = vpop.f32.mrf.mxu0
      %v1004 = vpop.f32.mrf.mxu0
      %v1005 = vadd.f32 0.0, %v1004
      %v1006 = vpop.f32.mrf.mxu0
      %1007 = vdwg.mxu0
      %v1008 = vadd.f32 %v552, %v830
      %v1009 = vadd.f32 %v554, %v832
      %v1010 = vadd.f32 %v595, %v873
      %v1011 = vadd.f32 %v597, %v875
      %v1012 = vadd.f32 %v638, %v916
      %v1013 = vadd.f32 %v640, %v918
      %v1014 = vadd.f32 %v681, %v959
      %v1015 = vadd.f32 %v683, %v961
      %v1016 = vadd.f32 %v724, %v1002
      %v1017 = vadd.f32 %v556, %v834
      %v1018 = vadd.f32 %v558, %v836
      %v1019 = vadd.f32 %v599, %v877
      %v1020 = vadd.f32 %v601, %v879
      %v1021 = vadd.f32 %v642, %v920
      %v1022 = vadd.f32 %v644, %v922
      %v1023 = vadd.f32 %v685, %v963
      %v1024 = vadd.f32 %v687, %v965
      %v1025 = vadd.f32 %v727, %v1005
      %s1026 = scalar_lea.vmem %s1, 24
      %v1027 = vld [vmem:[%s1026] sm:$0xf]
      %v1028 = vld [vmem:[%s1026 + $0x4] sm:$0xf]
      %v1031 = vunpack.c.l.b16 %v1027
      %v1032 = vunpack.c.l.b16 %v1028
      %v1033 = vpack.c.b16 %v1032, %v1031
      %1034 = vrot.lane.b32.xlu0 %v201, 94
      %v1035 = vpop.permute.xlu0 %1034
      %1036 = vrot.lane.b32.xlu0 %v202, 94
      %v1037 = vpop.permute.xlu0 %1036
      %1038 = vrot.lane.b32.xlu0 %v203, 94
      %v1039 = vpop.permute.xlu0 %1038
      %1040 = vrot.lane.b32.xlu0 %v204, 94
      %v1041 = vpop.permute.xlu0 %1040
      %1042 = vrot.lane.b32.xlu0 %v205, 94
      %v1043 = vpop.permute.xlu0 %1042
      %1044 = vrot.lane.b32.xlu0 %v206, 94
      %v1045 = vpop.permute.xlu0 %1044
      %1046 = vrot.lane.b32.xlu0 %v207, 94
      %v1047 = vpop.permute.xlu0 %1046
      %1048 = vrot.lane.b32.xlu0 %v208, 94
      %v1049 = vpop.permute.xlu0 %1048
      %1050 = vrot.lane.b32.xlu0 %v209, 94
      %v1051 = vpop.permute.xlu0 %1050
      %vm1052 = vcmask 769024
      %v1053 = vsel %vm1052, %v1035, %v1037
      %v1054 = vsel %vm1052, %v1037, %v1039
      %v1055 = vsel %vm1052, %v1039, %v1041
      %v1056 = vsel %vm1052, %v1041, %v1043
      %v1057 = vsel %vm1052, %v1043, %v1045
      %v1058 = vsel %vm1052, %v1045, %v1047
      %v1059 = vsel %vm1052, %v1047, %v1049
      %v1060 = vsel %vm1052, %v1049, %v1051
      %v1062 = vsel %vm237, %v1033, 0
      %v1065 = vsel %vm241, %v1053, 0
      %v1068 = vsel %vm241, %v1054, 0
      %v1071 = vsel %vm241, %v1055, 0
      %v1074 = vsel %vm241, %v1056, 0
      %v1077 = vsel %vm241, %v1057, 0
      %v1080 = vsel %vm241, %v1058, 0
      %v1083 = vsel %vm241, %v1059, 0
      %v1086 = vsel %vm241, %v1060, 0
      %v1089 = vsel %vm241, %v1051, 0
      %1091 = vmatprep.subr.bf16.mxu0 0
      %1092 = vmatpush1.bf16.msra.mxu0 0
      %1093 = vmatprep.subr.bf16.mxu0 0
      %1094 = vmatpush1.bf16.msra.mxu0 0
      %1095 = vmatprep.subr.bf16.mxu0 0
      %1096 = vmatpush1.bf16.msra.mxu0 0
      %1097 = vmatprep.subr.bf16.mxu0 0
      %1098 = vmatpush1.bf16.msra.mxu0 0
      %1099 = vmatprep.subr.bf16.mxu0 0
      %1100 = vmatpush1.bf16.msra.mxu0 0
      %1101 = vmatprep.subr.bf16.mxu0 0
      %1102 = vmatpush1.bf16.msra.mxu0 0
      %1103 = vmatprep.subr.bf16.mxu0 0
      %1104 = vmatpush1.bf16.msra.mxu0 0
      %1105 = vmatprep.subr.bf16.mxu0 %v1068
      %1106 = vmatpush1.bf16.msra.mxu0 %v1065
      %1107 = vmatprep.subr.bf16.mxu0 0
      %1108 = vmatpush2.bf16.msra.mxu0 0
      %1109 = vmatprep.subr.bf16.mxu0 0
      %1110 = vmatpush2.bf16.msra.mxu0 0
      %1111 = vmatprep.subr.bf16.mxu0 0
      %1112 = vmatpush2.bf16.msra.mxu0 0
      %1113 = vmatprep.subr.bf16.mxu0 0
      %1114 = vmatpush2.bf16.msra.mxu0 0
      %1115 = vmatprep.subr.bf16.mxu0 0
      %1116 = vmatpush2.bf16.msra.mxu0 0
      %1117 = vmatprep.subr.bf16.mxu0 0
      %1118 = vmatpush2.bf16.msra.mxu0 0
      %1119 = vmatprep.subr.bf16.mxu0 0
      %1120 = vmatpush2.bf16.msra.mxu0 0
      %1121 = vmatprep.subr.bf16.mxu0 0
      %1122 = vmatpush2.bf16.msra.mxu0 0
      %1123 = vmatprep.mubr.bf16.mxu0 0
      %1124 = vmatmul.mubr.bf16.gmra.mxu0 %v1062
      %v1125 = vpop.f32.mrf.mxu0
      %v1126 = vadd.f32 0.0, %v1125
      %v1127 = vpop.f32.mrf.mxu0
      %v1128 = vadd.f32 0.0, %v1127
      %v1129 = vpop.f32.mrf.mxu0
      %v1130 = vadd.f32 0.0, %v1129
      %v1131 = vpop.f32.mrf.mxu0
      %v1132 = vadd.f32 0.0, %v1131
      %1133 = vdwg.mxu0
      %1134 = vmatprep.subr.bf16.mxu0 0
      %1135 = vmatpush1.bf16.msra.mxu0 0
      %1136 = vmatprep.subr.bf16.mxu0 0
      %1137 = vmatpush1.bf16.msra.mxu0 0
      %1138 = vmatprep.subr.bf16.mxu0 0
      %1139 = vmatpush1.bf16.msra.mxu0 0
      %1140 = vmatprep.subr.bf16.mxu0 0
      %1141 = vmatpush1.bf16.msra.mxu0 0
      %1142 = vmatprep.subr.bf16.mxu0 0
      %1143 = vmatpush1.bf16.msra.mxu0 0
      %1144 = vmatprep.subr.bf16.mxu0 0
      %1145 = vmatpush1.bf16.msra.mxu0 0
      %1146 = vmatprep.subr.bf16.mxu0 0
      %1147 = vmatpush1.bf16.msra.mxu0 0
      %1148 = vmatprep.subr.bf16.mxu0 %v1074
      %1149 = vmatpush1.bf16.msra.mxu0 %v1071
      %1150 = vmatprep.subr.bf16.mxu0 0
      %1151 = vmatpush2.bf16.msra.mxu0 0
      %1152 = vmatprep.subr.bf16.mxu0 0
      %1153 = vmatpush2.bf16.msra.mxu0 0
      %1154 = vmatprep.subr.bf16.mxu0 0
      %1155 = vmatpush2.bf16.msra.mxu0 0
      %1156 = vmatprep.subr.bf16.mxu0 0
      %1157 = vmatpush2.bf16.msra.mxu0 0
      %1158 = vmatprep.subr.bf16.mxu0 0
      %1159 = vmatpush2.bf16.msra.mxu0 0
      %1160 = vmatprep.subr.bf16.mxu0 0
      %1161 = vmatpush2.bf16.msra.mxu0 0
      %1162 = vmatprep.subr.bf16.mxu0 0
      %1163 = vmatpush2.bf16.msra.mxu0 0
      %1164 = vmatprep.subr.bf16.mxu0 0
      %1165 = vmatpush2.bf16.msra.mxu0 0
      %1166 = vmatprep.mubr.bf16.mxu0 0
      %1167 = vmatmul.mubr.bf16.gmra.mxu0 %v1062
      %v1168 = vpop.f32.mrf.mxu0
      %v1169 = vadd.f32 0.0, %v1168
      %v1170 = vpop.f32.mrf.mxu0
      %v1171 = vadd.f32 0.0, %v1170
      %v1172 = vpop.f32.mrf.mxu0
      %v1173 = vadd.f32 0.0, %v1172
      %v1174 = vpop.f32.mrf.mxu0
      %v1175 = vadd.f32 0.0, %v1174
      %1176 = vdwg.mxu0
      %1177 = vmatprep.subr.bf16.mxu0 0
      %1178 = vmatpush1.bf16.msra.mxu0 0
      %1179 = vmatprep.subr.bf16.mxu0 0
      %1180 = vmatpush1.bf16.msra.mxu0 0
      %1181 = vmatprep.subr.bf16.mxu0 0
      %1182 = vmatpush1.bf16.msra.mxu0 0
      %1183 = vmatprep.subr.bf16.mxu0 0
      %1184 = vmatpush1.bf16.msra.mxu0 0
      %1185 = vmatprep.subr.bf16.mxu0 0
      %1186 = vmatpush1.bf16.msra.mxu0 0
      %1187 = vmatprep.subr.bf16.mxu0 0
      %1188 = vmatpush1.bf16.msra.mxu0 0
      %1189 = vmatprep.subr.bf16.mxu0 0
      %1190 = vmatpush1.bf16.msra.mxu0 0
      %1191 = vmatprep.subr.bf16.mxu0 %v1080
      %1192 = vmatpush1.bf16.msra.mxu0 %v1077
      %1193 = vmatprep.subr.bf16.mxu0 0
      %1194 = vmatpush2.bf16.msra.mxu0 0
      %1195 = vmatprep.subr.bf16.mxu0 0
      %1196 = vmatpush2.bf16.msra.mxu0 0
      %1197 = vmatprep.subr.bf16.mxu0 0
      %1198 = vmatpush2.bf16.msra.mxu0 0
      %1199 = vmatprep.subr.bf16.mxu0 0
      %1200 = vmatpush2.bf16.msra.mxu0 0
      %1201 = vmatprep.subr.bf16.mxu0 0
      %1202 = vmatpush2.bf16.msra.mxu0 0
      %1203 = vmatprep.subr.bf16.mxu0 0
      %1204 = vmatpush2.bf16.msra.mxu0 0
      %1205 = vmatprep.subr.bf16.mxu0 0
      %1206 = vmatpush2.bf16.msra.mxu0 0
      %1207 = vmatprep.subr.bf16.mxu0 0
      %1208 = vmatpush2.bf16.msra.mxu0 0
      %1209 = vmatprep.mubr.bf16.mxu0 0
      %1210 = vmatmul.mubr.bf16.gmra.mxu0 %v1062
      %v1211 = vpop.f32.mrf.mxu0
      %v1212 = vadd.f32 0.0, %v1211
      %v1213 = vpop.f32.mrf.mxu0
      %v1214 = vadd.f32 0.0, %v1213
      %v1215 = vpop.f32.mrf.mxu0
      %v1216 = vadd.f32 0.0, %v1215
      %v1217 = vpop.f32.mrf.mxu0
      %v1218 = vadd.f32 0.0, %v1217
      %1219 = vdwg.mxu0
      %1220 = vmatprep.subr.bf16.mxu0 0
      %1221 = vmatpush1.bf16.msra.mxu0 0
      %1222 = vmatprep.subr.bf16.mxu0 0
      %1223 = vmatpush1.bf16.msra.mxu0 0
      %1224 = vmatprep.subr.bf16.mxu0 0
      %1225 = vmatpush1.bf16.msra.mxu0 0
      %1226 = vmatprep.subr.bf16.mxu0 0
      %1227 = vmatpush1.bf16.msra.mxu0 0
      %1228 = vmatprep.subr.bf16.mxu0 0
      %1229 = vmatpush1.bf16.msra.mxu0 0
      %1230 = vmatprep.subr.bf16.mxu0 0
      %1231 = vmatpush1.bf16.msra.mxu0 0
      %1232 = vmatprep.subr.bf16.mxu0 0
      %1233 = vmatpush1.bf16.msra.mxu0 0
      %1234 = vmatprep.subr.bf16.mxu0 %v1086
      %1235 = vmatpush1.bf16.msra.mxu0 %v1083
      %1236 = vmatprep.subr.bf16.mxu0 0
      %1237 = vmatpush2.bf16.msra.mxu0 0
      %1238 = vmatprep.subr.bf16.mxu0 0
      %1239 = vmatpush2.bf16.msra.mxu0 0
      %1240 = vmatprep.subr.bf16.mxu0 0
      %1241 = vmatpush2.bf16.msra.mxu0 0
      %1242 = vmatprep.subr.bf16.mxu0 0
      %1243 = vmatpush2.bf16.msra.mxu0 0
      %1244 = vmatprep.subr.bf16.mxu0 0
      %1245 = vmatpush2.bf16.msra.mxu0 0
      %1246 = vmatprep.subr.bf16.mxu0 0
      %1247 = vmatpush2.bf16.msra.mxu0 0
      %1248 = vmatprep.subr.bf16.mxu0 0
      %1249 = vmatpush2.bf16.msra.mxu0 0
      %1250 = vmatprep.subr.bf16.mxu0 0
      %1251 = vmatpush2.bf16.msra.mxu0 0
      %1252 = vmatprep.mubr.bf16.mxu0 0
      %1253 = vmatmul.mubr.bf16.gmra.mxu0 %v1062
      %v1254 = vpop.f32.mrf.mxu0
      %v1255 = vadd.f32 0.0, %v1254
      %v1256 = vpop.f32.mrf.mxu0
      %v1257 = vadd.f32 0.0, %v1256
      %v1258 = vpop.f32.mrf.mxu0
      %v1259 = vadd.f32 0.0, %v1258
      %v1260 = vpop.f32.mrf.mxu0
      %v1261 = vadd.f32 0.0, %v1260
      %1262 = vdwg.mxu0
      %1263 = vmatprep.subr.bf16.mxu0 0
      %1264 = vmatpush1.bf16.msra.mxu0 0
      %1265 = vmatprep.subr.bf16.mxu0 0
      %1266 = vmatpush1.bf16.msra.mxu0 0
      %1267 = vmatprep.subr.bf16.mxu0 0
      %1268 = vmatpush1.bf16.msra.mxu0 0
      %1269 = vmatprep.subr.bf16.mxu0 0
      %1270 = vmatpush1.bf16.msra.mxu0 0
      %1271 = vmatprep.subr.bf16.mxu0 0
      %1272 = vmatpush1.bf16.msra.mxu0 0
      %1273 = vmatprep.subr.bf16.mxu0 0
      %1274 = vmatpush1.bf16.msra.mxu0 0
      %1275 = vmatprep.subr.bf16.mxu0 0
      %1276 = vmatpush1.bf16.msra.mxu0 0
      %1277 = vmatprep.subr.bf16.mxu0 0
      %1278 = vmatpush1.bf16.msra.mxu0 %v1089
      %1279 = vmatprep.subr.bf16.mxu0 0
      %1280 = vmatpush2.bf16.msra.mxu0 0
      %1281 = vmatprep.subr.bf16.mxu0 0
      %1282 = vmatpush2.bf16.msra.mxu0 0
      %1283 = vmatprep.subr.bf16.mxu0 0
      %1284 = vmatpush2.bf16.msra.mxu0 0
      %1285 = vmatprep.subr.bf16.mxu0 0
      %1286 = vmatpush2.bf16.msra.mxu0 0
      %1287 = vmatprep.subr.bf16.mxu0 0
      %1288 = vmatpush2.bf16.msra.mxu0 0
      %1289 = vmatprep.subr.bf16.mxu0 0
      %1290 = vmatpush2.bf16.msra.mxu0 0
      %1291 = vmatprep.subr.bf16.mxu0 0
      %1292 = vmatpush2.bf16.msra.mxu0 0
      %1293 = vmatprep.subr.bf16.mxu0 0
      %1294 = vmatpush2.bf16.msra.mxu0 0
      %1295 = vmatprep.mubr.bf16.mxu0 0
      %1296 = vmatmul.mubr.bf16.gmra.mxu0 %v1062
      %v1297 = vpop.f32.mrf.mxu0
      %v1298 = vadd.f32 0.0, %v1297
      %v1299 = vpop.f32.mrf.mxu0
      %v1300 = vpop.f32.mrf.mxu0
      %v1301 = vadd.f32 0.0, %v1300
      %v1302 = vpop.f32.mrf.mxu0
      %1303 = vdwg.mxu0
      %v1304 = vadd.f32 %v1008, %v1126
      %v1305 = vadd.f32 %v1009, %v1128
      %v1306 = vadd.f32 %v1010, %v1169
      %v1307 = vadd.f32 %v1011, %v1171
      %v1308 = vadd.f32 %v1012, %v1212
      %v1309 = vadd.f32 %v1013, %v1214
      %v1310 = vadd.f32 %v1014, %v1255
      %v1311 = vadd.f32 %v1015, %v1257
      %v1312 = vadd.f32 %v1016, %v1298
      %v1313 = vadd.f32 %v1017, %v1130
      %v1314 = vadd.f32 %v1018, %v1132
      %v1315 = vadd.f32 %v1019, %v1173
      %v1316 = vadd.f32 %v1020, %v1175
      %v1317 = vadd.f32 %v1021, %v1216
      %v1318 = vadd.f32 %v1022, %v1218
      %v1319 = vadd.f32 %v1023, %v1259
      %v1320 = vadd.f32 %v1024, %v1261
      %v1321 = vadd.f32 %v1025, %v1301
      %s1322 = scalar_lea.vmem %s1, 32
      %v1323 = vld [vmem:[%s1322] sm:$0xf]
      %v1324 = vld [vmem:[%s1322 + $0x4] sm:$0xf]
      %v1327 = vunpack.c.l.b16 %v1323
      %v1328 = vunpack.c.l.b16 %v1324
      %v1329 = vpack.c.b16 %v1328, %v1327
      %1330 = vrot.lane.b32.xlu0 %v201, 93
      %v1331 = vpop.permute.xlu0 %1330
      %1332 = vrot.lane.b32.xlu0 %v202, 93
      %v1333 = vpop.permute.xlu0 %1332
      %1334 = vrot.lane.b32.xlu0 %v203, 93
      %v1335 = vpop.permute.xlu0 %1334
      %1336 = vrot.lane.b32.xlu0 %v204, 93
      %v1337 = vpop.permute.xlu0 %1336
      %1338 = vrot.lane.b32.xlu0 %v205, 93
      %v1339 = vpop.permute.xlu0 %1338
      %1340 = vrot.lane.b32.xlu0 %v206, 93
      %v1341 = vpop.permute.xlu0 %1340
      %1342 = vrot.lane.b32.xlu0 %v207, 93
      %v1343 = vpop.permute.xlu0 %1342
      %1344 = vrot.lane.b32.xlu0 %v208, 93
      %v1345 = vpop.permute.xlu0 %1344
      %1346 = vrot.lane.b32.xlu0 %v209, 93
      %v1347 = vpop.permute.xlu0 %1346
      %vm1348 = vcmask 760832
      %v1349 = vsel %vm1348, %v1331, %v1333
      %v1350 = vsel %vm1348, %v1333, %v1335
      %v1351 = vsel %vm1348, %v1335, %v1337
      %v1352 = vsel %vm1348, %v1337, %v1339
      %v1353 = vsel %vm1348, %v1339, %v1341
      %v1354 = vsel %vm1348, %v1341, %v1343
      %v1355 = vsel %vm1348, %v1343, %v1345
      %v1356 = vsel %vm1348, %v1345, %v1347
      %v1358 = vsel %vm237, %v1329, 0
      %v1361 = vsel %vm241, %v1349, 0
      %v1364 = vsel %vm241, %v1350, 0
      %v1367 = vsel %vm241, %v1351, 0
      %v1370 = vsel %vm241, %v1352, 0
      %v1373 = vsel %vm241, %v1353, 0
      %v1376 = vsel %vm241, %v1354, 0
      %v1379 = vsel %vm241, %v1355, 0
      %v1382 = vsel %vm241, %v1356, 0
      %v1385 = vsel %vm241, %v1347, 0
      %1387 = vmatprep.subr.bf16.mxu0 0
      %1388 = vmatpush1.bf16.msra.mxu0 0
      %1389 = vmatprep.subr.bf16.mxu0 0
      %1390 = vmatpush1.bf16.msra.mxu0 0
      %1391 = vmatprep.subr.bf16.mxu0 0
      %1392 = vmatpush1.bf16.msra.mxu0 0
      %1393 = vmatprep.subr.bf16.mxu0 0
      %1394 = vmatpush1.bf16.msra.mxu0 0
      %1395 = vmatprep.subr.bf16.mxu0 0
      %1396 = vmatpush1.bf16.msra.mxu0 0
      %1397 = vmatprep.subr.bf16.mxu0 0
      %1398 = vmatpush1.bf16.msra.mxu0 0
      %1399 = vmatprep.subr.bf16.mxu0 0
      %1400 = vmatpush1.bf16.msra.mxu0 0
      %1401 = vmatprep.subr.bf16.mxu0 %v1364
      %1402 = vmatpush1.bf16.msra.mxu0 %v1361
      %1403 = vmatprep.subr.bf16.mxu0 0
      %1404 = vmatpush2.bf16.msra.mxu0 0
      %1405 = vmatprep.subr.bf16.mxu0 0
      %1406 = vmatpush2.bf16.msra.mxu0 0
      %1407 = vmatprep.subr.bf16.mxu0 0
      %1408 = vmatpush2.bf16.msra.mxu0 0
      %1409 = vmatprep.subr.bf16.mxu0 0
      %1410 = vmatpush2.bf16.msra.mxu0 0
      %1411 = vmatprep.subr.bf16.mxu0 0
      %1412 = vmatpush2.bf16.msra.mxu0 0
      %1413 = vmatprep.subr.bf16.mxu0 0
      %1414 = vmatpush2.bf16.msra.mxu0 0
      %1415 = vmatprep.subr.bf16.mxu0 0
      %1416 = vmatpush2.bf16.msra.mxu0 0
      %1417 = vmatprep.subr.bf16.mxu0 0
      %1418 = vmatpush2.bf16.msra.mxu0 0
      %1419 = vmatprep.mubr.bf16.mxu0 0
      %1420 = vmatmul.mubr.bf16.gmra.mxu0 %v1358
      %v1421 = vpop.f32.mrf.mxu0
      %v1422 = vadd.f32 0.0, %v1421
      %v1423 = vpop.f32.mrf.mxu0
      %v1424 = vadd.f32 0.0, %v1423
      %v1425 = vpop.f32.mrf.mxu0
      %v1426 = vadd.f32 0.0, %v1425
      %v1427 = vpop.f32.mrf.mxu0
      %v1428 = vadd.f32 0.0, %v1427
      %1429 = vdwg.mxu0
      %1430 = vmatprep.subr.bf16.mxu0 0
      %1431 = vmatpush1.bf16.msra.mxu0 0
      %1432 = vmatprep.subr.bf16.mxu0 0
      %1433 = vmatpush1.bf16.msra.mxu0 0
      %1434 = vmatprep.subr.bf16.mxu0 0
      %1435 = vmatpush1.bf16.msra.mxu0 0
      %1436 = vmatprep.subr.bf16.mxu0 0
      %1437 = vmatpush1.bf16.msra.mxu0 0
      %1438 = vmatprep.subr.bf16.mxu0 0
      %1439 = vmatpush1.bf16.msra.mxu0 0
      %1440 = vmatprep.subr.bf16.mxu0 0
      %1441 = vmatpush1.bf16.msra.mxu0 0
      %1442 = vmatprep.subr.bf16.mxu0 0
      %1443 = vmatpush1.bf16.msra.mxu0 0
      %1444 = vmatprep.subr.bf16.mxu0 %v1370
      %1445 = vmatpush1.bf16.msra.mxu0 %v1367
      %1446 = vmatprep.subr.bf16.mxu0 0
      %1447 = vmatpush2.bf16.msra.mxu0 0
      %1448 = vmatprep.subr.bf16.mxu0 0
      %1449 = vmatpush2.bf16.msra.mxu0 0
      %1450 = vmatprep.subr.bf16.mxu0 0
      %1451 = vmatpush2.bf16.msra.mxu0 0
      %1452 = vmatprep.subr.bf16.mxu0 0
      %1453 = vmatpush2.bf16.msra.mxu0 0
      %1454 = vmatprep.subr.bf16.mxu0 0
      %1455 = vmatpush2.bf16.msra.mxu0 0
      %1456 = vmatprep.subr.bf16.mxu0 0
      %1457 = vmatpush2.bf16.msra.mxu0 0
      %1458 = vmatprep.subr.bf16.mxu0 0
      %1459 = vmatpush2.bf16.msra.mxu0 0
      %1460 = vmatprep.subr.bf16.mxu0 0
      %1461 = vmatpush2.bf16.msra.mxu0 0
      %1462 = vmatprep.mubr.bf16.mxu0 0
      %1463 = vmatmul.mubr.bf16.gmra.mxu0 %v1358
      %v1464 = vpop.f32.mrf.mxu0
      %v1465 = vadd.f32 0.0, %v1464
      %v1466 = vpop.f32.mrf.mxu0
      %v1467 = vadd.f32 0.0, %v1466
      %v1468 = vpop.f32.mrf.mxu0
      %v1469 = vadd.f32 0.0, %v1468
      %v1470 = vpop.f32.mrf.mxu0
      %v1471 = vadd.f32 0.0, %v1470
      %1472 = vdwg.mxu0
      %1473 = vmatprep.subr.bf16.mxu0 0
      %1474 = vmatpush1.bf16.msra.mxu0 0
      %1475 = vmatprep.subr.bf16.mxu0 0
      %1476 = vmatpush1.bf16.msra.mxu0 0
      %1477 = vmatprep.subr.bf16.mxu0 0
      %1478 = vmatpush1.bf16.msra.mxu0 0
      %1479 = vmatprep.subr.bf16.mxu0 0
      %1480 = vmatpush1.bf16.msra.mxu0 0
      %1481 = vmatprep.subr.bf16.mxu0 0
      %1482 = vmatpush1.bf16.msra.mxu0 0
      %1483 = vmatprep.subr.bf16.mxu0 0
      %1484 = vmatpush1.bf16.msra.mxu0 0
      %1485 = vmatprep.subr.bf16.mxu0 0
      %1486 = vmatpush1.bf16.msra.mxu0 0
      %1487 = vmatprep.subr.bf16.mxu0 %v1376
      %1488 = vmatpush1.bf16.msra.mxu0 %v1373
      %1489 = vmatprep.subr.bf16.mxu0 0
      %1490 = vmatpush2.bf16.msra.mxu0 0
      %1491 = vmatprep.subr.bf16.mxu0 0
      %1492 = vmatpush2.bf16.msra.mxu0 0
      %1493 = vmatprep.subr.bf16.mxu0 0
      %1494 = vmatpush2.bf16.msra.mxu0 0
      %1495 = vmatprep.subr.bf16.mxu0 0
      %1496 = vmatpush2.bf16.msra.mxu0 0
      %1497 = vmatprep.subr.bf16.mxu0 0
      %1498 = vmatpush2.bf16.msra.mxu0 0
      %1499 = vmatprep.subr.bf16.mxu0 0
      %1500 = vmatpush2.bf16.msra.mxu0 0
      %1501 = vmatprep.subr.bf16.mxu0 0
      %1502 = vmatpush2.bf16.msra.mxu0 0
      %1503 = vmatprep.subr.bf16.mxu0 0
      %1504 = vmatpush2.bf16.msra.mxu0 0
      %1505 = vmatprep.mubr.bf16.mxu0 0
      %1506 = vmatmul.mubr.bf16.gmra.mxu0 %v1358
      %v1507 = vpop.f32.mrf.mxu0
      %v1508 = vadd.f32 0.0, %v1507
      %v1509 = vpop.f32.mrf.mxu0
      %v1510 = vadd.f32 0.0, %v1509
      %v1511 = vpop.f32.mrf.mxu0
      %v1512 = vadd.f32 0.0, %v1511
      %v1513 = vpop.f32.mrf.mxu0
      %v1514 = vadd.f32 0.0, %v1513
      %1515 = vdwg.mxu0
      %1516 = vmatprep.subr.bf16.mxu0 0
      %1517 = vmatpush1.bf16.msra.mxu0 0
      %1518 = vmatprep.subr.bf16.mxu0 0
      %1519 = vmatpush1.bf16.msra.mxu0 0
      %1520 = vmatprep.subr.bf16.mxu0 0
      %1521 = vmatpush1.bf16.msra.mxu0 0
      %1522 = vmatprep.subr.bf16.mxu0 0
      %1523 = vmatpush1.bf16.msra.mxu0 0
      %1524 = vmatprep.subr.bf16.mxu0 0
      %1525 = vmatpush1.bf16.msra.mxu0 0
      %1526 = vmatprep.subr.bf16.mxu0 0
      %1527 = vmatpush1.bf16.msra.mxu0 0
      %1528 = vmatprep.subr.bf16.mxu0 0
      %1529 = vmatpush1.bf16.msra.mxu0 0
      %1530 = vmatprep.subr.bf16.mxu0 %v1382
      %1531 = vmatpush1.bf16.msra.mxu0 %v1379
      %1532 = vmatprep.subr.bf16.mxu0 0
      %1533 = vmatpush2.bf16.msra.mxu0 0
      %1534 = vmatprep.subr.bf16.mxu0 0
      %1535 = vmatpush2.bf16.msra.mxu0 0
      %1536 = vmatprep.subr.bf16.mxu0 0
      %1537 = vmatpush2.bf16.msra.mxu0 0
      %1538 = vmatprep.subr.bf16.mxu0 0
      %1539 = vmatpush2.bf16.msra.mxu0 0
      %1540 = vmatprep.subr.bf16.mxu0 0
      %1541 = vmatpush2.bf16.msra.mxu0 0
      %1542 = vmatprep.subr.bf16.mxu0 0
      %1543 = vmatpush2.bf16.msra.mxu0 0
      %1544 = vmatprep.subr.bf16.mxu0 0
      %1545 = vmatpush2.bf16.msra.mxu0 0
      %1546 = vmatprep.subr.bf16.mxu0 0
      %1547 = vmatpush2.bf16.msra.mxu0 0
      %1548 = vmatprep.mubr.bf16.mxu0 0
      %1549 = vmatmul.mubr.bf16.gmra.mxu0 %v1358
      %v1550 = vpop.f32.mrf.mxu0
      %v1551 = vadd.f32 0.0, %v1550
      %v1552 = vpop.f32.mrf.mxu0
      %v1553 = vadd.f32 0.0, %v1552
      %v1554 = vpop.f32.mrf.mxu0
      %v1555 = vadd.f32 0.0, %v1554
      %v1556 = vpop.f32.mrf.mxu0
      %v1557 = vadd.f32 0.0, %v1556
      %1558 = vdwg.mxu0
      %1559 = vmatprep.subr.bf16.mxu0 0
      %1560 = vmatpush1.bf16.msra.mxu0 0
      %1561 = vmatprep.subr.bf16.mxu0 0
      %1562 = vmatpush1.bf16.msra.mxu0 0
      %1563 = vmatprep.subr.bf16.mxu0 0
      %1564 = vmatpush1.bf16.msra.mxu0 0
      %1565 = vmatprep.subr.bf16.mxu0 0
      %1566 = vmatpush1.bf16.msra.mxu0 0
      %1567 = vmatprep.subr.bf16.mxu0 0
      %1568 = vmatpush1.bf16.msra.mxu0 0
      %1569 = vmatprep.subr.bf16.mxu0 0
      %1570 = vmatpush1.bf16.msra.mxu0 0
      %1571 = vmatprep.subr.bf16.mxu0 0
      %1572 = vmatpush1.bf16.msra.mxu0 0
      %1573 = vmatprep.subr.bf16.mxu0 0
      %1574 = vmatpush1.bf16.msra.mxu0 %v1385
      %1575 = vmatprep.subr.bf16.mxu0 0
      %1576 = vmatpush2.bf16.msra.mxu0 0
      %1577 = vmatprep.subr.bf16.mxu0 0
      %1578 = vmatpush2.bf16.msra.mxu0 0
      %1579 = vmatprep.subr.bf16.mxu0 0
      %1580 = vmatpush2.bf16.msra.mxu0 0
      %1581 = vmatprep.subr.bf16.mxu0 0
      %1582 = vmatpush2.bf16.msra.mxu0 0
      %1583 = vmatprep.subr.bf16.mxu0 0
      %1584 = vmatpush2.bf16.msra.mxu0 0
      %1585 = vmatprep.subr.bf16.mxu0 0
      %1586 = vmatpush2.bf16.msra.mxu0 0
      %1587 = vmatprep.subr.bf16.mxu0 0
      %1588 = vmatpush2.bf16.msra.mxu0 0
      %1589 = vmatprep.subr.bf16.mxu0 0
      %1590 = vmatpush2.bf16.msra.mxu0 0
      %1591 = vmatprep.mubr.bf16.mxu0 0
      %1592 = vmatmul.mubr.bf16.gmra.mxu0 %v1358
      %v1593 = vpop.f32.mrf.mxu0
      %v1594 = vadd.f32 0.0, %v1593
      %v1595 = vpop.f32.mrf.mxu0
      %v1596 = vpop.f32.mrf.mxu0
      %v1597 = vadd.f32 0.0, %v1596
      %v1598 = vpop.f32.mrf.mxu0
      %1599 = vdwg.mxu0
      %v1600 = vadd.f32 %v1304, %v1422
      %v1601 = vadd.f32 %v1305, %v1424
      %v1602 = vadd.f32 %v1306, %v1465
      %v1603 = vadd.f32 %v1307, %v1467
      %v1604 = vadd.f32 %v1308, %v1508
      %v1605 = vadd.f32 %v1309, %v1510
      %v1606 = vadd.f32 %v1310, %v1551
      %v1607 = vadd.f32 %v1311, %v1553
      %v1608 = vadd.f32 %v1312, %v1594
      %v1609 = vadd.f32 %v1313, %v1426
      %v1610 = vadd.f32 %v1314, %v1428
      %v1611 = vadd.f32 %v1315, %v1469
      %v1612 = vadd.f32 %v1316, %v1471
      %v1613 = vadd.f32 %v1317, %v1512
      %v1614 = vadd.f32 %v1318, %v1514
      %v1615 = vadd.f32 %v1319, %v1555
      %v1616 = vadd.f32 %v1320, %v1557
      %v1617 = vadd.f32 %v1321, %v1597
      %s1618 = scalar_lea.vmem %s1, 40
      %v1619 = vld [vmem:[%s1618] sm:$0xf]
      %v1620 = vld [vmem:[%s1618 + $0x4] sm:$0xf]
      %v1623 = vunpack.c.l.b16 %v1619
      %v1624 = vunpack.c.l.b16 %v1620
      %v1625 = vpack.c.b16 %v1624, %v1623
      %1626 = vrot.lane.b32.xlu0 %v201, 92
      %v1627 = vpop.permute.xlu0 %1626
      %1628 = vrot.lane.b32.xlu0 %v202, 92
      %v1629 = vpop.permute.xlu0 %1628
      %1630 = vrot.lane.b32.xlu0 %v203, 92
      %v1631 = vpop.permute.xlu0 %1630
      %1632 = vrot.lane.b32.xlu0 %v204, 92
      %v1633 = vpop.permute.xlu0 %1632
      %1634 = vrot.lane.b32.xlu0 %v205, 92
      %v1635 = vpop.permute.xlu0 %1634
      %1636 = vrot.lane.b32.xlu0 %v206, 92
      %v1637 = vpop.permute.xlu0 %1636
      %1638 = vrot.lane.b32.xlu0 %v207, 92
      %v1639 = vpop.permute.xlu0 %1638
      %1640 = vrot.lane.b32.xlu0 %v208, 92
      %v1641 = vpop.permute.xlu0 %1640
      %1642 = vrot.lane.b32.xlu0 %v209, 92
      %v1643 = vpop.permute.xlu0 %1642
      %vm1644 = vcmask 752640
      %v1645 = vsel %vm1644, %v1627, %v1629
      %v1646 = vsel %vm1644, %v1629, %v1631
      %v1647 = vsel %vm1644, %v1631, %v1633
      %v1648 = vsel %vm1644, %v1633, %v1635
      %v1649 = vsel %vm1644, %v1635, %v1637
      %v1650 = vsel %vm1644, %v1637, %v1639
      %v1651 = vsel %vm1644, %v1639, %v1641
      %v1652 = vsel %vm1644, %v1641, %v1643
      %v1654 = vsel %vm237, %v1625, 0
      %v1657 = vsel %vm241, %v1645, 0
      %v1660 = vsel %vm241, %v1646, 0
      %v1663 = vsel %vm241, %v1647, 0
      %v1666 = vsel %vm241, %v1648, 0
      %v1669 = vsel %vm241, %v1649, 0
      %v1672 = vsel %vm241, %v1650, 0
      %v1675 = vsel %vm241, %v1651, 0
      %v1678 = vsel %vm241, %v1652, 0
      %v1681 = vsel %vm241, %v1643, 0
      %1683 = vmatprep.subr.bf16.mxu0 0
      %1684 = vmatpush1.bf16.msra.mxu0 0
      %1685 = vmatprep.subr.bf16.mxu0 0
      %1686 = vmatpush1.bf16.msra.mxu0 0
      %1687 = vmatprep.subr.bf16.mxu0 0
      %1688 = vmatpush1.bf16.msra.mxu0 0
      %1689 = vmatprep.subr.bf16.mxu0 0
      %1690 = vmatpush1.bf16.msra.mxu0 0
      %1691 = vmatprep.subr.bf16.mxu0 0
      %1692 = vmatpush1.bf16.msra.mxu0 0
      %1693 = vmatprep.subr.bf16.mxu0 0
      %1694 = vmatpush1.bf16.msra.mxu0 0
      %1695 = vmatprep.subr.bf16.mxu0 0
      %1696 = vmatpush1.bf16.msra.mxu0 0
      %1697 = vmatprep.subr.bf16.mxu0 %v1660
      %1698 = vmatpush1.bf16.msra.mxu0 %v1657
      %1699 = vmatprep.subr.bf16.mxu0 0
      %1700 = vmatpush2.bf16.msra.mxu0 0
      %1701 = vmatprep.subr.bf16.mxu0 0
      %1702 = vmatpush2.bf16.msra.mxu0 0
      %1703 = vmatprep.subr.bf16.mxu0 0
      %1704 = vmatpush2.bf16.msra.mxu0 0
      %1705 = vmatprep.subr.bf16.mxu0 0
      %1706 = vmatpush2.bf16.msra.mxu0 0
      %1707 = vmatprep.subr.bf16.mxu0 0
      %1708 = vmatpush2.bf16.msra.mxu0 0
      %1709 = vmatprep.subr.bf16.mxu0 0
      %1710 = vmatpush2.bf16.msra.mxu0 0
      %1711 = vmatprep.subr.bf16.mxu0 0
      %1712 = vmatpush2.bf16.msra.mxu0 0
      %1713 = vmatprep.subr.bf16.mxu0 0
      %1714 = vmatpush2.bf16.msra.mxu0 0
      %1715 = vmatprep.mubr.bf16.mxu0 0
      %1716 = vmatmul.mubr.bf16.gmra.mxu0 %v1654
      %v1717 = vpop.f32.mrf.mxu0
      %v1718 = vadd.f32 0.0, %v1717
      %v1719 = vpop.f32.mrf.mxu0
      %v1720 = vadd.f32 0.0, %v1719
      %v1721 = vpop.f32.mrf.mxu0
      %v1722 = vadd.f32 0.0, %v1721
      %v1723 = vpop.f32.mrf.mxu0
      %v1724 = vadd.f32 0.0, %v1723
      %1725 = vdwg.mxu0
      %1726 = vmatprep.subr.bf16.mxu0 0
      %1727 = vmatpush1.bf16.msra.mxu0 0
      %1728 = vmatprep.subr.bf16.mxu0 0
      %1729 = vmatpush1.bf16.msra.mxu0 0
      %1730 = vmatprep.subr.bf16.mxu0 0
      %1731 = vmatpush1.bf16.msra.mxu0 0
      %1732 = vmatprep.subr.bf16.mxu0 0
      %1733 = vmatpush1.bf16.msra.mxu0 0
      %1734 = vmatprep.subr.bf16.mxu0 0
      %1735 = vmatpush1.bf16.msra.mxu0 0
      %1736 = vmatprep.subr.bf16.mxu0 0
      %1737 = vmatpush1.bf16.msra.mxu0 0
      %1738 = vmatprep.subr.bf16.mxu0 0
      %1739 = vmatpush1.bf16.msra.mxu0 0
      %1740 = vmatprep.subr.bf16.mxu0 %v1666
      %1741 = vmatpush1.bf16.msra.mxu0 %v1663
      %1742 = vmatprep.subr.bf16.mxu0 0
      %1743 = vmatpush2.bf16.msra.mxu0 0
      %1744 = vmatprep.subr.bf16.mxu0 0
      %1745 = vmatpush2.bf16.msra.mxu0 0
      %1746 = vmatprep.subr.bf16.mxu0 0
      %1747 = vmatpush2.bf16.msra.mxu0 0
      %1748 = vmatprep.subr.bf16.mxu0 0
      %1749 = vmatpush2.bf16.msra.mxu0 0
      %1750 = vmatprep.subr.bf16.mxu0 0
      %1751 = vmatpush2.bf16.msra.mxu0 0
      %1752 = vmatprep.subr.bf16.mxu0 0
      %1753 = vmatpush2.bf16.msra.mxu0 0
      %1754 = vmatprep.subr.bf16.mxu0 0
      %1755 = vmatpush2.bf16.msra.mxu0 0
      %1756 = vmatprep.subr.bf16.mxu0 0
      %1757 = vmatpush2.bf16.msra.mxu0 0
      %1758 = vmatprep.mubr.bf16.mxu0 0
      %1759 = vmatmul.mubr.bf16.gmra.mxu0 %v1654
      %v1760 = vpop.f32.mrf.mxu0
      %v1761 = vadd.f32 0.0, %v1760
      %v1762 = vpop.f32.mrf.mxu0
      %v1763 = vadd.f32 0.0, %v1762
      %v1764 = vpop.f32.mrf.mxu0
      %v1765 = vadd.f32 0.0, %v1764
      %v1766 = vpop.f32.mrf.mxu0
      %v1767 = vadd.f32 0.0, %v1766
      %1768 = vdwg.mxu0
      %1769 = vmatprep.subr.bf16.mxu0 0
      %1770 = vmatpush1.bf16.msra.mxu0 0
      %1771 = vmatprep.subr.bf16.mxu0 0
      %1772 = vmatpush1.bf16.msra.mxu0 0
      %1773 = vmatprep.subr.bf16.mxu0 0
      %1774 = vmatpush1.bf16.msra.mxu0 0
      %1775 = vmatprep.subr.bf16.mxu0 0
      %1776 = vmatpush1.bf16.msra.mxu0 0
      %1777 = vmatprep.subr.bf16.mxu0 0
      %1778 = vmatpush1.bf16.msra.mxu0 0
      %1779 = vmatprep.subr.bf16.mxu0 0
      %1780 = vmatpush1.bf16.msra.mxu0 0
      %1781 = vmatprep.subr.bf16.mxu0 0
      %1782 = vmatpush1.bf16.msra.mxu0 0
      %1783 = vmatprep.subr.bf16.mxu0 %v1672
      %1784 = vmatpush1.bf16.msra.mxu0 %v1669
      %1785 = vmatprep.subr.bf16.mxu0 0
      %1786 = vmatpush2.bf16.msra.mxu0 0
      %1787 = vmatprep.subr.bf16.mxu0 0
      %1788 = vmatpush2.bf16.msra.mxu0 0
      %1789 = vmatprep.subr.bf16.mxu0 0
      %1790 = vmatpush2.bf16.msra.mxu0 0
      %1791 = vmatprep.subr.bf16.mxu0 0
      %1792 = vmatpush2.bf16.msra.mxu0 0
      %1793 = vmatprep.subr.bf16.mxu0 0
      %1794 = vmatpush2.bf16.msra.mxu0 0
      %1795 = vmatprep.subr.bf16.mxu0 0
      %1796 = vmatpush2.bf16.msra.mxu0 0
      %1797 = vmatprep.subr.bf16.mxu0 0
      %1798 = vmatpush2.bf16.msra.mxu0 0
      %1799 = vmatprep.subr.bf16.mxu0 0
      %1800 = vmatpush2.bf16.msra.mxu0 0
      %1801 = vmatprep.mubr.bf16.mxu0 0
      %1802 = vmatmul.mubr.bf16.gmra.mxu0 %v1654
      %v1803 = vpop.f32.mrf.mxu0
      %v1804 = vadd.f32 0.0, %v1803
      %v1805 = vpop.f32.mrf.mxu0
      %v1806 = vadd.f32 0.0, %v1805
      %v1807 = vpop.f32.mrf.mxu0
      %v1808 = vadd.f32 0.0, %v1807
      %v1809 = vpop.f32.mrf.mxu0
      %v1810 = vadd.f32 0.0, %v1809
      %1811 = vdwg.mxu0
      %1812 = vmatprep.subr.bf16.mxu0 0
      %1813 = vmatpush1.bf16.msra.mxu0 0
      %1814 = vmatprep.subr.bf16.mxu0 0
      %1815 = vmatpush1.bf16.msra.mxu0 0
      %1816 = vmatprep.subr.bf16.mxu0 0
      %1817 = vmatpush1.bf16.msra.mxu0 0
      %1818 = vmatprep.subr.bf16.mxu0 0
      %1819 = vmatpush1.bf16.msra.mxu0 0
      %1820 = vmatprep.subr.bf16.mxu0 0
      %1821 = vmatpush1.bf16.msra.mxu0 0
      %1822 = vmatprep.subr.bf16.mxu0 0
      %1823 = vmatpush1.bf16.msra.mxu0 0
      %1824 = vmatprep.subr.bf16.mxu0 0
      %1825 = vmatpush1.bf16.msra.mxu0 0
      %1826 = vmatprep.subr.bf16.mxu0 %v1678
      %1827 = vmatpush1.bf16.msra.mxu0 %v1675
      %1828 = vmatprep.subr.bf16.mxu0 0
      %1829 = vmatpush2.bf16.msra.mxu0 0
      %1830 = vmatprep.subr.bf16.mxu0 0
      %1831 = vmatpush2.bf16.msra.mxu0 0
      %1832 = vmatprep.subr.bf16.mxu0 0
      %1833 = vmatpush2.bf16.msra.mxu0 0
      %1834 = vmatprep.subr.bf16.mxu0 0
      %1835 = vmatpush2.bf16.msra.mxu0 0
      %1836 = vmatprep.subr.bf16.mxu0 0
      %1837 = vmatpush2.bf16.msra.mxu0 0
      %1838 = vmatprep.subr.bf16.mxu0 0
      %1839 = vmatpush2.bf16.msra.mxu0 0
      %1840 = vmatprep.subr.bf16.mxu0 0
      %1841 = vmatpush2.bf16.msra.mxu0 0
      %1842 = vmatprep.subr.bf16.mxu0 0
      %1843 = vmatpush2.bf16.msra.mxu0 0
      %1844 = vmatprep.mubr.bf16.mxu0 0
      %1845 = vmatmul.mubr.bf16.gmra.mxu0 %v1654
      %v1846 = vpop.f32.mrf.mxu0
      %v1847 = vadd.f32 0.0, %v1846
      %v1848 = vpop.f32.mrf.mxu0
      %v1849 = vadd.f32 0.0, %v1848
      %v1850 = vpop.f32.mrf.mxu0
      %v1851 = vadd.f32 0.0, %v1850
      %v1852 = vpop.f32.mrf.mxu0
      %v1853 = vadd.f32 0.0, %v1852
      %1854 = vdwg.mxu0
      %1855 = vmatprep.subr.bf16.mxu0 0
      %1856 = vmatpush1.bf16.msra.mxu0 0
      %1857 = vmatprep.subr.bf16.mxu0 0
      %1858 = vmatpush1.bf16.msra.mxu0 0
      %1859 = vmatprep.subr.bf16.mxu0 0
      %1860 = vmatpush1.bf16.msra.mxu0 0
      %1861 = vmatprep.subr.bf16.mxu0 0
      %1862 = vmatpush1.bf16.msra.mxu0 0
      %1863 = vmatprep.subr.bf16.mxu0 0
      %1864 = vmatpush1.bf16.msra.mxu0 0
      %1865 = vmatprep.subr.bf16.mxu0 0
      %1866 = vmatpush1.bf16.msra.mxu0 0
      %1867 = vmatprep.subr.bf16.mxu0 0
      %1868 = vmatpush1.bf16.msra.mxu0 0
      %1869 = vmatprep.subr.bf16.mxu0 0
      %1870 = vmatpush1.bf16.msra.mxu0 %v1681
      %1871 = vmatprep.subr.bf16.mxu0 0
      %1872 = vmatpush2.bf16.msra.mxu0 0
      %1873 = vmatprep.subr.bf16.mxu0 0
      %1874 = vmatpush2.bf16.msra.mxu0 0
      %1875 = vmatprep.subr.bf16.mxu0 0
      %1876 = vmatpush2.bf16.msra.mxu0 0
      %1877 = vmatprep.subr.bf16.mxu0 0
      %1878 = vmatpush2.bf16.msra.mxu0 0
      %1879 = vmatprep.subr.bf16.mxu0 0
      %1880 = vmatpush2.bf16.msra.mxu0 0
      %1881 = vmatprep.subr.bf16.mxu0 0
      %1882 = vmatpush2.bf16.msra.mxu0 0
      %1883 = vmatprep.subr.bf16.mxu0 0
      %1884 = vmatpush2.bf16.msra.mxu0 0
      %1885 = vmatprep.subr.bf16.mxu0 0
      %1886 = vmatpush2.bf16.msra.mxu0 0
      %1887 = vmatprep.mubr.bf16.mxu0 0
      %1888 = vmatmul.mubr.bf16.gmra.mxu0 %v1654
      %v1889 = vpop.f32.mrf.mxu0
      %v1890 = vadd.f32 0.0, %v1889
      %v1891 = vpop.f32.mrf.mxu0
      %v1892 = vpop.f32.mrf.mxu0
      %v1893 = vadd.f32 0.0, %v1892
      %v1894 = vpop.f32.mrf.mxu0
      %1895 = vdwg.mxu0
      %v1896 = vadd.f32 %v1600, %v1718
      %v1897 = vadd.f32 %v1601, %v1720
      %v1898 = vadd.f32 %v1602, %v1761
      %v1899 = vadd.f32 %v1603, %v1763
      %v1900 = vadd.f32 %v1604, %v1804
      %v1901 = vadd.f32 %v1605, %v1806
      %v1902 = vadd.f32 %v1606, %v1847
      %v1903 = vadd.f32 %v1607, %v1849
      %v1904 = vadd.f32 %v1608, %v1890
      %v1905 = vadd.f32 %v1609, %v1722
      %v1906 = vadd.f32 %v1610, %v1724
      %v1907 = vadd.f32 %v1611, %v1765
      %v1908 = vadd.f32 %v1612, %v1767
      %v1909 = vadd.f32 %v1613, %v1808
      %v1910 = vadd.f32 %v1614, %v1810
      %v1911 = vadd.f32 %v1615, %v1851
      %v1912 = vadd.f32 %v1616, %v1853
      %v1913 = vadd.f32 %v1617, %v1893
      %s1914 = scalar_lea.vmem %s1, 48
      %v1915 = vld [vmem:[%s1914] sm:$0xf]
      %v1916 = vld [vmem:[%s1914 + $0x4] sm:$0xf]
      %v1917 = vld [vmem:[%s165] sm:$0xff]
      %v1918 = vld [vmem:[%s165 + $0x8] sm:$0xff]
      %v1919 = vld [vmem:[%s165 + $0x10] sm:$0xff]
      %v1920 = vld [vmem:[%s165 + $0x18] sm:$0xff]
      %v1921 = vld [vmem:[%s165 + $0x20] sm:$0xff]
      %v1924 = vunpack.c.l.b16 %v1915
      %v1925 = vunpack.c.l.b16 %v1916
      %v1926 = vpack.c.b16 %v1925, %v1924
      %v1932 = vunpack.c.l.b16 %v1917
      %v1933 = vunpack.c.h.b16 %v1917
      %v1934 = vunpack.c.l.b16 %v1918
      %v1935 = vunpack.c.h.b16 %v1918
      %v1936 = vunpack.c.l.b16 %v1919
      %v1937 = vunpack.c.h.b16 %v1919
      %v1938 = vunpack.c.l.b16 %v1920
      %v1939 = vunpack.c.h.b16 %v1920
      %v1940 = vunpack.c.l.b16 %v1921
      %v1941 = vunpack.c.h.b16 %v1921
      %v1942 = vpack.c.b16 %v1932, %v1932
      %v1943 = vpack.c.b16 %v1933, %v1933
      %v1944 = vpack.c.b16 %v1934, %v1934
      %v1945 = vpack.c.b16 %v1935, %v1935
      %v1946 = vpack.c.b16 %v1936, %v1936
      %v1947 = vpack.c.b16 %v1937, %v1937
      %v1948 = vpack.c.b16 %v1938, %v1938
      %v1949 = vpack.c.b16 %v1939, %v1939
      %v1950 = vpack.c.b16 %v1940, %v1940
      %v1951 = vpack.c.b16 %v1941, %v1941
      %1952 = vrot.lane.b32.xlu0 %v1942, 60
      %v1953 = vpop.permute.xlu0 %1952
      %1954 = vrot.lane.b32.xlu0 %v1943, 60
      %v1955 = vpop.permute.xlu0 %1954
      %1956 = vrot.lane.b32.xlu0 %v1944, 60
      %v1957 = vpop.permute.xlu0 %1956
      %1958 = vrot.lane.b32.xlu0 %v1945, 60
      %v1959 = vpop.permute.xlu0 %1958
      %1960 = vrot.lane.b32.xlu0 %v1946, 60
      %v1961 = vpop.permute.xlu0 %1960
      %1962 = vrot.lane.b32.xlu0 %v1947, 60
      %v1963 = vpop.permute.xlu0 %1962
      %1964 = vrot.lane.b32.xlu0 %v1948, 60
      %v1965 = vpop.permute.xlu0 %1964
      %1966 = vrot.lane.b32.xlu0 %v1949, 60
      %v1967 = vpop.permute.xlu0 %1966
      %1968 = vrot.lane.b32.xlu0 %v1950, 60
      %v1969 = vpop.permute.xlu0 %1968
      %1970 = vrot.lane.b32.xlu0 %v1951, 60
      %v1971 = vpop.permute.xlu0 %1970
      %vm1972 = vcmask 490496
      %v1973 = vsel %vm1972, %v1953, %v1955
      %v1974 = vsel %vm1972, %v1955, %v1957
      %v1975 = vsel %vm1972, %v1957, %v1959
      %v1976 = vsel %vm1972, %v1959, %v1961
      %v1977 = vsel %vm1972, %v1961, %v1963
      %v1978 = vsel %vm1972, %v1963, %v1965
      %v1979 = vsel %vm1972, %v1965, %v1967
      %v1980 = vsel %vm1972, %v1967, %v1969
      %v1981 = vsel %vm1972, %v1969, %v1971
      %v1983 = vsel %vm237, %v1926, 0
      %v1986 = vsel %vm241, %v1973, 0
      %v1989 = vsel %vm241, %v1974, 0
      %v1992 = vsel %vm241, %v1975, 0
      %v1995 = vsel %vm241, %v1976, 0
      %v1998 = vsel %vm241, %v1977, 0
      %v2001 = vsel %vm241, %v1978, 0
      %v2004 = vsel %vm241, %v1979, 0
      %v2007 = vsel %vm241, %v1980, 0
      %v2010 = vsel %vm241, %v1981, 0
      %2012 = vmatprep.subr.bf16.mxu0 0
      %2013 = vmatpush1.bf16.msra.mxu0 0
      %2014 = vmatprep.subr.bf16.mxu0 0
      %2015 = vmatpush1.bf16.msra.mxu0 0
      %2016 = vmatprep.subr.bf16.mxu0 0
      %2017 = vmatpush1.bf16.msra.mxu0 0
      %2018 = vmatprep.subr.bf16.mxu0 0
      %2019 = vmatpush1.bf16.msra.mxu0 0
      %2020 = vmatprep.subr.bf16.mxu0 0
      %2021 = vmatpush1.bf16.msra.mxu0 0
      %2022 = vmatprep.subr.bf16.mxu0 0
      %2023 = vmatpush1.bf16.msra.mxu0 0
      %2024 = vmatprep.subr.bf16.mxu0 0
      %2025 = vmatpush1.bf16.msra.mxu0 0
      %2026 = vmatprep.subr.bf16.mxu0 %v1989
      %2027 = vmatpush1.bf16.msra.mxu0 %v1986
      %2028 = vmatprep.subr.bf16.mxu0 0
      %2029 = vmatpush2.bf16.msra.mxu0 0
      %2030 = vmatprep.subr.bf16.mxu0 0
      %2031 = vmatpush2.bf16.msra.mxu0 0
      %2032 = vmatprep.subr.bf16.mxu0 0
      %2033 = vmatpush2.bf16.msra.mxu0 0
      %2034 = vmatprep.subr.bf16.mxu0 0
      %2035 = vmatpush2.bf16.msra.mxu0 0
      %2036 = vmatprep.subr.bf16.mxu0 0
      %2037 = vmatpush2.bf16.msra.mxu0 0
      %2038 = vmatprep.subr.bf16.mxu0 0
      %2039 = vmatpush2.bf16.msra.mxu0 0
      %2040 = vmatprep.subr.bf16.mxu0 0
      %2041 = vmatpush2.bf16.msra.mxu0 0
      %2042 = vmatprep.subr.bf16.mxu0 0
      %2043 = vmatpush2.bf16.msra.mxu0 0
      %2044 = vmatprep.mubr.bf16.mxu0 0
      %2045 = vmatmul.mubr.bf16.gmra.mxu0 %v1983
      %v2046 = vpop.f32.mrf.mxu0
      %v2047 = vadd.f32 0.0, %v2046
      %v2048 = vpop.f32.mrf.mxu0
      %v2049 = vadd.f32 0.0, %v2048
      %v2050 = vpop.f32.mrf.mxu0
      %v2051 = vadd.f32 0.0, %v2050
      %v2052 = vpop.f32.mrf.mxu0
      %v2053 = vadd.f32 0.0, %v2052
      %2054 = vdwg.mxu0
      %2055 = vmatprep.subr.bf16.mxu0 0
      %2056 = vmatpush1.bf16.msra.mxu0 0
      %2057 = vmatprep.subr.bf16.mxu0 0
      %2058 = vmatpush1.bf16.msra.mxu0 0
      %2059 = vmatprep.subr.bf16.mxu0 0
      %2060 = vmatpush1.bf16.msra.mxu0 0
      %2061 = vmatprep.subr.bf16.mxu0 0
      %2062 = vmatpush1.bf16.msra.mxu0 0
      %2063 = vmatprep.subr.bf16.mxu0 0
      %2064 = vmatpush1.bf16.msra.mxu0 0
      %2065 = vmatprep.subr.bf16.mxu0 0
      %2066 = vmatpush1.bf16.msra.mxu0 0
      %2067 = vmatprep.subr.bf16.mxu0 0
      %2068 = vmatpush1.bf16.msra.mxu0 0
      %2069 = vmatprep.subr.bf16.mxu0 %v1995
      %2070 = vmatpush1.bf16.msra.mxu0 %v1992
      %2071 = vmatprep.subr.bf16.mxu0 0
      %2072 = vmatpush2.bf16.msra.mxu0 0
      %2073 = vmatprep.subr.bf16.mxu0 0
      %2074 = vmatpush2.bf16.msra.mxu0 0
      %2075 = vmatprep.subr.bf16.mxu0 0
      %2076 = vmatpush2.bf16.msra.mxu0 0
      %2077 = vmatprep.subr.bf16.mxu0 0
      %2078 = vmatpush2.bf16.msra.mxu0 0
      %2079 = vmatprep.subr.bf16.mxu0 0
      %2080 = vmatpush2.bf16.msra.mxu0 0
      %2081 = vmatprep.subr.bf16.mxu0 0
      %2082 = vmatpush2.bf16.msra.mxu0 0
      %2083 = vmatprep.subr.bf16.mxu0 0
      %2084 = vmatpush2.bf16.msra.mxu0 0
      %2085 = vmatprep.subr.bf16.mxu0 0
      %2086 = vmatpush2.bf16.msra.mxu0 0
      %2087 = vmatprep.mubr.bf16.mxu0 0
      %2088 = vmatmul.mubr.bf16.gmra.mxu0 %v1983
      %v2089 = vpop.f32.mrf.mxu0
      %v2090 = vadd.f32 0.0, %v2089
      %v2091 = vpop.f32.mrf.mxu0
      %v2092 = vadd.f32 0.0, %v2091
      %v2093 = vpop.f32.mrf.mxu0
      %v2094 = vadd.f32 0.0, %v2093
      %v2095 = vpop.f32.mrf.mxu0
      %v2096 = vadd.f32 0.0, %v2095
      %2097 = vdwg.mxu0
      %2098 = vmatprep.subr.bf16.mxu0 0
      %2099 = vmatpush1.bf16.msra.mxu0 0
      %2100 = vmatprep.subr.bf16.mxu0 0
      %2101 = vmatpush1.bf16.msra.mxu0 0
      %2102 = vmatprep.subr.bf16.mxu0 0
      %2103 = vmatpush1.bf16.msra.mxu0 0
      %2104 = vmatprep.subr.bf16.mxu0 0
      %2105 = vmatpush1.bf16.msra.mxu0 0
      %2106 = vmatprep.subr.bf16.mxu0 0
      %2107 = vmatpush1.bf16.msra.mxu0 0
      %2108 = vmatprep.subr.bf16.mxu0 0
      %2109 = vmatpush1.bf16.msra.mxu0 0
      %2110 = vmatprep.subr.bf16.mxu0 0
      %2111 = vmatpush1.bf16.msra.mxu0 0
      %2112 = vmatprep.subr.bf16.mxu0 %v2001
      %2113 = vmatpush1.bf16.msra.mxu0 %v1998
      %2114 = vmatprep.subr.bf16.mxu0 0
      %2115 = vmatpush2.bf16.msra.mxu0 0
      %2116 = vmatprep.subr.bf16.mxu0 0
      %2117 = vmatpush2.bf16.msra.mxu0 0
      %2118 = vmatprep.subr.bf16.mxu0 0
      %2119 = vmatpush2.bf16.msra.mxu0 0
      %2120 = vmatprep.subr.bf16.mxu0 0
      %2121 = vmatpush2.bf16.msra.mxu0 0
      %2122 = vmatprep.subr.bf16.mxu0 0
      %2123 = vmatpush2.bf16.msra.mxu0 0
      %2124 = vmatprep.subr.bf16.mxu0 0
      %2125 = vmatpush2.bf16.msra.mxu0 0
      %2126 = vmatprep.subr.bf16.mxu0 0
      %2127 = vmatpush2.bf16.msra.mxu0 0
      %2128 = vmatprep.subr.bf16.mxu0 0
      %2129 = vmatpush2.bf16.msra.mxu0 0
      %2130 = vmatprep.mubr.bf16.mxu0 0
      %2131 = vmatmul.mubr.bf16.gmra.mxu0 %v1983
      %v2132 = vpop.f32.mrf.mxu0
      %v2133 = vadd.f32 0.0, %v2132
      %v2134 = vpop.f32.mrf.mxu0
      %v2135 = vadd.f32 0.0, %v2134
      %v2136 = vpop.f32.mrf.mxu0
      %v2137 = vadd.f32 0.0, %v2136
      %v2138 = vpop.f32.mrf.mxu0
      %v2139 = vadd.f32 0.0, %v2138
      %2140 = vdwg.mxu0
      %2141 = vmatprep.subr.bf16.mxu0 0
      %2142 = vmatpush1.bf16.msra.mxu0 0
      %2143 = vmatprep.subr.bf16.mxu0 0
      %2144 = vmatpush1.bf16.msra.mxu0 0
      %2145 = vmatprep.subr.bf16.mxu0 0
      %2146 = vmatpush1.bf16.msra.mxu0 0
      %2147 = vmatprep.subr.bf16.mxu0 0
      %2148 = vmatpush1.bf16.msra.mxu0 0
      %2149 = vmatprep.subr.bf16.mxu0 0
      %2150 = vmatpush1.bf16.msra.mxu0 0
      %2151 = vmatprep.subr.bf16.mxu0 0
      %2152 = vmatpush1.bf16.msra.mxu0 0
      %2153 = vmatprep.subr.bf16.mxu0 0
      %2154 = vmatpush1.bf16.msra.mxu0 0
      %2155 = vmatprep.subr.bf16.mxu0 %v2007
      %2156 = vmatpush1.bf16.msra.mxu0 %v2004
      %2157 = vmatprep.subr.bf16.mxu0 0
      %2158 = vmatpush2.bf16.msra.mxu0 0
      %2159 = vmatprep.subr.bf16.mxu0 0
      %2160 = vmatpush2.bf16.msra.mxu0 0
      %2161 = vmatprep.subr.bf16.mxu0 0
      %2162 = vmatpush2.bf16.msra.mxu0 0
      %2163 = vmatprep.subr.bf16.mxu0 0
      %2164 = vmatpush2.bf16.msra.mxu0 0
      %2165 = vmatprep.subr.bf16.mxu0 0
      %2166 = vmatpush2.bf16.msra.mxu0 0
      %2167 = vmatprep.subr.bf16.mxu0 0
      %2168 = vmatpush2.bf16.msra.mxu0 0
      %2169 = vmatprep.subr.bf16.mxu0 0
      %2170 = vmatpush2.bf16.msra.mxu0 0
      %2171 = vmatprep.subr.bf16.mxu0 0
      %2172 = vmatpush2.bf16.msra.mxu0 0
      %2173 = vmatprep.mubr.bf16.mxu0 0
      %2174 = vmatmul.mubr.bf16.gmra.mxu0 %v1983
      %v2175 = vpop.f32.mrf.mxu0
      %v2176 = vadd.f32 0.0, %v2175
      %v2177 = vpop.f32.mrf.mxu0
      %v2178 = vadd.f32 0.0, %v2177
      %v2179 = vpop.f32.mrf.mxu0
      %v2180 = vadd.f32 0.0, %v2179
      %v2181 = vpop.f32.mrf.mxu0
      %v2182 = vadd.f32 0.0, %v2181
      %2183 = vdwg.mxu0
      %2184 = vmatprep.subr.bf16.mxu0 0
      %2185 = vmatpush1.bf16.msra.mxu0 0
      %2186 = vmatprep.subr.bf16.mxu0 0
      %2187 = vmatpush1.bf16.msra.mxu0 0
      %2188 = vmatprep.subr.bf16.mxu0 0
      %2189 = vmatpush1.bf16.msra.mxu0 0
      %2190 = vmatprep.subr.bf16.mxu0 0
      %2191 = vmatpush1.bf16.msra.mxu0 0
      %2192 = vmatprep.subr.bf16.mxu0 0
      %2193 = vmatpush1.bf16.msra.mxu0 0
      %2194 = vmatprep.subr.bf16.mxu0 0
      %2195 = vmatpush1.bf16.msra.mxu0 0
      %2196 = vmatprep.subr.bf16.mxu0 0
      %2197 = vmatpush1.bf16.msra.mxu0 0
      %2198 = vmatprep.subr.bf16.mxu0 0
      %2199 = vmatpush1.bf16.msra.mxu0 %v2010
      %2200 = vmatprep.subr.bf16.mxu0 0
      %2201 = vmatpush2.bf16.msra.mxu0 0
      %2202 = vmatprep.subr.bf16.mxu0 0
      %2203 = vmatpush2.bf16.msra.mxu0 0
      %2204 = vmatprep.subr.bf16.mxu0 0
      %2205 = vmatpush2.bf16.msra.mxu0 0
      %2206 = vmatprep.subr.bf16.mxu0 0
      %2207 = vmatpush2.bf16.msra.mxu0 0
      %2208 = vmatprep.subr.bf16.mxu0 0
      %2209 = vmatpush2.bf16.msra.mxu0 0
      %2210 = vmatprep.subr.bf16.mxu0 0
      %2211 = vmatpush2.bf16.msra.mxu0 0
      %2212 = vmatprep.subr.bf16.mxu0 0
      %2213 = vmatpush2.bf16.msra.mxu0 0
      %2214 = vmatprep.subr.bf16.mxu0 0
      %2215 = vmatpush2.bf16.msra.mxu0 0
      %2216 = vmatprep.mubr.bf16.mxu0 0
      %2217 = vmatmul.mubr.bf16.gmra.mxu0 %v1983
      %v2218 = vpop.f32.mrf.mxu0
      %v2219 = vadd.f32 0.0, %v2218
      %v2220 = vpop.f32.mrf.mxu0
      %v2221 = vpop.f32.mrf.mxu0
      %v2222 = vadd.f32 0.0, %v2221
      %v2223 = vpop.f32.mrf.mxu0
      %2224 = vdwg.mxu0
      %v2225 = vadd.f32 %v1896, %v2047
      %v2226 = vadd.f32 %v1897, %v2049
      %v2227 = vadd.f32 %v1898, %v2090
      %v2228 = vadd.f32 %v1899, %v2092
      %v2229 = vadd.f32 %v1900, %v2133
      %v2230 = vadd.f32 %v1901, %v2135
      %v2231 = vadd.f32 %v1902, %v2176
      %v2232 = vadd.f32 %v1903, %v2178
      %v2233 = vadd.f32 %v1904, %v2219
      %v2234 = vadd.f32 %v1905, %v2051
      %v2235 = vadd.f32 %v1906, %v2053
      %v2236 = vadd.f32 %v1907, %v2094
      %v2237 = vadd.f32 %v1908, %v2096
      %v2238 = vadd.f32 %v1909, %v2137
      %v2239 = vadd.f32 %v1910, %v2139
      %v2240 = vadd.f32 %v1911, %v2180
      %v2241 = vadd.f32 %v1912, %v2182
      %v2242 = vadd.f32 %v1913, %v2222
      %s2243 = scalar_lea.vmem %s1, 56
      %v2244 = vld [vmem:[%s2243] sm:$0xf]
      %v2245 = vld [vmem:[%s2243 + $0x4] sm:$0xf]
      %v2248 = vunpack.c.l.b16 %v2244
      %v2249 = vunpack.c.l.b16 %v2245
      %v2250 = vpack.c.b16 %v2249, %v2248
      %2251 = vrot.lane.b32.xlu0 %v1942, 59
      %v2252 = vpop.permute.xlu0 %2251
      %2253 = vrot.lane.b32.xlu0 %v1943, 59
      %v2254 = vpop.permute.xlu0 %2253
      %2255 = vrot.lane.b32.xlu0 %v1944, 59
      %v2256 = vpop.permute.xlu0 %2255
      %2257 = vrot.lane.b32.xlu0 %v1945, 59
      %v2258 = vpop.permute.xlu0 %2257
      %2259 = vrot.lane.b32.xlu0 %v1946, 59
      %v2260 = vpop.permute.xlu0 %2259
      %2261 = vrot.lane.b32.xlu0 %v1947, 59
      %v2262 = vpop.permute.xlu0 %2261
      %2263 = vrot.lane.b32.xlu0 %v1948, 59
      %v2264 = vpop.permute.xlu0 %2263
      %2265 = vrot.lane.b32.xlu0 %v1949, 59
      %v2266 = vpop.permute.xlu0 %2265
      %2267 = vrot.lane.b32.xlu0 %v1950, 59
      %v2268 = vpop.permute.xlu0 %2267
      %2269 = vrot.lane.b32.xlu0 %v1951, 59
      %v2270 = vpop.permute.xlu0 %2269
      %vm2271 = vcmask 482304
      %v2272 = vsel %vm2271, %v2252, %v2254
      %v2273 = vsel %vm2271, %v2254, %v2256
      %v2274 = vsel %vm2271, %v2256, %v2258
      %v2275 = vsel %vm2271, %v2258, %v2260
      %v2276 = vsel %vm2271, %v2260, %v2262
      %v2277 = vsel %vm2271, %v2262, %v2264
      %v2278 = vsel %vm2271, %v2264, %v2266
      %v2279 = vsel %vm2271, %v2266, %v2268
      %v2280 = vsel %vm2271, %v2268, %v2270
      %v2282 = vsel %vm237, %v2250, 0
      %v2285 = vsel %vm241, %v2272, 0
      %v2288 = vsel %vm241, %v2273, 0
      %v2291 = vsel %vm241, %v2274, 0
      %v2294 = vsel %vm241, %v2275, 0
      %v2297 = vsel %vm241, %v2276, 0
      %v2300 = vsel %vm241, %v2277, 0
      %v2303 = vsel %vm241, %v2278, 0
      %v2306 = vsel %vm241, %v2279, 0
      %v2309 = vsel %vm241, %v2280, 0
      %2311 = vmatprep.subr.bf16.mxu0 0
      %2312 = vmatpush1.bf16.msra.mxu0 0
      %2313 = vmatprep.subr.bf16.mxu0 0
      %2314 = vmatpush1.bf16.msra.mxu0 0
      %2315 = vmatprep.subr.bf16.mxu0 0
      %2316 = vmatpush1.bf16.msra.mxu0 0
      %2317 = vmatprep.subr.bf16.mxu0 0
      %2318 = vmatpush1.bf16.msra.mxu0 0
      %2319 = vmatprep.subr.bf16.mxu0 0
      %2320 = vmatpush1.bf16.msra.mxu0 0
      %2321 = vmatprep.subr.bf16.mxu0 0
      %2322 = vmatpush1.bf16.msra.mxu0 0
      %2323 = vmatprep.subr.bf16.mxu0 0
      %2324 = vmatpush1.bf16.msra.mxu0 0
      %2325 = vmatprep.subr.bf16.mxu0 %v2288
      %2326 = vmatpush1.bf16.msra.mxu0 %v2285
      %2327 = vmatprep.subr.bf16.mxu0 0
      %2328 = vmatpush2.bf16.msra.mxu0 0
      %2329 = vmatprep.subr.bf16.mxu0 0
      %2330 = vmatpush2.bf16.msra.mxu0 0
      %2331 = vmatprep.subr.bf16.mxu0 0
      %2332 = vmatpush2.bf16.msra.mxu0 0
      %2333 = vmatprep.subr.bf16.mxu0 0
      %2334 = vmatpush2.bf16.msra.mxu0 0
      %2335 = vmatprep.subr.bf16.mxu0 0
      %2336 = vmatpush2.bf16.msra.mxu0 0
      %2337 = vmatprep.subr.bf16.mxu0 0
      %2338 = vmatpush2.bf16.msra.mxu0 0
      %2339 = vmatprep.subr.bf16.mxu0 0
      %2340 = vmatpush2.bf16.msra.mxu0 0
      %2341 = vmatprep.subr.bf16.mxu0 0
      %2342 = vmatpush2.bf16.msra.mxu0 0
      %2343 = vmatprep.mubr.bf16.mxu0 0
      %2344 = vmatmul.mubr.bf16.gmra.mxu0 %v2282
      %v2345 = vpop.f32.mrf.mxu0
      %v2346 = vadd.f32 0.0, %v2345
      %v2347 = vpop.f32.mrf.mxu0
      %v2348 = vadd.f32 0.0, %v2347
      %v2349 = vpop.f32.mrf.mxu0
      %v2350 = vadd.f32 0.0, %v2349
      %v2351 = vpop.f32.mrf.mxu0
      %v2352 = vadd.f32 0.0, %v2351
      %2353 = vdwg.mxu0
      %2354 = vmatprep.subr.bf16.mxu0 0
      %2355 = vmatpush1.bf16.msra.mxu0 0
      %2356 = vmatprep.subr.bf16.mxu0 0
      %2357 = vmatpush1.bf16.msra.mxu0 0
      %2358 = vmatprep.subr.bf16.mxu0 0
      %2359 = vmatpush1.bf16.msra.mxu0 0
      %2360 = vmatprep.subr.bf16.mxu0 0
      %2361 = vmatpush1.bf16.msra.mxu0 0
      %2362 = vmatprep.subr.bf16.mxu0 0
      %2363 = vmatpush1.bf16.msra.mxu0 0
      %2364 = vmatprep.subr.bf16.mxu0 0
      %2365 = vmatpush1.bf16.msra.mxu0 0
      %2366 = vmatprep.subr.bf16.mxu0 0
      %2367 = vmatpush1.bf16.msra.mxu0 0
      %2368 = vmatprep.subr.bf16.mxu0 %v2294
      %2369 = vmatpush1.bf16.msra.mxu0 %v2291
      %2370 = vmatprep.subr.bf16.mxu0 0
      %2371 = vmatpush2.bf16.msra.mxu0 0
      %2372 = vmatprep.subr.bf16.mxu0 0
      %2373 = vmatpush2.bf16.msra.mxu0 0
      %2374 = vmatprep.subr.bf16.mxu0 0
      %2375 = vmatpush2.bf16.msra.mxu0 0
      %2376 = vmatprep.subr.bf16.mxu0 0
      %2377 = vmatpush2.bf16.msra.mxu0 0
      %2378 = vmatprep.subr.bf16.mxu0 0
      %2379 = vmatpush2.bf16.msra.mxu0 0
      %2380 = vmatprep.subr.bf16.mxu0 0
      %2381 = vmatpush2.bf16.msra.mxu0 0
      %2382 = vmatprep.subr.bf16.mxu0 0
      %2383 = vmatpush2.bf16.msra.mxu0 0
      %2384 = vmatprep.subr.bf16.mxu0 0
      %2385 = vmatpush2.bf16.msra.mxu0 0
      %2386 = vmatprep.mubr.bf16.mxu0 0
      %2387 = vmatmul.mubr.bf16.gmra.mxu0 %v2282
      %v2388 = vpop.f32.mrf.mxu0
      %v2389 = vadd.f32 0.0, %v2388
      %v2390 = vpop.f32.mrf.mxu0
      %v2391 = vadd.f32 0.0, %v2390
      %v2392 = vpop.f32.mrf.mxu0
      %v2393 = vadd.f32 0.0, %v2392
      %v2394 = vpop.f32.mrf.mxu0
      %v2395 = vadd.f32 0.0, %v2394
      %2396 = vdwg.mxu0
      %2397 = vmatprep.subr.bf16.mxu0 0
      %2398 = vmatpush1.bf16.msra.mxu0 0
      %2399 = vmatprep.subr.bf16.mxu0 0
      %2400 = vmatpush1.bf16.msra.mxu0 0
      %2401 = vmatprep.subr.bf16.mxu0 0
      %2402 = vmatpush1.bf16.msra.mxu0 0
      %2403 = vmatprep.subr.bf16.mxu0 0
      %2404 = vmatpush1.bf16.msra.mxu0 0
      %2405 = vmatprep.subr.bf16.mxu0 0
      %2406 = vmatpush1.bf16.msra.mxu0 0
      %2407 = vmatprep.subr.bf16.mxu0 0
      %2408 = vmatpush1.bf16.msra.mxu0 0
      %2409 = vmatprep.subr.bf16.mxu0 0
      %2410 = vmatpush1.bf16.msra.mxu0 0
      %2411 = vmatprep.subr.bf16.mxu0 %v2300
      %2412 = vmatpush1.bf16.msra.mxu0 %v2297
      %2413 = vmatprep.subr.bf16.mxu0 0
      %2414 = vmatpush2.bf16.msra.mxu0 0
      %2415 = vmatprep.subr.bf16.mxu0 0
      %2416 = vmatpush2.bf16.msra.mxu0 0
      %2417 = vmatprep.subr.bf16.mxu0 0
      %2418 = vmatpush2.bf16.msra.mxu0 0
      %2419 = vmatprep.subr.bf16.mxu0 0
      %2420 = vmatpush2.bf16.msra.mxu0 0
      %2421 = vmatprep.subr.bf16.mxu0 0
      %2422 = vmatpush2.bf16.msra.mxu0 0
      %2423 = vmatprep.subr.bf16.mxu0 0
      %2424 = vmatpush2.bf16.msra.mxu0 0
      %2425 = vmatprep.subr.bf16.mxu0 0
      %2426 = vmatpush2.bf16.msra.mxu0 0
      %2427 = vmatprep.subr.bf16.mxu0 0
      %2428 = vmatpush2.bf16.msra.mxu0 0
      %2429 = vmatprep.mubr.bf16.mxu0 0
      %2430 = vmatmul.mubr.bf16.gmra.mxu0 %v2282
      %v2431 = vpop.f32.mrf.mxu0
      %v2432 = vadd.f32 0.0, %v2431
      %v2433 = vpop.f32.mrf.mxu0
      %v2434 = vadd.f32 0.0, %v2433
      %v2435 = vpop.f32.mrf.mxu0
      %v2436 = vadd.f32 0.0, %v2435
      %v2437 = vpop.f32.mrf.mxu0
      %v2438 = vadd.f32 0.0, %v2437
      %2439 = vdwg.mxu0
      %2440 = vmatprep.subr.bf16.mxu0 0
      %2441 = vmatpush1.bf16.msra.mxu0 0
      %2442 = vmatprep.subr.bf16.mxu0 0
      %2443 = vmatpush1.bf16.msra.mxu0 0
      %2444 = vmatprep.subr.bf16.mxu0 0
      %2445 = vmatpush1.bf16.msra.mxu0 0
      %2446 = vmatprep.subr.bf16.mxu0 0
      %2447 = vmatpush1.bf16.msra.mxu0 0
      %2448 = vmatprep.subr.bf16.mxu0 0
      %2449 = vmatpush1.bf16.msra.mxu0 0
      %2450 = vmatprep.subr.bf16.mxu0 0
      %2451 = vmatpush1.bf16.msra.mxu0 0
      %2452 = vmatprep.subr.bf16.mxu0 0
      %2453 = vmatpush1.bf16.msra.mxu0 0
      %2454 = vmatprep.subr.bf16.mxu0 %v2306
      %2455 = vmatpush1.bf16.msra.mxu0 %v2303
      %2456 = vmatprep.subr.bf16.mxu0 0
      %2457 = vmatpush2.bf16.msra.mxu0 0
      %2458 = vmatprep.subr.bf16.mxu0 0
      %2459 = vmatpush2.bf16.msra.mxu0 0
      %2460 = vmatprep.subr.bf16.mxu0 0
      %2461 = vmatpush2.bf16.msra.mxu0 0
      %2462 = vmatprep.subr.bf16.mxu0 0
      %2463 = vmatpush2.bf16.msra.mxu0 0
      %2464 = vmatprep.subr.bf16.mxu0 0
      %2465 = vmatpush2.bf16.msra.mxu0 0
      %2466 = vmatprep.subr.bf16.mxu0 0
      %2467 = vmatpush2.bf16.msra.mxu0 0
      %2468 = vmatprep.subr.bf16.mxu0 0
      %2469 = vmatpush2.bf16.msra.mxu0 0
      %2470 = vmatprep.subr.bf16.mxu0 0
      %2471 = vmatpush2.bf16.msra.mxu0 0
      %2472 = vmatprep.mubr.bf16.mxu0 0
      %2473 = vmatmul.mubr.bf16.gmra.mxu0 %v2282
      %v2474 = vpop.f32.mrf.mxu0
      %v2475 = vadd.f32 0.0, %v2474
      %v2476 = vpop.f32.mrf.mxu0
      %v2477 = vadd.f32 0.0, %v2476
      %v2478 = vpop.f32.mrf.mxu0
      %v2479 = vadd.f32 0.0, %v2478
      %v2480 = vpop.f32.mrf.mxu0
      %v2481 = vadd.f32 0.0, %v2480
      %2482 = vdwg.mxu0
      %2483 = vmatprep.subr.bf16.mxu0 0
      %2484 = vmatpush1.bf16.msra.mxu0 0
      %2485 = vmatprep.subr.bf16.mxu0 0
      %2486 = vmatpush1.bf16.msra.mxu0 0
      %2487 = vmatprep.subr.bf16.mxu0 0
      %2488 = vmatpush1.bf16.msra.mxu0 0
      %2489 = vmatprep.subr.bf16.mxu0 0
      %2490 = vmatpush1.bf16.msra.mxu0 0
      %2491 = vmatprep.subr.bf16.mxu0 0
      %2492 = vmatpush1.bf16.msra.mxu0 0
      %2493 = vmatprep.subr.bf16.mxu0 0
      %2494 = vmatpush1.bf16.msra.mxu0 0
      %2495 = vmatprep.subr.bf16.mxu0 0
      %2496 = vmatpush1.bf16.msra.mxu0 0
      %2497 = vmatprep.subr.bf16.mxu0 0
      %2498 = vmatpush1.bf16.msra.mxu0 %v2309
      %2499 = vmatprep.subr.bf16.mxu0 0
      %2500 = vmatpush2.bf16.msra.mxu0 0
      %2501 = vmatprep.subr.bf16.mxu0 0
      %2502 = vmatpush2.bf16.msra.mxu0 0
      %2503 = vmatprep.subr.bf16.mxu0 0
      %2504 = vmatpush2.bf16.msra.mxu0 0
      %2505 = vmatprep.subr.bf16.mxu0 0
      %2506 = vmatpush2.bf16.msra.mxu0 0
      %2507 = vmatprep.subr.bf16.mxu0 0
      %2508 = vmatpush2.bf16.msra.mxu0 0
      %2509 = vmatprep.subr.bf16.mxu0 0
      %2510 = vmatpush2.bf16.msra.mxu0 0
      %2511 = vmatprep.subr.bf16.mxu0 0
      %2512 = vmatpush2.bf16.msra.mxu0 0
      %2513 = vmatprep.subr.bf16.mxu0 0
      %2514 = vmatpush2.bf16.msra.mxu0 0
      %2515 = vmatprep.mubr.bf16.mxu0 0
      %2516 = vmatmul.mubr.bf16.gmra.mxu0 %v2282
      %v2517 = vpop.f32.mrf.mxu0
      %v2518 = vadd.f32 0.0, %v2517
      %v2519 = vpop.f32.mrf.mxu0
      %v2520 = vpop.f32.mrf.mxu0
      %v2521 = vadd.f32 0.0, %v2520
      %v2522 = vpop.f32.mrf.mxu0
      %2523 = vdwg.mxu0
      %v2524 = vadd.f32 %v2225, %v2346
      %v2525 = vadd.f32 %v2226, %v2348
      %v2526 = vadd.f32 %v2227, %v2389
      %v2527 = vadd.f32 %v2228, %v2391
      %v2528 = vadd.f32 %v2229, %v2432
      %v2529 = vadd.f32 %v2230, %v2434
      %v2530 = vadd.f32 %v2231, %v2475
      %v2531 = vadd.f32 %v2232, %v2477
      %v2532 = vadd.f32 %v2233, %v2518
      %v2533 = vadd.f32 %v2234, %v2350
      %v2534 = vadd.f32 %v2235, %v2352
      %v2535 = vadd.f32 %v2236, %v2393
      %v2536 = vadd.f32 %v2237, %v2395
      %v2537 = vadd.f32 %v2238, %v2436
      %v2538 = vadd.f32 %v2239, %v2438
      %v2539 = vadd.f32 %v2240, %v2479
      %v2540 = vadd.f32 %v2241, %v2481
      %v2541 = vadd.f32 %v2242, %v2521
      %s2542 = scalar_lea.vmem %s1, 64
      %v2543 = vld [vmem:[%s2542] sm:$0xf]
      %v2544 = vld [vmem:[%s2542 + $0x4] sm:$0xf]
      %v2547 = vunpack.c.l.b16 %v2543
      %v2548 = vunpack.c.l.b16 %v2544
      %v2549 = vpack.c.b16 %v2548, %v2547
      %2550 = vrot.lane.b32.xlu0 %v1942, 58
      %v2551 = vpop.permute.xlu0 %2550
      %2552 = vrot.lane.b32.xlu0 %v1943, 58
      %v2553 = vpop.permute.xlu0 %2552
      %2554 = vrot.lane.b32.xlu0 %v1944, 58
      %v2555 = vpop.permute.xlu0 %2554
      %2556 = vrot.lane.b32.xlu0 %v1945, 58
      %v2557 = vpop.permute.xlu0 %2556
      %2558 = vrot.lane.b32.xlu0 %v1946, 58
      %v2559 = vpop.permute.xlu0 %2558
      %2560 = vrot.lane.b32.xlu0 %v1947, 58
      %v2561 = vpop.permute.xlu0 %2560
      %2562 = vrot.lane.b32.xlu0 %v1948, 58
      %v2563 = vpop.permute.xlu0 %2562
      %2564 = vrot.lane.b32.xlu0 %v1949, 58
      %v2565 = vpop.permute.xlu0 %2564
      %2566 = vrot.lane.b32.xlu0 %v1950, 58
      %v2567 = vpop.permute.xlu0 %2566
      %2568 = vrot.lane.b32.xlu0 %v1951, 58
      %v2569 = vpop.permute.xlu0 %2568
      %vm2570 = vcmask 474112
      %v2571 = vsel %vm2570, %v2551, %v2553
      %v2572 = vsel %vm2570, %v2553, %v2555
      %v2573 = vsel %vm2570, %v2555, %v2557
      %v2574 = vsel %vm2570, %v2557, %v2559
      %v2575 = vsel %vm2570, %v2559, %v2561
      %v2576 = vsel %vm2570, %v2561, %v2563
      %v2577 = vsel %vm2570, %v2563, %v2565
      %v2578 = vsel %vm2570, %v2565, %v2567
      %v2579 = vsel %vm2570, %v2567, %v2569
      %v2581 = vsel %vm237, %v2549, 0
      %v2584 = vsel %vm241, %v2571, 0
      %v2587 = vsel %vm241, %v2572, 0
      %v2590 = vsel %vm241, %v2573, 0
      %v2593 = vsel %vm241, %v2574, 0
      %v2596 = vsel %vm241, %v2575, 0
      %v2599 = vsel %vm241, %v2576, 0
      %v2602 = vsel %vm241, %v2577, 0
      %v2605 = vsel %vm241, %v2578, 0
      %v2608 = vsel %vm241, %v2579, 0
      %2610 = vmatprep.subr.bf16.mxu0 0
      %2611 = vmatpush1.bf16.msra.mxu0 0
      %2612 = vmatprep.subr.bf16.mxu0 0
      %2613 = vmatpush1.bf16.msra.mxu0 0
      %2614 = vmatprep.subr.bf16.mxu0 0
      %2615 = vmatpush1.bf16.msra.mxu0 0
      %2616 = vmatprep.subr.bf16.mxu0 0
      %2617 = vmatpush1.bf16.msra.mxu0 0
      %2618 = vmatprep.subr.bf16.mxu0 0
      %2619 = vmatpush1.bf16.msra.mxu0 0
      %2620 = vmatprep.subr.bf16.mxu0 0
      %2621 = vmatpush1.bf16.msra.mxu0 0
      %2622 = vmatprep.subr.bf16.mxu0 0
      %2623 = vmatpush1.bf16.msra.mxu0 0
      %2624 = vmatprep.subr.bf16.mxu0 %v2587
      %2625 = vmatpush1.bf16.msra.mxu0 %v2584
      %2626 = vmatprep.subr.bf16.mxu0 0
      %2627 = vmatpush2.bf16.msra.mxu0 0
      %2628 = vmatprep.subr.bf16.mxu0 0
      %2629 = vmatpush2.bf16.msra.mxu0 0
      %2630 = vmatprep.subr.bf16.mxu0 0
      %2631 = vmatpush2.bf16.msra.mxu0 0
      %2632 = vmatprep.subr.bf16.mxu0 0
      %2633 = vmatpush2.bf16.msra.mxu0 0
      %2634 = vmatprep.subr.bf16.mxu0 0
      %2635 = vmatpush2.bf16.msra.mxu0 0
      %2636 = vmatprep.subr.bf16.mxu0 0
      %2637 = vmatpush2.bf16.msra.mxu0 0
      %2638 = vmatprep.subr.bf16.mxu0 0
      %2639 = vmatpush2.bf16.msra.mxu0 0
      %2640 = vmatprep.subr.bf16.mxu0 0
      %2641 = vmatpush2.bf16.msra.mxu0 0
      %2642 = vmatprep.mubr.bf16.mxu0 0
      %2643 = vmatmul.mubr.bf16.gmra.mxu0 %v2581
      %v2644 = vpop.f32.mrf.mxu0
      %v2645 = vadd.f32 0.0, %v2644
      %v2646 = vpop.f32.mrf.mxu0
      %v2647 = vadd.f32 0.0, %v2646
      %v2648 = vpop.f32.mrf.mxu0
      %v2649 = vadd.f32 0.0, %v2648
      %v2650 = vpop.f32.mrf.mxu0
      %v2651 = vadd.f32 0.0, %v2650
      %2652 = vdwg.mxu0
      %2653 = vmatprep.subr.bf16.mxu0 0
      %2654 = vmatpush1.bf16.msra.mxu0 0
      %2655 = vmatprep.subr.bf16.mxu0 0
      %2656 = vmatpush1.bf16.msra.mxu0 0
      %2657 = vmatprep.subr.bf16.mxu0 0
      %2658 = vmatpush1.bf16.msra.mxu0 0
      %2659 = vmatprep.subr.bf16.mxu0 0
      %2660 = vmatpush1.bf16.msra.mxu0 0
      %2661 = vmatprep.subr.bf16.mxu0 0
      %2662 = vmatpush1.bf16.msra.mxu0 0
      %2663 = vmatprep.subr.bf16.mxu0 0
      %2664 = vmatpush1.bf16.msra.mxu0 0
      %2665 = vmatprep.subr.bf16.mxu0 0
      %2666 = vmatpush1.bf16.msra.mxu0 0
      %2667 = vmatprep.subr.bf16.mxu0 %v2593
      %2668 = vmatpush1.bf16.msra.mxu0 %v2590
      %2669 = vmatprep.subr.bf16.mxu0 0
      %2670 = vmatpush2.bf16.msra.mxu0 0
      %2671 = vmatprep.subr.bf16.mxu0 0
      %2672 = vmatpush2.bf16.msra.mxu0 0
      %2673 = vmatprep.subr.bf16.mxu0 0
      %2674 = vmatpush2.bf16.msra.mxu0 0
      %2675 = vmatprep.subr.bf16.mxu0 0
      %2676 = vmatpush2.bf16.msra.mxu0 0
      %2677 = vmatprep.subr.bf16.mxu0 0
      %2678 = vmatpush2.bf16.msra.mxu0 0
      %2679 = vmatprep.subr.bf16.mxu0 0
      %2680 = vmatpush2.bf16.msra.mxu0 0
      %2681 = vmatprep.subr.bf16.mxu0 0
      %2682 = vmatpush2.bf16.msra.mxu0 0
      %2683 = vmatprep.subr.bf16.mxu0 0
      %2684 = vmatpush2.bf16.msra.mxu0 0
      %2685 = vmatprep.mubr.bf16.mxu0 0
      %2686 = vmatmul.mubr.bf16.gmra.mxu0 %v2581
      %v2687 = vpop.f32.mrf.mxu0
      %v2688 = vadd.f32 0.0, %v2687
      %v2689 = vpop.f32.mrf.mxu0
      %v2690 = vadd.f32 0.0, %v2689
      %v2691 = vpop.f32.mrf.mxu0
      %v2692 = vadd.f32 0.0, %v2691
      %v2693 = vpop.f32.mrf.mxu0
      %v2694 = vadd.f32 0.0, %v2693
      %2695 = vdwg.mxu0
      %2696 = vmatprep.subr.bf16.mxu0 0
      %2697 = vmatpush1.bf16.msra.mxu0 0
      %2698 = vmatprep.subr.bf16.mxu0 0
      %2699 = vmatpush1.bf16.msra.mxu0 0
      %2700 = vmatprep.subr.bf16.mxu0 0
      %2701 = vmatpush1.bf16.msra.mxu0 0
      %2702 = vmatprep.subr.bf16.mxu0 0
      %2703 = vmatpush1.bf16.msra.mxu0 0
      %2704 = vmatprep.subr.bf16.mxu0 0
      %2705 = vmatpush1.bf16.msra.mxu0 0
      %2706 = vmatprep.subr.bf16.mxu0 0
      %2707 = vmatpush1.bf16.msra.mxu0 0
      %2708 = vmatprep.subr.bf16.mxu0 0
      %2709 = vmatpush1.bf16.msra.mxu0 0
      %2710 = vmatprep.subr.bf16.mxu0 %v2599
      %2711 = vmatpush1.bf16.msra.mxu0 %v2596
      %2712 = vmatprep.subr.bf16.mxu0 0
      %2713 = vmatpush2.bf16.msra.mxu0 0
      %2714 = vmatprep.subr.bf16.mxu0 0
      %2715 = vmatpush2.bf16.msra.mxu0 0
      %2716 = vmatprep.subr.bf16.mxu0 0
      %2717 = vmatpush2.bf16.msra.mxu0 0
      %2718 = vmatprep.subr.bf16.mxu0 0
      %2719 = vmatpush2.bf16.msra.mxu0 0
      %2720 = vmatprep.subr.bf16.mxu0 0
      %2721 = vmatpush2.bf16.msra.mxu0 0
      %2722 = vmatprep.subr.bf16.mxu0 0
      %2723 = vmatpush2.bf16.msra.mxu0 0
      %2724 = vmatprep.subr.bf16.mxu0 0
      %2725 = vmatpush2.bf16.msra.mxu0 0
      %2726 = vmatprep.subr.bf16.mxu0 0
      %2727 = vmatpush2.bf16.msra.mxu0 0
      %2728 = vmatprep.mubr.bf16.mxu0 0
      %2729 = vmatmul.mubr.bf16.gmra.mxu0 %v2581
      %v2730 = vpop.f32.mrf.mxu0
      %v2731 = vadd.f32 0.0, %v2730
      %v2732 = vpop.f32.mrf.mxu0
      %v2733 = vadd.f32 0.0, %v2732
      %v2734 = vpop.f32.mrf.mxu0
      %v2735 = vadd.f32 0.0, %v2734
      %v2736 = vpop.f32.mrf.mxu0
      %v2737 = vadd.f32 0.0, %v2736
      %2738 = vdwg.mxu0
      %2739 = vmatprep.subr.bf16.mxu0 0
      %2740 = vmatpush1.bf16.msra.mxu0 0
      %2741 = vmatprep.subr.bf16.mxu0 0
      %2742 = vmatpush1.bf16.msra.mxu0 0
      %2743 = vmatprep.subr.bf16.mxu0 0
      %2744 = vmatpush1.bf16.msra.mxu0 0
      %2745 = vmatprep.subr.bf16.mxu0 0
      %2746 = vmatpush1.bf16.msra.mxu0 0
      %2747 = vmatprep.subr.bf16.mxu0 0
      %2748 = vmatpush1.bf16.msra.mxu0 0
      %2749 = vmatprep.subr.bf16.mxu0 0
      %2750 = vmatpush1.bf16.msra.mxu0 0
      %2751 = vmatprep.subr.bf16.mxu0 0
      %2752 = vmatpush1.bf16.msra.mxu0 0
      %2753 = vmatprep.subr.bf16.mxu0 %v2605
      %2754 = vmatpush1.bf16.msra.mxu0 %v2602
      %2755 = vmatprep.subr.bf16.mxu0 0
      %2756 = vmatpush2.bf16.msra.mxu0 0
      %2757 = vmatprep.subr.bf16.mxu0 0
      %2758 = vmatpush2.bf16.msra.mxu0 0
      %2759 = vmatprep.subr.bf16.mxu0 0
      %2760 = vmatpush2.bf16.msra.mxu0 0
      %2761 = vmatprep.subr.bf16.mxu0 0
      %2762 = vmatpush2.bf16.msra.mxu0 0
      %2763 = vmatprep.subr.bf16.mxu0 0
      %2764 = vmatpush2.bf16.msra.mxu0 0
      %2765 = vmatprep.subr.bf16.mxu0 0
      %2766 = vmatpush2.bf16.msra.mxu0 0
      %2767 = vmatprep.subr.bf16.mxu0 0
      %2768 = vmatpush2.bf16.msra.mxu0 0
      %2769 = vmatprep.subr.bf16.mxu0 0
      %2770 = vmatpush2.bf16.msra.mxu0 0
      %2771 = vmatprep.mubr.bf16.mxu0 0
      %2772 = vmatmul.mubr.bf16.gmra.mxu0 %v2581
      %v2773 = vpop.f32.mrf.mxu0
      %v2774 = vadd.f32 0.0, %v2773
      %v2775 = vpop.f32.mrf.mxu0
      %v2776 = vadd.f32 0.0, %v2775
      %v2777 = vpop.f32.mrf.mxu0
      %v2778 = vadd.f32 0.0, %v2777
      %v2779 = vpop.f32.mrf.mxu0
      %v2780 = vadd.f32 0.0, %v2779
      %2781 = vdwg.mxu0
      %2782 = vmatprep.subr.bf16.mxu0 0
      %2783 = vmatpush1.bf16.msra.mxu0 0
      %2784 = vmatprep.subr.bf16.mxu0 0
      %2785 = vmatpush1.bf16.msra.mxu0 0
      %2786 = vmatprep.subr.bf16.mxu0 0
      %2787 = vmatpush1.bf16.msra.mxu0 0
      %2788 = vmatprep.subr.bf16.mxu0 0
      %2789 = vmatpush1.bf16.msra.mxu0 0
      %2790 = vmatprep.subr.bf16.mxu0 0
      %2791 = vmatpush1.bf16.msra.mxu0 0
      %2792 = vmatprep.subr.bf16.mxu0 0
      %2793 = vmatpush1.bf16.msra.mxu0 0
      %2794 = vmatprep.subr.bf16.mxu0 0
      %2795 = vmatpush1.bf16.msra.mxu0 0
      %2796 = vmatprep.subr.bf16.mxu0 0
      %2797 = vmatpush1.bf16.msra.mxu0 %v2608
      %2798 = vmatprep.subr.bf16.mxu0 0
      %2799 = vmatpush2.bf16.msra.mxu0 0
      %2800 = vmatprep.subr.bf16.mxu0 0
      %2801 = vmatpush2.bf16.msra.mxu0 0
      %2802 = vmatprep.subr.bf16.mxu0 0
      %2803 = vmatpush2.bf16.msra.mxu0 0
      %2804 = vmatprep.subr.bf16.mxu0 0
      %2805 = vmatpush2.bf16.msra.mxu0 0
      %2806 = vmatprep.subr.bf16.mxu0 0
      %2807 = vmatpush2.bf16.msra.mxu0 0
      %2808 = vmatprep.subr.bf16.mxu0 0
      %2809 = vmatpush2.bf16.msra.mxu0 0
      %2810 = vmatprep.subr.bf16.mxu0 0
      %2811 = vmatpush2.bf16.msra.mxu0 0
      %2812 = vmatprep.subr.bf16.mxu0 0
      %2813 = vmatpush2.bf16.msra.mxu0 0
      %2814 = vmatprep.mubr.bf16.mxu0 0
      %2815 = vmatmul.mubr.bf16.gmra.mxu0 %v2581
      %v2816 = vpop.f32.mrf.mxu0
      %v2817 = vadd.f32 0.0, %v2816
      %v2818 = vpop.f32.mrf.mxu0
      %v2819 = vpop.f32.mrf.mxu0
      %v2820 = vadd.f32 0.0, %v2819
      %v2821 = vpop.f32.mrf.mxu0
      %2822 = vdwg.mxu0
      %v2823 = vadd.f32 %v2524, %v2645
      %v2824 = vadd.f32 %v2525, %v2647
      %v2825 = vadd.f32 %v2526, %v2688
      %v2826 = vadd.f32 %v2527, %v2690
      %v2827 = vadd.f32 %v2528, %v2731
      %v2828 = vadd.f32 %v2529, %v2733
      %v2829 = vadd.f32 %v2530, %v2774
      %v2830 = vadd.f32 %v2531, %v2776
      %v2831 = vadd.f32 %v2532, %v2817
      %v2832 = vadd.f32 %v2533, %v2649
      %v2833 = vadd.f32 %v2534, %v2651
      %v2834 = vadd.f32 %v2535, %v2692
      %v2835 = vadd.f32 %v2536, %v2694
      %v2836 = vadd.f32 %v2537, %v2735
      %v2837 = vadd.f32 %v2538, %v2737
      %v2838 = vadd.f32 %v2539, %v2778
      %v2839 = vadd.f32 %v2540, %v2780
      %v2840 = vadd.f32 %v2541, %v2820
      %v2841 = vld [vmem:[%s2] sm:$0xff]
      %v2842 = vld [vmem:[%s2 + $0x8] sm:$0xff]
      %2844 = vset.pattern.permute.xlu0 0
      %2845 = vperm.xlu0 %2844, %v2841
      %v2846 = vpop.permute.xlu0 %2845
      %2849 = vset.pattern.permute.xlu0 0
      %2850 = vperm.xlu0 %2849, %v2842
      %v2851 = vpop.permute.xlu0 %2850
      %v2853 = vadd.f32 %v2823, %v2846
      %v2854 = vadd.f32 %v2824, %v2846
      %v2855 = vadd.f32 %v2825, %v2846
      %v2856 = vadd.f32 %v2826, %v2846
      %v2857 = vadd.f32 %v2827, %v2846
      %v2858 = vadd.f32 %v2828, %v2846
      %v2859 = vadd.f32 %v2829, %v2846
      %v2860 = vadd.f32 %v2830, %v2846
      %v2861 = vadd.f32 %v2831, %v2846
      %v2862 = vadd.f32 %v2832, %v2851
      %v2863 = vadd.f32 %v2833, %v2851
      %v2864 = vadd.f32 %v2834, %v2851
      %v2865 = vadd.f32 %v2835, %v2851
      %v2866 = vadd.f32 %v2836, %v2851
      %v2867 = vadd.f32 %v2837, %v2851
      %v2868 = vadd.f32 %v2838, %v2851
      %v2869 = vadd.f32 %v2839, %v2851
      %v2870 = vadd.f32 %v2840, %v2851
      %v2871 = vmax.f32 %v2853, 0.0
      %v2872 = vmax.f32 %v2854, 0.0
      %v2873 = vmax.f32 %v2855, 0.0
      %v2874 = vmax.f32 %v2856, 0.0
      %v2875 = vmax.f32 %v2857, 0.0
      %v2876 = vmax.f32 %v2858, 0.0
      %v2877 = vmax.f32 %v2859, 0.0
      %v2878 = vmax.f32 %v2860, 0.0
      %v2879 = vmax.f32 %v2861, 0.0
      %v2880 = vmax.f32 %v2862, 0.0
      %v2881 = vmax.f32 %v2863, 0.0
      %v2882 = vmax.f32 %v2864, 0.0
      %v2883 = vmax.f32 %v2865, 0.0
      %v2884 = vmax.f32 %v2866, 0.0
      %v2885 = vmax.f32 %v2867, 0.0
      %v2886 = vmax.f32 %v2868, 0.0
      %v2887 = vmax.f32 %v2869, 0.0
      %v2888 = vmax.f32 %v2870, 0.0
      %2889 = vst [vmem:[#allocation2] sm:$0xff] %v2871
      %2890 = vst [vmem:[#allocation2 + $0x8] sm:$0xff] %v2872
      %2891 = vst [vmem:[#allocation2 + $0x10] sm:$0xff] %v2873
      %2892 = vst [vmem:[#allocation2 + $0x18] sm:$0xff] %v2874
      %2893 = vst [vmem:[#allocation2 + $0x20] sm:$0xff] %v2875
      %2894 = vst [vmem:[#allocation2 + $0x28] sm:$0xff] %v2876
      %2895 = vst [vmem:[#allocation2 + $0x30] sm:$0xff] %v2877
      %2896 = vst [vmem:[#allocation2 + $0x38] sm:$0xff] %v2878
      %vm2897 = vcmask 523264
      %2898 = vst.msk [vmem:[#allocation2 + $0x40] sm:$0xff] %vm2897, %v2879
      %2899 = vst [vmem:[#allocation2 + $0x48] sm:$0xff] %v2880
      %2900 = vst [vmem:[#allocation2 + $0x50] sm:$0xff] %v2881
      %2901 = vst [vmem:[#allocation2 + $0x58] sm:$0xff] %v2882
      %2902 = vst [vmem:[#allocation2 + $0x60] sm:$0xff] %v2883
      %2903 = vst [vmem:[#allocation2 + $0x68] sm:$0xff] %v2884
      %2904 = vst [vmem:[#allocation2 + $0x70] sm:$0xff] %v2885
      %2905 = vst [vmem:[#allocation2 + $0x78] sm:$0xff] %v2886
      %2906 = vst [vmem:[#allocation2 + $0x80] sm:$0xff] %v2887
      %2907 = vst.msk [vmem:[#allocation2 + $0x88] sm:$0xff] %vm2897, %v2888
      %v2908 = vld [vmem:[#allocation2] sm:$0xff]
      %v2909 = vld [vmem:[#allocation2 + $0x48] sm:$0xff]
      %2912 = vrot.lane.b32.xlu0 %v2908, 127
      %v2913 = vpop.permute.xlu0 %2912
      %2914 = vrot.lane.b32.xlu0 %v2909, 127
      %v2915 = vpop.permute.xlu0 %2914
      %v2918 = vmax.f32 %v2908, %v2913
      %v2919 = vmax.f32 %v2909, %v2915
      %2922 = vrot.lane.b32.xlu0 %v2918, 94
      %v2923 = vpop.permute.xlu0 %2922
      %2924 = vrot.lane.b32.xlu0 %v2919, 94
      %v2925 = vpop.permute.xlu0 %2924
      %v2928 = vmax.f32 %v2918, %v2923
      %v2929 = vmax.f32 %v2919, %v2925
      %vm2930 = vcmask 261120
      %2931 = vst.msk [vmem:[%s170] sm:$0xff] %vm2930, %v2928
      %2932 = vst.msk [vmem:[%s170 + $0x20] sm:$0xff] %vm2930, %v2929
      %v2933 = vld [vmem:[#allocation2] sm:$0xff]
      %v2934 = vld [vmem:[#allocation2 + $0x48] sm:$0xff]
      %2937 = vrot.lane.b32.xlu0 %v2933, 127
      %v2938 = vpop.permute.xlu0 %2937
      %2939 = vrot.lane.b32.xlu0 %v2934, 127
      %v2940 = vpop.permute.xlu0 %2939
      %v2943 = vmax.f32 %v2933, %v2938
      %v2944 = vmax.f32 %v2934, %v2940
      %v2945 = vld [vmem:[#allocation2 + $0x8] sm:$0xff]
      %v2946 = vld [vmem:[#allocation2 + $0x50] sm:$0xff]
      %2949 = vrot.lane.b32.xlu0 %v2945, 127
      %v2950 = vpop.permute.xlu0 %2949
      %2951 = vrot.lane.b32.xlu0 %v2946, 127
      %v2952 = vpop.permute.xlu0 %2951
      %vm2953 = vcmask 1039360
      %v2954 = vsel %vm2953, %v2938, %v2950
      %v2955 = vsel %vm2953, %v2940, %v2952
      %v2960 = vmax.f32 %v2933, %v2954
      %v2961 = vmax.f32 %v2945, %v2950
      %v2962 = vmax.f32 %v2934, %v2955
      %v2963 = vmax.f32 %v2946, %v2952
      %2968 = vrot.lane.b32.xlu0 %v2960, 94
      %v2969 = vpop.permute.xlu0 %2968
      %2970 = vrot.lane.b32.xlu0 %v2961, 94
      %v2971 = vpop.permute.xlu0 %2970
      %2972 = vrot.lane.b32.xlu0 %v2962, 94
      %v2973 = vpop.permute.xlu0 %2972
      %2974 = vrot.lane.b32.xlu0 %v2963, 94
      %v2975 = vpop.permute.xlu0 %2974
      %vm2976 = vcmask 769024
      %v2977 = vsel %vm2976, %v2969, %v2971
      %v2978 = vsel %vm2976, %v2973, %v2975
      %v2981 = vmax.f32 %v2943, %v2977
      %v2982 = vmax.f32 %v2944, %v2978
      %2985 = vrot.lane.b32.xlu0 %v2981, 92
      %v2986 = vpop.permute.xlu0 %2985
      %2987 = vrot.lane.b32.xlu0 %v2982, 92
      %v2988 = vpop.permute.xlu0 %2987
      %vm2991 = vcmask 523520
      %2992 = vst.msk [vmem:[%s170] sm:$0xff] %vm2991, %v2986
      %2993 = vst.msk [vmem:[%s170 + $0x20] sm:$0xff] %vm2991, %v2988
      %v2994 = vld [vmem:[#allocation2 + $0x8] sm:$0xff]
      %v2995 = vld [vmem:[#allocation2 + $0x50] sm:$0xff]
      %2998 = vrot.lane.b32.xlu0 %v2994, 127
      %v2999 = vpop.permute.xlu0 %2998
      %3000 = vrot.lane.b32.xlu0 %v2995, 127
      %v3001 = vpop.permute.xlu0 %3000
      %v3004 = vmax.f32 %v2994, %v2999
      %v3005 = vmax.f32 %v2995, %v3001
      %3008 = vrot.lane.b32.xlu0 %v3004, 94
      %v3009 = vpop.permute.xlu0 %3008
      %3010 = vrot.lane.b32.xlu0 %v3005, 94
      %v3011 = vpop.permute.xlu0 %3010
      %v3014 = vmax.f32 %v3004, %v3009
      %v3015 = vmax.f32 %v3005, %v3011
      %3018 = vrot.lane.b32.xlu0 %v3014, 56
      %v3019 = vpop.permute.xlu0 %3018
      %3020 = vrot.lane.b32.xlu0 %v3015, 56
      %v3021 = vpop.permute.xlu0 %3020
      %vm3024 = vcmask 785920
      %3025 = vst.msk [vmem:[%s170] sm:$0xff] %vm3024, %v3019
      %3026 = vst.msk [vmem:[%s170 + $0x20] sm:$0xff] %vm3024, %v3021
      %v3027 = vld [vmem:[#allocation2 + $0x8] sm:$0xff]
      %v3028 = vld [vmem:[#allocation2 + $0x50] sm:$0xff]
      %3031 = vrot.lane.b32.xlu0 %v3027, 127
      %v3032 = vpop.permute.xlu0 %3031
      %3033 = vrot.lane.b32.xlu0 %v3028, 127
      %v3034 = vpop.permute.xlu0 %3033
      %v3037 = vmax.f32 %v3027, %v3032
      %v3038 = vmax.f32 %v3028, %v3034
      %v3039 = vld [vmem:[#allocation2 + $0x10] sm:$0xff]
      %v3040 = vld [vmem:[#allocation2 + $0x58] sm:$0xff]
      %3043 = vrot.lane.b32.xlu0 %v3039, 127
      %v3044 = vpop.permute.xlu0 %3043
      %3045 = vrot.lane.b32.xlu0 %v3040, 127
      %v3046 = vpop.permute.xlu0 %3045
      %v3047 = vsel %vm2953, %v3032, %v3044
      %v3048 = vsel %vm2953, %v3034, %v3046
      %v3053 = vmax.f32 %v3027, %v3047
      %v3054 = vmax.f32 %v3039, %v3044
      %v3055 = vmax.f32 %v3028, %v3048
      %v3056 = vmax.f32 %v3040, %v3046
      %3061 = vrot.lane.b32.xlu0 %v3053, 94
      %v3062 = vpop.permute.xlu0 %3061
      %3063 = vrot.lane.b32.xlu0 %v3054, 94
      %v3064 = vpop.permute.xlu0 %3063
      %3065 = vrot.lane.b32.xlu0 %v3055, 94
      %v3066 = vpop.permute.xlu0 %3065
      %3067 = vrot.lane.b32.xlu0 %v3056, 94
      %v3068 = vpop.permute.xlu0 %3067
      %v3069 = vsel %vm2976, %v3062, %v3064
      %v3070 = vsel %vm2976, %v3066, %v3068
      %v3073 = vmax.f32 %v3037, %v3069
      %v3074 = vmax.f32 %v3038, %v3070
      %3077 = vrot.lane.b32.xlu0 %v3073, 20
      %v3078 = vpop.permute.xlu0 %3077
      %3079 = vrot.lane.b32.xlu0 %v3074, 20
      %v3080 = vpop.permute.xlu0 %3079
      %vm3083 = vcmask 1048320
      %3084 = vst.msk [vmem:[%s170] sm:$0xff] %vm3083, %v3078
      %3085 = vst.msk [vmem:[%s170 + $0x20] sm:$0xff] %vm3083, %v3080
      %v3086 = vld [vmem:[#allocation2 + $0x10] sm:$0xff]
      %v3087 = vld [vmem:[#allocation2 + $0x58] sm:$0xff]
      %3090 = vrot.lane.b32.xlu0 %v3086, 127
      %v3091 = vpop.permute.xlu0 %3090
      %3092 = vrot.lane.b32.xlu0 %v3087, 127
      %v3093 = vpop.permute.xlu0 %3092
      %v3096 = vmax.f32 %v3086, %v3091
      %v3097 = vmax.f32 %v3087, %v3093
      %3100 = vrot.lane.b32.xlu0 %v3096, 94
      %v3101 = vpop.permute.xlu0 %3100
      %3102 = vrot.lane.b32.xlu0 %v3097, 94
      %v3103 = vpop.permute.xlu0 %3102
      %v3106 = vmax.f32 %v3096, %v3101
      %v3107 = vmax.f32 %v3097, %v3103
      %3110 = vrot.lane.b32.xlu0 %v3106, 112
      %v3111 = vpop.permute.xlu0 %3110
      %3112 = vrot.lane.b32.xlu0 %v3107, 112
      %v3113 = vpop.permute.xlu0 %3112
      %3116 = vst.msk [vmem:[%s170 + $0x8] sm:$0xff] %vm2930, %v3111
      %3117 = vst.msk [vmem:[%s170 + $0x28] sm:$0xff] %vm2930, %v3113
      %v3118 = vld [vmem:[#allocation2 + $0x10] sm:$0xff]
      %v3119 = vld [vmem:[#allocation2 + $0x58] sm:$0xff]
      %3122 = vrot.lane.b32.xlu0 %v3118, 127
      %v3123 = vpop.permute.xlu0 %3122
      %3124 = vrot.lane.b32.xlu0 %v3119, 127
      %v3125 = vpop.permute.xlu0 %3124
      %v3128 = vmax.f32 %v3118, %v3123
      %v3129 = vmax.f32 %v3119, %v3125
      %v3130 = vld [vmem:[#allocation2 + $0x18] sm:$0xff]
      %v3131 = vld [vmem:[#allocation2 + $0x60] sm:$0xff]
      %3134 = vrot.lane.b32.xlu0 %v3130, 127
      %v3135 = vpop.permute.xlu0 %3134
      %3136 = vrot.lane.b32.xlu0 %v3131, 127
      %v3137 = vpop.permute.xlu0 %3136
      %v3138 = vsel %vm2953, %v3123, %v3135
      %v3139 = vsel %vm2953, %v3125, %v3137
      %v3144 = vmax.f32 %v3118, %v3138
      %v3145 = vmax.f32 %v3130, %v3135
      %v3146 = vmax.f32 %v3119, %v3139
      %v3147 = vmax.f32 %v3131, %v3137
      %3152 = vrot.lane.b32.xlu0 %v3144, 94
      %v3153 = vpop.permute.xlu0 %3152
      %3154 = vrot.lane.b32.xlu0 %v3145, 94
      %v3155 = vpop.permute.xlu0 %3154
      %3156 = vrot.lane.b32.xlu0 %v3146, 94
      %v3157 = vpop.permute.xlu0 %3156
      %3158 = vrot.lane.b32.xlu0 %v3147, 94
      %v3159 = vpop.permute.xlu0 %3158
      %v3160 = vsel %vm2976, %v3153, %v3155
      %v3161 = vsel %vm2976, %v3157, %v3159
      %v3164 = vmax.f32 %v3128, %v3160
      %v3165 = vmax.f32 %v3129, %v3161
      %3168 = vrot.lane.b32.xlu0 %v3164, 76
      %v3169 = vpop.permute.xlu0 %3168
      %3170 = vrot.lane.b32.xlu0 %v3165, 76
      %v3171 = vpop.permute.xlu0 %3170
      %3174 = vst.msk [vmem:[%s170 + $0x8] sm:$0xff] %vm2991, %v3169
      %3175 = vst.msk [vmem:[%s170 + $0x28] sm:$0xff] %vm2991, %v3171
      %v3176 = vld [vmem:[#allocation2 + $0x18] sm:$0xff]
      %v3177 = vld [vmem:[#allocation2 + $0x60] sm:$0xff]
      %3180 = vrot.lane.b32.xlu0 %v3176, 127
      %v3181 = vpop.permute.xlu0 %3180
      %3182 = vrot.lane.b32.xlu0 %v3177, 127
      %v3183 = vpop.permute.xlu0 %3182
      %v3186 = vmax.f32 %v3176, %v3181
      %v3187 = vmax.f32 %v3177, %v3183
      %3190 = vrot.lane.b32.xlu0 %v3186, 94
      %v3191 = vpop.permute.xlu0 %3190
      %3192 = vrot.lane.b32.xlu0 %v3187, 94
      %v3193 = vpop.permute.xlu0 %3192
      %v3196 = vmax.f32 %v3186, %v3191
      %v3197 = vmax.f32 %v3187, %v3193
      %3200 = vrot.lane.b32.xlu0 %v3196, 40
      %v3201 = vpop.permute.xlu0 %3200
      %3202 = vrot.lane.b32.xlu0 %v3197, 40
      %v3203 = vpop.permute.xlu0 %3202
      %3206 = vst.msk [vmem:[%s170 + $0x8] sm:$0xff] %vm3024, %v3201
      %3207 = vst.msk [vmem:[%s170 + $0x28] sm:$0xff] %vm3024, %v3203
      %v3208 = vld [vmem:[#allocation2 + $0x18] sm:$0xff]
      %v3209 = vld [vmem:[#allocation2 + $0x60] sm:$0xff]
      %3212 = vrot.lane.b32.xlu0 %v3208, 127
      %v3213 = vpop.permute.xlu0 %3212
      %3214 = vrot.lane.b32.xlu0 %v3209, 127
      %v3215 = vpop.permute.xlu0 %3214
      %v3218 = vmax.f32 %v3208, %v3213
      %v3219 = vmax.f32 %v3209, %v3215
      %v3220 = vld [vmem:[#allocation2 + $0x20] sm:$0xff]
      %v3221 = vld [vmem:[#allocation2 + $0x68] sm:$0xff]
      %3224 = vrot.lane.b32.xlu0 %v3220, 127
      %v3225 = vpop.permute.xlu0 %3224
      %3226 = vrot.lane.b32.xlu0 %v3221, 127
      %v3227 = vpop.permute.xlu0 %3226
      %v3228 = vsel %vm2953, %v3213, %v3225
      %v3229 = vsel %vm2953, %v3215, %v3227
      %v3234 = vmax.f32 %v3208, %v3228
      %v3235 = vmax.f32 %v3220, %v3225
      %v3236 = vmax.f32 %v3209, %v3229
      %v3237 = vmax.f32 %v3221, %v3227
      %3242 = vrot.lane.b32.xlu0 %v3234, 94
      %v3243 = vpop.permute.xlu0 %3242
      %3244 = vrot.lane.b32.xlu0 %v3235, 94
      %v3245 = vpop.permute.xlu0 %3244
      %3246 = vrot.lane.b32.xlu0 %v3236, 94
      %v3247 = vpop.permute.xlu0 %3246
      %3248 = vrot.lane.b32.xlu0 %v3237, 94
      %v3249 = vpop.permute.xlu0 %3248
      %v3250 = vsel %vm2976, %v3243, %v3245
      %v3251 = vsel %vm2976, %v3247, %v3249
      %v3254 = vmax.f32 %v3218, %v3250
      %v3255 = vmax.f32 %v3219, %v3251
      %3258 = vrot.lane.b32.xlu0 %v3254, 4
      %v3259 = vpop.permute.xlu0 %3258
      %3260 = vrot.lane.b32.xlu0 %v3255, 4
      %v3261 = vpop.permute.xlu0 %3260
      %3264 = vst.msk [vmem:[%s170 + $0x8] sm:$0xff] %vm3083, %v3259
      %3265 = vst.msk [vmem:[%s170 + $0x28] sm:$0xff] %vm3083, %v3261
      %v3266 = vld [vmem:[#allocation2 + $0x20] sm:$0xff]
      %v3267 = vld [vmem:[#allocation2 + $0x68] sm:$0xff]
      %3270 = vrot.lane.b32.xlu0 %v3266, 127
      %v3271 = vpop.permute.xlu0 %3270
      %3272 = vrot.lane.b32.xlu0 %v3267, 127
      %v3273 = vpop.permute.xlu0 %3272
      %v3276 = vmax.f32 %v3266, %v3271
      %v3277 = vmax.f32 %v3267, %v3273
      %3280 = vrot.lane.b32.xlu0 %v3276, 94
      %v3281 = vpop.permute.xlu0 %3280
      %3282 = vrot.lane.b32.xlu0 %v3277, 94
      %v3283 = vpop.permute.xlu0 %3282
      %v3286 = vmax.f32 %v3276, %v3281
      %v3287 = vmax.f32 %v3277, %v3283
      %3290 = vrot.lane.b32.xlu0 %v3286, 96
      %v3291 = vpop.permute.xlu0 %3290
      %3292 = vrot.lane.b32.xlu0 %v3287, 96
      %v3293 = vpop.permute.xlu0 %3292
      %3296 = vst.msk [vmem:[%s170 + $0x10] sm:$0xff] %vm2930, %v3291
      %3297 = vst.msk [vmem:[%s170 + $0x30] sm:$0xff] %vm2930, %v3293
      %v3298 = vld [vmem:[#allocation2 + $0x20] sm:$0xff]
      %v3299 = vld [vmem:[#allocation2 + $0x28] sm:$0xff]
      %v3300 = vld [vmem:[#allocation2 + $0x68] sm:$0xff]
      %v3301 = vld [vmem:[#allocation2 + $0x70] sm:$0xff]
      %3306 = vrot.lane.b32.xlu0 %v3298, 127
      %v3307 = vpop.permute.xlu0 %3306
      %3308 = vrot.lane.b32.xlu0 %v3299, 127
      %v3309 = vpop.permute.xlu0 %3308
      %3310 = vrot.lane.b32.xlu0 %v3300, 127
      %v3311 = vpop.permute.xlu0 %3310
      %3312 = vrot.lane.b32.xlu0 %v3301, 127
      %v3313 = vpop.permute.xlu0 %3312
      %v3314 = vsel %vm2953, %v3307, %v3309
      %v3315 = vsel %vm2953, %v3311, %v3313
      %v3320 = vmax.f32 %v3298, %v3314
      %v3321 = vmax.f32 %v3299, %v3309
      %v3322 = vmax.f32 %v3300, %v3315
      %v3323 = vmax.f32 %v3301, %v3313
      %3326 = vrot.lane.b32.xlu0 %v3321, 94
      %v3327 = vpop.permute.xlu0 %3326
      %3328 = vrot.lane.b32.xlu0 %v3323, 94
      %v3329 = vpop.permute.xlu0 %3328
      %v3332 = vmax.f32 %v3320, %v3327
      %v3333 = vmax.f32 %v3321, %v3327
      %v3334 = vmax.f32 %v3322, %v3329
      %v3335 = vmax.f32 %v3323, %v3329
      %3340 = vrot.lane.b32.xlu0 %v3332, 60
      %v3341 = vpop.permute.xlu0 %3340
      %3342 = vrot.lane.b32.xlu0 %v3333, 60
      %v3343 = vpop.permute.xlu0 %3342
      %3344 = vrot.lane.b32.xlu0 %v3334, 60
      %v3345 = vpop.permute.xlu0 %3344
      %3346 = vrot.lane.b32.xlu0 %v3335, 60
      %v3347 = vpop.permute.xlu0 %3346
      %vm3348 = vcmask 490496
      %v3349 = vsel %vm3348, %v3341, %v3343
      %v3350 = vsel %vm3348, %v3345, %v3347
      %3353 = vst.msk [vmem:[%s170 + $0x10] sm:$0xff] %vm2991, %v3349
      %3354 = vst.msk [vmem:[%s170 + $0x30] sm:$0xff] %vm2991, %v3350
      %v3355 = vld [vmem:[#allocation2 + $0x28] sm:$0xff]
      %v3356 = vld [vmem:[#allocation2 + $0x70] sm:$0xff]
      %3359 = vrot.lane.b32.xlu0 %v3355, 127
      %v3360 = vpop.permute.xlu0 %3359
      %3361 = vrot.lane.b32.xlu0 %v3356, 127
      %v3362 = vpop.permute.xlu0 %3361
      %v3365 = vmax.f32 %v3355, %v3360
      %v3366 = vmax.f32 %v3356, %v3362
      %3369 = vrot.lane.b32.xlu0 %v3365, 94
      %v3370 = vpop.permute.xlu0 %3369
      %3371 = vrot.lane.b32.xlu0 %v3366, 94
      %v3372 = vpop.permute.xlu0 %3371
      %v3375 = vmax.f32 %v3365, %v3370
      %v3376 = vmax.f32 %v3366, %v3372
      %3379 = vrot.lane.b32.xlu0 %v3375, 24
      %v3380 = vpop.permute.xlu0 %3379
      %3381 = vrot.lane.b32.xlu0 %v3376, 24
      %v3382 = vpop.permute.xlu0 %3381
      %3385 = vst.msk [vmem:[%s170 + $0x10] sm:$0xff] %vm3024, %v3380
      %3386 = vst.msk [vmem:[%s170 + $0x30] sm:$0xff] %vm3024, %v3382
      %v3387 = vld [vmem:[#allocation2 + $0x28] sm:$0xff]
      %v3388 = vld [vmem:[#allocation2 + $0x30] sm:$0xff]
      %v3389 = vld [vmem:[#allocation2 + $0x70] sm:$0xff]
      %v3390 = vld [vmem:[#allocation2 + $0x78] sm:$0xff]
      %3395 = vrot.lane.b32.xlu0 %v3387, 127
      %v3396 = vpop.permute.xlu0 %3395
      %3397 = vrot.lane.b32.xlu0 %v3388, 127
      %v3398 = vpop.permute.xlu0 %3397
      %3399 = vrot.lane.b32.xlu0 %v3389, 127
      %v3400 = vpop.permute.xlu0 %3399
      %3401 = vrot.lane.b32.xlu0 %v3390, 127
      %v3402 = vpop.permute.xlu0 %3401
      %v3403 = vsel %vm2953, %v3396, %v3398
      %v3404 = vsel %vm2953, %v3400, %v3402
      %v3409 = vmax.f32 %v3387, %v3403
      %v3410 = vmax.f32 %v3388, %v3398
      %v3411 = vmax.f32 %v3389, %v3404
      %v3412 = vmax.f32 %v3390, %v3402
      %3415 = vrot.lane.b32.xlu0 %v3410, 94
      %v3416 = vpop.permute.xlu0 %3415
      %3417 = vrot.lane.b32.xlu0 %v3412, 94
      %v3418 = vpop.permute.xlu0 %3417
      %v3421 = vmax.f32 %v3409, %v3416
      %v3422 = vmax.f32 %v3410, %v3416
      %v3423 = vmax.f32 %v3411, %v3418
      %v3424 = vmax.f32 %v3412, %v3418
      %3429 = vrot.lane.b32.xlu0 %v3421, 116
      %v3430 = vpop.permute.xlu0 %3429
      %3431 = vrot.lane.b32.xlu0 %v3422, 116
      %v3432 = vpop.permute.xlu0 %3431
      %3433 = vrot.lane.b32.xlu0 %v3423, 116
      %v3434 = vpop.permute.xlu0 %3433
      %3435 = vrot.lane.b32.xlu0 %v3424, 116
      %v3436 = vpop.permute.xlu0 %3435
      %vm3437 = vcmask 949248
      %v3438 = vsel %vm3437, %v3430, %v3432
      %v3439 = vsel %vm3437, %v3434, %v3436
      %3442 = vst.msk [vmem:[%s170 + $0x10] sm:$0xff] %vm3083, %v3438
      %3443 = vst.msk [vmem:[%s170 + $0x30] sm:$0xff] %vm3083, %v3439
      %v3444 = vld [vmem:[#allocation2 + $0x30] sm:$0xff]
      %v3445 = vld [vmem:[#allocation2 + $0x78] sm:$0xff]
      %3448 = vrot.lane.b32.xlu0 %v3444, 127
      %v3449 = vpop.permute.xlu0 %3448
      %3450 = vrot.lane.b32.xlu0 %v3445, 127
      %v3451 = vpop.permute.xlu0 %3450
      %v3454 = vmax.f32 %v3444, %v3449
      %v3455 = vmax.f32 %v3445, %v3451
      %3458 = vrot.lane.b32.xlu0 %v3454, 94
      %v3459 = vpop.permute.xlu0 %3458
      %3460 = vrot.lane.b32.xlu0 %v3455, 94
      %v3461 = vpop.permute.xlu0 %3460
      %v3464 = vmax.f32 %v3454, %v3459
      %v3465 = vmax.f32 %v3455, %v3461
      %3468 = vrot.lane.b32.xlu0 %v3464, 80
      %v3469 = vpop.permute.xlu0 %3468
      %3470 = vrot.lane.b32.xlu0 %v3465, 80
      %v3471 = vpop.permute.xlu0 %3470
      %3474 = vst.msk [vmem:[%s170 + $0x18] sm:$0xff] %vm2930, %v3469
      %3475 = vst.msk [vmem:[%s170 + $0x38] sm:$0xff] %vm2930, %v3471
      %v3476 = vld [vmem:[#allocation2 + $0x30] sm:$0xff]
      %v3477 = vld [vmem:[#allocation2 + $0x38] sm:$0xff]
      %v3478 = vld [vmem:[#allocation2 + $0x78] sm:$0xff]
      %v3479 = vld [vmem:[#allocation2 + $0x80] sm:$0xff]
      %3484 = vrot.lane.b32.xlu0 %v3476, 127
      %v3485 = vpop.permute.xlu0 %3484
      %3486 = vrot.lane.b32.xlu0 %v3477, 127
      %v3487 = vpop.permute.xlu0 %3486
      %3488 = vrot.lane.b32.xlu0 %v3478, 127
      %v3489 = vpop.permute.xlu0 %3488
      %3490 = vrot.lane.b32.xlu0 %v3479, 127
      %v3491 = vpop.permute.xlu0 %3490
      %v3492 = vsel %vm2953, %v3485, %v3487
      %v3493 = vsel %vm2953, %v3489, %v3491
      %v3498 = vmax.f32 %v3476, %v3492
      %v3499 = vmax.f32 %v3477, %v3487
      %v3500 = vmax.f32 %v3478, %v3493
      %v3501 = vmax.f32 %v3479, %v3491
      %3504 = vrot.lane.b32.xlu0 %v3499, 94
      %v3505 = vpop.permute.xlu0 %3504
      %3506 = vrot.lane.b32.xlu0 %v3501, 94
      %v3507 = vpop.permute.xlu0 %3506
      %v3510 = vmax.f32 %v3498, %v3505
      %v3511 = vmax.f32 %v3499, %v3505
      %v3512 = vmax.f32 %v3500, %v3507
      %v3513 = vmax.f32 %v3501, %v3507
      %3518 = vrot.lane.b32.xlu0 %v3510, 44
      %v3519 = vpop.permute.xlu0 %3518
      %3520 = vrot.lane.b32.xlu0 %v3511, 44
      %v3521 = vpop.permute.xlu0 %3520
      %3522 = vrot.lane.b32.xlu0 %v3512, 44
      %v3523 = vpop.permute.xlu0 %3522
      %3524 = vrot.lane.b32.xlu0 %v3513, 44
      %v3525 = vpop.permute.xlu0 %3524
      %vm3526 = vcmask 359424
      %v3527 = vsel %vm3526, %v3519, %v3521
      %v3528 = vsel %vm3526, %v3523, %v3525
      %3531 = vst.msk [vmem:[%s170 + $0x18] sm:$0xff] %vm2991, %v3527
      %3532 = vst.msk [vmem:[%s170 + $0x38] sm:$0xff] %vm2991, %v3528
      %v3533 = vld [vmem:[#allocation2 + $0x38] sm:$0xff]
      %v3534 = vld [vmem:[#allocation2 + $0x80] sm:$0xff]
      %3537 = vrot.lane.b32.xlu0 %v3533, 127
      %v3538 = vpop.permute.xlu0 %3537
      %3539 = vrot.lane.b32.xlu0 %v3534, 127
      %v3540 = vpop.permute.xlu0 %3539
      %v3543 = vmax.f32 %v3533, %v3538
      %v3544 = vmax.f32 %v3534, %v3540
      %3547 = vrot.lane.b32.xlu0 %v3543, 94
      %v3548 = vpop.permute.xlu0 %3547
      %3549 = vrot.lane.b32.xlu0 %v3544, 94
      %v3550 = vpop.permute.xlu0 %3549
      %v3553 = vmax.f32 %v3543, %v3548
      %v3554 = vmax.f32 %v3544, %v3550
      %3557 = vrot.lane.b32.xlu0 %v3553, 8
      %v3558 = vpop.permute.xlu0 %3557
      %3559 = vrot.lane.b32.xlu0 %v3554, 8
      %v3560 = vpop.permute.xlu0 %3559
      %3563 = vst.msk [vmem:[%s170 + $0x18] sm:$0xff] %vm3024, %v3558
      %3564 = vst.msk [vmem:[%s170 + $0x38] sm:$0xff] %vm3024, %v3560
      %v3565 = vld [vmem:[#allocation2 + $0x38] sm:$0xff]
      %v3566 = vld [vmem:[#allocation2 + $0x40] sm:$0xff]
      %v3567 = vld [vmem:[#allocation2 + $0x80] sm:$0xff]
      %v3568 = vld [vmem:[#allocation2 + $0x88] sm:$0xff]
      %3573 = vrot.lane.b32.xlu0 %v3565, 127
      %v3574 = vpop.permute.xlu0 %3573
      %3575 = vrot.lane.b32.xlu0 %v3566, 127
      %v3576 = vpop.permute.xlu0 %3575
      %3577 = vrot.lane.b32.xlu0 %v3567, 127
      %v3578 = vpop.permute.xlu0 %3577
      %3579 = vrot.lane.b32.xlu0 %v3568, 127
      %v3580 = vpop.permute.xlu0 %3579
      %v3581 = vsel %vm2953, %v3574, %v3576
      %v3582 = vsel %vm2953, %v3578, %v3580
      %v3587 = vmax.f32 %v3565, %v3581
      %v3588 = vmax.f32 %v3566, %v3576
      %v3589 = vmax.f32 %v3567, %v3582
      %v3590 = vmax.f32 %v3568, %v3580
      %3593 = vrot.lane.b32.xlu0 %v3588, 94
      %v3594 = vpop.permute.xlu0 %3593
      %3595 = vrot.lane.b32.xlu0 %v3590, 94
      %v3596 = vpop.permute.xlu0 %3595
      %v3599 = vmax.f32 %v3587, %v3594
      %v3600 = vmax.f32 %v3588, %v3594
      %v3601 = vmax.f32 %v3589, %v3596
      %v3602 = vmax.f32 %v3590, %v3596
      %3607 = vrot.lane.b32.xlu0 %v3599, 100
      %v3608 = vpop.permute.xlu0 %3607
      %3609 = vrot.lane.b32.xlu0 %v3600, 100
      %v3610 = vpop.permute.xlu0 %3609
      %3611 = vrot.lane.b32.xlu0 %v3601, 100
      %v3612 = vpop.permute.xlu0 %3611
      %3613 = vrot.lane.b32.xlu0 %v3602, 100
      %v3614 = vpop.permute.xlu0 %3613
      %vm3615 = vcmask 818176
      %v3616 = vsel %vm3615, %v3608, %v3610
      %v3617 = vsel %vm3615, %v3612, %v3614
      %3620 = vst.msk [vmem:[%s170 + $0x18] sm:$0xff] %vm3083, %v3616
      %3621 = vst.msk [vmem:[%s170 + $0x38] sm:$0xff] %vm3083, %v3617
      %p3622 = scmp.lt.s32.totalorder %s14, 1
      %s3623 = scalar_select %p3622, %s14, 1
      %s3624 = smul.addr %s3623, 8
      %s3625 = smul.addr %s3624, 8
      %s3626 = scalar_lea.vmem %s3, %s3625
      // Predicated region
      $region33: #{simple_cnn_forward.3} parent=31 // pred_check
        %p3627 = pneg %p100
      $region34: #{simple_cnn_forward.3} parent=31 // pred_check_branch
        %3629 = sbr.rel (%p3627) target = $region36
      $region35: #{simple_cnn_forward.3} parent=31 // pred_region
        _
      $region36: #{simple_cnn_forward.3} parent=31 // pred_fallthru
        _
    $region32: #{simple_cnn_forward.3} parent=5 // pred_fallthru
      _
    %p3630 = scmp.le.s32.totalorder 2, %s9
    // Predicated region
    $region37: #{simple_cnn_forward.3} parent=5 // pred_check
      %p3631 = pneg %p3630
    $region38: #{simple_cnn_forward.3} parent=5 // pred_check_branch
      %3633 = sbr.rel (%p3631) target = $region40
    $region39: #{simple_cnn_forward.3} parent=5 // pred_region
      %s3634 = ssub.s32 %s9, 2
      // Predicated region
      $region41: #{simple_cnn_forward.3} parent=39 // pred_check
        %p3635 = pneg %p106
      $region42: #{simple_cnn_forward.3} parent=39 // pred_check_branch
        %3637 = sbr.rel (%p3635) target = $region44
      $region43: #{simple_cnn_forward.3} parent=39 // pred_region
        %p3638 = scmp.lt.s32.totalorder %s15, 1
        %s3639 = scalar_select %p3638, %s15, 1
        %s3640 = smul.addr %s3639, 8
        %s3641 = smul.addr %s3640, 8
        %s3642 = scalar_lea.vmem %s3, %s3641
      $region44: #{simple_cnn_forward.3} parent=39 // pred_fallthru
        _
    $region40: #{simple_cnn_forward.3} parent=5 // pred_fallthru
      _
  $region6: #{simple_cnn_forward.3} parent=0 // loop_footer
    %s13 = sadd.s32 1, %s9
  $region7: #{simple_cnn_forward.3} parent=0 // loop_footer_branch
    %8 = sbr.rel target = $region3
  $region8: #{simple_cnn_forward.3} parent=0 // loop_exit
    _

// kernel: simple_cnn_forward.5
$region0: #{simple_cnn_forward.5}
  #allocation0 [shape = 'u32[]', space=smem, size = 0x4, offset = 0x4, fixed_abs, tag = 'smem constant byte address 0x4 - core index']
  #allocation1 [shape = 'u32[144,128]{1,0:T(1,128)}', space=vmem, size = 0x12000, scoped, tag = 'internal scratch']
  %s0 = inlined_call_operand.vmem [shape: bf16[2,2048], index: 0, kind: input, shape index: {}]
  %s1 = inlined_call_operand.vmem [shape: bf16[2048,512], index: 1, kind: input, shape index: {}]
  %s2 = inlined_call_operand.vmem [shape: f32[1,512], index: 2, kind: input, shape index: {}]
  %s3 = inlined_call_operand.vmem [shape: bf16[512,10], index: 3, kind: input, shape index: {}]
  %s4 = inlined_call_operand.vmem [shape: f32[1,10], index: 4, kind: input, shape index: {}]
  %s5 = inlined_call_operand.hbm [shape: f32[2,10], index: 5, kind: output, shape index: {}]
  %s6 = sld [smem:[#allocation0]]
  $region30: #{simple_cnn_forward.5} parent=0
    _
  %s8 = ssub.s32 1, %s6
  %s9 = scalar_select 0, %s8, %s6
  $region1: #{simple_cnn_forward.5} parent=0
    #allocation2 [shape = 'u8[1024]{0}', space=vmem, size = 0x400, scoped, tag = 'output window, operand 0, single buffered']
    #allocation3 [shape = 's32[1]{0}', space=sflag, size = 0x4, scoped, tag = 'scoped memory for simple_cnn_forward.5']
    %10 = vsyncpa [#allocation3], 0
    // Predicated region
    $region2: #{simple_cnn_forward.5} parent=1 // pred_check
      _
    $region3: #{simple_cnn_forward.5} parent=1 // pred_check_branch
      %12 = sbr.rel (0) target = $region5
    $region4: #{simple_cnn_forward.5} parent=1 // pred_region
      _
    $region5: #{simple_cnn_forward.5} parent=1 // pred_fallthru
      _
    // Predicated region
    $region6: #{simple_cnn_forward.5} parent=1 // pred_check
      _
    $region7: #{simple_cnn_forward.5} parent=1 // pred_check_branch
      %14 = sbr.rel (0) target = $region9
    $region8: #{simple_cnn_forward.5} parent=1 // pred_region
      _
    $region9: #{simple_cnn_forward.5} parent=1 // pred_fallthru
      _
    // Predicated region
    $region10: #{simple_cnn_forward.5} parent=1 // pred_check
      _
    $region11: #{simple_cnn_forward.5} parent=1 // pred_check_branch
      %16 = sbr.rel (0) target = $region13
    $region12: #{simple_cnn_forward.5} parent=1 // pred_region
      _
    $region13: #{simple_cnn_forward.5} parent=1 // pred_fallthru
      _
    // Predicated region
    $region14: #{simple_cnn_forward.5} parent=1 // pred_check
      _
    $region15: #{simple_cnn_forward.5} parent=1 // pred_check_branch
      %18 = sbr.rel (0) target = $region17
    $region16: #{simple_cnn_forward.5} parent=1 // pred_region
      _
    $region17: #{simple_cnn_forward.5} parent=1 // pred_fallthru
      _
    // Predicated region
    $region18: #{simple_cnn_forward.5} parent=1 // pred_check
      _
    $region19: #{simple_cnn_forward.5} parent=1 // pred_check_branch
      %20 = sbr.rel (0) target = $region21
    $region20: #{simple_cnn_forward.5} parent=1 // pred_region
      _
    $region21: #{simple_cnn_forward.5} parent=1 // pred_fallthru
      _
    %v22 = vld [vmem:[%s0] sm:$0xff]
    %v23 = vld [vmem:[%s0 + $0x8] sm:$0xff]
    %v24 = vld [vmem:[%s1] sm:$0xff]
    %v25 = vld [vmem:[%s1 + $0x8] sm:$0xff]
    %v26 = vld [vmem:[%s1 + $0x10] sm:$0xff]
    %v27 = vld [vmem:[%s1 + $0x18] sm:$0xff]
    %v28 = vld [vmem:[%s1 + $0x20] sm:$0xff]
    %v29 = vld [vmem:[%s1 + $0x28] sm:$0xff]
    %v30 = vld [vmem:[%s1 + $0x30] sm:$0xff]
    %v31 = vld [vmem:[%s1 + $0x38] sm:$0xff]
    %v32 = vld [vmem:[%s1 + $0x40] sm:$0xff]
    %v33 = vld [vmem:[%s1 + $0x48] sm:$0xff]
    %v34 = vld [vmem:[%s1 + $0x50] sm:$0xff]
    %v35 = vld [vmem:[%s1 + $0x58] sm:$0xff]
    %v36 = vld [vmem:[%s1 + $0x60] sm:$0xff]
    %v37 = vld [vmem:[%s1 + $0x68] sm:$0xff]
    %v38 = vld [vmem:[%s1 + $0x70] sm:$0xff]
    %v39 = vld [vmem:[%s1 + $0x78] sm:$0xff]
    %v40 = vld [vmem:[%s1 + $0x80] sm:$0xff]
    %v41 = vld [vmem:[%s1 + $0x88] sm:$0xff]
    %v42 = vld [vmem:[%s1 + $0x90] sm:$0xff]
    %v43 = vld [vmem:[%s1 + $0x98] sm:$0xff]
    %v44 = vld [vmem:[%s1 + $0xa0] sm:$0xff]
    %v45 = vld [vmem:[%s1 + $0xa8] sm:$0xff]
    %v46 = vld [vmem:[%s1 + $0xb0] sm:$0xff]
    %v47 = vld [vmem:[%s1 + $0xb8] sm:$0xff]
    %v48 = vld [vmem:[%s1 + $0xc0] sm:$0xff]
    %v49 = vld [vmem:[%s1 + $0xc8] sm:$0xff]
    %v50 = vld [vmem:[%s1 + $0xd0] sm:$0xff]
    %v51 = vld [vmem:[%s1 + $0xd8] sm:$0xff]
    %v52 = vld [vmem:[%s1 + $0xe0] sm:$0xff]
    %v53 = vld [vmem:[%s1 + $0xe8] sm:$0xff]
    %v54 = vld [vmem:[%s1 + $0xf0] sm:$0xff]
    %v55 = vld [vmem:[%s1 + $0xf8] sm:$0xff]
    %v56 = vld [vmem:[%s1 + $0x100] sm:$0xff]
    %v57 = vld [vmem:[%s1 + $0x108] sm:$0xff]
    %v58 = vld [vmem:[%s1 + $0x110] sm:$0xff]
    %v59 = vld [vmem:[%s1 + $0x118] sm:$0xff]
    %v60 = vld [vmem:[%s1 + $0x120] sm:$0xff]
    %v61 = vld [vmem:[%s1 + $0x128] sm:$0xff]
    %v62 = vld [vmem:[%s1 + $0x130] sm:$0xff]
    %v63 = vld [vmem:[%s1 + $0x138] sm:$0xff]
    %v64 = vld [vmem:[%s1 + $0x140] sm:$0xff]
    %v65 = vld [vmem:[%s1 + $0x148] sm:$0xff]
    %v66 = vld [vmem:[%s1 + $0x150] sm:$0xff]
    %v67 = vld [vmem:[%s1 + $0x158] sm:$0xff]
    %v68 = vld [vmem:[%s1 + $0x160] sm:$0xff]
    %v69 = vld [vmem:[%s1 + $0x168] sm:$0xff]
    %v70 = vld [vmem:[%s1 + $0x170] sm:$0xff]
    %v71 = vld [vmem:[%s1 + $0x178] sm:$0xff]
    %v72 = vld [vmem:[%s1 + $0x180] sm:$0xff]
    %v73 = vld [vmem:[%s1 + $0x188] sm:$0xff]
    %v74 = vld [vmem:[%s1 + $0x190] sm:$0xff]
    %v75 = vld [vmem:[%s1 + $0x198] sm:$0xff]
    %v76 = vld [vmem:[%s1 + $0x1a0] sm:$0xff]
    %v77 = vld [vmem:[%s1 + $0x1a8] sm:$0xff]
    %v78 = vld [vmem:[%s1 + $0x1b0] sm:$0xff]
    %v79 = vld [vmem:[%s1 + $0x1b8] sm:$0xff]
    %v80 = vld [vmem:[%s1 + $0x1c0] sm:$0xff]
    %v81 = vld [vmem:[%s1 + $0x1c8] sm:$0xff]
    %v82 = vld [vmem:[%s1 + $0x1d0] sm:$0xff]
    %v83 = vld [vmem:[%s1 + $0x1d8] sm:$0xff]
    %v84 = vld [vmem:[%s1 + $0x1e0] sm:$0xff]
    %v85 = vld [vmem:[%s1 + $0x1e8] sm:$0xff]
    %v86 = vld [vmem:[%s1 + $0x1f0] sm:$0xff]
    %v87 = vld [vmem:[%s1 + $0x1f8] sm:$0xff]
    %v88 = vld [vmem:[%s1 + $0x200] sm:$0xff]
    %v89 = vld [vmem:[%s1 + $0x208] sm:$0xff]
    %v90 = vld [vmem:[%s1 + $0x210] sm:$0xff]
    %v91 = vld [vmem:[%s1 + $0x218] sm:$0xff]
    %v92 = vld [vmem:[%s1 + $0x220] sm:$0xff]
    %v93 = vld [vmem:[%s1 + $0x228] sm:$0xff]
    %v94 = vld [vmem:[%s1 + $0x230] sm:$0xff]
    %v95 = vld [vmem:[%s1 + $0x238] sm:$0xff]
    %v96 = vld [vmem:[%s1 + $0x240] sm:$0xff]
    %v97 = vld [vmem:[%s1 + $0x248] sm:$0xff]
    %v98 = vld [vmem:[%s1 + $0x250] sm:$0xff]
    %v99 = vld [vmem:[%s1 + $0x258] sm:$0xff]
    %v100 = vld [vmem:[%s1 + $0x260] sm:$0xff]
    %v101 = vld [vmem:[%s1 + $0x268] sm:$0xff]
    %v102 = vld [vmem:[%s1 + $0x270] sm:$0xff]
    %v103 = vld [vmem:[%s1 + $0x278] sm:$0xff]
    %v104 = vld [vmem:[%s1 + $0x280] sm:$0xff]
    %v105 = vld [vmem:[%s1 + $0x288] sm:$0xff]
    %v106 = vld [vmem:[%s1 + $0x290] sm:$0xff]
    %v107 = vld [vmem:[%s1 + $0x298] sm:$0xff]
    %v108 = vld [vmem:[%s1 + $0x2a0] sm:$0xff]
    %v109 = vld [vmem:[%s1 + $0x2a8] sm:$0xff]
    %v110 = vld [vmem:[%s1 + $0x2b0] sm:$0xff]
    %v111 = vld [vmem:[%s1 + $0x2b8] sm:$0xff]
    %v112 = vld [vmem:[%s1 + $0x2c0] sm:$0xff]
    %v113 = vld [vmem:[%s1 + $0x2c8] sm:$0xff]
    %v114 = vld [vmem:[%s1 + $0x2d0] sm:$0xff]
    %v115 = vld [vmem:[%s1 + $0x2d8] sm:$0xff]
    %v116 = vld [vmem:[%s1 + $0x2e0] sm:$0xff]
    %v117 = vld [vmem:[%s1 + $0x2e8] sm:$0xff]
    %v118 = vld [vmem:[%s1 + $0x2f0] sm:$0xff]
    %v119 = vld [vmem:[%s1 + $0x2f8] sm:$0xff]
    %v120 = vld [vmem:[%s1 + $0x300] sm:$0xff]
    %v121 = vld [vmem:[%s1 + $0x308] sm:$0xff]
    %v122 = vld [vmem:[%s1 + $0x310] sm:$0xff]
    %v123 = vld [vmem:[%s1 + $0x318] sm:$0xff]
    %v124 = vld [vmem:[%s1 + $0x320] sm:$0xff]
    %v125 = vld [vmem:[%s1 + $0x328] sm:$0xff]
    %v126 = vld [vmem:[%s1 + $0x330] sm:$0xff]
    %v127 = vld [vmem:[%s1 + $0x338] sm:$0xff]
    %v128 = vld [vmem:[%s1 + $0x340] sm:$0xff]
    %v129 = vld [vmem:[%s1 + $0x348] sm:$0xff]
    %v130 = vld [vmem:[%s1 + $0x350] sm:$0xff]
    %v131 = vld [vmem:[%s1 + $0x358] sm:$0xff]
    %v132 = vld [vmem:[%s1 + $0x360] sm:$0xff]
    %v133 = vld [vmem:[%s1 + $0x368] sm:$0xff]
    %v134 = vld [vmem:[%s1 + $0x370] sm:$0xff]
    %v135 = vld [vmem:[%s1 + $0x378] sm:$0xff]
    %v136 = vld [vmem:[%s1 + $0x380] sm:$0xff]
    %v137 = vld [vmem:[%s1 + $0x388] sm:$0xff]
    %v138 = vld [vmem:[%s1 + $0x390] sm:$0xff]
    %v139 = vld [vmem:[%s1 + $0x398] sm:$0xff]
    %v140 = vld [vmem:[%s1 + $0x3a0] sm:$0xff]
    %v141 = vld [vmem:[%s1 + $0x3a8] sm:$0xff]
    %v142 = vld [vmem:[%s1 + $0x3b0] sm:$0xff]
    %v143 = vld [vmem:[%s1 + $0x3b8] sm:$0xff]
    %v144 = vld [vmem:[%s1 + $0x3c0] sm:$0xff]
    %v145 = vld [vmem:[%s1 + $0x3c8] sm:$0xff]
    %v146 = vld [vmem:[%s1 + $0x3d0] sm:$0xff]
    %v147 = vld [vmem:[%s1 + $0x3d8] sm:$0xff]
    %v148 = vld [vmem:[%s1 + $0x3e0] sm:$0xff]
    %v149 = vld [vmem:[%s1 + $0x3e8] sm:$0xff]
    %v150 = vld [vmem:[%s1 + $0x3f0] sm:$0xff]
    %v151 = vld [vmem:[%s1 + $0x3f8] sm:$0xff]
    %v152 = vld [vmem:[%s1 + $0x400] sm:$0xff]
    %v153 = vld [vmem:[%s1 + $0x408] sm:$0xff]
    %v154 = vld [vmem:[%s1 + $0x410] sm:$0xff]
    %v155 = vld [vmem:[%s1 + $0x418] sm:$0xff]
    %v156 = vld [vmem:[%s1 + $0x420] sm:$0xff]
    %v157 = vld [vmem:[%s1 + $0x428] sm:$0xff]
    %v158 = vld [vmem:[%s1 + $0x430] sm:$0xff]
    %v159 = vld [vmem:[%s1 + $0x438] sm:$0xff]
    %v160 = vld [vmem:[%s1 + $0x440] sm:$0xff]
    %v161 = vld [vmem:[%s1 + $0x448] sm:$0xff]
    %v162 = vld [vmem:[%s1 + $0x450] sm:$0xff]
    %v163 = vld [vmem:[%s1 + $0x458] sm:$0xff]
    %v164 = vld [vmem:[%s1 + $0x460] sm:$0xff]
    %v165 = vld [vmem:[%s1 + $0x468] sm:$0xff]
    %v166 = vld [vmem:[%s1 + $0x470] sm:$0xff]
    %v167 = vld [vmem:[%s1 + $0x478] sm:$0xff]
    %v168 = vld [vmem:[%s1 + $0x480] sm:$0xff]
    %v169 = vld [vmem:[%s1 + $0x488] sm:$0xff]
    %v170 = vld [vmem:[%s1 + $0x490] sm:$0xff]
    %v171 = vld [vmem:[%s1 + $0x498] sm:$0xff]
    %v172 = vld [vmem:[%s1 + $0x4a0] sm:$0xff]
    %v173 = vld [vmem:[%s1 + $0x4a8] sm:$0xff]
    %v174 = vld [vmem:[%s1 + $0x4b0] sm:$0xff]
    %v175 = vld [vmem:[%s1 + $0x4b8] sm:$0xff]
    %v176 = vld [vmem:[%s1 + $0x4c0] sm:$0xff]
    %v177 = vld [vmem:[%s1 + $0x4c8] sm:$0xff]
    %v178 = vld [vmem:[%s1 + $0x4d0] sm:$0xff]
    %v179 = vld [vmem:[%s1 + $0x4d8] sm:$0xff]
    %v180 = vld [vmem:[%s1 + $0x4e0] sm:$0xff]
    %v181 = vld [vmem:[%s1 + $0x4e8] sm:$0xff]
    %v182 = vld [vmem:[%s1 + $0x4f0] sm:$0xff]
    %v183 = vld [vmem:[%s1 + $0x4f8] sm:$0xff]
    %v184 = vld [vmem:[%s1 + $0x500] sm:$0xff]
    %v185 = vld [vmem:[%s1 + $0x508] sm:$0xff]
    %v186 = vld [vmem:[%s1 + $0x510] sm:$0xff]
    %v187 = vld [vmem:[%s1 + $0x518] sm:$0xff]
    %v188 = vld [vmem:[%s1 + $0x520] sm:$0xff]
    %v189 = vld [vmem:[%s1 + $0x528] sm:$0xff]
    %v190 = vld [vmem:[%s1 + $0x530] sm:$0xff]
    %v191 = vld [vmem:[%s1 + $0x538] sm:$0xff]
    %v192 = vld [vmem:[%s1 + $0x540] sm:$0xff]
    %v193 = vld [vmem:[%s1 + $0x548] sm:$0xff]
    %v194 = vld [vmem:[%s1 + $0x550] sm:$0xff]
    %v195 = vld [vmem:[%s1 + $0x558] sm:$0xff]
    %v196 = vld [vmem:[%s1 + $0x560] sm:$0xff]
    %v197 = vld [vmem:[%s1 + $0x568] sm:$0xff]
    %v198 = vld [vmem:[%s1 + $0x570] sm:$0xff]
    %v199 = vld [vmem:[%s1 + $0x578] sm:$0xff]
    %v200 = vld [vmem:[%s1 + $0x580] sm:$0xff]
    %v201 = vld [vmem:[%s1 + $0x588] sm:$0xff]
    %v202 = vld [vmem:[%s1 + $0x590] sm:$0xff]
    %v203 = vld [vmem:[%s1 + $0x598] sm:$0xff]
    %v204 = vld [vmem:[%s1 + $0x5a0] sm:$0xff]
    %v205 = vld [vmem:[%s1 + $0x5a8] sm:$0xff]
    %v206 = vld [vmem:[%s1 + $0x5b0] sm:$0xff]
    %v207 = vld [vmem:[%s1 + $0x5b8] sm:$0xff]
    %v208 = vld [vmem:[%s1 + $0x5c0] sm:$0xff]
    %v209 = vld [vmem:[%s1 + $0x5c8] sm:$0xff]
    %v210 = vld [vmem:[%s1 + $0x5d0] sm:$0xff]
    %v211 = vld [vmem:[%s1 + $0x5d8] sm:$0xff]
    %v212 = vld [vmem:[%s1 + $0x5e0] sm:$0xff]
    %v213 = vld [vmem:[%s1 + $0x5e8] sm:$0xff]
    %v214 = vld [vmem:[%s1 + $0x5f0] sm:$0xff]
    %v215 = vld [vmem:[%s1 + $0x5f8] sm:$0xff]
    %v216 = vld [vmem:[%s1 + $0x600] sm:$0xff]
    %v217 = vld [vmem:[%s1 + $0x608] sm:$0xff]
    %v218 = vld [vmem:[%s1 + $0x610] sm:$0xff]
    %v219 = vld [vmem:[%s1 + $0x618] sm:$0xff]
    %v220 = vld [vmem:[%s1 + $0x620] sm:$0xff]
    %v221 = vld [vmem:[%s1 + $0x628] sm:$0xff]
    %v222 = vld [vmem:[%s1 + $0x630] sm:$0xff]
    %v223 = vld [vmem:[%s1 + $0x638] sm:$0xff]
    %v224 = vld [vmem:[%s1 + $0x640] sm:$0xff]
    %v225 = vld [vmem:[%s1 + $0x648] sm:$0xff]
    %v226 = vld [vmem:[%s1 + $0x650] sm:$0xff]
    %v227 = vld [vmem:[%s1 + $0x658] sm:$0xff]
    %v228 = vld [vmem:[%s1 + $0x660] sm:$0xff]
    %v229 = vld [vmem:[%s1 + $0x668] sm:$0xff]
    %v230 = vld [vmem:[%s1 + $0x670] sm:$0xff]
    %v231 = vld [vmem:[%s1 + $0x678] sm:$0xff]
    %v232 = vld [vmem:[%s1 + $0x680] sm:$0xff]
    %v233 = vld [vmem:[%s1 + $0x688] sm:$0xff]
    %v234 = vld [vmem:[%s1 + $0x690] sm:$0xff]
    %v235 = vld [vmem:[%s1 + $0x698] sm:$0xff]
    %v236 = vld [vmem:[%s1 + $0x6a0] sm:$0xff]
    %v237 = vld [vmem:[%s1 + $0x6a8] sm:$0xff]
    %v238 = vld [vmem:[%s1 + $0x6b0] sm:$0xff]
    %v239 = vld [vmem:[%s1 + $0x6b8] sm:$0xff]
    %v240 = vld [vmem:[%s1 + $0x6c0] sm:$0xff]
    %v241 = vld [vmem:[%s1 + $0x6c8] sm:$0xff]
    %v242 = vld [vmem:[%s1 + $0x6d0] sm:$0xff]
    %v243 = vld [vmem:[%s1 + $0x6d8] sm:$0xff]
    %v244 = vld [vmem:[%s1 + $0x6e0] sm:$0xff]
    %v245 = vld [vmem:[%s1 + $0x6e8] sm:$0xff]
    %v246 = vld [vmem:[%s1 + $0x6f0] sm:$0xff]
    %v247 = vld [vmem:[%s1 + $0x6f8] sm:$0xff]
    %v248 = vld [vmem:[%s1 + $0x700] sm:$0xff]
    %v249 = vld [vmem:[%s1 + $0x708] sm:$0xff]
    %v250 = vld [vmem:[%s1 + $0x710] sm:$0xff]
    %v251 = vld [vmem:[%s1 + $0x718] sm:$0xff]
    %v252 = vld [vmem:[%s1 + $0x720] sm:$0xff]
    %v253 = vld [vmem:[%s1 + $0x728] sm:$0xff]
    %v254 = vld [vmem:[%s1 + $0x730] sm:$0xff]
    %v255 = vld [vmem:[%s1 + $0x738] sm:$0xff]
    %v256 = vld [vmem:[%s1 + $0x740] sm:$0xff]
    %v257 = vld [vmem:[%s1 + $0x748] sm:$0xff]
    %v258 = vld [vmem:[%s1 + $0x750] sm:$0xff]
    %v259 = vld [vmem:[%s1 + $0x758] sm:$0xff]
    %v260 = vld [vmem:[%s1 + $0x760] sm:$0xff]
    %v261 = vld [vmem:[%s1 + $0x768] sm:$0xff]
    %v262 = vld [vmem:[%s1 + $0x770] sm:$0xff]
    %v263 = vld [vmem:[%s1 + $0x778] sm:$0xff]
    %v264 = vld [vmem:[%s1 + $0x780] sm:$0xff]
    %v265 = vld [vmem:[%s1 + $0x788] sm:$0xff]
    %v266 = vld [vmem:[%s1 + $0x790] sm:$0xff]
    %v267 = vld [vmem:[%s1 + $0x798] sm:$0xff]
    %v268 = vld [vmem:[%s1 + $0x7a0] sm:$0xff]
    %v269 = vld [vmem:[%s1 + $0x7a8] sm:$0xff]
    %v270 = vld [vmem:[%s1 + $0x7b0] sm:$0xff]
    %v271 = vld [vmem:[%s1 + $0x7b8] sm:$0xff]
    %v272 = vld [vmem:[%s1 + $0x7c0] sm:$0xff]
    %v273 = vld [vmem:[%s1 + $0x7c8] sm:$0xff]
    %v274 = vld [vmem:[%s1 + $0x7d0] sm:$0xff]
    %v275 = vld [vmem:[%s1 + $0x7d8] sm:$0xff]
    %v276 = vld [vmem:[%s1 + $0x7e0] sm:$0xff]
    %v277 = vld [vmem:[%s1 + $0x7e8] sm:$0xff]
    %v278 = vld [vmem:[%s1 + $0x7f0] sm:$0xff]
    %v279 = vld [vmem:[%s1 + $0x7f8] sm:$0xff]
    %v280 = vld [vmem:[%s1 + $0x800] sm:$0xff]
    %v281 = vld [vmem:[%s1 + $0x808] sm:$0xff]
    %v282 = vld [vmem:[%s1 + $0x810] sm:$0xff]
    %v283 = vld [vmem:[%s1 + $0x818] sm:$0xff]
    %v284 = vld [vmem:[%s1 + $0x820] sm:$0xff]
    %v285 = vld [vmem:[%s1 + $0x828] sm:$0xff]
    %v286 = vld [vmem:[%s1 + $0x830] sm:$0xff]
    %v287 = vld [vmem:[%s1 + $0x838] sm:$0xff]
    %v288 = vld [vmem:[%s1 + $0x840] sm:$0xff]
    %v289 = vld [vmem:[%s1 + $0x848] sm:$0xff]
    %v290 = vld [vmem:[%s1 + $0x850] sm:$0xff]
    %v291 = vld [vmem:[%s1 + $0x858] sm:$0xff]
    %v292 = vld [vmem:[%s1 + $0x860] sm:$0xff]
    %v293 = vld [vmem:[%s1 + $0x868] sm:$0xff]
    %v294 = vld [vmem:[%s1 + $0x870] sm:$0xff]
    %v295 = vld [vmem:[%s1 + $0x878] sm:$0xff]
    %v296 = vld [vmem:[%s1 + $0x880] sm:$0xff]
    %v297 = vld [vmem:[%s1 + $0x888] sm:$0xff]
    %v298 = vld [vmem:[%s1 + $0x890] sm:$0xff]
    %v299 = vld [vmem:[%s1 + $0x898] sm:$0xff]
    %v300 = vld [vmem:[%s1 + $0x8a0] sm:$0xff]
    %v301 = vld [vmem:[%s1 + $0x8a8] sm:$0xff]
    %v302 = vld [vmem:[%s1 + $0x8b0] sm:$0xff]
    %v303 = vld [vmem:[%s1 + $0x8b8] sm:$0xff]
    %v304 = vld [vmem:[%s1 + $0x8c0] sm:$0xff]
    %v305 = vld [vmem:[%s1 + $0x8c8] sm:$0xff]
    %v306 = vld [vmem:[%s1 + $0x8d0] sm:$0xff]
    %v307 = vld [vmem:[%s1 + $0x8d8] sm:$0xff]
    %v308 = vld [vmem:[%s1 + $0x8e0] sm:$0xff]
    %v309 = vld [vmem:[%s1 + $0x8e8] sm:$0xff]
    %v310 = vld [vmem:[%s1 + $0x8f0] sm:$0xff]
    %v311 = vld [vmem:[%s1 + $0x8f8] sm:$0xff]
    %v312 = vld [vmem:[%s1 + $0x900] sm:$0xff]
    %v313 = vld [vmem:[%s1 + $0x908] sm:$0xff]
    %v314 = vld [vmem:[%s1 + $0x910] sm:$0xff]
    %v315 = vld [vmem:[%s1 + $0x918] sm:$0xff]
    %v316 = vld [vmem:[%s1 + $0x920] sm:$0xff]
    %v317 = vld [vmem:[%s1 + $0x928] sm:$0xff]
    %v318 = vld [vmem:[%s1 + $0x930] sm:$0xff]
    %v319 = vld [vmem:[%s1 + $0x938] sm:$0xff]
    %v320 = vld [vmem:[%s1 + $0x940] sm:$0xff]
    %v321 = vld [vmem:[%s1 + $0x948] sm:$0xff]
    %v322 = vld [vmem:[%s1 + $0x950] sm:$0xff]
    %v323 = vld [vmem:[%s1 + $0x958] sm:$0xff]
    %v324 = vld [vmem:[%s1 + $0x960] sm:$0xff]
    %v325 = vld [vmem:[%s1 + $0x968] sm:$0xff]
    %v326 = vld [vmem:[%s1 + $0x970] sm:$0xff]
    %v327 = vld [vmem:[%s1 + $0x978] sm:$0xff]
    %v328 = vld [vmem:[%s1 + $0x980] sm:$0xff]
    %v329 = vld [vmem:[%s1 + $0x988] sm:$0xff]
    %v330 = vld [vmem:[%s1 + $0x990] sm:$0xff]
    %v331 = vld [vmem:[%s1 + $0x998] sm:$0xff]
    %v332 = vld [vmem:[%s1 + $0x9a0] sm:$0xff]
    %v333 = vld [vmem:[%s1 + $0x9a8] sm:$0xff]
    %v334 = vld [vmem:[%s1 + $0x9b0] sm:$0xff]
    %v335 = vld [vmem:[%s1 + $0x9b8] sm:$0xff]
    %v336 = vld [vmem:[%s1 + $0x9c0] sm:$0xff]
    %v337 = vld [vmem:[%s1 + $0x9c8] sm:$0xff]
    %v338 = vld [vmem:[%s1 + $0x9d0] sm:$0xff]
    %v339 = vld [vmem:[%s1 + $0x9d8] sm:$0xff]
    %v340 = vld [vmem:[%s1 + $0x9e0] sm:$0xff]
    %v341 = vld [vmem:[%s1 + $0x9e8] sm:$0xff]
    %v342 = vld [vmem:[%s1 + $0x9f0] sm:$0xff]
    %v343 = vld [vmem:[%s1 + $0x9f8] sm:$0xff]
    %v344 = vld [vmem:[%s1 + $0xa00] sm:$0xff]
    %v345 = vld [vmem:[%s1 + $0xa08] sm:$0xff]
    %v346 = vld [vmem:[%s1 + $0xa10] sm:$0xff]
    %v347 = vld [vmem:[%s1 + $0xa18] sm:$0xff]
    %v348 = vld [vmem:[%s1 + $0xa20] sm:$0xff]
    %v349 = vld [vmem:[%s1 + $0xa28] sm:$0xff]
    %v350 = vld [vmem:[%s1 + $0xa30] sm:$0xff]
    %v351 = vld [vmem:[%s1 + $0xa38] sm:$0xff]
    %v352 = vld [vmem:[%s1 + $0xa40] sm:$0xff]
    %v353 = vld [vmem:[%s1 + $0xa48] sm:$0xff]
    %v354 = vld [vmem:[%s1 + $0xa50] sm:$0xff]
    %v355 = vld [vmem:[%s1 + $0xa58] sm:$0xff]
    %v356 = vld [vmem:[%s1 + $0xa60] sm:$0xff]
    %v357 = vld [vmem:[%s1 + $0xa68] sm:$0xff]
    %v358 = vld [vmem:[%s1 + $0xa70] sm:$0xff]
    %v359 = vld [vmem:[%s1 + $0xa78] sm:$0xff]
    %v360 = vld [vmem:[%s1 + $0xa80] sm:$0xff]
    %v361 = vld [vmem:[%s1 + $0xa88] sm:$0xff]
    %v362 = vld [vmem:[%s1 + $0xa90] sm:$0xff]
    %v363 = vld [vmem:[%s1 + $0xa98] sm:$0xff]
    %v364 = vld [vmem:[%s1 + $0xaa0] sm:$0xff]
    %v365 = vld [vmem:[%s1 + $0xaa8] sm:$0xff]
    %v366 = vld [vmem:[%s1 + $0xab0] sm:$0xff]
    %v367 = vld [vmem:[%s1 + $0xab8] sm:$0xff]
    %v368 = vld [vmem:[%s1 + $0xac0] sm:$0xff]
    %v369 = vld [vmem:[%s1 + $0xac8] sm:$0xff]
    %v370 = vld [vmem:[%s1 + $0xad0] sm:$0xff]
    %v371 = vld [vmem:[%s1 + $0xad8] sm:$0xff]
    %v372 = vld [vmem:[%s1 + $0xae0] sm:$0xff]
    %v373 = vld [vmem:[%s1 + $0xae8] sm:$0xff]
    %v374 = vld [vmem:[%s1 + $0xaf0] sm:$0xff]
    %v375 = vld [vmem:[%s1 + $0xaf8] sm:$0xff]
    %v376 = vld [vmem:[%s1 + $0xb00] sm:$0xff]
    %v377 = vld [vmem:[%s1 + $0xb08] sm:$0xff]
    %v378 = vld [vmem:[%s1 + $0xb10] sm:$0xff]
    %v379 = vld [vmem:[%s1 + $0xb18] sm:$0xff]
    %v380 = vld [vmem:[%s1 + $0xb20] sm:$0xff]
    %v381 = vld [vmem:[%s1 + $0xb28] sm:$0xff]
    %v382 = vld [vmem:[%s1 + $0xb30] sm:$0xff]
    %v383 = vld [vmem:[%s1 + $0xb38] sm:$0xff]
    %v384 = vld [vmem:[%s1 + $0xb40] sm:$0xff]
    %v385 = vld [vmem:[%s1 + $0xb48] sm:$0xff]
    %v386 = vld [vmem:[%s1 + $0xb50] sm:$0xff]
    %v387 = vld [vmem:[%s1 + $0xb58] sm:$0xff]
    %v388 = vld [vmem:[%s1 + $0xb60] sm:$0xff]
    %v389 = vld [vmem:[%s1 + $0xb68] sm:$0xff]
    %v390 = vld [vmem:[%s1 + $0xb70] sm:$0xff]
    %v391 = vld [vmem:[%s1 + $0xb78] sm:$0xff]
    %v392 = vld [vmem:[%s1 + $0xb80] sm:$0xff]
    %v393 = vld [vmem:[%s1 + $0xb88] sm:$0xff]
    %v394 = vld [vmem:[%s1 + $0xb90] sm:$0xff]
    %v395 = vld [vmem:[%s1 + $0xb98] sm:$0xff]
    %v396 = vld [vmem:[%s1 + $0xba0] sm:$0xff]
    %v397 = vld [vmem:[%s1 + $0xba8] sm:$0xff]
    %v398 = vld [vmem:[%s1 + $0xbb0] sm:$0xff]
    %v399 = vld [vmem:[%s1 + $0xbb8] sm:$0xff]
    %v400 = vld [vmem:[%s1 + $0xbc0] sm:$0xff]
    %v401 = vld [vmem:[%s1 + $0xbc8] sm:$0xff]
    %v402 = vld [vmem:[%s1 + $0xbd0] sm:$0xff]
    %v403 = vld [vmem:[%s1 + $0xbd8] sm:$0xff]
    %v404 = vld [vmem:[%s1 + $0xbe0] sm:$0xff]
    %v405 = vld [vmem:[%s1 + $0xbe8] sm:$0xff]
    %v406 = vld [vmem:[%s1 + $0xbf0] sm:$0xff]
    %v407 = vld [vmem:[%s1 + $0xbf8] sm:$0xff]
    %v408 = vld [vmem:[%s1 + $0xc00] sm:$0xff]
    %v409 = vld [vmem:[%s1 + $0xc08] sm:$0xff]
    %v410 = vld [vmem:[%s1 + $0xc10] sm:$0xff]
    %v411 = vld [vmem:[%s1 + $0xc18] sm:$0xff]
    %v412 = vld [vmem:[%s1 + $0xc20] sm:$0xff]
    %v413 = vld [vmem:[%s1 + $0xc28] sm:$0xff]
    %v414 = vld [vmem:[%s1 + $0xc30] sm:$0xff]
    %v415 = vld [vmem:[%s1 + $0xc38] sm:$0xff]
    %v416 = vld [vmem:[%s1 + $0xc40] sm:$0xff]
    %v417 = vld [vmem:[%s1 + $0xc48] sm:$0xff]
    %v418 = vld [vmem:[%s1 + $0xc50] sm:$0xff]
    %v419 = vld [vmem:[%s1 + $0xc58] sm:$0xff]
    %v420 = vld [vmem:[%s1 + $0xc60] sm:$0xff]
    %v421 = vld [vmem:[%s1 + $0xc68] sm:$0xff]
    %v422 = vld [vmem:[%s1 + $0xc70] sm:$0xff]
    %v423 = vld [vmem:[%s1 + $0xc78] sm:$0xff]
    %v424 = vld [vmem:[%s1 + $0xc80] sm:$0xff]
    %v425 = vld [vmem:[%s1 + $0xc88] sm:$0xff]
    %v426 = vld [vmem:[%s1 + $0xc90] sm:$0xff]
    %v427 = vld [vmem:[%s1 + $0xc98] sm:$0xff]
    %v428 = vld [vmem:[%s1 + $0xca0] sm:$0xff]
    %v429 = vld [vmem:[%s1 + $0xca8] sm:$0xff]
    %v430 = vld [vmem:[%s1 + $0xcb0] sm:$0xff]
    %v431 = vld [vmem:[%s1 + $0xcb8] sm:$0xff]
    %v432 = vld [vmem:[%s1 + $0xcc0] sm:$0xff]
    %v433 = vld [vmem:[%s1 + $0xcc8] sm:$0xff]
    %v434 = vld [vmem:[%s1 + $0xcd0] sm:$0xff]
    %v435 = vld [vmem:[%s1 + $0xcd8] sm:$0xff]
    %v436 = vld [vmem:[%s1 + $0xce0] sm:$0xff]
    %v437 = vld [vmem:[%s1 + $0xce8] sm:$0xff]
    %v438 = vld [vmem:[%s1 + $0xcf0] sm:$0xff]
    %v439 = vld [vmem:[%s1 + $0xcf8] sm:$0xff]
    %v440 = vld [vmem:[%s1 + $0xd00] sm:$0xff]
    %v441 = vld [vmem:[%s1 + $0xd08] sm:$0xff]
    %v442 = vld [vmem:[%s1 + $0xd10] sm:$0xff]
    %v443 = vld [vmem:[%s1 + $0xd18] sm:$0xff]
    %v444 = vld [vmem:[%s1 + $0xd20] sm:$0xff]
    %v445 = vld [vmem:[%s1 + $0xd28] sm:$0xff]
    %v446 = vld [vmem:[%s1 + $0xd30] sm:$0xff]
    %v447 = vld [vmem:[%s1 + $0xd38] sm:$0xff]
    %v448 = vld [vmem:[%s1 + $0xd40] sm:$0xff]
    %v449 = vld [vmem:[%s1 + $0xd48] sm:$0xff]
    %v450 = vld [vmem:[%s1 + $0xd50] sm:$0xff]
    %v451 = vld [vmem:[%s1 + $0xd58] sm:$0xff]
    %v452 = vld [vmem:[%s1 + $0xd60] sm:$0xff]
    %v453 = vld [vmem:[%s1 + $0xd68] sm:$0xff]
    %v454 = vld [vmem:[%s1 + $0xd70] sm:$0xff]
    %v455 = vld [vmem:[%s1 + $0xd78] sm:$0xff]
    %v456 = vld [vmem:[%s1 + $0xd80] sm:$0xff]
    %v457 = vld [vmem:[%s1 + $0xd88] sm:$0xff]
    %v458 = vld [vmem:[%s1 + $0xd90] sm:$0xff]
    %v459 = vld [vmem:[%s1 + $0xd98] sm:$0xff]
    %v460 = vld [vmem:[%s1 + $0xda0] sm:$0xff]
    %v461 = vld [vmem:[%s1 + $0xda8] sm:$0xff]
    %v462 = vld [vmem:[%s1 + $0xdb0] sm:$0xff]
    %v463 = vld [vmem:[%s1 + $0xdb8] sm:$0xff]
    %v464 = vld [vmem:[%s1 + $0xdc0] sm:$0xff]
    %v465 = vld [vmem:[%s1 + $0xdc8] sm:$0xff]
    %v466 = vld [vmem:[%s1 + $0xdd0] sm:$0xff]
    %v467 = vld [vmem:[%s1 + $0xdd8] sm:$0xff]
    %v468 = vld [vmem:[%s1 + $0xde0] sm:$0xff]
    %v469 = vld [vmem:[%s1 + $0xde8] sm:$0xff]
    %v470 = vld [vmem:[%s1 + $0xdf0] sm:$0xff]
    %v471 = vld [vmem:[%s1 + $0xdf8] sm:$0xff]
    %v472 = vld [vmem:[%s1 + $0xe00] sm:$0xff]
    %v473 = vld [vmem:[%s1 + $0xe08] sm:$0xff]
    %v474 = vld [vmem:[%s1 + $0xe10] sm:$0xff]
    %v475 = vld [vmem:[%s1 + $0xe18] sm:$0xff]
    %v476 = vld [vmem:[%s1 + $0xe20] sm:$0xff]
    %v477 = vld [vmem:[%s1 + $0xe28] sm:$0xff]
    %v478 = vld [vmem:[%s1 + $0xe30] sm:$0xff]
    %v479 = vld [vmem:[%s1 + $0xe38] sm:$0xff]
    %v480 = vld [vmem:[%s1 + $0xe40] sm:$0xff]
    %v481 = vld [vmem:[%s1 + $0xe48] sm:$0xff]
    %v482 = vld [vmem:[%s1 + $0xe50] sm:$0xff]
    %v483 = vld [vmem:[%s1 + $0xe58] sm:$0xff]
    %v484 = vld [vmem:[%s1 + $0xe60] sm:$0xff]
    %v485 = vld [vmem:[%s1 + $0xe68] sm:$0xff]
    %v486 = vld [vmem:[%s1 + $0xe70] sm:$0xff]
    %v487 = vld [vmem:[%s1 + $0xe78] sm:$0xff]
    %v488 = vld [vmem:[%s1 + $0xe80] sm:$0xff]
    %v489 = vld [vmem:[%s1 + $0xe88] sm:$0xff]
    %v490 = vld [vmem:[%s1 + $0xe90] sm:$0xff]
    %v491 = vld [vmem:[%s1 + $0xe98] sm:$0xff]
    %v492 = vld [vmem:[%s1 + $0xea0] sm:$0xff]
    %v493 = vld [vmem:[%s1 + $0xea8] sm:$0xff]
    %v494 = vld [vmem:[%s1 + $0xeb0] sm:$0xff]
    %v495 = vld [vmem:[%s1 + $0xeb8] sm:$0xff]
    %v496 = vld [vmem:[%s1 + $0xec0] sm:$0xff]
    %v497 = vld [vmem:[%s1 + $0xec8] sm:$0xff]
    %v498 = vld [vmem:[%s1 + $0xed0] sm:$0xff]
    %v499 = vld [vmem:[%s1 + $0xed8] sm:$0xff]
    %v500 = vld [vmem:[%s1 + $0xee0] sm:$0xff]
    %v501 = vld [vmem:[%s1 + $0xee8] sm:$0xff]
    %v502 = vld [vmem:[%s1 + $0xef0] sm:$0xff]
    %v503 = vld [vmem:[%s1 + $0xef8] sm:$0xff]
    %v504 = vld [vmem:[%s1 + $0xf00] sm:$0xff]
    %v505 = vld [vmem:[%s1 + $0xf08] sm:$0xff]
    %v506 = vld [vmem:[%s1 + $0xf10] sm:$0xff]
    %v507 = vld [vmem:[%s1 + $0xf18] sm:$0xff]
    %v508 = vld [vmem:[%s1 + $0xf20] sm:$0xff]
    %v509 = vld [vmem:[%s1 + $0xf28] sm:$0xff]
    %v510 = vld [vmem:[%s1 + $0xf30] sm:$0xff]
    %v511 = vld [vmem:[%s1 + $0xf38] sm:$0xff]
    %v512 = vld [vmem:[%s1 + $0xf40] sm:$0xff]
    %v513 = vld [vmem:[%s1 + $0xf48] sm:$0xff]
    %v514 = vld [vmem:[%s1 + $0xf50] sm:$0xff]
    %v515 = vld [vmem:[%s1 + $0xf58] sm:$0xff]
    %v516 = vld [vmem:[%s1 + $0xf60] sm:$0xff]
    %v517 = vld [vmem:[%s1 + $0xf68] sm:$0xff]
    %v518 = vld [vmem:[%s1 + $0xf70] sm:$0xff]
    %v519 = vld [vmem:[%s1 + $0xf78] sm:$0xff]
    %v520 = vld [vmem:[%s1 + $0xf80] sm:$0xff]
    %v521 = vld [vmem:[%s1 + $0xf88] sm:$0xff]
    %v522 = vld [vmem:[%s1 + $0xf90] sm:$0xff]
    %v523 = vld [vmem:[%s1 + $0xf98] sm:$0xff]
    %v524 = vld [vmem:[%s1 + $0xfa0] sm:$0xff]
    %v525 = vld [vmem:[%s1 + $0xfa8] sm:$0xff]
    %v526 = vld [vmem:[%s1 + $0xfb0] sm:$0xff]
    %v527 = vld [vmem:[%s1 + $0xfb8] sm:$0xff]
    %v528 = vld [vmem:[%s1 + $0xfc0] sm:$0xff]
    %v529 = vld [vmem:[%s1 + $0xfc8] sm:$0xff]
    %v530 = vld [vmem:[%s1 + $0xfd0] sm:$0xff]
    %v531 = vld [vmem:[%s1 + $0xfd8] sm:$0xff]
    %v532 = vld [vmem:[%s1 + $0xfe0] sm:$0xff]
    %v533 = vld [vmem:[%s1 + $0xfe8] sm:$0xff]
    %v534 = vld [vmem:[%s1 + $0xff0] sm:$0xff]
    %v535 = vld [vmem:[%s1 + $0xff8] sm:$0xff]
    %v536 = vld [vmem:[%s2] sm:$0xf]
    %v538 = vlaneseq
    %v539 = vshrl.u32 %v538, 7
    %v540 = vsub.s32 0, %v539
    %v541 = vrot.slane %v536, %v540
    %v542 = vlaneseq
    %v543 = vshrl.u32 %v542, 7
    %v544 = vsub.s32 1, %v543
    %v545 = vrot.slane %v536, %v544
    %v546 = vlaneseq
    %v547 = vshrl.u32 %v546, 7
    %v548 = vsub.s32 2, %v547
    %v549 = vrot.slane %v536, %v548
    %v550 = vlaneseq
    %v551 = vshrl.u32 %v550, 7
    %v552 = vsub.s32 3, %v551
    %v553 = vrot.slane %v536, %v552
    %v560 = vcombine.high %v22, %v22
    %v562 = vunpack.c.l.s4 1966171168
    %v563 = vunpack.c.0.s8 %v562
    %v564 = vlaneseq
    %v565 = vshrl.u32 %v564, 7
    %v566 = vsub.s32 %v563, %v565
    %v567 = vrot.slane %v22, %v566
    %v569 = vunpack.c.l.s4 1966171168
    %v570 = vunpack.c.0.s8 %v569
    %v571 = vlaneseq
    %v572 = vshrl.u32 %v571, 7
    %v573 = vsub.s32 %v570, %v572
    %v574 = vrot.slane %v560, %v573
    %v575 = vcombine.high %v567, %v567
    %v576 = vcombine.high %v574, %v574
    %v578 = vunpack.c.l.s4 1966171168
    %v579 = vunpack.c.0.s8 %v578
    %v580 = vlaneseq
    %v581 = vshrl.u32 %v580, 7
    %v582 = vsub.s32 %v579, %v581
    %v583 = vrot.slane %v567, %v582
    %v585 = vunpack.c.l.s4 1966171168
    %v586 = vunpack.c.0.s8 %v585
    %v587 = vlaneseq
    %v588 = vshrl.u32 %v587, 7
    %v589 = vsub.s32 %v586, %v588
    %v590 = vrot.slane %v574, %v589
    %v592 = vunpack.c.l.s4 1966171168
    %v593 = vunpack.c.0.s8 %v592
    %v594 = vlaneseq
    %v595 = vshrl.u32 %v594, 7
    %v596 = vsub.s32 %v593, %v595
    %v597 = vrot.slane %v575, %v596
    %v599 = vunpack.c.l.s4 1966171168
    %v600 = vunpack.c.0.s8 %v599
    %v601 = vlaneseq
    %v602 = vshrl.u32 %v601, 7
    %v603 = vsub.s32 %v600, %v602
    %v604 = vrot.slane %v576, %v603
    %v605 = vcombine.high %v583, %v583
    %v606 = vcombine.high %v590, %v590
    %v607 = vcombine.high %v597, %v597
    %v608 = vcombine.high %v604, %v604
    %v609 = vcombine.high %v23, %v23
    %v611 = vunpack.c.l.s4 1966171168
    %v612 = vunpack.c.0.s8 %v611
    %v613 = vlaneseq
    %v614 = vshrl.u32 %v613, 7
    %v615 = vsub.s32 %v612, %v614
    %v616 = vrot.slane %v23, %v615
    %v618 = vunpack.c.l.s4 1966171168
    %v619 = vunpack.c.0.s8 %v618
    %v620 = vlaneseq
    %v621 = vshrl.u32 %v620, 7
    %v622 = vsub.s32 %v619, %v621
    %v623 = vrot.slane %v609, %v622
    %v624 = vcombine.high %v616, %v616
    %v625 = vcombine.high %v623, %v623
    %v627 = vunpack.c.l.s4 1966171168
    %v628 = vunpack.c.0.s8 %v627
    %v629 = vlaneseq
    %v630 = vshrl.u32 %v629, 7
    %v631 = vsub.s32 %v628, %v630
    %v632 = vrot.slane %v616, %v631
    %v634 = vunpack.c.l.s4 1966171168
    %v635 = vunpack.c.0.s8 %v634
    %v636 = vlaneseq
    %v637 = vshrl.u32 %v636, 7
    %v638 = vsub.s32 %v635, %v637
    %v639 = vrot.slane %v623, %v638
    %v641 = vunpack.c.l.s4 1966171168
    %v642 = vunpack.c.0.s8 %v641
    %v643 = vlaneseq
    %v644 = vshrl.u32 %v643, 7
    %v645 = vsub.s32 %v642, %v644
    %v646 = vrot.slane %v624, %v645
    %v648 = vunpack.c.l.s4 1966171168
    %v649 = vunpack.c.0.s8 %v648
    %v650 = vlaneseq
    %v651 = vshrl.u32 %v650, 7
    %v652 = vsub.s32 %v649, %v651
    %v653 = vrot.slane %v625, %v652
    %v654 = vcombine.high %v632, %v632
    %v655 = vcombine.high %v639, %v639
    %v656 = vcombine.high %v646, %v646
    %v657 = vcombine.high %v653, %v653
    %v1186 = vunpack.c.l.b16 %v24
    %v1187 = vunpack.c.h.b16 %v24
    %v1188 = vunpack.c.l.b16 %v25
    %v1189 = vunpack.c.h.b16 %v25
    %v1190 = vunpack.c.l.b16 %v26
    %v1191 = vunpack.c.h.b16 %v26
    %v1192 = vunpack.c.l.b16 %v27
    %v1193 = vunpack.c.h.b16 %v27
    %v1194 = vunpack.c.l.b16 %v28
    %v1195 = vunpack.c.h.b16 %v28
    %v1196 = vunpack.c.l.b16 %v29
    %v1197 = vunpack.c.h.b16 %v29
    %v1198 = vunpack.c.l.b16 %v30
    %v1199 = vunpack.c.h.b16 %v30
    %v1200 = vunpack.c.l.b16 %v31
    %v1201 = vunpack.c.h.b16 %v31
    %v1202 = vunpack.c.l.b16 %v32
    %v1203 = vunpack.c.h.b16 %v32
    %v1204 = vunpack.c.l.b16 %v33
    %v1205 = vunpack.c.h.b16 %v33
    %v1206 = vunpack.c.l.b16 %v34
    %v1207 = vunpack.c.h.b16 %v34
    %v1208 = vunpack.c.l.b16 %v35
    %v1209 = vunpack.c.h.b16 %v35
    %v1210 = vunpack.c.l.b16 %v36
    %v1211 = vunpack.c.h.b16 %v36
    %v1212 = vunpack.c.l.b16 %v37
    %v1213 = vunpack.c.h.b16 %v37
    %v1214 = vunpack.c.l.b16 %v38
    %v1215 = vunpack.c.h.b16 %v38
    %v1216 = vunpack.c.l.b16 %v39
    %v1217 = vunpack.c.h.b16 %v39
    %v1218 = vunpack.c.l.b16 %v40
    %v1219 = vunpack.c.h.b16 %v40
    %v1220 = vunpack.c.l.b16 %v41
    %v1221 = vunpack.c.h.b16 %v41
    %v1222 = vunpack.c.l.b16 %v42
    %v1223 = vunpack.c.h.b16 %v42
    %v1224 = vunpack.c.l.b16 %v43
    %v1225 = vunpack.c.h.b16 %v43
    %v1226 = vunpack.c.l.b16 %v44
    %v1227 = vunpack.c.h.b16 %v44
    %v1228 = vunpack.c.l.b16 %v45
    %v1229 = vunpack.c.h.b16 %v45
    %v1230 = vunpack.c.l.b16 %v46
    %v1231 = vunpack.c.h.b16 %v46
    %v1232 = vunpack.c.l.b16 %v47
    %v1233 = vunpack.c.h.b16 %v47
    %v1234 = vunpack.c.l.b16 %v48
    %v1235 = vunpack.c.h.b16 %v48
    %v1236 = vunpack.c.l.b16 %v49
    %v1237 = vunpack.c.h.b16 %v49
    %v1238 = vunpack.c.l.b16 %v50
    %v1239 = vunpack.c.h.b16 %v50
    %v1240 = vunpack.c.l.b16 %v51
    %v1241 = vunpack.c.h.b16 %v51
    %v1242 = vunpack.c.l.b16 %v52
    %v1243 = vunpack.c.h.b16 %v52
    %v1244 = vunpack.c.l.b16 %v53
    %v1245 = vunpack.c.h.b16 %v53
    %v1246 = vunpack.c.l.b16 %v54
    %v1247 = vunpack.c.h.b16 %v54
    %v1248 = vunpack.c.l.b16 %v55
    %v1249 = vunpack.c.h.b16 %v55
    %v1250 = vunpack.c.l.b16 %v56
    %v1251 = vunpack.c.h.b16 %v56
    %v1252 = vunpack.c.l.b16 %v57
    %v1253 = vunpack.c.h.b16 %v57
    %v1254 = vunpack.c.l.b16 %v58
    %v1255 = vunpack.c.h.b16 %v58
    %v1256 = vunpack.c.l.b16 %v59
    %v1257 = vunpack.c.h.b16 %v59
    %v1258 = vunpack.c.l.b16 %v60
    %v1259 = vunpack.c.h.b16 %v60
    %v1260 = vunpack.c.l.b16 %v61
    %v1261 = vunpack.c.h.b16 %v61
    %v1262 = vunpack.c.l.b16 %v62
    %v1263 = vunpack.c.h.b16 %v62
    %v1264 = vunpack.c.l.b16 %v63
    %v1265 = vunpack.c.h.b16 %v63
    %v1266 = vunpack.c.l.b16 %v64
    %v1267 = vunpack.c.h.b16 %v64
    %v1268 = vunpack.c.l.b16 %v65
    %v1269 = vunpack.c.h.b16 %v65
    %v1270 = vunpack.c.l.b16 %v66
    %v1271 = vunpack.c.h.b16 %v66
    %v1272 = vunpack.c.l.b16 %v67
    %v1273 = vunpack.c.h.b16 %v67
    %v1274 = vunpack.c.l.b16 %v68
    %v1275 = vunpack.c.h.b16 %v68
    %v1276 = vunpack.c.l.b16 %v69
    %v1277 = vunpack.c.h.b16 %v69
    %v1278 = vunpack.c.l.b16 %v70
    %v1279 = vunpack.c.h.b16 %v70
    %v1280 = vunpack.c.l.b16 %v71
    %v1281 = vunpack.c.h.b16 %v71
    %v1282 = vunpack.c.l.b16 %v72
    %v1283 = vunpack.c.h.b16 %v72
    %v1284 = vunpack.c.l.b16 %v73
    %v1285 = vunpack.c.h.b16 %v73
    %v1286 = vunpack.c.l.b16 %v74
    %v1287 = vunpack.c.h.b16 %v74
    %v1288 = vunpack.c.l.b16 %v75
    %v1289 = vunpack.c.h.b16 %v75
    %v1290 = vunpack.c.l.b16 %v76
    %v1291 = vunpack.c.h.b16 %v76
    %v1292 = vunpack.c.l.b16 %v77
    %v1293 = vunpack.c.h.b16 %v77
    %v1294 = vunpack.c.l.b16 %v78
    %v1295 = vunpack.c.h.b16 %v78
    %v1296 = vunpack.c.l.b16 %v79
    %v1297 = vunpack.c.h.b16 %v79
    %v1298 = vunpack.c.l.b16 %v80
    %v1299 = vunpack.c.h.b16 %v80
    %v1300 = vunpack.c.l.b16 %v81
    %v1301 = vunpack.c.h.b16 %v81
    %v1302 = vunpack.c.l.b16 %v82
    %v1303 = vunpack.c.h.b16 %v82
    %v1304 = vunpack.c.l.b16 %v83
    %v1305 = vunpack.c.h.b16 %v83
    %v1306 = vunpack.c.l.b16 %v84
    %v1307 = vunpack.c.h.b16 %v84
    %v1308 = vunpack.c.l.b16 %v85
    %v1309 = vunpack.c.h.b16 %v85
    %v1310 = vunpack.c.l.b16 %v86
    %v1311 = vunpack.c.h.b16 %v86
    %v1312 = vunpack.c.l.b16 %v87
    %v1313 = vunpack.c.h.b16 %v87
    %v1314 = vunpack.c.l.b16 %v88
    %v1315 = vunpack.c.h.b16 %v88
    %v1316 = vunpack.c.l.b16 %v89
    %v1317 = vunpack.c.h.b16 %v89
    %v1318 = vunpack.c.l.b16 %v90
    %v1319 = vunpack.c.h.b16 %v90
    %v1320 = vunpack.c.l.b16 %v91
    %v1321 = vunpack.c.h.b16 %v91
    %v1322 = vunpack.c.l.b16 %v92
    %v1323 = vunpack.c.h.b16 %v92
    %v1324 = vunpack.c.l.b16 %v93
    %v1325 = vunpack.c.h.b16 %v93
    %v1326 = vunpack.c.l.b16 %v94
    %v1327 = vunpack.c.h.b16 %v94
    %v1328 = vunpack.c.l.b16 %v95
    %v1329 = vunpack.c.h.b16 %v95
    %v1330 = vunpack.c.l.b16 %v96
    %v1331 = vunpack.c.h.b16 %v96
    %v1332 = vunpack.c.l.b16 %v97
    %v1333 = vunpack.c.h.b16 %v97
    %v1334 = vunpack.c.l.b16 %v98
    %v1335 = vunpack.c.h.b16 %v98
    %v1336 = vunpack.c.l.b16 %v99
    %v1337 = vunpack.c.h.b16 %v99
    %v1338 = vunpack.c.l.b16 %v100
    %v1339 = vunpack.c.h.b16 %v100
    %v1340 = vunpack.c.l.b16 %v101
    %v1341 = vunpack.c.h.b16 %v101
    %v1342 = vunpack.c.l.b16 %v102
    %v1343 = vunpack.c.h.b16 %v102
    %v1344 = vunpack.c.l.b16 %v103
    %v1345 = vunpack.c.h.b16 %v103
    %v1346 = vunpack.c.l.b16 %v104
    %v1347 = vunpack.c.h.b16 %v104
    %v1348 = vunpack.c.l.b16 %v105
    %v1349 = vunpack.c.h.b16 %v105
    %v1350 = vunpack.c.l.b16 %v106
    %v1351 = vunpack.c.h.b16 %v106
    %v1352 = vunpack.c.l.b16 %v107
    %v1353 = vunpack.c.h.b16 %v107
    %v1354 = vunpack.c.l.b16 %v108
    %v1355 = vunpack.c.h.b16 %v108
    %v1356 = vunpack.c.l.b16 %v109
    %v1357 = vunpack.c.h.b16 %v109
    %v1358 = vunpack.c.l.b16 %v110
    %v1359 = vunpack.c.h.b16 %v110
    %v1360 = vunpack.c.l.b16 %v111
    %v1361 = vunpack.c.h.b16 %v111
    %v1362 = vunpack.c.l.b16 %v112
    %v1363 = vunpack.c.h.b16 %v112
    %v1364 = vunpack.c.l.b16 %v113
    %v1365 = vunpack.c.h.b16 %v113
    %v1366 = vunpack.c.l.b16 %v114
    %v1367 = vunpack.c.h.b16 %v114
    %v1368 = vunpack.c.l.b16 %v115
    %v1369 = vunpack.c.h.b16 %v115
    %v1370 = vunpack.c.l.b16 %v116
    %v1371 = vunpack.c.h.b16 %v116
    %v1372 = vunpack.c.l.b16 %v117
    %v1373 = vunpack.c.h.b16 %v117
    %v1374 = vunpack.c.l.b16 %v118
    %v1375 = vunpack.c.h.b16 %v118
    %v1376 = vunpack.c.l.b16 %v119
    %v1377 = vunpack.c.h.b16 %v119
    %v1378 = vunpack.c.l.b16 %v120
    %v1379 = vunpack.c.h.b16 %v120
    %v1380 = vunpack.c.l.b16 %v121
    %v1381 = vunpack.c.h.b16 %v121
    %v1382 = vunpack.c.l.b16 %v122
    %v1383 = vunpack.c.h.b16 %v122
    %v1384 = vunpack.c.l.b16 %v123
    %v1385 = vunpack.c.h.b16 %v123
    %v1386 = vunpack.c.l.b16 %v124
    %v1387 = vunpack.c.h.b16 %v124
    %v1388 = vunpack.c.l.b16 %v125
    %v1389 = vunpack.c.h.b16 %v125
    %v1390 = vunpack.c.l.b16 %v126
    %v1391 = vunpack.c.h.b16 %v126
    %v1392 = vunpack.c.l.b16 %v127
    %v1393 = vunpack.c.h.b16 %v127
    %v1394 = vunpack.c.l.b16 %v128
    %v1395 = vunpack.c.h.b16 %v128
    %v1396 = vunpack.c.l.b16 %v129
    %v1397 = vunpack.c.h.b16 %v129
    %v1398 = vunpack.c.l.b16 %v130
    %v1399 = vunpack.c.h.b16 %v130
    %v1400 = vunpack.c.l.b16 %v131
    %v1401 = vunpack.c.h.b16 %v131
    %v1402 = vunpack.c.l.b16 %v132
    %v1403 = vunpack.c.h.b16 %v132
    %v1404 = vunpack.c.l.b16 %v133
    %v1405 = vunpack.c.h.b16 %v133
    %v1406 = vunpack.c.l.b16 %v134
    %v1407 = vunpack.c.h.b16 %v134
    %v1408 = vunpack.c.l.b16 %v135
    %v1409 = vunpack.c.h.b16 %v135
    %v1410 = vunpack.c.l.b16 %v136
    %v1411 = vunpack.c.h.b16 %v136
    %v1412 = vunpack.c.l.b16 %v137
    %v1413 = vunpack.c.h.b16 %v137
    %v1414 = vunpack.c.l.b16 %v138
    %v1415 = vunpack.c.h.b16 %v138
    %v1416 = vunpack.c.l.b16 %v139
    %v1417 = vunpack.c.h.b16 %v139
    %v1418 = vunpack.c.l.b16 %v140
    %v1419 = vunpack.c.h.b16 %v140
    %v1420 = vunpack.c.l.b16 %v141
    %v1421 = vunpack.c.h.b16 %v141
    %v1422 = vunpack.c.l.b16 %v142
    %v1423 = vunpack.c.h.b16 %v142
    %v1424 = vunpack.c.l.b16 %v143
    %v1425 = vunpack.c.h.b16 %v143
    %v1426 = vunpack.c.l.b16 %v144
    %v1427 = vunpack.c.h.b16 %v144
    %v1428 = vunpack.c.l.b16 %v145
    %v1429 = vunpack.c.h.b16 %v145
    %v1430 = vunpack.c.l.b16 %v146
    %v1431 = vunpack.c.h.b16 %v146
    %v1432 = vunpack.c.l.b16 %v147
    %v1433 = vunpack.c.h.b16 %v147
    %v1434 = vunpack.c.l.b16 %v148
    %v1435 = vunpack.c.h.b16 %v148
    %v1436 = vunpack.c.l.b16 %v149
    %v1437 = vunpack.c.h.b16 %v149
    %v1438 = vunpack.c.l.b16 %v150
    %v1439 = vunpack.c.h.b16 %v150
    %v1440 = vunpack.c.l.b16 %v151
    %v1441 = vunpack.c.h.b16 %v151
    %v1442 = vunpack.c.l.b16 %v152
    %v1443 = vunpack.c.h.b16 %v152
    %v1444 = vunpack.c.l.b16 %v153
    %v1445 = vunpack.c.h.b16 %v153
    %v1446 = vunpack.c.l.b16 %v154
    %v1447 = vunpack.c.h.b16 %v154
    %v1448 = vunpack.c.l.b16 %v155
    %v1449 = vunpack.c.h.b16 %v155
    %v1450 = vunpack.c.l.b16 %v156
    %v1451 = vunpack.c.h.b16 %v156
    %v1452 = vunpack.c.l.b16 %v157
    %v1453 = vunpack.c.h.b16 %v157
    %v1454 = vunpack.c.l.b16 %v158
    %v1455 = vunpack.c.h.b16 %v158
    %v1456 = vunpack.c.l.b16 %v159
    %v1457 = vunpack.c.h.b16 %v159
    %v1458 = vunpack.c.l.b16 %v160
    %v1459 = vunpack.c.h.b16 %v160
    %v1460 = vunpack.c.l.b16 %v161
    %v1461 = vunpack.c.h.b16 %v161
    %v1462 = vunpack.c.l.b16 %v162
    %v1463 = vunpack.c.h.b16 %v162
    %v1464 = vunpack.c.l.b16 %v163
    %v1465 = vunpack.c.h.b16 %v163
    %v1466 = vunpack.c.l.b16 %v164
    %v1467 = vunpack.c.h.b16 %v164
    %v1468 = vunpack.c.l.b16 %v165
    %v1469 = vunpack.c.h.b16 %v165
    %v1470 = vunpack.c.l.b16 %v166
    %v1471 = vunpack.c.h.b16 %v166
    %v1472 = vunpack.c.l.b16 %v167
    %v1473 = vunpack.c.h.b16 %v167
    %v1474 = vunpack.c.l.b16 %v168
    %v1475 = vunpack.c.h.b16 %v168
    %v1476 = vunpack.c.l.b16 %v169
    %v1477 = vunpack.c.h.b16 %v169
    %v1478 = vunpack.c.l.b16 %v170
    %v1479 = vunpack.c.h.b16 %v170
    %v1480 = vunpack.c.l.b16 %v171
    %v1481 = vunpack.c.h.b16 %v171
    %v1482 = vunpack.c.l.b16 %v172
    %v1483 = vunpack.c.h.b16 %v172
    %v1484 = vunpack.c.l.b16 %v173
    %v1485 = vunpack.c.h.b16 %v173
    %v1486 = vunpack.c.l.b16 %v174
    %v1487 = vunpack.c.h.b16 %v174
    %v1488 = vunpack.c.l.b16 %v175
    %v1489 = vunpack.c.h.b16 %v175
    %v1490 = vunpack.c.l.b16 %v176
    %v1491 = vunpack.c.h.b16 %v176
    %v1492 = vunpack.c.l.b16 %v177
    %v1493 = vunpack.c.h.b16 %v177
    %v1494 = vunpack.c.l.b16 %v178
    %v1495 = vunpack.c.h.b16 %v178
    %v1496 = vunpack.c.l.b16 %v179
    %v1497 = vunpack.c.h.b16 %v179
    %v1498 = vunpack.c.l.b16 %v180
    %v1499 = vunpack.c.h.b16 %v180
    %v1500 = vunpack.c.l.b16 %v181
    %v1501 = vunpack.c.h.b16 %v181
    %v1502 = vunpack.c.l.b16 %v182
    %v1503 = vunpack.c.h.b16 %v182
    %v1504 = vunpack.c.l.b16 %v183
    %v1505 = vunpack.c.h.b16 %v183
    %v1506 = vunpack.c.l.b16 %v184
    %v1507 = vunpack.c.h.b16 %v184
    %v1508 = vunpack.c.l.b16 %v185
    %v1509 = vunpack.c.h.b16 %v185
    %v1510 = vunpack.c.l.b16 %v186
    %v1511 = vunpack.c.h.b16 %v186
    %v1512 = vunpack.c.l.b16 %v187
    %v1513 = vunpack.c.h.b16 %v187
    %v1514 = vunpack.c.l.b16 %v188
    %v1515 = vunpack.c.h.b16 %v188
    %v1516 = vunpack.c.l.b16 %v189
    %v1517 = vunpack.c.h.b16 %v189
    %v1518 = vunpack.c.l.b16 %v190
    %v1519 = vunpack.c.h.b16 %v190
    %v1520 = vunpack.c.l.b16 %v191
    %v1521 = vunpack.c.h.b16 %v191
    %v1522 = vunpack.c.l.b16 %v192
    %v1523 = vunpack.c.h.b16 %v192
    %v1524 = vunpack.c.l.b16 %v193
    %v1525 = vunpack.c.h.b16 %v193
    %v1526 = vunpack.c.l.b16 %v194
    %v1527 = vunpack.c.h.b16 %v194
    %v1528 = vunpack.c.l.b16 %v195
    %v1529 = vunpack.c.h.b16 %v195
    %v1530 = vunpack.c.l.b16 %v196
    %v1531 = vunpack.c.h.b16 %v196
    %v1532 = vunpack.c.l.b16 %v197
    %v1533 = vunpack.c.h.b16 %v197
    %v1534 = vunpack.c.l.b16 %v198
    %v1535 = vunpack.c.h.b16 %v198
    %v1536 = vunpack.c.l.b16 %v199
    %v1537 = vunpack.c.h.b16 %v199
    %v1538 = vunpack.c.l.b16 %v200
    %v1539 = vunpack.c.h.b16 %v200
    %v1540 = vunpack.c.l.b16 %v201
    %v1541 = vunpack.c.h.b16 %v201
    %v1542 = vunpack.c.l.b16 %v202
    %v1543 = vunpack.c.h.b16 %v202
    %v1544 = vunpack.c.l.b16 %v203
    %v1545 = vunpack.c.h.b16 %v203
    %v1546 = vunpack.c.l.b16 %v204
    %v1547 = vunpack.c.h.b16 %v204
    %v1548 = vunpack.c.l.b16 %v205
    %v1549 = vunpack.c.h.b16 %v205
    %v1550 = vunpack.c.l.b16 %v206
    %v1551 = vunpack.c.h.b16 %v206
    %v1552 = vunpack.c.l.b16 %v207
    %v1553 = vunpack.c.h.b16 %v207
    %v1554 = vunpack.c.l.b16 %v208
    %v1555 = vunpack.c.h.b16 %v208
    %v1556 = vunpack.c.l.b16 %v209
    %v1557 = vunpack.c.h.b16 %v209
    %v1558 = vunpack.c.l.b16 %v210
    %v1559 = vunpack.c.h.b16 %v210
    %v1560 = vunpack.c.l.b16 %v211
    %v1561 = vunpack.c.h.b16 %v211
    %v1562 = vunpack.c.l.b16 %v212
    %v1563 = vunpack.c.h.b16 %v212
    %v1564 = vunpack.c.l.b16 %v213
    %v1565 = vunpack.c.h.b16 %v213
    %v1566 = vunpack.c.l.b16 %v214
    %v1567 = vunpack.c.h.b16 %v214
    %v1568 = vunpack.c.l.b16 %v215
    %v1569 = vunpack.c.h.b16 %v215
    %v1570 = vunpack.c.l.b16 %v216
    %v1571 = vunpack.c.h.b16 %v216
    %v1572 = vunpack.c.l.b16 %v217
    %v1573 = vunpack.c.h.b16 %v217
    %v1574 = vunpack.c.l.b16 %v218
    %v1575 = vunpack.c.h.b16 %v218
    %v1576 = vunpack.c.l.b16 %v219
    %v1577 = vunpack.c.h.b16 %v219
    %v1578 = vunpack.c.l.b16 %v220
    %v1579 = vunpack.c.h.b16 %v220
    %v1580 = vunpack.c.l.b16 %v221
    %v1581 = vunpack.c.h.b16 %v221
    %v1582 = vunpack.c.l.b16 %v222
    %v1583 = vunpack.c.h.b16 %v222
    %v1584 = vunpack.c.l.b16 %v223
    %v1585 = vunpack.c.h.b16 %v223
    %v1586 = vunpack.c.l.b16 %v224
    %v1587 = vunpack.c.h.b16 %v224
    %v1588 = vunpack.c.l.b16 %v225
    %v1589 = vunpack.c.h.b16 %v225
    %v1590 = vunpack.c.l.b16 %v226
    %v1591 = vunpack.c.h.b16 %v226
    %v1592 = vunpack.c.l.b16 %v227
    %v1593 = vunpack.c.h.b16 %v227
    %v1594 = vunpack.c.l.b16 %v228
    %v1595 = vunpack.c.h.b16 %v228
    %v1596 = vunpack.c.l.b16 %v229
    %v1597 = vunpack.c.h.b16 %v229
    %v1598 = vunpack.c.l.b16 %v230
    %v1599 = vunpack.c.h.b16 %v230
    %v1600 = vunpack.c.l.b16 %v231
    %v1601 = vunpack.c.h.b16 %v231
    %v1602 = vunpack.c.l.b16 %v232
    %v1603 = vunpack.c.h.b16 %v232
    %v1604 = vunpack.c.l.b16 %v233
    %v1605 = vunpack.c.h.b16 %v233
    %v1606 = vunpack.c.l.b16 %v234
    %v1607 = vunpack.c.h.b16 %v234
    %v1608 = vunpack.c.l.b16 %v235
    %v1609 = vunpack.c.h.b16 %v235
    %v1610 = vunpack.c.l.b16 %v236
    %v1611 = vunpack.c.h.b16 %v236
    %v1612 = vunpack.c.l.b16 %v237
    %v1613 = vunpack.c.h.b16 %v237
    %v1614 = vunpack.c.l.b16 %v238
    %v1615 = vunpack.c.h.b16 %v238
    %v1616 = vunpack.c.l.b16 %v239
    %v1617 = vunpack.c.h.b16 %v239
    %v1618 = vunpack.c.l.b16 %v240
    %v1619 = vunpack.c.h.b16 %v240
    %v1620 = vunpack.c.l.b16 %v241
    %v1621 = vunpack.c.h.b16 %v241
    %v1622 = vunpack.c.l.b16 %v242
    %v1623 = vunpack.c.h.b16 %v242
    %v1624 = vunpack.c.l.b16 %v243
    %v1625 = vunpack.c.h.b16 %v243
    %v1626 = vunpack.c.l.b16 %v244
    %v1627 = vunpack.c.h.b16 %v244
    %v1628 = vunpack.c.l.b16 %v245
    %v1629 = vunpack.c.h.b16 %v245
    %v1630 = vunpack.c.l.b16 %v246
    %v1631 = vunpack.c.h.b16 %v246
    %v1632 = vunpack.c.l.b16 %v247
    %v1633 = vunpack.c.h.b16 %v247
    %v1634 = vunpack.c.l.b16 %v248
    %v1635 = vunpack.c.h.b16 %v248
    %v1636 = vunpack.c.l.b16 %v249
    %v1637 = vunpack.c.h.b16 %v249
    %v1638 = vunpack.c.l.b16 %v250
    %v1639 = vunpack.c.h.b16 %v250
    %v1640 = vunpack.c.l.b16 %v251
    %v1641 = vunpack.c.h.b16 %v251
    %v1642 = vunpack.c.l.b16 %v252
    %v1643 = vunpack.c.h.b16 %v252
    %v1644 = vunpack.c.l.b16 %v253
    %v1645 = vunpack.c.h.b16 %v253
    %v1646 = vunpack.c.l.b16 %v254
    %v1647 = vunpack.c.h.b16 %v254
    %v1648 = vunpack.c.l.b16 %v255
    %v1649 = vunpack.c.h.b16 %v255
    %v1650 = vunpack.c.l.b16 %v256
    %v1651 = vunpack.c.h.b16 %v256
    %v1652 = vunpack.c.l.b16 %v257
    %v1653 = vunpack.c.h.b16 %v257
    %v1654 = vunpack.c.l.b16 %v258
    %v1655 = vunpack.c.h.b16 %v258
    %v1656 = vunpack.c.l.b16 %v259
    %v1657 = vunpack.c.h.b16 %v259
    %v1658 = vunpack.c.l.b16 %v260
    %v1659 = vunpack.c.h.b16 %v260
    %v1660 = vunpack.c.l.b16 %v261
    %v1661 = vunpack.c.h.b16 %v261
    %v1662 = vunpack.c.l.b16 %v262
    %v1663 = vunpack.c.h.b16 %v262
    %v1664 = vunpack.c.l.b16 %v263
    %v1665 = vunpack.c.h.b16 %v263
    %v1666 = vunpack.c.l.b16 %v264
    %v1667 = vunpack.c.h.b16 %v264
    %v1668 = vunpack.c.l.b16 %v265
    %v1669 = vunpack.c.h.b16 %v265
    %v1670 = vunpack.c.l.b16 %v266
    %v1671 = vunpack.c.h.b16 %v266
    %v1672 = vunpack.c.l.b16 %v267
    %v1673 = vunpack.c.h.b16 %v267
    %v1674 = vunpack.c.l.b16 %v268
    %v1675 = vunpack.c.h.b16 %v268
    %v1676 = vunpack.c.l.b16 %v269
    %v1677 = vunpack.c.h.b16 %v269
    %v1678 = vunpack.c.l.b16 %v270
    %v1679 = vunpack.c.h.b16 %v270
    %v1680 = vunpack.c.l.b16 %v271
    %v1681 = vunpack.c.h.b16 %v271
    %v1682 = vunpack.c.l.b16 %v272
    %v1683 = vunpack.c.h.b16 %v272
    %v1684 = vunpack.c.l.b16 %v273
    %v1685 = vunpack.c.h.b16 %v273
    %v1686 = vunpack.c.l.b16 %v274
    %v1687 = vunpack.c.h.b16 %v274
    %v1688 = vunpack.c.l.b16 %v275
    %v1689 = vunpack.c.h.b16 %v275
    %v1690 = vunpack.c.l.b16 %v276
    %v1691 = vunpack.c.h.b16 %v276
    %v1692 = vunpack.c.l.b16 %v277
    %v1693 = vunpack.c.h.b16 %v277
    %v1694 = vunpack.c.l.b16 %v278
    %v1695 = vunpack.c.h.b16 %v278
    %v1696 = vunpack.c.l.b16 %v279
    %v1697 = vunpack.c.h.b16 %v279
    %v1698 = vunpack.c.l.b16 %v280
    %v1699 = vunpack.c.h.b16 %v280
    %v1700 = vunpack.c.l.b16 %v281
    %v1701 = vunpack.c.h.b16 %v281
    %v1702 = vunpack.c.l.b16 %v282
    %v1703 = vunpack.c.h.b16 %v282
    %v1704 = vunpack.c.l.b16 %v283
    %v1705 = vunpack.c.h.b16 %v283
    %v1706 = vunpack.c.l.b16 %v284
    %v1707 = vunpack.c.h.b16 %v284
    %v1708 = vunpack.c.l.b16 %v285
    %v1709 = vunpack.c.h.b16 %v285
    %v1710 = vunpack.c.l.b16 %v286
    %v1711 = vunpack.c.h.b16 %v286
    %v1712 = vunpack.c.l.b16 %v287
    %v1713 = vunpack.c.h.b16 %v287
    %v1714 = vunpack.c.l.b16 %v288
    %v1715 = vunpack.c.h.b16 %v288
    %v1716 = vunpack.c.l.b16 %v289
    %v1717 = vunpack.c.h.b16 %v289
    %v1718 = vunpack.c.l.b16 %v290
    %v1719 = vunpack.c.h.b16 %v290
    %v1720 = vunpack.c.l.b16 %v291
    %v1721 = vunpack.c.h.b16 %v291
    %v1722 = vunpack.c.l.b16 %v292
    %v1723 = vunpack.c.h.b16 %v292
    %v1724 = vunpack.c.l.b16 %v293
    %v1725 = vunpack.c.h.b16 %v293
    %v1726 = vunpack.c.l.b16 %v294
    %v1727 = vunpack.c.h.b16 %v294
    %v1728 = vunpack.c.l.b16 %v295
    %v1729 = vunpack.c.h.b16 %v295
    %v1730 = vunpack.c.l.b16 %v296
    %v1731 = vunpack.c.h.b16 %v296
    %v1732 = vunpack.c.l.b16 %v297
    %v1733 = vunpack.c.h.b16 %v297
    %v1734 = vunpack.c.l.b16 %v298
    %v1735 = vunpack.c.h.b16 %v298
    %v1736 = vunpack.c.l.b16 %v299
    %v1737 = vunpack.c.h.b16 %v299
    %v1738 = vunpack.c.l.b16 %v300
    %v1739 = vunpack.c.h.b16 %v300
    %v1740 = vunpack.c.l.b16 %v301
    %v1741 = vunpack.c.h.b16 %v301
    %v1742 = vunpack.c.l.b16 %v302
    %v1743 = vunpack.c.h.b16 %v302
    %v1744 = vunpack.c.l.b16 %v303
    %v1745 = vunpack.c.h.b16 %v303
    %v1746 = vunpack.c.l.b16 %v304
    %v1747 = vunpack.c.h.b16 %v304
    %v1748 = vunpack.c.l.b16 %v305
    %v1749 = vunpack.c.h.b16 %v305
    %v1750 = vunpack.c.l.b16 %v306
    %v1751 = vunpack.c.h.b16 %v306
    %v1752 = vunpack.c.l.b16 %v307
    %v1753 = vunpack.c.h.b16 %v307
    %v1754 = vunpack.c.l.b16 %v308
    %v1755 = vunpack.c.h.b16 %v308
    %v1756 = vunpack.c.l.b16 %v309
    %v1757 = vunpack.c.h.b16 %v309
    %v1758 = vunpack.c.l.b16 %v310
    %v1759 = vunpack.c.h.b16 %v310
    %v1760 = vunpack.c.l.b16 %v311
    %v1761 = vunpack.c.h.b16 %v311
    %v1762 = vunpack.c.l.b16 %v312
    %v1763 = vunpack.c.h.b16 %v312
    %v1764 = vunpack.c.l.b16 %v313
    %v1765 = vunpack.c.h.b16 %v313
    %v1766 = vunpack.c.l.b16 %v314
    %v1767 = vunpack.c.h.b16 %v314
    %v1768 = vunpack.c.l.b16 %v315
    %v1769 = vunpack.c.h.b16 %v315
    %v1770 = vunpack.c.l.b16 %v316
    %v1771 = vunpack.c.h.b16 %v316
    %v1772 = vunpack.c.l.b16 %v317
    %v1773 = vunpack.c.h.b16 %v317
    %v1774 = vunpack.c.l.b16 %v318
    %v1775 = vunpack.c.h.b16 %v318
    %v1776 = vunpack.c.l.b16 %v319
    %v1777 = vunpack.c.h.b16 %v319
    %v1778 = vunpack.c.l.b16 %v320
    %v1779 = vunpack.c.h.b16 %v320
    %v1780 = vunpack.c.l.b16 %v321
    %v1781 = vunpack.c.h.b16 %v321
    %v1782 = vunpack.c.l.b16 %v322
    %v1783 = vunpack.c.h.b16 %v322
    %v1784 = vunpack.c.l.b16 %v323
    %v1785 = vunpack.c.h.b16 %v323
    %v1786 = vunpack.c.l.b16 %v324
    %v1787 = vunpack.c.h.b16 %v324
    %v1788 = vunpack.c.l.b16 %v325
    %v1789 = vunpack.c.h.b16 %v325
    %v1790 = vunpack.c.l.b16 %v326
    %v1791 = vunpack.c.h.b16 %v326
    %v1792 = vunpack.c.l.b16 %v327
    %v1793 = vunpack.c.h.b16 %v327
    %v1794 = vunpack.c.l.b16 %v328
    %v1795 = vunpack.c.h.b16 %v328
    %v1796 = vunpack.c.l.b16 %v329
    %v1797 = vunpack.c.h.b16 %v329
    %v1798 = vunpack.c.l.b16 %v330
    %v1799 = vunpack.c.h.b16 %v330
    %v1800 = vunpack.c.l.b16 %v331
    %v1801 = vunpack.c.h.b16 %v331
    %v1802 = vunpack.c.l.b16 %v332
    %v1803 = vunpack.c.h.b16 %v332
    %v1804 = vunpack.c.l.b16 %v333
    %v1805 = vunpack.c.h.b16 %v333
    %v1806 = vunpack.c.l.b16 %v334
    %v1807 = vunpack.c.h.b16 %v334
    %v1808 = vunpack.c.l.b16 %v335
    %v1809 = vunpack.c.h.b16 %v335
    %v1810 = vunpack.c.l.b16 %v336
    %v1811 = vunpack.c.h.b16 %v336
    %v1812 = vunpack.c.l.b16 %v337
    %v1813 = vunpack.c.h.b16 %v337
    %v1814 = vunpack.c.l.b16 %v338
    %v1815 = vunpack.c.h.b16 %v338
    %v1816 = vunpack.c.l.b16 %v339
    %v1817 = vunpack.c.h.b16 %v339
    %v1818 = vunpack.c.l.b16 %v340
    %v1819 = vunpack.c.h.b16 %v340
    %v1820 = vunpack.c.l.b16 %v341
    %v1821 = vunpack.c.h.b16 %v341
    %v1822 = vunpack.c.l.b16 %v342
    %v1823 = vunpack.c.h.b16 %v342
    %v1824 = vunpack.c.l.b16 %v343
    %v1825 = vunpack.c.h.b16 %v343
    %v1826 = vunpack.c.l.b16 %v344
    %v1827 = vunpack.c.h.b16 %v344
    %v1828 = vunpack.c.l.b16 %v345
    %v1829 = vunpack.c.h.b16 %v345
    %v1830 = vunpack.c.l.b16 %v346
    %v1831 = vunpack.c.h.b16 %v346
    %v1832 = vunpack.c.l.b16 %v347
    %v1833 = vunpack.c.h.b16 %v347
    %v1834 = vunpack.c.l.b16 %v348
    %v1835 = vunpack.c.h.b16 %v348
    %v1836 = vunpack.c.l.b16 %v349
    %v1837 = vunpack.c.h.b16 %v349
    %v1838 = vunpack.c.l.b16 %v350
    %v1839 = vunpack.c.h.b16 %v350
    %v1840 = vunpack.c.l.b16 %v351
    %v1841 = vunpack.c.h.b16 %v351
    %v1842 = vunpack.c.l.b16 %v352
    %v1843 = vunpack.c.h.b16 %v352
    %v1844 = vunpack.c.l.b16 %v353
    %v1845 = vunpack.c.h.b16 %v353
    %v1846 = vunpack.c.l.b16 %v354
    %v1847 = vunpack.c.h.b16 %v354
    %v1848 = vunpack.c.l.b16 %v355
    %v1849 = vunpack.c.h.b16 %v355
    %v1850 = vunpack.c.l.b16 %v356
    %v1851 = vunpack.c.h.b16 %v356
    %v1852 = vunpack.c.l.b16 %v357
    %v1853 = vunpack.c.h.b16 %v357
    %v1854 = vunpack.c.l.b16 %v358
    %v1855 = vunpack.c.h.b16 %v358
    %v1856 = vunpack.c.l.b16 %v359
    %v1857 = vunpack.c.h.b16 %v359
    %v1858 = vunpack.c.l.b16 %v360
    %v1859 = vunpack.c.h.b16 %v360
    %v1860 = vunpack.c.l.b16 %v361
    %v1861 = vunpack.c.h.b16 %v361
    %v1862 = vunpack.c.l.b16 %v362
    %v1863 = vunpack.c.h.b16 %v362
    %v1864 = vunpack.c.l.b16 %v363
    %v1865 = vunpack.c.h.b16 %v363
    %v1866 = vunpack.c.l.b16 %v364
    %v1867 = vunpack.c.h.b16 %v364
    %v1868 = vunpack.c.l.b16 %v365
    %v1869 = vunpack.c.h.b16 %v365
    %v1870 = vunpack.c.l.b16 %v366
    %v1871 = vunpack.c.h.b16 %v366
    %v1872 = vunpack.c.l.b16 %v367
    %v1873 = vunpack.c.h.b16 %v367
    %v1874 = vunpack.c.l.b16 %v368
    %v1875 = vunpack.c.h.b16 %v368
    %v1876 = vunpack.c.l.b16 %v369
    %v1877 = vunpack.c.h.b16 %v369
    %v1878 = vunpack.c.l.b16 %v370
    %v1879 = vunpack.c.h.b16 %v370
    %v1880 = vunpack.c.l.b16 %v371
    %v1881 = vunpack.c.h.b16 %v371
    %v1882 = vunpack.c.l.b16 %v372
    %v1883 = vunpack.c.h.b16 %v372
    %v1884 = vunpack.c.l.b16 %v373
    %v1885 = vunpack.c.h.b16 %v373
    %v1886 = vunpack.c.l.b16 %v374
    %v1887 = vunpack.c.h.b16 %v374
    %v1888 = vunpack.c.l.b16 %v375
    %v1889 = vunpack.c.h.b16 %v375
    %v1890 = vunpack.c.l.b16 %v376
    %v1891 = vunpack.c.h.b16 %v376
    %v1892 = vunpack.c.l.b16 %v377
    %v1893 = vunpack.c.h.b16 %v377
    %v1894 = vunpack.c.l.b16 %v378
    %v1895 = vunpack.c.h.b16 %v378
    %v1896 = vunpack.c.l.b16 %v379
    %v1897 = vunpack.c.h.b16 %v379
    %v1898 = vunpack.c.l.b16 %v380
    %v1899 = vunpack.c.h.b16 %v380
    %v1900 = vunpack.c.l.b16 %v381
    %v1901 = vunpack.c.h.b16 %v381
    %v1902 = vunpack.c.l.b16 %v382
    %v1903 = vunpack.c.h.b16 %v382
    %v1904 = vunpack.c.l.b16 %v383
    %v1905 = vunpack.c.h.b16 %v383
    %v1906 = vunpack.c.l.b16 %v384
    %v1907 = vunpack.c.h.b16 %v384
    %v1908 = vunpack.c.l.b16 %v385
    %v1909 = vunpack.c.h.b16 %v385
    %v1910 = vunpack.c.l.b16 %v386
    %v1911 = vunpack.c.h.b16 %v386
    %v1912 = vunpack.c.l.b16 %v387
    %v1913 = vunpack.c.h.b16 %v387
    %v1914 = vunpack.c.l.b16 %v388
    %v1915 = vunpack.c.h.b16 %v388
    %v1916 = vunpack.c.l.b16 %v389
    %v1917 = vunpack.c.h.b16 %v389
    %v1918 = vunpack.c.l.b16 %v390
    %v1919 = vunpack.c.h.b16 %v390
    %v1920 = vunpack.c.l.b16 %v391
    %v1921 = vunpack.c.h.b16 %v391
    %v1922 = vunpack.c.l.b16 %v392
    %v1923 = vunpack.c.h.b16 %v392
    %v1924 = vunpack.c.l.b16 %v393
    %v1925 = vunpack.c.h.b16 %v393
    %v1926 = vunpack.c.l.b16 %v394
    %v1927 = vunpack.c.h.b16 %v394
    %v1928 = vunpack.c.l.b16 %v395
    %v1929 = vunpack.c.h.b16 %v395
    %v1930 = vunpack.c.l.b16 %v396
    %v1931 = vunpack.c.h.b16 %v396
    %v1932 = vunpack.c.l.b16 %v397
    %v1933 = vunpack.c.h.b16 %v397
    %v1934 = vunpack.c.l.b16 %v398
    %v1935 = vunpack.c.h.b16 %v398
    %v1936 = vunpack.c.l.b16 %v399
    %v1937 = vunpack.c.h.b16 %v399
    %v1938 = vunpack.c.l.b16 %v400
    %v1939 = vunpack.c.h.b16 %v400
    %v1940 = vunpack.c.l.b16 %v401
    %v1941 = vunpack.c.h.b16 %v401
    %v1942 = vunpack.c.l.b16 %v402
    %v1943 = vunpack.c.h.b16 %v402
    %v1944 = vunpack.c.l.b16 %v403
    %v1945 = vunpack.c.h.b16 %v403
    %v1946 = vunpack.c.l.b16 %v404
    %v1947 = vunpack.c.h.b16 %v404
    %v1948 = vunpack.c.l.b16 %v405
    %v1949 = vunpack.c.h.b16 %v405
    %v1950 = vunpack.c.l.b16 %v406
    %v1951 = vunpack.c.h.b16 %v406
    %v1952 = vunpack.c.l.b16 %v407
    %v1953 = vunpack.c.h.b16 %v407
    %v1954 = vunpack.c.l.b16 %v408
    %v1955 = vunpack.c.h.b16 %v408
    %v1956 = vunpack.c.l.b16 %v409
    %v1957 = vunpack.c.h.b16 %v409
    %v1958 = vunpack.c.l.b16 %v410
    %v1959 = vunpack.c.h.b16 %v410
    %v1960 = vunpack.c.l.b16 %v411
    %v1961 = vunpack.c.h.b16 %v411
    %v1962 = vunpack.c.l.b16 %v412
    %v1963 = vunpack.c.h.b16 %v412
    %v1964 = vunpack.c.l.b16 %v413
    %v1965 = vunpack.c.h.b16 %v413
    %v1966 = vunpack.c.l.b16 %v414
    %v1967 = vunpack.c.h.b16 %v414
    %v1968 = vunpack.c.l.b16 %v415
    %v1969 = vunpack.c.h.b16 %v415
    %v1970 = vunpack.c.l.b16 %v416
    %v1971 = vunpack.c.h.b16 %v416
    %v1972 = vunpack.c.l.b16 %v417
    %v1973 = vunpack.c.h.b16 %v417
    %v1974 = vunpack.c.l.b16 %v418
    %v1975 = vunpack.c.h.b16 %v418
    %v1976 = vunpack.c.l.b16 %v419
    %v1977 = vunpack.c.h.b16 %v419
    %v1978 = vunpack.c.l.b16 %v420
    %v1979 = vunpack.c.h.b16 %v420
    %v1980 = vunpack.c.l.b16 %v421
    %v1981 = vunpack.c.h.b16 %v421
    %v1982 = vunpack.c.l.b16 %v422
    %v1983 = vunpack.c.h.b16 %v422
    %v1984 = vunpack.c.l.b16 %v423
    %v1985 = vunpack.c.h.b16 %v423
    %v1986 = vunpack.c.l.b16 %v424
    %v1987 = vunpack.c.h.b16 %v424
    %v1988 = vunpack.c.l.b16 %v425
    %v1989 = vunpack.c.h.b16 %v425
    %v1990 = vunpack.c.l.b16 %v426
    %v1991 = vunpack.c.h.b16 %v426
    %v1992 = vunpack.c.l.b16 %v427
    %v1993 = vunpack.c.h.b16 %v427
    %v1994 = vunpack.c.l.b16 %v428
    %v1995 = vunpack.c.h.b16 %v428
    %v1996 = vunpack.c.l.b16 %v429
    %v1997 = vunpack.c.h.b16 %v429
    %v1998 = vunpack.c.l.b16 %v430
    %v1999 = vunpack.c.h.b16 %v430
    %v2000 = vunpack.c.l.b16 %v431
    %v2001 = vunpack.c.h.b16 %v431
    %v2002 = vunpack.c.l.b16 %v432
    %v2003 = vunpack.c.h.b16 %v432
    %v2004 = vunpack.c.l.b16 %v433
    %v2005 = vunpack.c.h.b16 %v433
    %v2006 = vunpack.c.l.b16 %v434
    %v2007 = vunpack.c.h.b16 %v434
    %v2008 = vunpack.c.l.b16 %v435
    %v2009 = vunpack.c.h.b16 %v435
    %v2010 = vunpack.c.l.b16 %v436
    %v2011 = vunpack.c.h.b16 %v436
    %v2012 = vunpack.c.l.b16 %v437
    %v2013 = vunpack.c.h.b16 %v437
    %v2014 = vunpack.c.l.b16 %v438
    %v2015 = vunpack.c.h.b16 %v438
    %v2016 = vunpack.c.l.b16 %v439
    %v2017 = vunpack.c.h.b16 %v439
    %v2018 = vunpack.c.l.b16 %v440
    %v2019 = vunpack.c.h.b16 %v440
    %v2020 = vunpack.c.l.b16 %v441
    %v2021 = vunpack.c.h.b16 %v441
    %v2022 = vunpack.c.l.b16 %v442
    %v2023 = vunpack.c.h.b16 %v442
    %v2024 = vunpack.c.l.b16 %v443
    %v2025 = vunpack.c.h.b16 %v443
    %v2026 = vunpack.c.l.b16 %v444
    %v2027 = vunpack.c.h.b16 %v444
    %v2028 = vunpack.c.l.b16 %v445
    %v2029 = vunpack.c.h.b16 %v445
    %v2030 = vunpack.c.l.b16 %v446
    %v2031 = vunpack.c.h.b16 %v446
    %v2032 = vunpack.c.l.b16 %v447
    %v2033 = vunpack.c.h.b16 %v447
    %v2034 = vunpack.c.l.b16 %v448
    %v2035 = vunpack.c.h.b16 %v448
    %v2036 = vunpack.c.l.b16 %v449
    %v2037 = vunpack.c.h.b16 %v449
    %v2038 = vunpack.c.l.b16 %v450
    %v2039 = vunpack.c.h.b16 %v450
    %v2040 = vunpack.c.l.b16 %v451
    %v2041 = vunpack.c.h.b16 %v451
    %v2042 = vunpack.c.l.b16 %v452
    %v2043 = vunpack.c.h.b16 %v452
    %v2044 = vunpack.c.l.b16 %v453
    %v2045 = vunpack.c.h.b16 %v453
    %v2046 = vunpack.c.l.b16 %v454
    %v2047 = vunpack.c.h.b16 %v454
    %v2048 = vunpack.c.l.b16 %v455
    %v2049 = vunpack.c.h.b16 %v455
    %v2050 = vunpack.c.l.b16 %v456
    %v2051 = vunpack.c.h.b16 %v456
    %v2052 = vunpack.c.l.b16 %v457
    %v2053 = vunpack.c.h.b16 %v457
    %v2054 = vunpack.c.l.b16 %v458
    %v2055 = vunpack.c.h.b16 %v458
    %v2056 = vunpack.c.l.b16 %v459
    %v2057 = vunpack.c.h.b16 %v459
    %v2058 = vunpack.c.l.b16 %v460
    %v2059 = vunpack.c.h.b16 %v460
    %v2060 = vunpack.c.l.b16 %v461
    %v2061 = vunpack.c.h.b16 %v461
    %v2062 = vunpack.c.l.b16 %v462
    %v2063 = vunpack.c.h.b16 %v462
    %v2064 = vunpack.c.l.b16 %v463
    %v2065 = vunpack.c.h.b16 %v463
    %v2066 = vunpack.c.l.b16 %v464
    %v2067 = vunpack.c.h.b16 %v464
    %v2068 = vunpack.c.l.b16 %v465
    %v2069 = vunpack.c.h.b16 %v465
    %v2070 = vunpack.c.l.b16 %v466
    %v2071 = vunpack.c.h.b16 %v466
    %v2072 = vunpack.c.l.b16 %v467
    %v2073 = vunpack.c.h.b16 %v467
    %v2074 = vunpack.c.l.b16 %v468
    %v2075 = vunpack.c.h.b16 %v468
    %v2076 = vunpack.c.l.b16 %v469
    %v2077 = vunpack.c.h.b16 %v469
    %v2078 = vunpack.c.l.b16 %v470
    %v2079 = vunpack.c.h.b16 %v470
    %v2080 = vunpack.c.l.b16 %v471
    %v2081 = vunpack.c.h.b16 %v471
    %v2082 = vunpack.c.l.b16 %v472
    %v2083 = vunpack.c.h.b16 %v472
    %v2084 = vunpack.c.l.b16 %v473
    %v2085 = vunpack.c.h.b16 %v473
    %v2086 = vunpack.c.l.b16 %v474
    %v2087 = vunpack.c.h.b16 %v474
    %v2088 = vunpack.c.l.b16 %v475
    %v2089 = vunpack.c.h.b16 %v475
    %v2090 = vunpack.c.l.b16 %v476
    %v2091 = vunpack.c.h.b16 %v476
    %v2092 = vunpack.c.l.b16 %v477
    %v2093 = vunpack.c.h.b16 %v477
    %v2094 = vunpack.c.l.b16 %v478
    %v2095 = vunpack.c.h.b16 %v478
    %v2096 = vunpack.c.l.b16 %v479
    %v2097 = vunpack.c.h.b16 %v479
    %v2098 = vunpack.c.l.b16 %v480
    %v2099 = vunpack.c.h.b16 %v480
    %v2100 = vunpack.c.l.b16 %v481
    %v2101 = vunpack.c.h.b16 %v481
    %v2102 = vunpack.c.l.b16 %v482
    %v2103 = vunpack.c.h.b16 %v482
    %v2104 = vunpack.c.l.b16 %v483
    %v2105 = vunpack.c.h.b16 %v483
    %v2106 = vunpack.c.l.b16 %v484
    %v2107 = vunpack.c.h.b16 %v484
    %v2108 = vunpack.c.l.b16 %v485
    %v2109 = vunpack.c.h.b16 %v485
    %v2110 = vunpack.c.l.b16 %v486
    %v2111 = vunpack.c.h.b16 %v486
    %v2112 = vunpack.c.l.b16 %v487
    %v2113 = vunpack.c.h.b16 %v487
    %v2114 = vunpack.c.l.b16 %v488
    %v2115 = vunpack.c.h.b16 %v488
    %v2116 = vunpack.c.l.b16 %v489
    %v2117 = vunpack.c.h.b16 %v489
    %v2118 = vunpack.c.l.b16 %v490
    %v2119 = vunpack.c.h.b16 %v490
    %v2120 = vunpack.c.l.b16 %v491
    %v2121 = vunpack.c.h.b16 %v491
    %v2122 = vunpack.c.l.b16 %v492
    %v2123 = vunpack.c.h.b16 %v492
    %v2124 = vunpack.c.l.b16 %v493
    %v2125 = vunpack.c.h.b16 %v493
    %v2126 = vunpack.c.l.b16 %v494
    %v2127 = vunpack.c.h.b16 %v494
    %v2128 = vunpack.c.l.b16 %v495
    %v2129 = vunpack.c.h.b16 %v495
    %v2130 = vunpack.c.l.b16 %v496
    %v2131 = vunpack.c.h.b16 %v496
    %v2132 = vunpack.c.l.b16 %v497
    %v2133 = vunpack.c.h.b16 %v497
    %v2134 = vunpack.c.l.b16 %v498
    %v2135 = vunpack.c.h.b16 %v498
    %v2136 = vunpack.c.l.b16 %v499
    %v2137 = vunpack.c.h.b16 %v499
    %v2138 = vunpack.c.l.b16 %v500
    %v2139 = vunpack.c.h.b16 %v500
    %v2140 = vunpack.c.l.b16 %v501
    %v2141 = vunpack.c.h.b16 %v501
    %v2142 = vunpack.c.l.b16 %v502
    %v2143 = vunpack.c.h.b16 %v502
    %v2144 = vunpack.c.l.b16 %v503
    %v2145 = vunpack.c.h.b16 %v503
    %v2146 = vunpack.c.l.b16 %v504
    %v2147 = vunpack.c.h.b16 %v504
    %v2148 = vunpack.c.l.b16 %v505
    %v2149 = vunpack.c.h.b16 %v505
    %v2150 = vunpack.c.l.b16 %v506
    %v2151 = vunpack.c.h.b16 %v506
    %v2152 = vunpack.c.l.b16 %v507
    %v2153 = vunpack.c.h.b16 %v507
    %v2154 = vunpack.c.l.b16 %v508
    %v2155 = vunpack.c.h.b16 %v508
    %v2156 = vunpack.c.l.b16 %v509
    %v2157 = vunpack.c.h.b16 %v509
    %v2158 = vunpack.c.l.b16 %v510
    %v2159 = vunpack.c.h.b16 %v510
    %v2160 = vunpack.c.l.b16 %v511
    %v2161 = vunpack.c.h.b16 %v511
    %v2162 = vunpack.c.l.b16 %v512
    %v2163 = vunpack.c.h.b16 %v512
    %v2164 = vunpack.c.l.b16 %v513
    %v2165 = vunpack.c.h.b16 %v513
    %v2166 = vunpack.c.l.b16 %v514
    %v2167 = vunpack.c.h.b16 %v514
    %v2168 = vunpack.c.l.b16 %v515
    %v2169 = vunpack.c.h.b16 %v515
    %v2170 = vunpack.c.l.b16 %v516
    %v2171 = vunpack.c.h.b16 %v516
    %v2172 = vunpack.c.l.b16 %v517
    %v2173 = vunpack.c.h.b16 %v517
    %v2174 = vunpack.c.l.b16 %v518
    %v2175 = vunpack.c.h.b16 %v518
    %v2176 = vunpack.c.l.b16 %v519
    %v2177 = vunpack.c.h.b16 %v519
    %v2178 = vunpack.c.l.b16 %v520
    %v2179 = vunpack.c.h.b16 %v520
    %v2180 = vunpack.c.l.b16 %v521
    %v2181 = vunpack.c.h.b16 %v521
    %v2182 = vunpack.c.l.b16 %v522
    %v2183 = vunpack.c.h.b16 %v522
    %v2184 = vunpack.c.l.b16 %v523
    %v2185 = vunpack.c.h.b16 %v523
    %v2186 = vunpack.c.l.b16 %v524
    %v2187 = vunpack.c.h.b16 %v524
    %v2188 = vunpack.c.l.b16 %v525
    %v2189 = vunpack.c.h.b16 %v525
    %v2190 = vunpack.c.l.b16 %v526
    %v2191 = vunpack.c.h.b16 %v526
    %v2192 = vunpack.c.l.b16 %v527
    %v2193 = vunpack.c.h.b16 %v527
    %v2194 = vunpack.c.l.b16 %v528
    %v2195 = vunpack.c.h.b16 %v528
    %v2196 = vunpack.c.l.b16 %v529
    %v2197 = vunpack.c.h.b16 %v529
    %v2198 = vunpack.c.l.b16 %v530
    %v2199 = vunpack.c.h.b16 %v530
    %v2200 = vunpack.c.l.b16 %v531
    %v2201 = vunpack.c.h.b16 %v531
    %v2202 = vunpack.c.l.b16 %v532
    %v2203 = vunpack.c.h.b16 %v532
    %v2204 = vunpack.c.l.b16 %v533
    %v2205 = vunpack.c.h.b16 %v533
    %v2206 = vunpack.c.l.b16 %v534
    %v2207 = vunpack.c.h.b16 %v534
    %v2208 = vunpack.c.l.b16 %v535
    %v2209 = vunpack.c.h.b16 %v535
    %v2210 = vpack.c.b16 %v1190, %v1186
    %v2211 = vpack.c.b16 %v1191, %v1187
    %v2212 = vpack.c.b16 %v1192, %v1188
    %v2213 = vpack.c.b16 %v1193, %v1189
    %v2214 = vpack.c.b16 %v1198, %v1194
    %v2215 = vpack.c.b16 %v1199, %v1195
    %v2216 = vpack.c.b16 %v1200, %v1196
    %v2217 = vpack.c.b16 %v1201, %v1197
    %v2218 = vpack.c.b16 %v1206, %v1202
    %v2219 = vpack.c.b16 %v1207, %v1203
    %v2220 = vpack.c.b16 %v1208, %v1204
    %v2221 = vpack.c.b16 %v1209, %v1205
    %v2222 = vpack.c.b16 %v1214, %v1210
    %v2223 = vpack.c.b16 %v1215, %v1211
    %v2224 = vpack.c.b16 %v1216, %v1212
    %v2225 = vpack.c.b16 %v1217, %v1213
    %v2226 = vpack.c.b16 %v1222, %v1218
    %v2227 = vpack.c.b16 %v1223, %v1219
    %v2228 = vpack.c.b16 %v1224, %v1220
    %v2229 = vpack.c.b16 %v1225, %v1221
    %v2230 = vpack.c.b16 %v1230, %v1226
    %v2231 = vpack.c.b16 %v1231, %v1227
    %v2232 = vpack.c.b16 %v1232, %v1228
    %v2233 = vpack.c.b16 %v1233, %v1229
    %v2234 = vpack.c.b16 %v1238, %v1234
    %v2235 = vpack.c.b16 %v1239, %v1235
    %v2236 = vpack.c.b16 %v1240, %v1236
    %v2237 = vpack.c.b16 %v1241, %v1237
    %v2238 = vpack.c.b16 %v1246, %v1242
    %v2239 = vpack.c.b16 %v1247, %v1243
    %v2240 = vpack.c.b16 %v1248, %v1244
    %v2241 = vpack.c.b16 %v1249, %v1245
    %v2242 = vpack.c.b16 %v1254, %v1250
    %v2243 = vpack.c.b16 %v1255, %v1251
    %v2244 = vpack.c.b16 %v1256, %v1252
    %v2245 = vpack.c.b16 %v1257, %v1253
    %v2246 = vpack.c.b16 %v1262, %v1258
    %v2247 = vpack.c.b16 %v1263, %v1259
    %v2248 = vpack.c.b16 %v1264, %v1260
    %v2249 = vpack.c.b16 %v1265, %v1261
    %v2250 = vpack.c.b16 %v1270, %v1266
    %v2251 = vpack.c.b16 %v1271, %v1267
    %v2252 = vpack.c.b16 %v1272, %v1268
    %v2253 = vpack.c.b16 %v1273, %v1269
    %v2254 = vpack.c.b16 %v1278, %v1274
    %v2255 = vpack.c.b16 %v1279, %v1275
    %v2256 = vpack.c.b16 %v1280, %v1276
    %v2257 = vpack.c.b16 %v1281, %v1277
    %v2258 = vpack.c.b16 %v1286, %v1282
    %v2259 = vpack.c.b16 %v1287, %v1283
    %v2260 = vpack.c.b16 %v1288, %v1284
    %v2261 = vpack.c.b16 %v1289, %v1285
    %v2262 = vpack.c.b16 %v1294, %v1290
    %v2263 = vpack.c.b16 %v1295, %v1291
    %v2264 = vpack.c.b16 %v1296, %v1292
    %v2265 = vpack.c.b16 %v1297, %v1293
    %v2266 = vpack.c.b16 %v1302, %v1298
    %v2267 = vpack.c.b16 %v1303, %v1299
    %v2268 = vpack.c.b16 %v1304, %v1300
    %v2269 = vpack.c.b16 %v1305, %v1301
    %v2270 = vpack.c.b16 %v1310, %v1306
    %v2271 = vpack.c.b16 %v1311, %v1307
    %v2272 = vpack.c.b16 %v1312, %v1308
    %v2273 = vpack.c.b16 %v1313, %v1309
    %v2274 = vpack.c.b16 %v1318, %v1314
    %v2275 = vpack.c.b16 %v1319, %v1315
    %v2276 = vpack.c.b16 %v1320, %v1316
    %v2277 = vpack.c.b16 %v1321, %v1317
    %v2278 = vpack.c.b16 %v1326, %v1322
    %v2279 = vpack.c.b16 %v1327, %v1323
    %v2280 = vpack.c.b16 %v1328, %v1324
    %v2281 = vpack.c.b16 %v1329, %v1325
    %v2282 = vpack.c.b16 %v1334, %v1330
    %v2283 = vpack.c.b16 %v1335, %v1331
    %v2284 = vpack.c.b16 %v1336, %v1332
    %v2285 = vpack.c.b16 %v1337, %v1333
    %v2286 = vpack.c.b16 %v1342, %v1338
    %v2287 = vpack.c.b16 %v1343, %v1339
    %v2288 = vpack.c.b16 %v1344, %v1340
    %v2289 = vpack.c.b16 %v1345, %v1341
    %v2290 = vpack.c.b16 %v1350, %v1346
    %v2291 = vpack.c.b16 %v1351, %v1347
    %v2292 = vpack.c.b16 %v1352, %v1348
    %v2293 = vpack.c.b16 %v1353, %v1349
    %v2294 = vpack.c.b16 %v1358, %v1354
    %v2295 = vpack.c.b16 %v1359, %v1355
    %v2296 = vpack.c.b16 %v1360, %v1356
    %v2297 = vpack.c.b16 %v1361, %v1357
    %v2298 = vpack.c.b16 %v1366, %v1362
    %v2299 = vpack.c.b16 %v1367, %v1363
    %v2300 = vpack.c.b16 %v1368, %v1364
    %v2301 = vpack.c.b16 %v1369, %v1365
    %v2302 = vpack.c.b16 %v1374, %v1370
    %v2303 = vpack.c.b16 %v1375, %v1371
    %v2304 = vpack.c.b16 %v1376, %v1372
    %v2305 = vpack.c.b16 %v1377, %v1373
    %v2306 = vpack.c.b16 %v1382, %v1378
    %v2307 = vpack.c.b16 %v1383, %v1379
    %v2308 = vpack.c.b16 %v1384, %v1380
    %v2309 = vpack.c.b16 %v1385, %v1381
    %v2310 = vpack.c.b16 %v1390, %v1386
    %v2311 = vpack.c.b16 %v1391, %v1387
    %v2312 = vpack.c.b16 %v1392, %v1388
    %v2313 = vpack.c.b16 %v1393, %v1389
    %v2314 = vpack.c.b16 %v1398, %v1394
    %v2315 = vpack.c.b16 %v1399, %v1395
    %v2316 = vpack.c.b16 %v1400, %v1396
    %v2317 = vpack.c.b16 %v1401, %v1397
    %v2318 = vpack.c.b16 %v1406, %v1402
    %v2319 = vpack.c.b16 %v1407, %v1403
    %v2320 = vpack.c.b16 %v1408, %v1404
    %v2321 = vpack.c.b16 %v1409, %v1405
    %v2322 = vpack.c.b16 %v1414, %v1410
    %v2323 = vpack.c.b16 %v1415, %v1411
    %v2324 = vpack.c.b16 %v1416, %v1412
    %v2325 = vpack.c.b16 %v1417, %v1413
    %v2326 = vpack.c.b16 %v1422, %v1418
    %v2327 = vpack.c.b16 %v1423, %v1419
    %v2328 = vpack.c.b16 %v1424, %v1420
    %v2329 = vpack.c.b16 %v1425, %v1421
    %v2330 = vpack.c.b16 %v1430, %v1426
    %v2331 = vpack.c.b16 %v1431, %v1427
    %v2332 = vpack.c.b16 %v1432, %v1428
    %v2333 = vpack.c.b16 %v1433, %v1429
    %v2334 = vpack.c.b16 %v1438, %v1434
    %v2335 = vpack.c.b16 %v1439, %v1435
    %v2336 = vpack.c.b16 %v1440, %v1436
    %v2337 = vpack.c.b16 %v1441, %v1437
    %v2338 = vpack.c.b16 %v1446, %v1442
    %v2339 = vpack.c.b16 %v1447, %v1443
    %v2340 = vpack.c.b16 %v1448, %v1444
    %v2341 = vpack.c.b16 %v1449, %v1445
    %v2342 = vpack.c.b16 %v1454, %v1450
    %v2343 = vpack.c.b16 %v1455, %v1451
    %v2344 = vpack.c.b16 %v1456, %v1452
    %v2345 = vpack.c.b16 %v1457, %v1453
    %v2346 = vpack.c.b16 %v1462, %v1458
    %v2347 = vpack.c.b16 %v1463, %v1459
    %v2348 = vpack.c.b16 %v1464, %v1460
    %v2349 = vpack.c.b16 %v1465, %v1461
    %v2350 = vpack.c.b16 %v1470, %v1466
    %v2351 = vpack.c.b16 %v1471, %v1467
    %v2352 = vpack.c.b16 %v1472, %v1468
    %v2353 = vpack.c.b16 %v1473, %v1469
    %v2354 = vpack.c.b16 %v1478, %v1474
    %v2355 = vpack.c.b16 %v1479, %v1475
    %v2356 = vpack.c.b16 %v1480, %v1476
    %v2357 = vpack.c.b16 %v1481, %v1477
    %v2358 = vpack.c.b16 %v1486, %v1482
    %v2359 = vpack.c.b16 %v1487, %v1483
    %v2360 = vpack.c.b16 %v1488, %v1484
    %v2361 = vpack.c.b16 %v1489, %v1485
    %v2362 = vpack.c.b16 %v1494, %v1490
    %v2363 = vpack.c.b16 %v1495, %v1491
    %v2364 = vpack.c.b16 %v1496, %v1492
    %v2365 = vpack.c.b16 %v1497, %v1493
    %v2366 = vpack.c.b16 %v1502, %v1498
    %v2367 = vpack.c.b16 %v1503, %v1499
    %v2368 = vpack.c.b16 %v1504, %v1500
    %v2369 = vpack.c.b16 %v1505, %v1501
    %v2370 = vpack.c.b16 %v1510, %v1506
    %v2371 = vpack.c.b16 %v1511, %v1507
    %v2372 = vpack.c.b16 %v1512, %v1508
    %v2373 = vpack.c.b16 %v1513, %v1509
    %v2374 = vpack.c.b16 %v1518, %v1514
    %v2375 = vpack.c.b16 %v1519, %v1515
    %v2376 = vpack.c.b16 %v1520, %v1516
    %v2377 = vpack.c.b16 %v1521, %v1517
    %v2378 = vpack.c.b16 %v1526, %v1522
    %v2379 = vpack.c.b16 %v1527, %v1523
    %v2380 = vpack.c.b16 %v1528, %v1524
    %v2381 = vpack.c.b16 %v1529, %v1525
    %v2382 = vpack.c.b16 %v1534, %v1530
    %v2383 = vpack.c.b16 %v1535, %v1531
    %v2384 = vpack.c.b16 %v1536, %v1532
    %v2385 = vpack.c.b16 %v1537, %v1533
    %v2386 = vpack.c.b16 %v1542, %v1538
    %v2387 = vpack.c.b16 %v1543, %v1539
    %v2388 = vpack.c.b16 %v1544, %v1540
    %v2389 = vpack.c.b16 %v1545, %v1541
    %v2390 = vpack.c.b16 %v1550, %v1546
    %v2391 = vpack.c.b16 %v1551, %v1547
    %v2392 = vpack.c.b16 %v1552, %v1548
    %v2393 = vpack.c.b16 %v1553, %v1549
    %v2394 = vpack.c.b16 %v1558, %v1554
    %v2395 = vpack.c.b16 %v1559, %v1555
    %v2396 = vpack.c.b16 %v1560, %v1556
    %v2397 = vpack.c.b16 %v1561, %v1557
    %v2398 = vpack.c.b16 %v1566, %v1562
    %v2399 = vpack.c.b16 %v1567, %v1563
    %v2400 = vpack.c.b16 %v1568, %v1564
    %v2401 = vpack.c.b16 %v1569, %v1565
    %v2402 = vpack.c.b16 %v1574, %v1570
    %v2403 = vpack.c.b16 %v1575, %v1571
    %v2404 = vpack.c.b16 %v1576, %v1572
    %v2405 = vpack.c.b16 %v1577, %v1573
    %v2406 = vpack.c.b16 %v1582, %v1578
    %v2407 = vpack.c.b16 %v1583, %v1579
    %v2408 = vpack.c.b16 %v1584, %v1580
    %v2409 = vpack.c.b16 %v1585, %v1581
    %v2410 = vpack.c.b16 %v1590, %v1586
    %v2411 = vpack.c.b16 %v1591, %v1587
    %v2412 = vpack.c.b16 %v1592, %v1588
    %v2413 = vpack.c.b16 %v1593, %v1589
    %v2414 = vpack.c.b16 %v1598, %v1594
    %v2415 = vpack.c.b16 %v1599, %v1595
    %v2416 = vpack.c.b16 %v1600, %v1596
    %v2417 = vpack.c.b16 %v1601, %v1597
    %v2418 = vpack.c.b16 %v1606, %v1602
    %v2419 = vpack.c.b16 %v1607, %v1603
    %v2420 = vpack.c.b16 %v1608, %v1604
    %v2421 = vpack.c.b16 %v1609, %v1605
    %v2422 = vpack.c.b16 %v1614, %v1610
    %v2423 = vpack.c.b16 %v1615, %v1611
    %v2424 = vpack.c.b16 %v1616, %v1612
    %v2425 = vpack.c.b16 %v1617, %v1613
    %v2426 = vpack.c.b16 %v1622, %v1618
    %v2427 = vpack.c.b16 %v1623, %v1619
    %v2428 = vpack.c.b16 %v1624, %v1620
    %v2429 = vpack.c.b16 %v1625, %v1621
    %v2430 = vpack.c.b16 %v1630, %v1626
    %v2431 = vpack.c.b16 %v1631, %v1627
    %v2432 = vpack.c.b16 %v1632, %v1628
    %v2433 = vpack.c.b16 %v1633, %v1629
    %v2434 = vpack.c.b16 %v1638, %v1634
    %v2435 = vpack.c.b16 %v1639, %v1635
    %v2436 = vpack.c.b16 %v1640, %v1636
    %v2437 = vpack.c.b16 %v1641, %v1637
    %v2438 = vpack.c.b16 %v1646, %v1642
    %v2439 = vpack.c.b16 %v1647, %v1643
    %v2440 = vpack.c.b16 %v1648, %v1644
    %v2441 = vpack.c.b16 %v1649, %v1645
    %v2442 = vpack.c.b16 %v1654, %v1650
    %v2443 = vpack.c.b16 %v1655, %v1651
    %v2444 = vpack.c.b16 %v1656, %v1652
    %v2445 = vpack.c.b16 %v1657, %v1653
    %v2446 = vpack.c.b16 %v1662, %v1658
    %v2447 = vpack.c.b16 %v1663, %v1659
    %v2448 = vpack.c.b16 %v1664, %v1660
    %v2449 = vpack.c.b16 %v1665, %v1661
    %v2450 = vpack.c.b16 %v1670, %v1666
    %v2451 = vpack.c.b16 %v1671, %v1667
    %v2452 = vpack.c.b16 %v1672, %v1668
    %v2453 = vpack.c.b16 %v1673, %v1669
    %v2454 = vpack.c.b16 %v1678, %v1674
    %v2455 = vpack.c.b16 %v1679, %v1675
    %v2456 = vpack.c.b16 %v1680, %v1676
    %v2457 = vpack.c.b16 %v1681, %v1677
    %v2458 = vpack.c.b16 %v1686, %v1682
    %v2459 = vpack.c.b16 %v1687, %v1683
    %v2460 = vpack.c.b16 %v1688, %v1684
    %v2461 = vpack.c.b16 %v1689, %v1685
    %v2462 = vpack.c.b16 %v1694, %v1690
    %v2463 = vpack.c.b16 %v1695, %v1691
    %v2464 = vpack.c.b16 %v1696, %v1692
    %v2465 = vpack.c.b16 %v1697, %v1693
    %v2466 = vpack.c.b16 %v1702, %v1698
    %v2467 = vpack.c.b16 %v1703, %v1699
    %v2468 = vpack.c.b16 %v1704, %v1700
    %v2469 = vpack.c.b16 %v1705, %v1701
    %v2470 = vpack.c.b16 %v1710, %v1706
    %v2471 = vpack.c.b16 %v1711, %v1707
    %v2472 = vpack.c.b16 %v1712, %v1708
    %v2473 = vpack.c.b16 %v1713, %v1709
    %v2474 = vpack.c.b16 %v1718, %v1714
    %v2475 = vpack.c.b16 %v1719, %v1715
    %v2476 = vpack.c.b16 %v1720, %v1716
    %v2477 = vpack.c.b16 %v1721, %v1717
    %v2478 = vpack.c.b16 %v1726, %v1722
    %v2479 = vpack.c.b16 %v1727, %v1723
    %v2480 = vpack.c.b16 %v1728, %v1724
    %v2481 = vpack.c.b16 %v1729, %v1725
    %v2482 = vpack.c.b16 %v1734, %v1730
    %v2483 = vpack.c.b16 %v1735, %v1731
    %v2484 = vpack.c.b16 %v1736, %v1732
    %v2485 = vpack.c.b16 %v1737, %v1733
    %v2486 = vpack.c.b16 %v1742, %v1738
    %v2487 = vpack.c.b16 %v1743, %v1739
    %v2488 = vpack.c.b16 %v1744, %v1740
    %v2489 = vpack.c.b16 %v1745, %v1741
    %v2490 = vpack.c.b16 %v1750, %v1746
    %v2491 = vpack.c.b16 %v1751, %v1747
    %v2492 = vpack.c.b16 %v1752, %v1748
    %v2493 = vpack.c.b16 %v1753, %v1749
    %v2494 = vpack.c.b16 %v1758, %v1754
    %v2495 = vpack.c.b16 %v1759, %v1755
    %v2496 = vpack.c.b16 %v1760, %v1756
    %v2497 = vpack.c.b16 %v1761, %v1757
    %v2498 = vpack.c.b16 %v1766, %v1762
    %v2499 = vpack.c.b16 %v1767, %v1763
    %v2500 = vpack.c.b16 %v1768, %v1764
    %v2501 = vpack.c.b16 %v1769, %v1765
    %v2502 = vpack.c.b16 %v1774, %v1770
    %v2503 = vpack.c.b16 %v1775, %v1771
    %v2504 = vpack.c.b16 %v1776, %v1772
    %v2505 = vpack.c.b16 %v1777, %v1773
    %v2506 = vpack.c.b16 %v1782, %v1778
    %v2507 = vpack.c.b16 %v1783, %v1779
    %v2508 = vpack.c.b16 %v1784, %v1780
    %v2509 = vpack.c.b16 %v1785, %v1781
    %v2510 = vpack.c.b16 %v1790, %v1786
    %v2511 = vpack.c.b16 %v1791, %v1787
    %v2512 = vpack.c.b16 %v1792, %v1788
    %v2513 = vpack.c.b16 %v1793, %v1789
    %v2514 = vpack.c.b16 %v1798, %v1794
    %v2515 = vpack.c.b16 %v1799, %v1795
    %v2516 = vpack.c.b16 %v1800, %v1796
    %v2517 = vpack.c.b16 %v1801, %v1797
    %v2518 = vpack.c.b16 %v1806, %v1802
    %v2519 = vpack.c.b16 %v1807, %v1803
    %v2520 = vpack.c.b16 %v1808, %v1804
    %v2521 = vpack.c.b16 %v1809, %v1805
    %v2522 = vpack.c.b16 %v1814, %v1810
    %v2523 = vpack.c.b16 %v1815, %v1811
    %v2524 = vpack.c.b16 %v1816, %v1812
    %v2525 = vpack.c.b16 %v1817, %v1813
    %v2526 = vpack.c.b16 %v1822, %v1818
    %v2527 = vpack.c.b16 %v1823, %v1819
    %v2528 = vpack.c.b16 %v1824, %v1820
    %v2529 = vpack.c.b16 %v1825, %v1821
    %v2530 = vpack.c.b16 %v1830, %v1826
    %v2531 = vpack.c.b16 %v1831, %v1827
    %v2532 = vpack.c.b16 %v1832, %v1828
    %v2533 = vpack.c.b16 %v1833, %v1829
    %v2534 = vpack.c.b16 %v1838, %v1834
    %v2535 = vpack.c.b16 %v1839, %v1835
    %v2536 = vpack.c.b16 %v1840, %v1836
    %v2537 = vpack.c.b16 %v1841, %v1837
    %v2538 = vpack.c.b16 %v1846, %v1842
    %v2539 = vpack.c.b16 %v1847, %v1843
    %v2540 = vpack.c.b16 %v1848, %v1844
    %v2541 = vpack.c.b16 %v1849, %v1845
    %v2542 = vpack.c.b16 %v1854, %v1850
    %v2543 = vpack.c.b16 %v1855, %v1851
    %v2544 = vpack.c.b16 %v1856, %v1852
    %v2545 = vpack.c.b16 %v1857, %v1853
    %v2546 = vpack.c.b16 %v1862, %v1858
    %v2547 = vpack.c.b16 %v1863, %v1859
    %v2548 = vpack.c.b16 %v1864, %v1860
    %v2549 = vpack.c.b16 %v1865, %v1861
    %v2550 = vpack.c.b16 %v1870, %v1866
    %v2551 = vpack.c.b16 %v1871, %v1867
    %v2552 = vpack.c.b16 %v1872, %v1868
    %v2553 = vpack.c.b16 %v1873, %v1869
    %v2554 = vpack.c.b16 %v1878, %v1874
    %v2555 = vpack.c.b16 %v1879, %v1875
    %v2556 = vpack.c.b16 %v1880, %v1876
    %v2557 = vpack.c.b16 %v1881, %v1877
    %v2558 = vpack.c.b16 %v1886, %v1882
    %v2559 = vpack.c.b16 %v1887, %v1883
    %v2560 = vpack.c.b16 %v1888, %v1884
    %v2561 = vpack.c.b16 %v1889, %v1885
    %v2562 = vpack.c.b16 %v1894, %v1890
    %v2563 = vpack.c.b16 %v1895, %v1891
    %v2564 = vpack.c.b16 %v1896, %v1892
    %v2565 = vpack.c.b16 %v1897, %v1893
    %v2566 = vpack.c.b16 %v1902, %v1898
    %v2567 = vpack.c.b16 %v1903, %v1899
    %v2568 = vpack.c.b16 %v1904, %v1900
    %v2569 = vpack.c.b16 %v1905, %v1901
    %v2570 = vpack.c.b16 %v1910, %v1906
    %v2571 = vpack.c.b16 %v1911, %v1907
    %v2572 = vpack.c.b16 %v1912, %v1908
    %v2573 = vpack.c.b16 %v1913, %v1909
    %v2574 = vpack.c.b16 %v1918, %v1914
    %v2575 = vpack.c.b16 %v1919, %v1915
    %v2576 = vpack.c.b16 %v1920, %v1916
    %v2577 = vpack.c.b16 %v1921, %v1917
    %v2578 = vpack.c.b16 %v1926, %v1922
    %v2579 = vpack.c.b16 %v1927, %v1923
    %v2580 = vpack.c.b16 %v1928, %v1924
    %v2581 = vpack.c.b16 %v1929, %v1925
    %v2582 = vpack.c.b16 %v1934, %v1930
    %v2583 = vpack.c.b16 %v1935, %v1931
    %v2584 = vpack.c.b16 %v1936, %v1932
    %v2585 = vpack.c.b16 %v1937, %v1933
    %v2586 = vpack.c.b16 %v1942, %v1938
    %v2587 = vpack.c.b16 %v1943, %v1939
    %v2588 = vpack.c.b16 %v1944, %v1940
    %v2589 = vpack.c.b16 %v1945, %v1941
    %v2590 = vpack.c.b16 %v1950, %v1946
    %v2591 = vpack.c.b16 %v1951, %v1947
    %v2592 = vpack.c.b16 %v1952, %v1948
    %v2593 = vpack.c.b16 %v1953, %v1949
    %v2594 = vpack.c.b16 %v1958, %v1954
    %v2595 = vpack.c.b16 %v1959, %v1955
    %v2596 = vpack.c.b16 %v1960, %v1956
    %v2597 = vpack.c.b16 %v1961, %v1957
    %v2598 = vpack.c.b16 %v1966, %v1962
    %v2599 = vpack.c.b16 %v1967, %v1963
    %v2600 = vpack.c.b16 %v1968, %v1964
    %v2601 = vpack.c.b16 %v1969, %v1965
    %v2602 = vpack.c.b16 %v1974, %v1970
    %v2603 = vpack.c.b16 %v1975, %v1971
    %v2604 = vpack.c.b16 %v1976, %v1972
    %v2605 = vpack.c.b16 %v1977, %v1973
    %v2606 = vpack.c.b16 %v1982, %v1978
    %v2607 = vpack.c.b16 %v1983, %v1979
    %v2608 = vpack.c.b16 %v1984, %v1980
    %v2609 = vpack.c.b16 %v1985, %v1981
    %v2610 = vpack.c.b16 %v1990, %v1986
    %v2611 = vpack.c.b16 %v1991, %v1987
    %v2612 = vpack.c.b16 %v1992, %v1988
    %v2613 = vpack.c.b16 %v1993, %v1989
    %v2614 = vpack.c.b16 %v1998, %v1994
    %v2615 = vpack.c.b16 %v1999, %v1995
    %v2616 = vpack.c.b16 %v2000, %v1996
    %v2617 = vpack.c.b16 %v2001, %v1997
    %v2618 = vpack.c.b16 %v2006, %v2002
    %v2619 = vpack.c.b16 %v2007, %v2003
    %v2620 = vpack.c.b16 %v2008, %v2004
    %v2621 = vpack.c.b16 %v2009, %v2005
    %v2622 = vpack.c.b16 %v2014, %v2010
    %v2623 = vpack.c.b16 %v2015, %v2011
    %v2624 = vpack.c.b16 %v2016, %v2012
    %v2625 = vpack.c.b16 %v2017, %v2013
    %v2626 = vpack.c.b16 %v2022, %v2018
    %v2627 = vpack.c.b16 %v2023, %v2019
    %v2628 = vpack.c.b16 %v2024, %v2020
    %v2629 = vpack.c.b16 %v2025, %v2021
    %v2630 = vpack.c.b16 %v2030, %v2026
    %v2631 = vpack.c.b16 %v2031, %v2027
    %v2632 = vpack.c.b16 %v2032, %v2028
    %v2633 = vpack.c.b16 %v2033, %v2029
    %v2634 = vpack.c.b16 %v2038, %v2034
    %v2635 = vpack.c.b16 %v2039, %v2035
    %v2636 = vpack.c.b16 %v2040, %v2036
    %v2637 = vpack.c.b16 %v2041, %v2037
    %v2638 = vpack.c.b16 %v2046, %v2042
    %v2639 = vpack.c.b16 %v2047, %v2043
    %v2640 = vpack.c.b16 %v2048, %v2044
    %v2641 = vpack.c.b16 %v2049, %v2045
    %v2642 = vpack.c.b16 %v2054, %v2050
    %v2643 = vpack.c.b16 %v2055, %v2051
    %v2644 = vpack.c.b16 %v2056, %v2052
    %v2645 = vpack.c.b16 %v2057, %v2053
    %v2646 = vpack.c.b16 %v2062, %v2058
    %v2647 = vpack.c.b16 %v2063, %v2059
    %v2648 = vpack.c.b16 %v2064, %v2060
    %v2649 = vpack.c.b16 %v2065, %v2061
    %v2650 = vpack.c.b16 %v2070, %v2066
    %v2651 = vpack.c.b16 %v2071, %v2067
    %v2652 = vpack.c.b16 %v2072, %v2068
    %v2653 = vpack.c.b16 %v2073, %v2069
    %v2654 = vpack.c.b16 %v2078, %v2074
    %v2655 = vpack.c.b16 %v2079, %v2075
    %v2656 = vpack.c.b16 %v2080, %v2076
    %v2657 = vpack.c.b16 %v2081, %v2077
    %v2658 = vpack.c.b16 %v2086, %v2082
    %v2659 = vpack.c.b16 %v2087, %v2083
    %v2660 = vpack.c.b16 %v2088, %v2084
    %v2661 = vpack.c.b16 %v2089, %v2085
    %v2662 = vpack.c.b16 %v2094, %v2090
    %v2663 = vpack.c.b16 %v2095, %v2091
    %v2664 = vpack.c.b16 %v2096, %v2092
    %v2665 = vpack.c.b16 %v2097, %v2093
    %v2666 = vpack.c.b16 %v2102, %v2098
    %v2667 = vpack.c.b16 %v2103, %v2099
    %v2668 = vpack.c.b16 %v2104, %v2100
    %v2669 = vpack.c.b16 %v2105, %v2101
    %v2670 = vpack.c.b16 %v2110, %v2106
    %v2671 = vpack.c.b16 %v2111, %v2107
    %v2672 = vpack.c.b16 %v2112, %v2108
    %v2673 = vpack.c.b16 %v2113, %v2109
    %v2674 = vpack.c.b16 %v2118, %v2114
    %v2675 = vpack.c.b16 %v2119, %v2115
    %v2676 = vpack.c.b16 %v2120, %v2116
    %v2677 = vpack.c.b16 %v2121, %v2117
    %v2678 = vpack.c.b16 %v2126, %v2122
    %v2679 = vpack.c.b16 %v2127, %v2123
    %v2680 = vpack.c.b16 %v2128, %v2124
    %v2681 = vpack.c.b16 %v2129, %v2125
    %v2682 = vpack.c.b16 %v2134, %v2130
    %v2683 = vpack.c.b16 %v2135, %v2131
    %v2684 = vpack.c.b16 %v2136, %v2132
    %v2685 = vpack.c.b16 %v2137, %v2133
    %v2686 = vpack.c.b16 %v2142, %v2138
    %v2687 = vpack.c.b16 %v2143, %v2139
    %v2688 = vpack.c.b16 %v2144, %v2140
    %v2689 = vpack.c.b16 %v2145, %v2141
    %v2690 = vpack.c.b16 %v2150, %v2146
    %v2691 = vpack.c.b16 %v2151, %v2147
    %v2692 = vpack.c.b16 %v2152, %v2148
    %v2693 = vpack.c.b16 %v2153, %v2149
    %v2694 = vpack.c.b16 %v2158, %v2154
    %v2695 = vpack.c.b16 %v2159, %v2155
    %v2696 = vpack.c.b16 %v2160, %v2156
    %v2697 = vpack.c.b16 %v2161, %v2157
    %v2698 = vpack.c.b16 %v2166, %v2162
    %v2699 = vpack.c.b16 %v2167, %v2163
    %v2700 = vpack.c.b16 %v2168, %v2164
    %v2701 = vpack.c.b16 %v2169, %v2165
    %v2702 = vpack.c.b16 %v2174, %v2170
    %v2703 = vpack.c.b16 %v2175, %v2171
    %v2704 = vpack.c.b16 %v2176, %v2172
    %v2705 = vpack.c.b16 %v2177, %v2173
    %v2706 = vpack.c.b16 %v2182, %v2178
    %v2707 = vpack.c.b16 %v2183, %v2179
    %v2708 = vpack.c.b16 %v2184, %v2180
    %v2709 = vpack.c.b16 %v2185, %v2181
    %v2710 = vpack.c.b16 %v2190, %v2186
    %v2711 = vpack.c.b16 %v2191, %v2187
    %v2712 = vpack.c.b16 %v2192, %v2188
    %v2713 = vpack.c.b16 %v2193, %v2189
    %v2714 = vpack.c.b16 %v2198, %v2194
    %v2715 = vpack.c.b16 %v2199, %v2195
    %v2716 = vpack.c.b16 %v2200, %v2196
    %v2717 = vpack.c.b16 %v2201, %v2197
    %v2718 = vpack.c.b16 %v2206, %v2202
    %v2719 = vpack.c.b16 %v2207, %v2203
    %v2720 = vpack.c.b16 %v2208, %v2204
    %v2721 = vpack.c.b16 %v2209, %v2205
    %3234 = vmatprep.subr.bf16.mxu0 %v2239
    %3235 = vmatpush1.bf16.msra.mxu0 %v2238
    %3236 = vmatprep.subr.bf16.mxu0 %v2235
    %3237 = vmatpush1.bf16.msra.mxu0 %v2234
    %3238 = vmatprep.subr.bf16.mxu0 %v2231
    %3239 = vmatpush1.bf16.msra.mxu0 %v2230
    %3240 = vmatprep.subr.bf16.mxu0 %v2227
    %3241 = vmatpush1.bf16.msra.mxu0 %v2226
    %3242 = vmatprep.subr.bf16.mxu0 %v2223
    %3243 = vmatpush1.bf16.msra.mxu0 %v2222
    %3244 = vmatprep.subr.bf16.mxu0 %v2219
    %3245 = vmatpush1.bf16.msra.mxu0 %v2218
    %3246 = vmatprep.subr.bf16.mxu0 %v2215
    %3247 = vmatpush1.bf16.msra.mxu0 %v2214
    %3248 = vmatprep.subr.bf16.mxu0 %v2211
    %3249 = vmatpush1.bf16.msra.mxu0 %v2210
    %3250 = vmatprep.subr.bf16.mxu0 %v2271
    %3251 = vmatpush2.bf16.msra.mxu0 %v2270
    %3252 = vmatprep.subr.bf16.mxu0 %v2267
    %3253 = vmatpush2.bf16.msra.mxu0 %v2266
    %3254 = vmatprep.subr.bf16.mxu0 %v2263
    %3255 = vmatpush2.bf16.msra.mxu0 %v2262
    %3256 = vmatprep.subr.bf16.mxu0 %v2259
    %3257 = vmatpush2.bf16.msra.mxu0 %v2258
    %3258 = vmatprep.subr.bf16.mxu0 %v2255
    %3259 = vmatpush2.bf16.msra.mxu0 %v2254
    %3260 = vmatprep.subr.bf16.mxu0 %v2251
    %3261 = vmatpush2.bf16.msra.mxu0 %v2250
    %3262 = vmatprep.subr.bf16.mxu0 %v2247
    %3263 = vmatpush2.bf16.msra.mxu0 %v2246
    %3264 = vmatprep.subr.bf16.mxu0 %v2243
    %3265 = vmatpush2.bf16.msra.mxu0 %v2242
    %3266 = vmatprep.mubr.bf16.mxu0 %v597
    %3267 = vmatmul.mubr.bf16.gmra.mxu0 %v583
    %v3268 = vpop.f32.mrf.mxu0
    %v3269 = vadd.f32 %v541, %v3268
    %v3270 = vpop.f32.mrf.mxu0
    %v3271 = vadd.f32 %v545, %v3270
    %v3272 = vpop.f32.mrf.mxu0
    %v3273 = vpop.f32.mrf.mxu0
    %3274 = vdwg.mxu0
    %3275 = vmatprep.subr.bf16.mxu0 %v2303
    %3276 = vmatpush1.bf16.msra.mxu0 %v2302
    %3277 = vmatprep.subr.bf16.mxu0 %v2299
    %3278 = vmatpush1.bf16.msra.mxu0 %v2298
    %3279 = vmatprep.subr.bf16.mxu0 %v2295
    %3280 = vmatpush1.bf16.msra.mxu0 %v2294
    %3281 = vmatprep.subr.bf16.mxu0 %v2291
    %3282 = vmatpush1.bf16.msra.mxu0 %v2290
    %3283 = vmatprep.subr.bf16.mxu0 %v2287
    %3284 = vmatpush1.bf16.msra.mxu0 %v2286
    %3285 = vmatprep.subr.bf16.mxu0 %v2283
    %3286 = vmatpush1.bf16.msra.mxu0 %v2282
    %3287 = vmatprep.subr.bf16.mxu0 %v2279
    %3288 = vmatpush1.bf16.msra.mxu0 %v2278
    %3289 = vmatprep.subr.bf16.mxu0 %v2275
    %3290 = vmatpush1.bf16.msra.mxu0 %v2274
    %3291 = vmatprep.subr.bf16.mxu0 %v2335
    %3292 = vmatpush2.bf16.msra.mxu0 %v2334
    %3293 = vmatprep.subr.bf16.mxu0 %v2331
    %3294 = vmatpush2.bf16.msra.mxu0 %v2330
    %3295 = vmatprep.subr.bf16.mxu0 %v2327
    %3296 = vmatpush2.bf16.msra.mxu0 %v2326
    %3297 = vmatprep.subr.bf16.mxu0 %v2323
    %3298 = vmatpush2.bf16.msra.mxu0 %v2322
    %3299 = vmatprep.subr.bf16.mxu0 %v2319
    %3300 = vmatpush2.bf16.msra.mxu0 %v2318
    %3301 = vmatprep.subr.bf16.mxu0 %v2315
    %3302 = vmatpush2.bf16.msra.mxu0 %v2314
    %3303 = vmatprep.subr.bf16.mxu0 %v2311
    %3304 = vmatpush2.bf16.msra.mxu0 %v2310
    %3305 = vmatprep.subr.bf16.mxu0 %v2307
    %3306 = vmatpush2.bf16.msra.mxu0 %v2306
    %3307 = vmatprep.mubr.bf16.mxu0 %v607
    %3308 = vmatmul.mubr.bf16.gmra.mxu0 %v605
    %v3309 = vpop.f32.mrf.mxu0
    %v3310 = vadd.f32 %v3269, %v3309
    %v3311 = vpop.f32.mrf.mxu0
    %v3312 = vadd.f32 %v3271, %v3311
    %v3313 = vpop.f32.mrf.mxu0
    %v3314 = vpop.f32.mrf.mxu0
    %3315 = vdwg.mxu0
    %3316 = vmatprep.subr.bf16.mxu0 %v2367
    %3317 = vmatpush1.bf16.msra.mxu0 %v2366
    %3318 = vmatprep.subr.bf16.mxu0 %v2363
    %3319 = vmatpush1.bf16.msra.mxu0 %v2362
    %3320 = vmatprep.subr.bf16.mxu0 %v2359
    %3321 = vmatpush1.bf16.msra.mxu0 %v2358
    %3322 = vmatprep.subr.bf16.mxu0 %v2355
    %3323 = vmatpush1.bf16.msra.mxu0 %v2354
    %3324 = vmatprep.subr.bf16.mxu0 %v2351
    %3325 = vmatpush1.bf16.msra.mxu0 %v2350
    %3326 = vmatprep.subr.bf16.mxu0 %v2347
    %3327 = vmatpush1.bf16.msra.mxu0 %v2346
    %3328 = vmatprep.subr.bf16.mxu0 %v2343
    %3329 = vmatpush1.bf16.msra.mxu0 %v2342
    %3330 = vmatprep.subr.bf16.mxu0 %v2339
    %3331 = vmatpush1.bf16.msra.mxu0 %v2338
    %3332 = vmatprep.subr.bf16.mxu0 %v2399
    %3333 = vmatpush2.bf16.msra.mxu0 %v2398
    %3334 = vmatprep.subr.bf16.mxu0 %v2395
    %3335 = vmatpush2.bf16.msra.mxu0 %v2394
    %3336 = vmatprep.subr.bf16.mxu0 %v2391
    %3337 = vmatpush2.bf16.msra.mxu0 %v2390
    %3338 = vmatprep.subr.bf16.mxu0 %v2387
    %3339 = vmatpush2.bf16.msra.mxu0 %v2386
    %3340 = vmatprep.subr.bf16.mxu0 %v2383
    %3341 = vmatpush2.bf16.msra.mxu0 %v2382
    %3342 = vmatprep.subr.bf16.mxu0 %v2379
    %3343 = vmatpush2.bf16.msra.mxu0 %v2378
    %3344 = vmatprep.subr.bf16.mxu0 %v2375
    %3345 = vmatpush2.bf16.msra.mxu0 %v2374
    %3346 = vmatprep.subr.bf16.mxu0 %v2371
    %3347 = vmatpush2.bf16.msra.mxu0 %v2370
    %3348 = vmatprep.mubr.bf16.mxu0 %v604
    %3349 = vmatmul.mubr.bf16.gmra.mxu0 %v590
    %v3350 = vpop.f32.mrf.mxu0
    %v3351 = vadd.f32 %v3310, %v3350
    %v3352 = vpop.f32.mrf.mxu0
    %v3353 = vadd.f32 %v3312, %v3352
    %v3354 = vpop.f32.mrf.mxu0
    %v3355 = vpop.f32.mrf.mxu0
    %3356 = vdwg.mxu0
    %3357 = vmatprep.subr.bf16.mxu0 %v2431
    %3358 = vmatpush1.bf16.msra.mxu0 %v2430
    %3359 = vmatprep.subr.bf16.mxu0 %v2427
    %3360 = vmatpush1.bf16.msra.mxu0 %v2426
    %3361 = vmatprep.subr.bf16.mxu0 %v2423
    %3362 = vmatpush1.bf16.msra.mxu0 %v2422
    %3363 = vmatprep.subr.bf16.mxu0 %v2419
    %3364 = vmatpush1.bf16.msra.mxu0 %v2418
    %3365 = vmatprep.subr.bf16.mxu0 %v2415
    %3366 = vmatpush1.bf16.msra.mxu0 %v2414
    %3367 = vmatprep.subr.bf16.mxu0 %v2411
    %3368 = vmatpush1.bf16.msra.mxu0 %v2410
    %3369 = vmatprep.subr.bf16.mxu0 %v2407
    %3370 = vmatpush1.bf16.msra.mxu0 %v2406
    %3371 = vmatprep.subr.bf16.mxu0 %v2403
    %3372 = vmatpush1.bf16.msra.mxu0 %v2402
    %3373 = vmatprep.subr.bf16.mxu0 %v2463
    %3374 = vmatpush2.bf16.msra.mxu0 %v2462
    %3375 = vmatprep.subr.bf16.mxu0 %v2459
    %3376 = vmatpush2.bf16.msra.mxu0 %v2458
    %3377 = vmatprep.subr.bf16.mxu0 %v2455
    %3378 = vmatpush2.bf16.msra.mxu0 %v2454
    %3379 = vmatprep.subr.bf16.mxu0 %v2451
    %3380 = vmatpush2.bf16.msra.mxu0 %v2450
    %3381 = vmatprep.subr.bf16.mxu0 %v2447
    %3382 = vmatpush2.bf16.msra.mxu0 %v2446
    %3383 = vmatprep.subr.bf16.mxu0 %v2443
    %3384 = vmatpush2.bf16.msra.mxu0 %v2442
    %3385 = vmatprep.subr.bf16.mxu0 %v2439
    %3386 = vmatpush2.bf16.msra.mxu0 %v2438
    %3387 = vmatprep.subr.bf16.mxu0 %v2435
    %3388 = vmatpush2.bf16.msra.mxu0 %v2434
    %3389 = vmatprep.mubr.bf16.mxu0 %v608
    %3390 = vmatmul.mubr.bf16.gmra.mxu0 %v606
    %v3391 = vpop.f32.mrf.mxu0
    %v3392 = vadd.f32 %v3351, %v3391
    %v3393 = vpop.f32.mrf.mxu0
    %v3394 = vadd.f32 %v3353, %v3393
    %v3395 = vpop.f32.mrf.mxu0
    %v3396 = vpop.f32.mrf.mxu0
    %3397 = vdwg.mxu0
    %3398 = vmatprep.subr.bf16.mxu0 %v2495
    %3399 = vmatpush1.bf16.msra.mxu0 %v2494
    %3400 = vmatprep.subr.bf16.mxu0 %v2491
    %3401 = vmatpush1.bf16.msra.mxu0 %v2490
    %3402 = vmatprep.subr.bf16.mxu0 %v2487
    %3403 = vmatpush1.bf16.msra.mxu0 %v2486
    %3404 = vmatprep.subr.bf16.mxu0 %v2483
    %3405 = vmatpush1.bf16.msra.mxu0 %v2482
    %3406 = vmatprep.subr.bf16.mxu0 %v2479
    %3407 = vmatpush1.bf16.msra.mxu0 %v2478
    %3408 = vmatprep.subr.bf16.mxu0 %v2475
    %3409 = vmatpush1.bf16.msra.mxu0 %v2474
    %3410 = vmatprep.subr.bf16.mxu0 %v2471
    %3411 = vmatpush1.bf16.msra.mxu0 %v2470
    %3412 = vmatprep.subr.bf16.mxu0 %v2467
    %3413 = vmatpush1.bf16.msra.mxu0 %v2466
    %3414 = vmatprep.subr.bf16.mxu0 %v2527
    %3415 = vmatpush2.bf16.msra.mxu0 %v2526
    %3416 = vmatprep.subr.bf16.mxu0 %v2523
    %3417 = vmatpush2.bf16.msra.mxu0 %v2522
    %3418 = vmatprep.subr.bf16.mxu0 %v2519
    %3419 = vmatpush2.bf16.msra.mxu0 %v2518
    %3420 = vmatprep.subr.bf16.mxu0 %v2515
    %3421 = vmatpush2.bf16.msra.mxu0 %v2514
    %3422 = vmatprep.subr.bf16.mxu0 %v2511
    %3423 = vmatpush2.bf16.msra.mxu0 %v2510
    %3424 = vmatprep.subr.bf16.mxu0 %v2507
    %3425 = vmatpush2.bf16.msra.mxu0 %v2506
    %3426 = vmatprep.subr.bf16.mxu0 %v2503
    %3427 = vmatpush2.bf16.msra.mxu0 %v2502
    %3428 = vmatprep.subr.bf16.mxu0 %v2499
    %3429 = vmatpush2.bf16.msra.mxu0 %v2498
    %3430 = vmatprep.mubr.bf16.mxu0 %v646
    %3431 = vmatmul.mubr.bf16.gmra.mxu0 %v632
    %v3432 = vpop.f32.mrf.mxu0
    %v3433 = vadd.f32 %v3392, %v3432
    %v3434 = vpop.f32.mrf.mxu0
    %v3435 = vadd.f32 %v3394, %v3434
    %v3436 = vpop.f32.mrf.mxu0
    %v3437 = vpop.f32.mrf.mxu0
    %3438 = vdwg.mxu0
    %3439 = vmatprep.subr.bf16.mxu0 %v2559
    %3440 = vmatpush1.bf16.msra.mxu0 %v2558
    %3441 = vmatprep.subr.bf16.mxu0 %v2555
    %3442 = vmatpush1.bf16.msra.mxu0 %v2554
    %3443 = vmatprep.subr.bf16.mxu0 %v2551
    %3444 = vmatpush1.bf16.msra.mxu0 %v2550
    %3445 = vmatprep.subr.bf16.mxu0 %v2547
    %3446 = vmatpush1.bf16.msra.mxu0 %v2546
    %3447 = vmatprep.subr.bf16.mxu0 %v2543
    %3448 = vmatpush1.bf16.msra.mxu0 %v2542
    %3449 = vmatprep.subr.bf16.mxu0 %v2539
    %3450 = vmatpush1.bf16.msra.mxu0 %v2538
    %3451 = vmatprep.subr.bf16.mxu0 %v2535
    %3452 = vmatpush1.bf16.msra.mxu0 %v2534
    %3453 = vmatprep.subr.bf16.mxu0 %v2531
    %3454 = vmatpush1.bf16.msra.mxu0 %v2530
    %3455 = vmatprep.subr.bf16.mxu0 %v2591
    %3456 = vmatpush2.bf16.msra.mxu0 %v2590
    %3457 = vmatprep.subr.bf16.mxu0 %v2587
    %3458 = vmatpush2.bf16.msra.mxu0 %v2586
    %3459 = vmatprep.subr.bf16.mxu0 %v2583
    %3460 = vmatpush2.bf16.msra.mxu0 %v2582
    %3461 = vmatprep.subr.bf16.mxu0 %v2579
    %3462 = vmatpush2.bf16.msra.mxu0 %v2578
    %3463 = vmatprep.subr.bf16.mxu0 %v2575
    %3464 = vmatpush2.bf16.msra.mxu0 %v2574
    %3465 = vmatprep.subr.bf16.mxu0 %v2571
    %3466 = vmatpush2.bf16.msra.mxu0 %v2570
    %3467 = vmatprep.subr.bf16.mxu0 %v2567
    %3468 = vmatpush2.bf16.msra.mxu0 %v2566
    %3469 = vmatprep.subr.bf16.mxu0 %v2563
    %3470 = vmatpush2.bf16.msra.mxu0 %v2562
    %3471 = vmatprep.mubr.bf16.mxu0 %v656
    %3472 = vmatmul.mubr.bf16.gmra.mxu0 %v654
    %v3473 = vpop.f32.mrf.mxu0
    %v3474 = vadd.f32 %v3433, %v3473
    %v3475 = vpop.f32.mrf.mxu0
    %v3476 = vadd.f32 %v3435, %v3475
    %v3477 = vpop.f32.mrf.mxu0
    %v3478 = vpop.f32.mrf.mxu0
    %3479 = vdwg.mxu0
    %3480 = vmatprep.subr.bf16.mxu0 %v2623
    %3481 = vmatpush1.bf16.msra.mxu0 %v2622
    %3482 = vmatprep.subr.bf16.mxu0 %v2619
    %3483 = vmatpush1.bf16.msra.mxu0 %v2618
    %3484 = vmatprep.subr.bf16.mxu0 %v2615
    %3485 = vmatpush1.bf16.msra.mxu0 %v2614
    %3486 = vmatprep.subr.bf16.mxu0 %v2611
    %3487 = vmatpush1.bf16.msra.mxu0 %v2610
    %3488 = vmatprep.subr.bf16.mxu0 %v2607
    %3489 = vmatpush1.bf16.msra.mxu0 %v2606
    %3490 = vmatprep.subr.bf16.mxu0 %v2603
    %3491 = vmatpush1.bf16.msra.mxu0 %v2602
    %3492 = vmatprep.subr.bf16.mxu0 %v2599
    %3493 = vmatpush1.bf16.msra.mxu0 %v2598
    %3494 = vmatprep.subr.bf16.mxu0 %v2595
    %3495 = vmatpush1.bf16.msra.mxu0 %v2594
    %3496 = vmatprep.subr.bf16.mxu0 %v2655
    %3497 = vmatpush2.bf16.msra.mxu0 %v2654
    %3498 = vmatprep.subr.bf16.mxu0 %v2651
    %3499 = vmatpush2.bf16.msra.mxu0 %v2650
    %3500 = vmatprep.subr.bf16.mxu0 %v2647
    %3501 = vmatpush2.bf16.msra.mxu0 %v2646
    %3502 = vmatprep.subr.bf16.mxu0 %v2643
    %3503 = vmatpush2.bf16.msra.mxu0 %v2642
    %3504 = vmatprep.subr.bf16.mxu0 %v2639
    %3505 = vmatpush2.bf16.msra.mxu0 %v2638
    %3506 = vmatprep.subr.bf16.mxu0 %v2635
    %3507 = vmatpush2.bf16.msra.mxu0 %v2634
    %3508 = vmatprep.subr.bf16.mxu0 %v2631
    %3509 = vmatpush2.bf16.msra.mxu0 %v2630
    %3510 = vmatprep.subr.bf16.mxu0 %v2627
    %3511 = vmatpush2.bf16.msra.mxu0 %v2626
    %3512 = vmatprep.mubr.bf16.mxu0 %v653
    %3513 = vmatmul.mubr.bf16.gmra.mxu0 %v639
    %v3514 = vpop.f32.mrf.mxu0
    %v3515 = vadd.f32 %v3474, %v3514
    %v3516 = vpop.f32.mrf.mxu0
    %v3517 = vadd.f32 %v3476, %v3516
    %v3518 = vpop.f32.mrf.mxu0
    %v3519 = vpop.f32.mrf.mxu0
    %3520 = vdwg.mxu0
    %3521 = vmatprep.subr.bf16.mxu0 %v2687
    %3522 = vmatpush1.bf16.msra.mxu0 %v2686
    %3523 = vmatprep.subr.bf16.mxu0 %v2683
    %3524 = vmatpush1.bf16.msra.mxu0 %v2682
    %3525 = vmatprep.subr.bf16.mxu0 %v2679
    %3526 = vmatpush1.bf16.msra.mxu0 %v2678
    %3527 = vmatprep.subr.bf16.mxu0 %v2675
    %3528 = vmatpush1.bf16.msra.mxu0 %v2674
    %3529 = vmatprep.subr.bf16.mxu0 %v2671
    %3530 = vmatpush1.bf16.msra.mxu0 %v2670
    %3531 = vmatprep.subr.bf16.mxu0 %v2667
    %3532 = vmatpush1.bf16.msra.mxu0 %v2666
    %3533 = vmatprep.subr.bf16.mxu0 %v2663
    %3534 = vmatpush1.bf16.msra.mxu0 %v2662
    %3535 = vmatprep.subr.bf16.mxu0 %v2659
    %3536 = vmatpush1.bf16.msra.mxu0 %v2658
    %3537 = vmatprep.subr.bf16.mxu0 %v2719
    %3538 = vmatpush2.bf16.msra.mxu0 %v2718
    %3539 = vmatprep.subr.bf16.mxu0 %v2715
    %3540 = vmatpush2.bf16.msra.mxu0 %v2714
    %3541 = vmatprep.subr.bf16.mxu0 %v2711
    %3542 = vmatpush2.bf16.msra.mxu0 %v2710
    %3543 = vmatprep.subr.bf16.mxu0 %v2707
    %3544 = vmatpush2.bf16.msra.mxu0 %v2706
    %3545 = vmatprep.subr.bf16.mxu0 %v2703
    %3546 = vmatpush2.bf16.msra.mxu0 %v2702
    %3547 = vmatprep.subr.bf16.mxu0 %v2699
    %3548 = vmatpush2.bf16.msra.mxu0 %v2698
    %3549 = vmatprep.subr.bf16.mxu0 %v2695
    %3550 = vmatpush2.bf16.msra.mxu0 %v2694
    %3551 = vmatprep.subr.bf16.mxu0 %v2691
    %3552 = vmatpush2.bf16.msra.mxu0 %v2690
    %3553 = vmatprep.mubr.bf16.mxu0 %v657
    %3554 = vmatmul.mubr.bf16.gmra.mxu0 %v655
    %v3555 = vpop.f32.mrf.mxu0
    %v3556 = vadd.f32 %v3515, %v3555
    %v3557 = vpop.f32.mrf.mxu0
    %v3558 = vadd.f32 %v3517, %v3557
    %v3559 = vpop.f32.mrf.mxu0
    %v3560 = vpop.f32.mrf.mxu0
    %3561 = vdwg.mxu0
    %3562 = vmatprep.subr.bf16.mxu0 %v2241
    %3563 = vmatpush1.bf16.msra.mxu0 %v2240
    %3564 = vmatprep.subr.bf16.mxu0 %v2237
    %3565 = vmatpush1.bf16.msra.mxu0 %v2236
    %3566 = vmatprep.subr.bf16.mxu0 %v2233
    %3567 = vmatpush1.bf16.msra.mxu0 %v2232
    %3568 = vmatprep.subr.bf16.mxu0 %v2229
    %3569 = vmatpush1.bf16.msra.mxu0 %v2228
    %3570 = vmatprep.subr.bf16.mxu0 %v2225
    %3571 = vmatpush1.bf16.msra.mxu0 %v2224
    %3572 = vmatprep.subr.bf16.mxu0 %v2221
    %3573 = vmatpush1.bf16.msra.mxu0 %v2220
    %3574 = vmatprep.subr.bf16.mxu0 %v2217
    %3575 = vmatpush1.bf16.msra.mxu0 %v2216
    %3576 = vmatprep.subr.bf16.mxu0 %v2213
    %3577 = vmatpush1.bf16.msra.mxu0 %v2212
    %3578 = vmatprep.subr.bf16.mxu0 %v2273
    %3579 = vmatpush2.bf16.msra.mxu0 %v2272
    %3580 = vmatprep.subr.bf16.mxu0 %v2269
    %3581 = vmatpush2.bf16.msra.mxu0 %v2268
    %3582 = vmatprep.subr.bf16.mxu0 %v2265
    %3583 = vmatpush2.bf16.msra.mxu0 %v2264
    %3584 = vmatprep.subr.bf16.mxu0 %v2261
    %3585 = vmatpush2.bf16.msra.mxu0 %v2260
    %3586 = vmatprep.subr.bf16.mxu0 %v2257
    %3587 = vmatpush2.bf16.msra.mxu0 %v2256
    %3588 = vmatprep.subr.bf16.mxu0 %v2253
    %3589 = vmatpush2.bf16.msra.mxu0 %v2252
    %3590 = vmatprep.subr.bf16.mxu0 %v2249
    %3591 = vmatpush2.bf16.msra.mxu0 %v2248
    %3592 = vmatprep.subr.bf16.mxu0 %v2245
    %3593 = vmatpush2.bf16.msra.mxu0 %v2244
    %3594 = vmatprep.mubr.bf16.mxu0 %v597
    %3595 = vmatmul.mubr.bf16.gmra.mxu0 %v583
    %v3596 = vpop.f32.mrf.mxu0
    %v3597 = vadd.f32 %v549, %v3596
    %v3598 = vpop.f32.mrf.mxu0
    %v3599 = vadd.f32 %v553, %v3598
    %v3600 = vpop.f32.mrf.mxu0
    %v3601 = vpop.f32.mrf.mxu0
    %3602 = vdwg.mxu0
    %3603 = vmatprep.subr.bf16.mxu0 %v2305
    %3604 = vmatpush1.bf16.msra.mxu0 %v2304
    %3605 = vmatprep.subr.bf16.mxu0 %v2301
    %3606 = vmatpush1.bf16.msra.mxu0 %v2300
    %3607 = vmatprep.subr.bf16.mxu0 %v2297
    %3608 = vmatpush1.bf16.msra.mxu0 %v2296
    %3609 = vmatprep.subr.bf16.mxu0 %v2293
    %3610 = vmatpush1.bf16.msra.mxu0 %v2292
    %3611 = vmatprep.subr.bf16.mxu0 %v2289
    %3612 = vmatpush1.bf16.msra.mxu0 %v2288
    %3613 = vmatprep.subr.bf16.mxu0 %v2285
    %3614 = vmatpush1.bf16.msra.mxu0 %v2284
    %3615 = vmatprep.subr.bf16.mxu0 %v2281
    %3616 = vmatpush1.bf16.msra.mxu0 %v2280
    %3617 = vmatprep.subr.bf16.mxu0 %v2277
    %3618 = vmatpush1.bf16.msra.mxu0 %v2276
    %3619 = vmatprep.subr.bf16.mxu0 %v2337
    %3620 = vmatpush2.bf16.msra.mxu0 %v2336
    %3621 = vmatprep.subr.bf16.mxu0 %v2333
    %3622 = vmatpush2.bf16.msra.mxu0 %v2332
    %3623 = vmatprep.subr.bf16.mxu0 %v2329
    %3624 = vmatpush2.bf16.msra.mxu0 %v2328
    %3625 = vmatprep.subr.bf16.mxu0 %v2325
    %3626 = vmatpush2.bf16.msra.mxu0 %v2324
    %3627 = vmatprep.subr.bf16.mxu0 %v2321
    %3628 = vmatpush2.bf16.msra.mxu0 %v2320
    %3629 = vmatprep.subr.bf16.mxu0 %v2317
    %3630 = vmatpush2.bf16.msra.mxu0 %v2316
    %3631 = vmatprep.subr.bf16.mxu0 %v2313
    %3632 = vmatpush2.bf16.msra.mxu0 %v2312
    %3633 = vmatprep.subr.bf16.mxu0 %v2309
    %3634 = vmatpush2.bf16.msra.mxu0 %v2308
    %3635 = vmatprep.mubr.bf16.mxu0 %v607
    %3636 = vmatmul.mubr.bf16.gmra.mxu0 %v605
    %v3637 = vpop.f32.mrf.mxu0
    %v3638 = vadd.f32 %v3597, %v3637
    %v3639 = vpop.f32.mrf.mxu0
    %v3640 = vadd.f32 %v3599, %v3639
    %v3641 = vpop.f32.mrf.mxu0
    %v3642 = vpop.f32.mrf.mxu0
    %3643 = vdwg.mxu0
    %3644 = vmatprep.subr.bf16.mxu0 %v2369
    %3645 = vmatpush1.bf16.msra.mxu0 %v2368
    %3646 = vmatprep.subr.bf16.mxu0 %v2365
    %3647 = vmatpush1.bf16.msra.mxu0 %v2364
    %3648 = vmatprep.subr.bf16.mxu0 %v2361
    %3649 = vmatpush1.bf16.msra.mxu0 %v2360
    %3650 = vmatprep.subr.bf16.mxu0 %v2357
    %3651 = vmatpush1.bf16.msra.mxu0 %v2356
    %3652 = vmatprep.subr.bf16.mxu0 %v2353
    %3653 = vmatpush1.bf16.msra.mxu0 %v2352
    %3654 = vmatprep.subr.bf16.mxu0 %v2349
    %3655 = vmatpush1.bf16.msra.mxu0 %v2348
    %3656 = vmatprep.subr.bf16.mxu0 %v2345
    %3657 = vmatpush1.bf16.msra.mxu0 %v2344
    %3658 = vmatprep.subr.bf16.mxu0 %v2341
    %3659 = vmatpush1.bf16.msra.mxu0 %v2340
    %3660 = vmatprep.subr.bf16.mxu0 %v2401
    %3661 = vmatpush2.bf16.msra.mxu0 %v2400
    %3662 = vmatprep.subr.bf16.mxu0 %v2397
    %3663 = vmatpush2.bf16.msra.mxu0 %v2396
    %3664 = vmatprep.subr.bf16.mxu0 %v2393
    %3665 = vmatpush2.bf16.msra.mxu0 %v2392
    %3666 = vmatprep.subr.bf16.mxu0 %v2389
    %3667 = vmatpush2.bf16.msra.mxu0 %v2388
    %3668 = vmatprep.subr.bf16.mxu0 %v2385
    %3669 = vmatpush2.bf16.msra.mxu0 %v2384
    %3670 = vmatprep.subr.bf16.mxu0 %v2381
    %3671 = vmatpush2.bf16.msra.mxu0 %v2380
    %3672 = vmatprep.subr.bf16.mxu0 %v2377
    %3673 = vmatpush2.bf16.msra.mxu0 %v2376
    %3674 = vmatprep.subr.bf16.mxu0 %v2373
    %3675 = vmatpush2.bf16.msra.mxu0 %v2372
    %3676 = vmatprep.mubr.bf16.mxu0 %v604
    %3677 = vmatmul.mubr.bf16.gmra.mxu0 %v590
    %v3678 = vpop.f32.mrf.mxu0
    %v3679 = vadd.f32 %v3638, %v3678
    %v3680 = vpop.f32.mrf.mxu0
    %v3681 = vadd.f32 %v3640, %v3680
    %v3682 = vpop.f32.mrf.mxu0
    %v3683 = vpop.f32.mrf.mxu0
    %3684 = vdwg.mxu0
    %3685 = vmatprep.subr.bf16.mxu0 %v2433
    %3686 = vmatpush1.bf16.msra.mxu0 %v2432
    %3687 = vmatprep.subr.bf16.mxu0 %v2429
    %3688 = vmatpush1.bf16.msra.mxu0 %v2428
    %3689 = vmatprep.subr.bf16.mxu0 %v2425
    %3690 = vmatpush1.bf16.msra.mxu0 %v2424
    %3691 = vmatprep.subr.bf16.mxu0 %v2421
    %3692 = vmatpush1.bf16.msra.mxu0 %v2420
    %3693 = vmatprep.subr.bf16.mxu0 %v2417
    %3694 = vmatpush1.bf16.msra.mxu0 %v2416
    %3695 = vmatprep.subr.bf16.mxu0 %v2413
    %3696 = vmatpush1.bf16.msra.mxu0 %v2412
    %3697 = vmatprep.subr.bf16.mxu0 %v2409
    %3698 = vmatpush1.bf16.msra.mxu0 %v2408
    %3699 = vmatprep.subr.bf16.mxu0 %v2405
    %3700 = vmatpush1.bf16.msra.mxu0 %v2404
    %3701 = vmatprep.subr.bf16.mxu0 %v2465
    %3702 = vmatpush2.bf16.msra.mxu0 %v2464
    %3703 = vmatprep.subr.bf16.mxu0 %v2461
    %3704 = vmatpush2.bf16.msra.mxu0 %v2460
    %3705 = vmatprep.subr.bf16.mxu0 %v2457
    %3706 = vmatpush2.bf16.msra.mxu0 %v2456
    %3707 = vmatprep.subr.bf16.mxu0 %v2453
    %3708 = vmatpush2.bf16.msra.mxu0 %v2452
    %3709 = vmatprep.subr.bf16.mxu0 %v2449
    %3710 = vmatpush2.bf16.msra.mxu0 %v2448
    %3711 = vmatprep.subr.bf16.mxu0 %v2445
    %3712 = vmatpush2.bf16.msra.mxu0 %v2444
    %3713 = vmatprep.subr.bf16.mxu0 %v2441
    %3714 = vmatpush2.bf16.msra.mxu0 %v2440
    %3715 = vmatprep.subr.bf16.mxu0 %v2437
    %3716 = vmatpush2.bf16.msra.mxu0 %v2436
    %3717 = vmatprep.mubr.bf16.mxu0 %v608
    %3718 = vmatmul.mubr.bf16.gmra.mxu0 %v606
    %v3719 = vpop.f32.mrf.mxu0
    %v3720 = vadd.f32 %v3679, %v3719
    %v3721 = vpop.f32.mrf.mxu0
    %v3722 = vadd.f32 %v3681, %v3721
    %v3723 = vpop.f32.mrf.mxu0
    %v3724 = vpop.f32.mrf.mxu0
    %3725 = vdwg.mxu0
    %3726 = vmatprep.subr.bf16.mxu0 %v2497
    %3727 = vmatpush1.bf16.msra.mxu0 %v2496
    %3728 = vmatprep.subr.bf16.mxu0 %v2493
    %3729 = vmatpush1.bf16.msra.mxu0 %v2492
    %3730 = vmatprep.subr.bf16.mxu0 %v2489
    %3731 = vmatpush1.bf16.msra.mxu0 %v2488
    %3732 = vmatprep.subr.bf16.mxu0 %v2485
    %3733 = vmatpush1.bf16.msra.mxu0 %v2484
    %3734 = vmatprep.subr.bf16.mxu0 %v2481
    %3735 = vmatpush1.bf16.msra.mxu0 %v2480
    %3736 = vmatprep.subr.bf16.mxu0 %v2477
    %3737 = vmatpush1.bf16.msra.mxu0 %v2476
    %3738 = vmatprep.subr.bf16.mxu0 %v2473
    %3739 = vmatpush1.bf16.msra.mxu0 %v2472
    %3740 = vmatprep.subr.bf16.mxu0 %v2469
    %3741 = vmatpush1.bf16.msra.mxu0 %v2468
    %3742 = vmatprep.subr.bf16.mxu0 %v2529
    %3743 = vmatpush2.bf16.msra.mxu0 %v2528
    %3744 = vmatprep.subr.bf16.mxu0 %v2525
    %3745 = vmatpush2.bf16.msra.mxu0 %v2524
    %3746 = vmatprep.subr.bf16.mxu0 %v2521
    %3747 = vmatpush2.bf16.msra.mxu0 %v2520
    %3748 = vmatprep.subr.bf16.mxu0 %v2517
    %3749 = vmatpush2.bf16.msra.mxu0 %v2516
    %3750 = vmatprep.subr.bf16.mxu0 %v2513
    %3751 = vmatpush2.bf16.msra.mxu0 %v2512
    %3752 = vmatprep.subr.bf16.mxu0 %v2509
    %3753 = vmatpush2.bf16.msra.mxu0 %v2508
    %3754 = vmatprep.subr.bf16.mxu0 %v2505
    %3755 = vmatpush2.bf16.msra.mxu0 %v2504
    %3756 = vmatprep.subr.bf16.mxu0 %v2501
    %3757 = vmatpush2.bf16.msra.mxu0 %v2500
    %3758 = vmatprep.mubr.bf16.mxu0 %v646
    %3759 = vmatmul.mubr.bf16.gmra.mxu0 %v632
    %v3760 = vpop.f32.mrf.mxu0
    %v3761 = vadd.f32 %v3720, %v3760
    %v3762 = vpop.f32.mrf.mxu0
    %v3763 = vadd.f32 %v3722, %v3762
    %v3764 = vpop.f32.mrf.mxu0
    %v3765 = vpop.f32.mrf.mxu0
    %3766 = vdwg.mxu0
    %3767 = vmatprep.subr.bf16.mxu0 %v2561
    %3768 = vmatpush1.bf16.msra.mxu0 %v2560
    %3769 = vmatprep.subr.bf16.mxu0 %v2557
    %3770 = vmatpush1.bf16.msra.mxu0 %v2556
    %3771 = vmatprep.subr.bf16.mxu0 %v2553
    %3772 = vmatpush1.bf16.msra.mxu0 %v2552
    %3773 = vmatprep.subr.bf16.mxu0 %v2549
    %3774 = vmatpush1.bf16.msra.mxu0 %v2548
    %3775 = vmatprep.subr.bf16.mxu0 %v2545
    %3776 = vmatpush1.bf16.msra.mxu0 %v2544
    %3777 = vmatprep.subr.bf16.mxu0 %v2541
    %3778 = vmatpush1.bf16.msra.mxu0 %v2540
    %3779 = vmatprep.subr.bf16.mxu0 %v2537
    %3780 = vmatpush1.bf16.msra.mxu0 %v2536
    %3781 = vmatprep.subr.bf16.mxu0 %v2533
    %3782 = vmatpush1.bf16.msra.mxu0 %v2532
    %3783 = vmatprep.subr.bf16.mxu0 %v2593
    %3784 = vmatpush2.bf16.msra.mxu0 %v2592
    %3785 = vmatprep.subr.bf16.mxu0 %v2589
    %3786 = vmatpush2.bf16.msra.mxu0 %v2588
    %3787 = vmatprep.subr.bf16.mxu0 %v2585
    %3788 = vmatpush2.bf16.msra.mxu0 %v2584
    %3789 = vmatprep.subr.bf16.mxu0 %v2581
    %3790 = vmatpush2.bf16.msra.mxu0 %v2580
    %3791 = vmatprep.subr.bf16.mxu0 %v2577
    %3792 = vmatpush2.bf16.msra.mxu0 %v2576
    %3793 = vmatprep.subr.bf16.mxu0 %v2573
    %3794 = vmatpush2.bf16.msra.mxu0 %v2572
    %3795 = vmatprep.subr.bf16.mxu0 %v2569
    %3796 = vmatpush2.bf16.msra.mxu0 %v2568
    %3797 = vmatprep.subr.bf16.mxu0 %v2565
    %3798 = vmatpush2.bf16.msra.mxu0 %v2564
    %3799 = vmatprep.mubr.bf16.mxu0 %v656
    %3800 = vmatmul.mubr.bf16.gmra.mxu0 %v654
    %v3801 = vpop.f32.mrf.mxu0
    %v3802 = vadd.f32 %v3761, %v3801
    %v3803 = vpop.f32.mrf.mxu0
    %v3804 = vadd.f32 %v3763, %v3803
    %v3805 = vpop.f32.mrf.mxu0
    %v3806 = vpop.f32.mrf.mxu0
    %3807 = vdwg.mxu0
    %3808 = vmatprep.subr.bf16.mxu0 %v2625
    %3809 = vmatpush1.bf16.msra.mxu0 %v2624
    %3810 = vmatprep.subr.bf16.mxu0 %v2621
    %3811 = vmatpush1.bf16.msra.mxu0 %v2620
    %3812 = vmatprep.subr.bf16.mxu0 %v2617
    %3813 = vmatpush1.bf16.msra.mxu0 %v2616
    %3814 = vmatprep.subr.bf16.mxu0 %v2613
    %3815 = vmatpush1.bf16.msra.mxu0 %v2612
    %3816 = vmatprep.subr.bf16.mxu0 %v2609
    %3817 = vmatpush1.bf16.msra.mxu0 %v2608
    %3818 = vmatprep.subr.bf16.mxu0 %v2605
    %3819 = vmatpush1.bf16.msra.mxu0 %v2604
    %3820 = vmatprep.subr.bf16.mxu0 %v2601
    %3821 = vmatpush1.bf16.msra.mxu0 %v2600
    %3822 = vmatprep.subr.bf16.mxu0 %v2597
    %3823 = vmatpush1.bf16.msra.mxu0 %v2596
    %3824 = vmatprep.subr.bf16.mxu0 %v2657
    %3825 = vmatpush2.bf16.msra.mxu0 %v2656
    %3826 = vmatprep.subr.bf16.mxu0 %v2653
    %3827 = vmatpush2.bf16.msra.mxu0 %v2652
    %3828 = vmatprep.subr.bf16.mxu0 %v2649
    %3829 = vmatpush2.bf16.msra.mxu0 %v2648
    %3830 = vmatprep.subr.bf16.mxu0 %v2645
    %3831 = vmatpush2.bf16.msra.mxu0 %v2644
    %3832 = vmatprep.subr.bf16.mxu0 %v2641
    %3833 = vmatpush2.bf16.msra.mxu0 %v2640
    %3834 = vmatprep.subr.bf16.mxu0 %v2637
    %3835 = vmatpush2.bf16.msra.mxu0 %v2636
    %3836 = vmatprep.subr.bf16.mxu0 %v2633
    %3837 = vmatpush2.bf16.msra.mxu0 %v2632
    %3838 = vmatprep.subr.bf16.mxu0 %v2629
    %3839 = vmatpush2.bf16.msra.mxu0 %v2628
    %3840 = vmatprep.mubr.bf16.mxu0 %v653
    %3841 = vmatmul.mubr.bf16.gmra.mxu0 %v639
    %v3842 = vpop.f32.mrf.mxu0
    %v3843 = vadd.f32 %v3802, %v3842
    %v3844 = vpop.f32.mrf.mxu0
    %v3845 = vadd.f32 %v3804, %v3844
    %v3846 = vpop.f32.mrf.mxu0
    %v3847 = vpop.f32.mrf.mxu0
    %3848 = vdwg.mxu0
    %3849 = vmatprep.subr.bf16.mxu0 %v2689
    %3850 = vmatpush1.bf16.msra.mxu0 %v2688
    %3851 = vmatprep.subr.bf16.mxu0 %v2685
    %3852 = vmatpush1.bf16.msra.mxu0 %v2684
    %3853 = vmatprep.subr.bf16.mxu0 %v2681
    %3854 = vmatpush1.bf16.msra.mxu0 %v2680
    %3855 = vmatprep.subr.bf16.mxu0 %v2677
    %3856 = vmatpush1.bf16.msra.mxu0 %v2676
    %3857 = vmatprep.subr.bf16.mxu0 %v2673
    %3858 = vmatpush1.bf16.msra.mxu0 %v2672
    %3859 = vmatprep.subr.bf16.mxu0 %v2669
    %3860 = vmatpush1.bf16.msra.mxu0 %v2668
    %3861 = vmatprep.subr.bf16.mxu0 %v2665
    %3862 = vmatpush1.bf16.msra.mxu0 %v2664
    %3863 = vmatprep.subr.bf16.mxu0 %v2661
    %3864 = vmatpush1.bf16.msra.mxu0 %v2660
    %3865 = vmatprep.subr.bf16.mxu0 %v2721
    %3866 = vmatpush2.bf16.msra.mxu0 %v2720
    %3867 = vmatprep.subr.bf16.mxu0 %v2717
    %3868 = vmatpush2.bf16.msra.mxu0 %v2716
    %3869 = vmatprep.subr.bf16.mxu0 %v2713
    %3870 = vmatpush2.bf16.msra.mxu0 %v2712
    %3871 = vmatprep.subr.bf16.mxu0 %v2709
    %3872 = vmatpush2.bf16.msra.mxu0 %v2708
    %3873 = vmatprep.subr.bf16.mxu0 %v2705
    %3874 = vmatpush2.bf16.msra.mxu0 %v2704
    %3875 = vmatprep.subr.bf16.mxu0 %v2701
    %3876 = vmatpush2.bf16.msra.mxu0 %v2700
    %3877 = vmatprep.subr.bf16.mxu0 %v2697
    %3878 = vmatpush2.bf16.msra.mxu0 %v2696
    %3879 = vmatprep.subr.bf16.mxu0 %v2693
    %3880 = vmatpush2.bf16.msra.mxu0 %v2692
    %3881 = vmatprep.mubr.bf16.mxu0 %v657
    %3882 = vmatmul.mubr.bf16.gmra.mxu0 %v655
    %v3883 = vpop.f32.mrf.mxu0
    %v3884 = vadd.f32 %v3843, %v3883
    %v3885 = vpop.f32.mrf.mxu0
    %v3886 = vadd.f32 %v3845, %v3885
    %v3887 = vpop.f32.mrf.mxu0
    %v3888 = vpop.f32.mrf.mxu0
    %3889 = vdwg.mxu0
    %v3890 = vmax.f32 %v3556, 0.0
    %v3891 = vmax.f32 %v3558, 0.0
    %v3892 = vmax.f32 %v3884, 0.0
    %v3893 = vmax.f32 %v3886, 0.0
    %v3894 = vpack.c.bf16 %v3890, %v3890
    %v3895 = vpack.c.bf16 %v3891, %v3891
    %v3896 = vpack.c.bf16 %v3892, %v3892
    %v3897 = vpack.c.bf16 %v3893, %v3893
    %v3898 = vld [vmem:[%s3] sm:$0xf]
    %v3899 = vld [vmem:[%s3 + $0x4] sm:$0xf]
    %v3900 = vld [vmem:[%s3 + $0x8] sm:$0xf]
    %v3901 = vld [vmem:[%s3 + $0xc] sm:$0xf]
    %v3902 = vld [vmem:[%s3 + $0x10] sm:$0xf]
    %v3903 = vld [vmem:[%s3 + $0x14] sm:$0xf]
    %v3904 = vld [vmem:[%s3 + $0x18] sm:$0xf]
    %v3905 = vld [vmem:[%s3 + $0x1c] sm:$0xf]
    %v3906 = vld [vmem:[%s3 + $0x20] sm:$0xf]
    %v3907 = vld [vmem:[%s3 + $0x24] sm:$0xf]
    %v3908 = vld [vmem:[%s3 + $0x28] sm:$0xf]
    %v3909 = vld [vmem:[%s3 + $0x2c] sm:$0xf]
    %v3910 = vld [vmem:[%s3 + $0x30] sm:$0xf]
    %v3911 = vld [vmem:[%s3 + $0x34] sm:$0xf]
    %v3912 = vld [vmem:[%s3 + $0x38] sm:$0xf]
    %v3913 = vld [vmem:[%s3 + $0x3c] sm:$0xf]
    %v3914 = vld [vmem:[%s3 + $0x40] sm:$0xf]
    %v3915 = vld [vmem:[%s3 + $0x44] sm:$0xf]
    %v3916 = vld [vmem:[%s3 + $0x48] sm:$0xf]
    %v3917 = vld [vmem:[%s3 + $0x4c] sm:$0xf]
    %v3918 = vld [vmem:[%s3 + $0x50] sm:$0xf]
    %v3919 = vld [vmem:[%s3 + $0x54] sm:$0xf]
    %v3920 = vld [vmem:[%s3 + $0x58] sm:$0xf]
    %v3921 = vld [vmem:[%s3 + $0x5c] sm:$0xf]
    %v3922 = vld [vmem:[%s3 + $0x60] sm:$0xf]
    %v3923 = vld [vmem:[%s3 + $0x64] sm:$0xf]
    %v3924 = vld [vmem:[%s3 + $0x68] sm:$0xf]
    %v3925 = vld [vmem:[%s3 + $0x6c] sm:$0xf]
    %v3926 = vld [vmem:[%s3 + $0x70] sm:$0xf]
    %v3927 = vld [vmem:[%s3 + $0x74] sm:$0xf]
    %v3928 = vld [vmem:[%s3 + $0x78] sm:$0xf]
    %v3929 = vld [vmem:[%s3 + $0x7c] sm:$0xf]
    %v3930 = vld [vmem:[%s3 + $0x80] sm:$0xf]
    %v3931 = vld [vmem:[%s3 + $0x84] sm:$0xf]
    %v3932 = vld [vmem:[%s3 + $0x88] sm:$0xf]
    %v3933 = vld [vmem:[%s3 + $0x8c] sm:$0xf]
    %v3934 = vld [vmem:[%s3 + $0x90] sm:$0xf]
    %v3935 = vld [vmem:[%s3 + $0x94] sm:$0xf]
    %v3936 = vld [vmem:[%s3 + $0x98] sm:$0xf]
    %v3937 = vld [vmem:[%s3 + $0x9c] sm:$0xf]
    %v3938 = vld [vmem:[%s3 + $0xa0] sm:$0xf]
    %v3939 = vld [vmem:[%s3 + $0xa4] sm:$0xf]
    %v3940 = vld [vmem:[%s3 + $0xa8] sm:$0xf]
    %v3941 = vld [vmem:[%s3 + $0xac] sm:$0xf]
    %v3942 = vld [vmem:[%s3 + $0xb0] sm:$0xf]
    %v3943 = vld [vmem:[%s3 + $0xb4] sm:$0xf]
    %v3944 = vld [vmem:[%s3 + $0xb8] sm:$0xf]
    %v3945 = vld [vmem:[%s3 + $0xbc] sm:$0xf]
    %v3946 = vld [vmem:[%s3 + $0xc0] sm:$0xf]
    %v3947 = vld [vmem:[%s3 + $0xc4] sm:$0xf]
    %v3948 = vld [vmem:[%s3 + $0xc8] sm:$0xf]
    %v3949 = vld [vmem:[%s3 + $0xcc] sm:$0xf]
    %v3950 = vld [vmem:[%s3 + $0xd0] sm:$0xf]
    %v3951 = vld [vmem:[%s3 + $0xd4] sm:$0xf]
    %v3952 = vld [vmem:[%s3 + $0xd8] sm:$0xf]
    %v3953 = vld [vmem:[%s3 + $0xdc] sm:$0xf]
    %v3954 = vld [vmem:[%s3 + $0xe0] sm:$0xf]
    %v3955 = vld [vmem:[%s3 + $0xe4] sm:$0xf]
    %v3956 = vld [vmem:[%s3 + $0xe8] sm:$0xf]
    %v3957 = vld [vmem:[%s3 + $0xec] sm:$0xf]
    %v3958 = vld [vmem:[%s3 + $0xf0] sm:$0xf]
    %v3959 = vld [vmem:[%s3 + $0xf4] sm:$0xf]
    %v3960 = vld [vmem:[%s3 + $0xf8] sm:$0xf]
    %v3961 = vld [vmem:[%s3 + $0xfc] sm:$0xf]
    %v3962 = vld [vmem:[%s4] sm:$0x1]
    %v3964 = vlaneseq
    %v3965 = vshrl.u32 %v3964, 7
    %v3966 = vsub.s32 0, %v3965
    %v3967 = vrot.slane %v3962, %v3966
    %v4033 = vunpack.c.l.b16 %v3898
    %v4034 = vunpack.c.l.b16 %v3899
    %v4035 = vunpack.c.l.b16 %v3900
    %v4036 = vunpack.c.l.b16 %v3901
    %v4037 = vunpack.c.l.b16 %v3902
    %v4038 = vunpack.c.l.b16 %v3903
    %v4039 = vunpack.c.l.b16 %v3904
    %v4040 = vunpack.c.l.b16 %v3905
    %v4041 = vunpack.c.l.b16 %v3906
    %v4042 = vunpack.c.l.b16 %v3907
    %v4043 = vunpack.c.l.b16 %v3908
    %v4044 = vunpack.c.l.b16 %v3909
    %v4045 = vunpack.c.l.b16 %v3910
    %v4046 = vunpack.c.l.b16 %v3911
    %v4047 = vunpack.c.l.b16 %v3912
    %v4048 = vunpack.c.l.b16 %v3913
    %v4049 = vunpack.c.l.b16 %v3914
    %v4050 = vunpack.c.l.b16 %v3915
    %v4051 = vunpack.c.l.b16 %v3916
    %v4052 = vunpack.c.l.b16 %v3917
    %v4053 = vunpack.c.l.b16 %v3918
    %v4054 = vunpack.c.l.b16 %v3919
    %v4055 = vunpack.c.l.b16 %v3920
    %v4056 = vunpack.c.l.b16 %v3921
    %v4057 = vunpack.c.l.b16 %v3922
    %v4058 = vunpack.c.l.b16 %v3923
    %v4059 = vunpack.c.l.b16 %v3924
    %v4060 = vunpack.c.l.b16 %v3925
    %v4061 = vunpack.c.l.b16 %v3926
    %v4062 = vunpack.c.l.b16 %v3927
    %v4063 = vunpack.c.l.b16 %v3928
    %v4064 = vunpack.c.l.b16 %v3929
    %v4065 = vunpack.c.l.b16 %v3930
    %v4066 = vunpack.c.l.b16 %v3931
    %v4067 = vunpack.c.l.b16 %v3932
    %v4068 = vunpack.c.l.b16 %v3933
    %v4069 = vunpack.c.l.b16 %v3934
    %v4070 = vunpack.c.l.b16 %v3935
    %v4071 = vunpack.c.l.b16 %v3936
    %v4072 = vunpack.c.l.b16 %v3937
    %v4073 = vunpack.c.l.b16 %v3938
    %v4074 = vunpack.c.l.b16 %v3939
    %v4075 = vunpack.c.l.b16 %v3940
    %v4076 = vunpack.c.l.b16 %v3941
    %v4077 = vunpack.c.l.b16 %v3942
    %v4078 = vunpack.c.l.b16 %v3943
    %v4079 = vunpack.c.l.b16 %v3944
    %v4080 = vunpack.c.l.b16 %v3945
    %v4081 = vunpack.c.l.b16 %v3946
    %v4082 = vunpack.c.l.b16 %v3947
    %v4083 = vunpack.c.l.b16 %v3948
    %v4084 = vunpack.c.l.b16 %v3949
    %v4085 = vunpack.c.l.b16 %v3950
    %v4086 = vunpack.c.l.b16 %v3951
    %v4087 = vunpack.c.l.b16 %v3952
    %v4088 = vunpack.c.l.b16 %v3953
    %v4089 = vunpack.c.l.b16 %v3954
    %v4090 = vunpack.c.l.b16 %v3955
    %v4091 = vunpack.c.l.b16 %v3956
    %v4092 = vunpack.c.l.b16 %v3957
    %v4093 = vunpack.c.l.b16 %v3958
    %v4094 = vunpack.c.l.b16 %v3959
    %v4095 = vunpack.c.l.b16 %v3960
    %v4096 = vunpack.c.l.b16 %v3961
    %v4097 = vpack.c.b16 %v4034, %v4033
    %v4098 = vpack.c.b16 %v4036, %v4035
    %v4099 = vpack.c.b16 %v4038, %v4037
    %v4100 = vpack.c.b16 %v4040, %v4039
    %v4101 = vpack.c.b16 %v4042, %v4041
    %v4102 = vpack.c.b16 %v4044, %v4043
    %v4103 = vpack.c.b16 %v4046, %v4045
    %v4104 = vpack.c.b16 %v4048, %v4047
    %v4105 = vpack.c.b16 %v4050, %v4049
    %v4106 = vpack.c.b16 %v4052, %v4051
    %v4107 = vpack.c.b16 %v4054, %v4053
    %v4108 = vpack.c.b16 %v4056, %v4055
    %v4109 = vpack.c.b16 %v4058, %v4057
    %v4110 = vpack.c.b16 %v4060, %v4059
    %v4111 = vpack.c.b16 %v4062, %v4061
    %v4112 = vpack.c.b16 %v4064, %v4063
    %v4113 = vpack.c.b16 %v4066, %v4065
    %v4114 = vpack.c.b16 %v4068, %v4067
    %v4115 = vpack.c.b16 %v4070, %v4069
    %v4116 = vpack.c.b16 %v4072, %v4071
    %v4117 = vpack.c.b16 %v4074, %v4073
    %v4118 = vpack.c.b16 %v4076, %v4075
    %v4119 = vpack.c.b16 %v4078, %v4077
    %v4120 = vpack.c.b16 %v4080, %v4079
    %v4121 = vpack.c.b16 %v4082, %v4081
    %v4122 = vpack.c.b16 %v4084, %v4083
    %v4123 = vpack.c.b16 %v4086, %v4085
    %v4124 = vpack.c.b16 %v4088, %v4087
    %v4125 = vpack.c.b16 %v4090, %v4089
    %v4126 = vpack.c.b16 %v4092, %v4091
    %v4127 = vpack.c.b16 %v4094, %v4093
    %v4128 = vpack.c.b16 %v4096, %v4095
    %4161 = vmatprep.subr.bf16.mxu0 0
    %4162 = vmatpush1.bf16.msra.mxu0 %v4104
    %4163 = vmatprep.subr.bf16.mxu0 0
    %4164 = vmatpush1.bf16.msra.mxu0 %v4103
    %4165 = vmatprep.subr.bf16.mxu0 0
    %4166 = vmatpush1.bf16.msra.mxu0 %v4102
    %4167 = vmatprep.subr.bf16.mxu0 0
    %4168 = vmatpush1.bf16.msra.mxu0 %v4101
    %4169 = vmatprep.subr.bf16.mxu0 0
    %4170 = vmatpush1.bf16.msra.mxu0 %v4100
    %4171 = vmatprep.subr.bf16.mxu0 0
    %4172 = vmatpush1.bf16.msra.mxu0 %v4099
    %4173 = vmatprep.subr.bf16.mxu0 0
    %4174 = vmatpush1.bf16.msra.mxu0 %v4098
    %4175 = vmatprep.subr.bf16.mxu0 0
    %4176 = vmatpush1.bf16.msra.mxu0 %v4097
    %4177 = vmatprep.subr.bf16.mxu0 0
    %4178 = vmatpush2.bf16.msra.mxu0 %v4112
    %4179 = vmatprep.subr.bf16.mxu0 0
    %4180 = vmatpush2.bf16.msra.mxu0 %v4111
    %4181 = vmatprep.subr.bf16.mxu0 0
    %4182 = vmatpush2.bf16.msra.mxu0 %v4110
    %4183 = vmatprep.subr.bf16.mxu0 0
    %4184 = vmatpush2.bf16.msra.mxu0 %v4109
    %4185 = vmatprep.subr.bf16.mxu0 0
    %4186 = vmatpush2.bf16.msra.mxu0 %v4108
    %4187 = vmatprep.subr.bf16.mxu0 0
    %4188 = vmatpush2.bf16.msra.mxu0 %v4107
    %4189 = vmatprep.subr.bf16.mxu0 0
    %4190 = vmatpush2.bf16.msra.mxu0 %v4106
    %4191 = vmatprep.subr.bf16.mxu0 0
    %4192 = vmatpush2.bf16.msra.mxu0 %v4105
    %4193 = vmatprep.mubr.bf16.mxu0 %v3895
    %4194 = vmatmul.mubr.bf16.gmra.mxu0 %v3894
    %v4195 = vpop.f32.mrf.mxu0
    %v4196 = vadd.f32 %v3967, %v4195
    %v4197 = vpop.f32.mrf.mxu0
    %v4198 = vpop.f32.mrf.mxu0
    %v4199 = vpop.f32.mrf.mxu0
    %4200 = vdwg.mxu0
    %4201 = vmatprep.subr.bf16.mxu0 0
    %4202 = vmatpush1.bf16.msra.mxu0 %v4120
    %4203 = vmatprep.subr.bf16.mxu0 0
    %4204 = vmatpush1.bf16.msra.mxu0 %v4119
    %4205 = vmatprep.subr.bf16.mxu0 0
    %4206 = vmatpush1.bf16.msra.mxu0 %v4118
    %4207 = vmatprep.subr.bf16.mxu0 0
    %4208 = vmatpush1.bf16.msra.mxu0 %v4117
    %4209 = vmatprep.subr.bf16.mxu0 0
    %4210 = vmatpush1.bf16.msra.mxu0 %v4116
    %4211 = vmatprep.subr.bf16.mxu0 0
    %4212 = vmatpush1.bf16.msra.mxu0 %v4115
    %4213 = vmatprep.subr.bf16.mxu0 0
    %4214 = vmatpush1.bf16.msra.mxu0 %v4114
    %4215 = vmatprep.subr.bf16.mxu0 0
    %4216 = vmatpush1.bf16.msra.mxu0 %v4113
    %4217 = vmatprep.subr.bf16.mxu0 0
    %4218 = vmatpush2.bf16.msra.mxu0 %v4128
    %4219 = vmatprep.subr.bf16.mxu0 0
    %4220 = vmatpush2.bf16.msra.mxu0 %v4127
    %4221 = vmatprep.subr.bf16.mxu0 0
    %4222 = vmatpush2.bf16.msra.mxu0 %v4126
    %4223 = vmatprep.subr.bf16.mxu0 0
    %4224 = vmatpush2.bf16.msra.mxu0 %v4125
    %4225 = vmatprep.subr.bf16.mxu0 0
    %4226 = vmatpush2.bf16.msra.mxu0 %v4124
    %4227 = vmatprep.subr.bf16.mxu0 0
    %4228 = vmatpush2.bf16.msra.mxu0 %v4123
    %4229 = vmatprep.subr.bf16.mxu0 0
    %4230 = vmatpush2.bf16.msra.mxu0 %v4122
    %4231 = vmatprep.subr.bf16.mxu0 0
    %4232 = vmatpush2.bf16.msra.mxu0 %v4121
    %4233 = vmatprep.mubr.bf16.mxu0 %v3897
    %4234 = vmatmul.mubr.bf16.gmra.mxu0 %v3896
    %v4235 = vpop.f32.mrf.mxu0
    %v4236 = vadd.f32 %v4196, %v4235
    %v4237 = vpop.f32.mrf.mxu0
    %v4238 = vpop.f32.mrf.mxu0
    %v4239 = vpop.f32.mrf.mxu0
    %4240 = vdwg.mxu0
    %vm4241 = vcmask 74752
    %4242 = vst.msk [vmem:[#allocation2] sm:$0x3] %vm4241, %v4236
    // Predicated region
    $region22: #{simple_cnn_forward.5} parent=1 // pred_check
      _
    $region23: #{simple_cnn_forward.5} parent=1 // pred_check_branch
      %4244 = sbr.rel (0) target = $region25
    $region24: #{simple_cnn_forward.5} parent=1 // pred_region
      %s4246 = ssub.s32 32, 32
      %4247 = vsyncadd [#allocation3], %s4246
      %s4249 = sshll.u32 [#allocation2], 4
      %s4250 = int_to_ptr.vmem [resolvable:$true] %s4249
      %4252 = dma.vmem_to_hbm [thread:$0]  %s4250, 32, %s5, [#allocation3]
    $region25: #{simple_cnn_forward.5} parent=1 // pred_fallthru
      _
    // Predicated region
    $region26: #{simple_cnn_forward.5} parent=1 // pred_check
      _
    $region27: #{simple_cnn_forward.5} parent=1 // pred_check_branch
      %4254 = sbr.rel (0) target = $region29
    $region28: #{simple_cnn_forward.5} parent=1 // pred_region
      %4255 = dma.done [#allocation3], 32
    $region29: #{simple_cnn_forward.5} parent=1 // pred_fallthru
      _
    %4256 = vsyncpa [#allocation3], 1

</llo_original>
